<compile_context>
chip_gen: v7x
topology: tpu7x:2x2x1
jax: 0.10.0
libtpu: 0.0.40
codegen_flags: <defaults>
</compile_context>

<pallas_src>
import math

import jax
import jax.numpy as jnp
from jax import lax
from jax.experimental import pallas as pl
from jax.experimental.pallas import tpu as pltpu

VMEM = pltpu.MemorySpace.VMEM
SMEM = pltpu.MemorySpace.SMEM

D_IN = 784
D_H = 400
D_LAT_IN = 100   # == omegas.shape[0]
D_LAT_OUT = 30
LANE = 128
SLAB = 4 * LANE  # 512: packed encoder-head output slab (mu_in|sig_in|mu_out|sig_out)


# ----------------------------------------------------------------------------
# Fused Pallas kernel: encode -> GP predict -> decode, all in VMEM
# ----------------------------------------------------------------------------
def _vgp_fused_kernel(x_ref, w1_ref, b1_ref, w2p_ref, b2p_ref,
                      scale_ref, xi_ref, w3p_ref, b3_ref,
                      w4_hbm_ref, b4_ref, sigma_ref,
                      enc_ref, gp_ref, xrec_ref,
                      w4_vmem, w4_sem):
    # Kick off the big decoder-weight DMA right away; wait just before its matmul
    # so the HBM load overlaps the encoder + GP compute.
    w4_copy = pltpu.make_async_copy(w4_hbm_ref, w4_vmem, w4_sem.at[0])
    w4_copy.start()

    sigma = sigma_ref[0, 0]

    # ---------------- encoder ----------------
    h1 = jnp.dot(x_ref[...].astype(jnp.bfloat16), w1_ref[...],
                 preferred_element_type=jnp.float32)
    h1 = jnp.maximum(h1 + b1_ref[...], 0.0)                       # (B, 400)
    # All four heads in one lane-aligned matmul:
    #   lanes [0:100]=mu_in, [128:228]=sig_in, [256:286]=mu_out, [384:414]=sig_out
    enc = jnp.dot(h1, w2p_ref[...],
                  preferred_element_type=jnp.float32) + b2p_ref[...]   # (B, 512)
    enc_ref[...] = enc

    # ---------------- GP (ARD-RBF) ----------------
    dn = (((1,), (1,)), ((), ()))   # contract last dims -> (rows_a, rows_b)
    # scaled inputs: mu_in * omegas / lengthscale, zero padded to 128 lanes
    si = enc[:, 0:LANE] * scale_ref[...]                          # (B, 128)
    si2 = si * si
    cross_ss = lax.dot_general(si, si, dn, preferred_element_type=jnp.float32)     # (B,B)
    norm_row_ss = lax.dot_general(jnp.ones_like(si), si2, dn,
                                  preferred_element_type=jnp.float32)              # row j -> ||s_j||^2
    norm_col_ss = jnp.sum(si2, axis=-1, keepdims=True)                             # (B,1)
    kss = sigma * jnp.exp(-0.5 * jnp.maximum(
        norm_col_ss + norm_row_ss - 2.0 * cross_ss, 0.0))                          # (B,B)

    # In-kernel Gauss-Jordan inverse of the tiny (B,B) Gram matrix (B is static).
    # (Matches torch.inverse semantics: no jitter is added.)
    bsz = kss.shape[0]
    rid = lax.broadcasted_iota(jnp.int32, (bsz, bsz), 0)
    cid = lax.broadcasted_iota(jnp.int32, (bsz, bsz), 1)
    A = kss
    Minv = (rid == cid).astype(jnp.float32)
    for i in range(bsz):
        row_m = rid == i
        col_m = cid == i
        piv = jnp.sum(jnp.where(row_m & col_m, A, 0.0), keepdims=True)   # (1,1)
        inv_piv = 1.0 / piv
        pr_a = jnp.sum(jnp.where(row_m, A, 0.0), axis=0, keepdims=True) * inv_piv     # (1,B)
        pr_m = jnp.sum(jnp.where(row_m, Minv, 0.0), axis=0, keepdims=True) * inv_piv  # (1,B)
        col_a = jnp.sum(jnp.where(col_m, A, 0.0), axis=1, keepdims=True)              # (B,1)
        A = jnp.where(row_m, pr_a, A - col_a * pr_a)
        Minv = jnp.where(row_m, pr_m, Minv - col_a * pr_m)

    xi_s = xi_ref[...]                                            # (100,128) pre-scaled, zero padded
    cross_es = lax.dot_general(xi_s, si, dn, preferred_element_type=jnp.float32)    # (100,B)
    norm_row_es = lax.dot_general(jnp.ones_like(xi_s), si2, dn,
                                  preferred_element_type=jnp.float32)               # (100,B)
    xi_norm = jnp.sum(xi_s * xi_s, axis=-1, keepdims=True)                          # (100,1)
    kes = sigma * jnp.exp(-0.5 * jnp.maximum(
        xi_norm + norm_row_es - 2.0 * cross_es, 0.0))                               # (100,B)

    a = jnp.dot(kes, Minv, preferred_element_type=jnp.float32)                      # (100,B)
    # mu_out slab slice (B,128) is zero in lanes 30:128 -> mean128 lanes 30:128 == 0
    mean128 = jnp.dot(a, enc[:, 2 * LANE:3 * LANE],
                      preferred_element_type=jnp.float32)                           # (100,128)
    quad = jnp.sum(a * kes, axis=-1, keepdims=True)                                 # (100,1)
    cov_col = sigma - quad                           # Kee = sigma for every xi point
    col_id = lax.broadcasted_iota(jnp.int32, mean128.shape, 1)
    cov_block = jnp.where((col_id >= 64) & (col_id < 64 + D_LAT_OUT), cov_col, 0.0)
    # lane-dense packed GP output: lanes 0:30 = mean, lanes 64:94 = cov (broadcast)
    gp_ref[...] = mean128 + cov_block

    # ---------------- decoder ----------------
    # z = mean (eval mode); w3p has zero rows 30:128, so the padded mean128 slab
    # feeds the decoder directly with a clean K=128 matmul.
    h2 = jnp.dot(mean128, w3p_ref[...], preferred_element_type=jnp.float32)
    h2 = jnp.maximum(h2 + b3_ref[...], 0.0)                        # (100, 400)
    w4_copy.wait()
    logits = jnp.dot(h2.astype(jnp.bfloat16), w4_vmem[...],
                     preferred_element_type=jnp.float32) + b4_ref[...]
    xrec_ref[...] = jax.nn.sigmoid(logits)                         # (100, 784)


# ----------------------------------------------------------------------------
# pallas_call wrapper (single fused call, gridless, whole arrays in VMEM)
# ----------------------------------------------------------------------------
def _vspec():
    return pl.BlockSpec(memory_space=VMEM)


def vgp_fused(x2d, xi_scaled, prep):
    B = x2d.shape[0]
    out_shapes = (
        jax.ShapeDtypeStruct((B, SLAB), jnp.float32),          # packed encoder heads
        jax.ShapeDtypeStruct((D_LAT_IN, LANE), jnp.float32),   # packed mean/cov
        jax.ShapeDtypeStruct((D_LAT_IN, D_IN), jnp.float32),   # reconstruction
    )
    return pl.pallas_call(
        _vgp_fused_kernel,
        out_shape=out_shapes,
        in_specs=[
            _vspec(),                              # x
            _vspec(), _vspec(),                    # w1 (bf16), b1
            _vspec(), _vspec(),                    # w2p packed, b2p packed
            _vspec(),                              # scale128 = omegas/lengthscale padded
            _vspec(),                              # xi (pre-scaled, padded)
            _vspec(), _vspec(),                    # w3p padded, b3
            pl.BlockSpec(memory_space=pl.ANY),     # w4 (bf16) stays in HBM; manual DMA
            _vspec(),                              # b4
            pl.BlockSpec(memory_space=SMEM),       # sigma_ard (1,1)
        ],
        out_specs=(_vspec(), _vspec(), _vspec()),
        scratch_shapes=[
            pltpu.VMEM((D_H, D_IN), jnp.bfloat16),   # w4 landing buffer
            pltpu.SemaphoreType.DMA((1,)),
        ],
    )(x2d, prep["w1"], prep["b1"], prep["w2p"], prep["b2p"],
      prep["scale128"], xi_scaled, prep["w3p"], prep["b3"],
      prep["w4"], prep["b4"], prep["sigma11"])


# ----------------------------------------------------------------------------
# Forward pass (thin glue: xi sampling + output unpacking)
# ----------------------------------------------------------------------------
def vgp_forward(x, prep, xi_key):
    x2d = x.reshape(-1, D_IN).astype(jnp.float32)
    B = x2d.shape[0]

    # xi ~ N(0,1) with shape (100, 1, 100) as in the PyTorch code (drawn every forward).
    xi = jax.random.normal(xi_key, (D_LAT_IN, 1, D_LAT_IN), jnp.float32)
    xi2d = xi.reshape(D_LAT_IN, D_LAT_IN)
    xi_scaled = jnp.pad(xi2d, ((0, 0), (0, LANE - D_LAT_IN))) * prep["scale128"]

    enc, gp, x_rec = vgp_fused(x2d, xi_scaled, prep)

    mu_in = enc[:, 0:D_LAT_IN]
    sig_in = enc[:, LANE:LANE + D_LAT_IN]
    mu_out = enc[:, 2 * LANE:2 * LANE + D_LAT_OUT]
    sig_out = enc[:, 3 * LANE:3 * LANE + D_LAT_OUT]

    mean = gp[:, 0:D_LAT_OUT]
    cov = gp[:, 64:64 + D_LAT_OUT]
    z = mean                                     # eval-mode generate_z
    # TODO(synk): training-mode reparametrization / z-sampling path not implemented
    # (eval-mode semantics, matching model.eval() in PyTorch).

    return (x_rec, z, mean, cov,
            mu_in.reshape(B, 1, D_LAT_IN), sig_in.reshape(B, 1, D_LAT_IN),
            mu_out.reshape(B, 1, D_LAT_OUT), sig_out.reshape(B, 1, D_LAT_OUT))


# ----------------------------------------------------------------------------
# Deterministic parameter init (torch.nn.Linear default U(-1/sqrt(in), .)) and
# one-time packing/padding of weights into the kernel's lane-aligned layout.
# ----------------------------------------------------------------------------
def _init_linear(key, fan_in, fan_out):
    kw, kb = jax.random.split(key)
    bound = 1.0 / math.sqrt(fan_in)
    w = jax.random.uniform(kw, (fan_in, fan_out), jnp.float32, -bound, bound)
    b = jax.random.uniform(kb, (1, fan_out), jnp.float32, -bound, bound)
    return w, b


def init_params(key):
    keys = jax.random.split(key, 7)
    p = {}
    p["w1"], p["b1"] = _init_linear(keys[0], D_IN, D_H)
    p["w21"], p["b21"] = _init_linear(keys[1], D_H, D_LAT_IN)
    p["w22"], p["b22"] = _init_linear(keys[2], D_H, D_LAT_IN)
    p["w23"], p["b23"] = _init_linear(keys[3], D_H, D_LAT_OUT)
    p["w24"], p["b24"] = _init_linear(keys[4], D_H, D_LAT_OUT)
    p["w3"], p["b3"] = _init_linear(keys[5], D_LAT_OUT, D_H)
    p["w4"], p["b4"] = _init_linear(keys[6], D_H, D_IN)
    p["omegas"] = -jnp.ones((D_LAT_IN,), jnp.float32)        # torch.ones(100).mul(-1)
    p["sigma_ard"] = jnp.float32(1.0)                         # torch.ones(1)
    p["lengthscale"] = jnp.float32(math.log(2.0))             # gpytorch default softplus(0)
    return p


def prepare_params(p):
    # Pack the four encoder heads into one 128-lane-aligned (400, 512) weight.
    w2p = jnp.zeros((D_H, SLAB), jnp.float32)
    w2p = w2p.at[:, 0:D_LAT_IN].set(p["w21"])
    w2p = w2p.at[:, LANE:LANE + D_LAT_IN].set(p["w22"])
    w2p = w2p.at[:, 2 * LANE:2 * LANE + D_LAT_OUT].set(p["w23"])
    w2p = w2p.at[:, 3 * LANE:3 * LANE + D_LAT_OUT].set(p["w24"])
    b2p = jnp.zeros((1, SLAB), jnp.float32)
    b2p = b2p.at[:, 0:D_LAT_IN].set(p["b21"])
    b2p = b2p.at[:, LANE:LANE + D_LAT_IN].set(p["b22"])
    b2p = b2p.at[:, 2 * LANE:2 * LANE + D_LAT_OUT].set(p["b23"])
    b2p = b2p.at[:, 3 * LANE:3 * LANE + D_LAT_OUT].set(p["b24"])

    # fc3 weight zero-padded to 128 input rows so the padded mean slab feeds it.
    w3p = jnp.zeros((LANE, D_H), jnp.float32).at[0:D_LAT_OUT, :].set(p["w3"])

    # RBF input scaling: omegas / lengthscale, zero-padded to 128 lanes.
    scale = (p["omegas"] / p["lengthscale"]).astype(jnp.float32)
    scale128 = jnp.zeros((1, LANE), jnp.float32).at[0, 0:D_LAT_IN].set(scale)

    return {
        "w1": p["w1"].astype(jnp.bfloat16),   # big weights in bf16 (f32 accumulation)
        "b1": p["b1"],
        "w2p": w2p, "b2p": b2p,
        "w3p": w3p, "b3": p["b3"],
        "w4": p["w4"].astype(jnp.bfloat16),
        "b4": p["b4"],
        "scale128": scale128,
        "sigma11": jnp.full((1, 1), p["sigma_ard"], jnp.float32),
    }


if __name__ == "__main__":
    root = jax.random.PRNGKey(0)
    k_params, k_x, k_xi = jax.random.split(root, 3)

    params = init_params(k_params)
    prep = prepare_params(params)
    # small, module-consistent input: batch=4 flattened 28*28 images in [0, 1]
    x = jax.random.uniform(k_x, (4, D_IN), jnp.float32)

    fwd = jax.jit(vgp_forward)
    outs = fwd(x, prep, k_xi)
    for o in outs:
        jax.block_until_ready(o)

    # light sanity checks
    assert outs[0].shape == (D_LAT_IN, D_IN)          # x_rec (100, 784)
    assert outs[1].shape == (D_LAT_IN, D_LAT_OUT)     # z     (100, 30)
    assert outs[2].shape == (D_LAT_IN, D_LAT_OUT)     # mean  (100, 30)
    assert outs[3].shape == (D_LAT_IN, D_LAT_OUT)     # cov   (100, 30)
    assert outs[4].shape == (4, 1, D_LAT_IN)          # inputs_mu
    assert all(bool(jnp.isfinite(o).all()) for o in outs)
    print("KERNEL_OK")
</pallas_src>

<mosaic_0001>
module attributes {stable_mosaic.version = 11 : i64} {
  func.func @_vgp_fused_kernel(%arg0: memref<4x784xf32, #tpu.memory_space<vmem>>, %arg1: memref<784x400xbf16, #tpu.memory_space<vmem>>, %arg2: memref<1x400xf32, #tpu.memory_space<vmem>>, %arg3: memref<400x512xf32, #tpu.memory_space<vmem>>, %arg4: memref<1x512xf32, #tpu.memory_space<vmem>>, %arg5: memref<1x128xf32, #tpu.memory_space<vmem>>, %arg6: memref<100x128xf32, #tpu.memory_space<vmem>>, %arg7: memref<128x400xf32, #tpu.memory_space<vmem>>, %arg8: memref<1x400xf32, #tpu.memory_space<vmem>>, %arg9: memref<400x784xbf16, #tpu.memory_space<any>>, %arg10: memref<1x784xf32, #tpu.memory_space<vmem>>, %arg11: memref<1x1xf32, #tpu.memory_space<smem>>, %arg12: memref<4x512xf32, #tpu.memory_space<vmem>>, %arg13: memref<100x128xf32, #tpu.memory_space<vmem>>, %arg14: memref<100x784xf32, #tpu.memory_space<vmem>>, %arg15: memref<400x784xbf16, #tpu.memory_space<vmem>>, %arg16: memref<1x!tpu.dma_semaphore, #tpu.memory_space<semaphore_mem>>) attributes {dimension_semantics = [], scalar_prefetch = 0 : i64, scratch_operands = 2 : i64, tpu.core_type = #tpu.core_type<tc>} {
    %c0_i32 = arith.constant 0 : i32
    %0 = tpu.memref_slice %arg16[%c0_i32] : memref<1x!tpu.dma_semaphore, #tpu.memory_space<semaphore_mem>> -> memref<1x!tpu.dma_semaphore, #tpu.memory_space<semaphore_mem>>
    %1 = tpu.memref_squeeze %0 : memref<1x!tpu.dma_semaphore, #tpu.memory_space<semaphore_mem>> -> memref<!tpu.dma_semaphore, #tpu.memory_space<semaphore_mem>>
    tpu.enqueue_dma source(%arg9 : memref<400x784xbf16, #tpu.memory_space<any>>) target(%arg15 : memref<400x784xbf16, #tpu.memory_space<vmem>>) target_semaphore(%1 : memref<!tpu.dma_semaphore, #tpu.memory_space<semaphore_mem>>)
    %c0 = arith.constant 0 : index
    %c0_0 = arith.constant 0 : index
    %2 = memref.load %arg11[%c0, %c0_0] : memref<1x1xf32, #tpu.memory_space<smem>>
    %c0_1 = arith.constant 0 : index
    %c0_2 = arith.constant 0 : index
    %3 = vector.load %arg0[%c0_1, %c0_2] : memref<4x784xf32, #tpu.memory_space<vmem>>, vector<4x784xf32>
    %4 = arith.truncf %3 : vector<4x784xf32> to vector<4x784xbf16>
    %c0_3 = arith.constant 0 : index
    %c0_4 = arith.constant 0 : index
    %5 = vector.load %arg1[%c0_3, %c0_4] : memref<784x400xbf16, #tpu.memory_space<vmem>>, vector<784x400xbf16>
    %cst = arith.constant dense<0.000000e+00> : vector<4x400xf32>
    %6 = tpu.matmul %4, %5, %cst {dimension_numbers = #tpu.dot_dimension_numbers<[1], [0], [0], [1], [0, 0, 1, 1], [], []>} : vector<4x784xbf16>, vector<784x400xbf16>, vector<4x400xf32> -> vector<4x400xf32>
    %c0_5 = arith.constant 0 : index
    %c0_6 = arith.constant 0 : index
    %7 = vector.load %arg2[%c0_5, %c0_6] : memref<1x400xf32, #tpu.memory_space<vmem>>, vector<1x400xf32>
    %8 = vector.broadcast %7 : vector<1x400xf32> to vector<4x400xf32>
    %9 = arith.addf %6, %8 : vector<4x400xf32>
    %cst_7 = arith.constant 0.000000e+00 : f32
    %10 = vector.broadcast %cst_7 : f32 to vector<4x400xf32>
    %11 = arith.maximumf %9, %10 : vector<4x400xf32>
    %c0_8 = arith.constant 0 : index
    %c0_9 = arith.constant 0 : index
    %12 = vector.load %arg3[%c0_8, %c0_9] : memref<400x512xf32, #tpu.memory_space<vmem>>, vector<400x512xf32>
    %cst_10 = arith.constant dense<0.000000e+00> : vector<4x512xf32>
    %13 = tpu.matmul %11, %12, %cst_10 {dimension_numbers = #tpu.dot_dimension_numbers<[1], [0], [0], [1], [0, 0, 1, 1], [], []>} : vector<4x400xf32>, vector<400x512xf32>, vector<4x512xf32> -> vector<4x512xf32>
    %c0_11 = arith.constant 0 : index
    %c0_12 = arith.constant 0 : index
    %14 = vector.load %arg4[%c0_11, %c0_12] : memref<1x512xf32, #tpu.memory_space<vmem>>, vector<1x512xf32>
    %15 = vector.broadcast %14 : vector<1x512xf32> to vector<4x512xf32>
    %16 = arith.addf %13, %15 : vector<4x512xf32>
    %c0_13 = arith.constant 0 : index
    %c0_14 = arith.constant 0 : index
    %17 = vector.load %arg12[%c0_13, %c0_14] : memref<4x512xf32, #tpu.memory_space<vmem>>, vector<4x512xf32>
    tpu.vector_store %arg12[%c0_13, %c0_14], %16 {strides = array<i32>} : memref<4x512xf32, #tpu.memory_space<vmem>>, vector<4x512xf32>,
    %18 = vector.extract_strided_slice %16 {offsets = [0, 0], sizes = [4, 128], strides = [1, 1]} : vector<4x512xf32> to vector<4x128xf32>
    %c0_15 = arith.constant 0 : index
    %c0_16 = arith.constant 0 : index
    %19 = vector.load %arg5[%c0_15, %c0_16] : memref<1x128xf32, #tpu.memory_space<vmem>>, vector<1x128xf32>
    %20 = vector.broadcast %19 : vector<1x128xf32> to vector<4x128xf32>
    %21 = arith.mulf %18, %20 : vector<4x128xf32>
    %22 = arith.mulf %21, %21 : vector<4x128xf32>
    %cst_17 = arith.constant dense<0.000000e+00> : vector<4x4xf32>
    %23 = tpu.matmul %21, %21, %cst_17 {dimension_numbers = #tpu.dot_dimension_numbers<[1], [1], [0], [0], [0, 0, 1, 0], [], []>} : vector<4x128xf32>, vector<4x128xf32>, vector<4x4xf32> -> vector<4x4xf32>
    %cst_18 = arith.constant 1.000000e+00 : f32
    %24 = vector.broadcast %cst_18 : f32 to vector<4x128xf32>
    %cst_19 = arith.constant dense<0.000000e+00> : vector<4x4xf32>
    %25 = tpu.matmul %24, %22, %cst_19 {dimension_numbers = #tpu.dot_dimension_numbers<[1], [1], [0], [0], [0, 0, 1, 0], [], []>} : vector<4x128xf32>, vector<4x128xf32>, vector<4x4xf32> -> vector<4x4xf32>
    %cst_20 = arith.constant dense<0.000000e+00> : vector<4xf32>
    %26 = vector.multi_reduction <add>, %22, %cst_20 [1] : vector<4x128xf32> to vector<4xf32>
    %27 = vector.shape_cast %26 : vector<4xf32> to vector<4x1xf32>
    %28 = vector.broadcast %27 : vector<4x1xf32> to vector<4x4xf32>
    %29 = arith.addf %28, %25 : vector<4x4xf32>
    %cst_21 = arith.constant 2.000000e+00 : f32
    %30 = vector.broadcast %cst_21 : f32 to vector<4x4xf32>
    %31 = arith.mulf %30, %23 : vector<4x4xf32>
    %32 = arith.subf %29, %31 : vector<4x4xf32>
    %cst_22 = arith.constant 0.000000e+00 : f32
    %33 = vector.broadcast %cst_22 : f32 to vector<4x4xf32>
    %34 = arith.maximumf %32, %33 : vector<4x4xf32>
    %cst_23 = arith.constant -5.000000e-01 : f32
    %35 = vector.broadcast %cst_23 : f32 to vector<4x4xf32>
    %36 = arith.mulf %35, %34 : vector<4x4xf32>
    %37 = math.exp %36 : vector<4x4xf32>
    %38 = vector.broadcast %2 : f32 to vector<4x4xf32>
    %39 = arith.mulf %38, %37 : vector<4x4xf32>
    %40 = tpu.iota {dimensions = array<i32: 0>} : vector<4x4xi32>
    %41 = tpu.iota {dimensions = array<i32: 1>} : vector<4x4xi32>
    %42 = arith.cmpi eq, %40, %41 : vector<4x4xi32>
    %43 = arith.extui %42 : vector<4x4xi1> to vector<4x4xi32>
    %44 = arith.sitofp %43 : vector<4x4xi32> to vector<4x4xf32>
    %c0_i32_24 = arith.constant 0 : i32
    %45 = vector.broadcast %c0_i32_24 : i32 to vector<4x4xi32>
    %46 = arith.cmpi eq, %40, %45 : vector<4x4xi32>
    %c0_i32_25 = arith.constant 0 : i32
    %47 = vector.broadcast %c0_i32_25 : i32 to vector<4x4xi32>
    %48 = arith.cmpi eq, %41, %47 : vector<4x4xi32>
    %49 = arith.andi %46, %48 : vector<4x4xi1>
    %cst_26 = arith.constant 0.000000e+00 : f32
    %50 = vector.broadcast %cst_26 : f32 to vector<4x4xf32>
    %51 = arith.select %49, %39, %50 : vector<4x4xi1>, vector<4x4xf32>
    %52 = vector.shape_cast %51 : vector<4x4xf32> to vector<1x4x4xf32>
    %cst_27 = arith.constant dense<0.000000e+00> : vector<1xf32>
    %53 = vector.multi_reduction <add>, %52, %cst_27 [1, 2] : vector<1x4x4xf32> to vector<1xf32>
    %54 = vector.shape_cast %53 : vector<1xf32> to vector<1x1x1xf32>
    %55 = vector.extract %54[0, 0, 0] : f32 from vector<1x1x1xf32>
    %56 = vector.broadcast %55 : f32 to vector<1x1xf32>
    %cst_28 = arith.constant 1.000000e+00 : f32
    %57 = vector.broadcast %cst_28 : f32 to vector<1x1xf32>
    %58 = arith.divf %57, %56 : vector<1x1xf32>
    %cst_29 = arith.constant 0.000000e+00 : f32
    %59 = vector.broadcast %cst_29 : f32 to vector<4x4xf32>
    %60 = arith.select %46, %39, %59 : vector<4x4xi1>, vector<4x4xf32>
    %cst_30 = arith.constant dense<0.000000e+00> : vector<4xf32>
    %61 = vector.multi_reduction <add>, %60, %cst_30 [0] : vector<4x4xf32> to vector<4xf32>
    %62 = vector.shape_cast %61 : vector<4xf32> to vector<1x4xf32>
    %63 = vector.broadcast %58 : vector<1x1xf32> to vector<1x4xf32>
    %64 = arith.mulf %62, %63 : vector<1x4xf32>
    %cst_31 = arith.constant 0.000000e+00 : f32
    %65 = vector.broadcast %cst_31 : f32 to vector<4x4xf32>
    %66 = arith.select %46, %44, %65 : vector<4x4xi1>, vector<4x4xf32>
    %cst_32 = arith.constant dense<0.000000e+00> : vector<4xf32>
    %67 = vector.multi_reduction <add>, %66, %cst_32 [0] : vector<4x4xf32> to vector<4xf32>
    %68 = vector.shape_cast %67 : vector<4xf32> to vector<1x4xf32>
    %69 = vector.broadcast %58 : vector<1x1xf32> to vector<1x4xf32>
    %70 = arith.mulf %68, %69 : vector<1x4xf32>
    %cst_33 = arith.constant 0.000000e+00 : f32
    %71 = vector.broadcast %cst_33 : f32 to vector<4x4xf32>
    %72 = arith.select %48, %39, %71 : vector<4x4xi1>, vector<4x4xf32>
    %cst_34 = arith.constant dense<0.000000e+00> : vector<4xf32>
    %73 = vector.multi_reduction <add>, %72, %cst_34 [1] : vector<4x4xf32> to vector<4xf32>
    %74 = vector.shape_cast %73 : vector<4xf32> to vector<4x1xf32>
    %75 = vector.broadcast %74 : vector<4x1xf32> to vector<4x4xf32>
    %76 = vector.broadcast %64 : vector<1x4xf32> to vector<4x4xf32>
    %77 = arith.mulf %75, %76 : vector<4x4xf32>
    %78 = arith.subf %39, %77 : vector<4x4xf32>
    %79 = vector.shape_cast %64 : vector<1x4xf32> to vector<1x4xf32>
    %80 = vector.broadcast %79 : vector<1x4xf32> to vector<4x4xf32>
    %81 = arith.select %46, %80, %78 : vector<4x4xi1>, vector<4x4xf32>
    %82 = vector.broadcast %74 : vector<4x1xf32> to vector<4x4xf32>
    %83 = vector.broadcast %70 : vector<1x4xf32> to vector<4x4xf32>
    %84 = arith.mulf %82, %83 : vector<4x4xf32>
    %85 = arith.subf %44, %84 : vector<4x4xf32>
    %86 = vector.shape_cast %70 : vector<1x4xf32> to vector<1x4xf32>
    %87 = vector.broadcast %86 : vector<1x4xf32> to vector<4x4xf32>
    %88 = arith.select %46, %87, %85 : vector<4x4xi1>, vector<4x4xf32>
    %c1_i32 = arith.constant 1 : i32
    %89 = vector.broadcast %c1_i32 : i32 to vector<4x4xi32>
    %90 = arith.cmpi eq, %40, %89 : vector<4x4xi32>
    %c1_i32_35 = arith.constant 1 : i32
    %91 = vector.broadcast %c1_i32_35 : i32 to vector<4x4xi32>
    %92 = arith.cmpi eq, %41, %91 : vector<4x4xi32>
    %93 = arith.andi %90, %92 : vector<4x4xi1>
    %cst_36 = arith.constant 0.000000e+00 : f32
    %94 = vector.broadcast %cst_36 : f32 to vector<4x4xf32>
    %95 = arith.select %93, %81, %94 : vector<4x4xi1>, vector<4x4xf32>
    %96 = vector.shape_cast %95 : vector<4x4xf32> to vector<1x4x4xf32>
    %cst_37 = arith.constant dense<0.000000e+00> : vector<1xf32>
    %97 = vector.multi_reduction <add>, %96, %cst_37 [1, 2] : vector<1x4x4xf32> to vector<1xf32>
    %98 = vector.shape_cast %97 : vector<1xf32> to vector<1x1x1xf32>
    %99 = vector.extract %98[0, 0, 0] : f32 from vector<1x1x1xf32>
    %100 = vector.broadcast %99 : f32 to vector<1x1xf32>
    %cst_38 = arith.constant 1.000000e+00 : f32
    %101 = vector.broadcast %cst_38 : f32 to vector<1x1xf32>
    %102 = arith.divf %101, %100 : vector<1x1xf32>
    %cst_39 = arith.constant 0.000000e+00 : f32
    %103 = vector.broadcast %cst_39 : f32 to vector<4x4xf32>
    %104 = arith.select %90, %81, %103 : vector<4x4xi1>, vector<4x4xf32>
    %cst_40 = arith.constant dense<0.000000e+00> : vector<4xf32>
    %105 = vector.multi_reduction <add>, %104, %cst_40 [0] : vector<4x4xf32> to vector<4xf32>
    %106 = vector.shape_cast %105 : vector<4xf32> to vector<1x4xf32>
    %107 = vector.broadcast %102 : vector<1x1xf32> to vector<1x4xf32>
    %108 = arith.mulf %106, %107 : vector<1x4xf32>
    %cst_41 = arith.constant 0.000000e+00 : f32
    %109 = vector.broadcast %cst_41 : f32 to vector<4x4xf32>
    %110 = arith.select %90, %88, %109 : vector<4x4xi1>, vector<4x4xf32>
    %cst_42 = arith.constant dense<0.000000e+00> : vector<4xf32>
    %111 = vector.multi_reduction <add>, %110, %cst_42 [0] : vector<4x4xf32> to vector<4xf32>
    %112 = vector.shape_cast %111 : vector<4xf32> to vector<1x4xf32>
    %113 = vector.broadcast %102 : vector<1x1xf32> to vector<1x4xf32>
    %114 = arith.mulf %112, %113 : vector<1x4xf32>
    %cst_43 = arith.constant 0.000000e+00 : f32
    %115 = vector.broadcast %cst_43 : f32 to vector<4x4xf32>
    %116 = arith.select %92, %81, %115 : vector<4x4xi1>, vector<4x4xf32>
    %cst_44 = arith.constant dense<0.000000e+00> : vector<4xf32>
    %117 = vector.multi_reduction <add>, %116, %cst_44 [1] : vector<4x4xf32> to vector<4xf32>
    %118 = vector.shape_cast %117 : vector<4xf32> to vector<4x1xf32>
    %119 = vector.broadcast %118 : vector<4x1xf32> to vector<4x4xf32>
    %120 = vector.broadcast %108 : vector<1x4xf32> to vector<4x4xf32>
    %121 = arith.mulf %119, %120 : vector<4x4xf32>
    %122 = arith.subf %81, %121 : vector<4x4xf32>
    %123 = vector.shape_cast %108 : vector<1x4xf32> to vector<1x4xf32>
    %124 = vector.broadcast %123 : vector<1x4xf32> to vector<4x4xf32>
    %125 = arith.select %90, %124, %122 : vector<4x4xi1>, vector<4x4xf32>
    %126 = vector.broadcast %118 : vector<4x1xf32> to vector<4x4xf32>
    %127 = vector.broadcast %114 : vector<1x4xf32> to vector<4x4xf32>
    %128 = arith.mulf %126, %127 : vector<4x4xf32>
    %129 = arith.subf %88, %128 : vector<4x4xf32>
    %130 = vector.shape_cast %114 : vector<1x4xf32> to vector<1x4xf32>
    %131 = vector.broadcast %130 : vector<1x4xf32> to vector<4x4xf32>
    %132 = arith.select %90, %131, %129 : vector<4x4xi1>, vector<4x4xf32>
    %c2_i32 = arith.constant 2 : i32
    %133 = vector.broadcast %c2_i32 : i32 to vector<4x4xi32>
    %134 = arith.cmpi eq, %40, %133 : vector<4x4xi32>
    %c2_i32_45 = arith.constant 2 : i32
    %135 = vector.broadcast %c2_i32_45 : i32 to vector<4x4xi32>
    %136 = arith.cmpi eq, %41, %135 : vector<4x4xi32>
    %137 = arith.andi %134, %136 : vector<4x4xi1>
    %cst_46 = arith.constant 0.000000e+00 : f32
    %138 = vector.broadcast %cst_46 : f32 to vector<4x4xf32>
    %139 = arith.select %137, %125, %138 : vector<4x4xi1>, vector<4x4xf32>
    %140 = vector.shape_cast %139 : vector<4x4xf32> to vector<1x4x4xf32>
    %cst_47 = arith.constant dense<0.000000e+00> : vector<1xf32>
    %141 = vector.multi_reduction <add>, %140, %cst_47 [1, 2] : vector<1x4x4xf32> to vector<1xf32>
    %142 = vector.shape_cast %141 : vector<1xf32> to vector<1x1x1xf32>
    %143 = vector.extract %142[0, 0, 0] : f32 from vector<1x1x1xf32>
    %144 = vector.broadcast %143 : f32 to vector<1x1xf32>
    %cst_48 = arith.constant 1.000000e+00 : f32
    %145 = vector.broadcast %cst_48 : f32 to vector<1x1xf32>
    %146 = arith.divf %145, %144 : vector<1x1xf32>
    %cst_49 = arith.constant 0.000000e+00 : f32
    %147 = vector.broadcast %cst_49 : f32 to vector<4x4xf32>
    %148 = arith.select %134, %125, %147 : vector<4x4xi1>, vector<4x4xf32>
    %cst_50 = arith.constant dense<0.000000e+00> : vector<4xf32>
    %149 = vector.multi_reduction <add>, %148, %cst_50 [0] : vector<4x4xf32> to vector<4xf32>
    %150 = vector.shape_cast %149 : vector<4xf32> to vector<1x4xf32>
    %151 = vector.broadcast %146 : vector<1x1xf32> to vector<1x4xf32>
    %152 = arith.mulf %150, %151 : vector<1x4xf32>
    %cst_51 = arith.constant 0.000000e+00 : f32
    %153 = vector.broadcast %cst_51 : f32 to vector<4x4xf32>
    %154 = arith.select %134, %132, %153 : vector<4x4xi1>, vector<4x4xf32>
    %cst_52 = arith.constant dense<0.000000e+00> : vector<4xf32>
    %155 = vector.multi_reduction <add>, %154, %cst_52 [0] : vector<4x4xf32> to vector<4xf32>
    %156 = vector.shape_cast %155 : vector<4xf32> to vector<1x4xf32>
    %157 = vector.broadcast %146 : vector<1x1xf32> to vector<1x4xf32>
    %158 = arith.mulf %156, %157 : vector<1x4xf32>
    %cst_53 = arith.constant 0.000000e+00 : f32
    %159 = vector.broadcast %cst_53 : f32 to vector<4x4xf32>
    %160 = arith.select %136, %125, %159 : vector<4x4xi1>, vector<4x4xf32>
    %cst_54 = arith.constant dense<0.000000e+00> : vector<4xf32>
    %161 = vector.multi_reduction <add>, %160, %cst_54 [1] : vector<4x4xf32> to vector<4xf32>
    %162 = vector.shape_cast %161 : vector<4xf32> to vector<4x1xf32>
    %163 = vector.broadcast %162 : vector<4x1xf32> to vector<4x4xf32>
    %164 = vector.broadcast %152 : vector<1x4xf32> to vector<4x4xf32>
    %165 = arith.mulf %163, %164 : vector<4x4xf32>
    %166 = arith.subf %125, %165 : vector<4x4xf32>
    %167 = vector.shape_cast %152 : vector<1x4xf32> to vector<1x4xf32>
    %168 = vector.broadcast %167 : vector<1x4xf32> to vector<4x4xf32>
    %169 = arith.select %134, %168, %166 : vector<4x4xi1>, vector<4x4xf32>
    %170 = vector.broadcast %162 : vector<4x1xf32> to vector<4x4xf32>
    %171 = vector.broadcast %158 : vector<1x4xf32> to vector<4x4xf32>
    %172 = arith.mulf %170, %171 : vector<4x4xf32>
    %173 = arith.subf %132, %172 : vector<4x4xf32>
    %174 = vector.shape_cast %158 : vector<1x4xf32> to vector<1x4xf32>
    %175 = vector.broadcast %174 : vector<1x4xf32> to vector<4x4xf32>
    %176 = arith.select %134, %175, %173 : vector<4x4xi1>, vector<4x4xf32>
    %c3_i32 = arith.constant 3 : i32
    %177 = vector.broadcast %c3_i32 : i32 to vector<4x4xi32>
    %178 = arith.cmpi eq, %40, %177 : vector<4x4xi32>
    %c3_i32_55 = arith.constant 3 : i32
    %179 = vector.broadcast %c3_i32_55 : i32 to vector<4x4xi32>
    %180 = arith.cmpi eq, %41, %179 : vector<4x4xi32>
    %181 = arith.andi %178, %180 : vector<4x4xi1>
    %cst_56 = arith.constant 0.000000e+00 : f32
    %182 = vector.broadcast %cst_56 : f32 to vector<4x4xf32>
    %183 = arith.select %181, %169, %182 : vector<4x4xi1>, vector<4x4xf32>
    %184 = vector.shape_cast %183 : vector<4x4xf32> to vector<1x4x4xf32>
    %cst_57 = arith.constant dense<0.000000e+00> : vector<1xf32>
    %185 = vector.multi_reduction <add>, %184, %cst_57 [1, 2] : vector<1x4x4xf32> to vector<1xf32>
    %186 = vector.shape_cast %185 : vector<1xf32> to vector<1x1x1xf32>
    %187 = vector.extract %186[0, 0, 0] : f32 from vector<1x1x1xf32>
    %188 = vector.broadcast %187 : f32 to vector<1x1xf32>
    %cst_58 = arith.constant 1.000000e+00 : f32
    %189 = vector.broadcast %cst_58 : f32 to vector<1x1xf32>
    %190 = arith.divf %189, %188 : vector<1x1xf32>
    %cst_59 = arith.constant 0.000000e+00 : f32
    %191 = vector.broadcast %cst_59 : f32 to vector<4x4xf32>
    %192 = arith.select %178, %176, %191 : vector<4x4xi1>, vector<4x4xf32>
    %cst_60 = arith.constant dense<0.000000e+00> : vector<4xf32>
    %193 = vector.multi_reduction <add>, %192, %cst_60 [0] : vector<4x4xf32> to vector<4xf32>
    %194 = vector.shape_cast %193 : vector<4xf32> to vector<1x4xf32>
    %195 = vector.broadcast %190 : vector<1x1xf32> to vector<1x4xf32>
    %196 = arith.mulf %194, %195 : vector<1x4xf32>
    %cst_61 = arith.constant 0.000000e+00 : f32
    %197 = vector.broadcast %cst_61 : f32 to vector<4x4xf32>
    %198 = arith.select %180, %169, %197 : vector<4x4xi1>, vector<4x4xf32>
    %cst_62 = arith.constant dense<0.000000e+00> : vector<4xf32>
    %199 = vector.multi_reduction <add>, %198, %cst_62 [1] : vector<4x4xf32> to vector<4xf32>
    %200 = vector.shape_cast %199 : vector<4xf32> to vector<4x1xf32>
    %201 = vector.broadcast %200 : vector<4x1xf32> to vector<4x4xf32>
    %202 = vector.broadcast %196 : vector<1x4xf32> to vector<4x4xf32>
    %203 = arith.mulf %201, %202 : vector<4x4xf32>
    %204 = arith.subf %176, %203 : vector<4x4xf32>
    %205 = vector.shape_cast %196 : vector<1x4xf32> to vector<1x4xf32>
    %206 = vector.broadcast %205 : vector<1x4xf32> to vector<4x4xf32>
    %207 = arith.select %178, %206, %204 : vector<4x4xi1>, vector<4x4xf32>
    %c0_63 = arith.constant 0 : index
    %c0_64 = arith.constant 0 : index
    %208 = vector.load %arg6[%c0_63, %c0_64] : memref<100x128xf32, #tpu.memory_space<vmem>>, vector<100x128xf32>
    %cst_65 = arith.constant dense<0.000000e+00> : vector<100x4xf32>
    %209 = tpu.matmul %208, %21, %cst_65 {dimension_numbers = #tpu.dot_dimension_numbers<[1], [1], [0], [0], [0, 0, 1, 0], [], []>} : vector<100x128xf32>, vector<4x128xf32>, vector<100x4xf32> -> vector<100x4xf32>
    %cst_66 = arith.constant 1.000000e+00 : f32
    %210 = vector.broadcast %cst_66 : f32 to vector<100x128xf32>
    %cst_67 = arith.constant dense<0.000000e+00> : vector<100x4xf32>
    %211 = tpu.matmul %210, %22, %cst_67 {dimension_numbers = #tpu.dot_dimension_numbers<[1], [1], [0], [0], [0, 0, 1, 0], [], []>} : vector<100x128xf32>, vector<4x128xf32>, vector<100x4xf32> -> vector<100x4xf32>
    %212 = arith.mulf %208, %208 : vector<100x128xf32>
    %cst_68 = arith.constant dense<0.000000e+00> : vector<100xf32>
    %213 = vector.multi_reduction <add>, %212, %cst_68 [1] : vector<100x128xf32> to vector<100xf32>
    %214 = vector.shape_cast %213 : vector<100xf32> to vector<100x1xf32>
    %215 = vector.broadcast %214 : vector<100x1xf32> to vector<100x4xf32>
    %216 = arith.addf %215, %211 : vector<100x4xf32>
    %cst_69 = arith.constant 2.000000e+00 : f32
    %217 = vector.broadcast %cst_69 : f32 to vector<100x4xf32>
    %218 = arith.mulf %217, %209 : vector<100x4xf32>
    %219 = arith.subf %216, %218 : vector<100x4xf32>
    %cst_70 = arith.constant 0.000000e+00 : f32
    %220 = vector.broadcast %cst_70 : f32 to vector<100x4xf32>
    %221 = arith.maximumf %219, %220 : vector<100x4xf32>
    %cst_71 = arith.constant -5.000000e-01 : f32
    %222 = vector.broadcast %cst_71 : f32 to vector<100x4xf32>
    %223 = arith.mulf %222, %221 : vector<100x4xf32>
    %224 = math.exp %223 : vector<100x4xf32>
    %225 = vector.broadcast %2 : f32 to vector<100x4xf32>
    %226 = arith.mulf %225, %224 : vector<100x4xf32>
    %cst_72 = arith.constant dense<0.000000e+00> : vector<100x4xf32>
    %227 = tpu.matmul %226, %207, %cst_72 {dimension_numbers = #tpu.dot_dimension_numbers<[1], [0], [0], [1], [0, 0, 1, 1], [], []>} : vector<100x4xf32>, vector<4x4xf32>, vector<100x4xf32> -> vector<100x4xf32>
    %228 = vector.extract_strided_slice %16 {offsets = [0, 256], sizes = [4, 128], strides = [1, 1]} : vector<4x512xf32> to vector<4x128xf32>
    %cst_73 = arith.constant dense<0.000000e+00> : vector<100x128xf32>
    %229 = tpu.matmul %227, %228, %cst_73 {dimension_numbers = #tpu.dot_dimension_numbers<[1], [0], [0], [1], [0, 0, 1, 1], [], []>} : vector<100x4xf32>, vector<4x128xf32>, vector<100x128xf32> -> vector<100x128xf32>
    %230 = arith.mulf %227, %226 : vector<100x4xf32>
    %cst_74 = arith.constant dense<0.000000e+00> : vector<100xf32>
    %231 = vector.multi_reduction <add>, %230, %cst_74 [1] : vector<100x4xf32> to vector<100xf32>
    %232 = vector.shape_cast %231 : vector<100xf32> to vector<100x1xf32>
    %233 = vector.broadcast %2 : f32 to vector<100x1xf32>
    %234 = arith.subf %233, %232 : vector<100x1xf32>
    %235 = tpu.iota {dimensions = array<i32: 1>} : vector<100x128xi32>
    %c64_i32 = arith.constant 64 : i32
    %236 = vector.broadcast %c64_i32 : i32 to vector<100x128xi32>
    %237 = arith.cmpi sge, %235, %236 : vector<100x128xi32>
    %c94_i32 = arith.constant 94 : i32
    %238 = vector.broadcast %c94_i32 : i32 to vector<100x128xi32>
    %239 = arith.cmpi slt, %235, %238 : vector<100x128xi32>
    %240 = arith.andi %237, %239 : vector<100x128xi1>
    %cst_75 = arith.constant 0.000000e+00 : f32
    %241 = vector.shape_cast %234 : vector<100x1xf32> to vector<100x1xf32>
    %242 = vector.broadcast %241 : vector<100x1xf32> to vector<100x128xf32>
    %243 = vector.broadcast %cst_75 : f32 to vector<100x128xf32>
    %244 = arith.select %240, %242, %243 : vector<100x128xi1>, vector<100x128xf32>
    %245 = arith.addf %229, %244 : vector<100x128xf32>
    %c0_76 = arith.constant 0 : index
    %c0_77 = arith.constant 0 : index
    %246 = vector.load %arg13[%c0_76, %c0_77] : memref<100x128xf32, #tpu.memory_space<vmem>>, vector<100x128xf32>
    tpu.vector_store %arg13[%c0_76, %c0_77], %245 {strides = array<i32>} : memref<100x128xf32, #tpu.memory_space<vmem>>, vector<100x128xf32>,
    %c0_78 = arith.constant 0 : index
    %c0_79 = arith.constant 0 : index
    %247 = vector.load %arg7[%c0_78, %c0_79] : memref<128x400xf32, #tpu.memory_space<vmem>>, vector<128x400xf32>
    %cst_80 = arith.constant dense<0.000000e+00> : vector<100x400xf32>
    %248 = tpu.matmul %229, %247, %cst_80 {dimension_numbers = #tpu.dot_dimension_numbers<[1], [0], [0], [1], [0, 0, 1, 1], [], []>} : vector<100x128xf32>, vector<128x400xf32>, vector<100x400xf32> -> vector<100x400xf32>
    %c0_81 = arith.constant 0 : index
    %c0_82 = arith.constant 0 : index
    %249 = vector.load %arg8[%c0_81, %c0_82] : memref<1x400xf32, #tpu.memory_space<vmem>>, vector<1x400xf32>
    %250 = vector.broadcast %249 : vector<1x400xf32> to vector<100x400xf32>
    %251 = arith.addf %248, %250 : vector<100x400xf32>
    %cst_83 = arith.constant 0.000000e+00 : f32
    %252 = vector.broadcast %cst_83 : f32 to vector<100x400xf32>
    %253 = arith.maximumf %251, %252 : vector<100x400xf32>
    %c0_i32_84 = arith.constant 0 : i32
    %254 = tpu.memref_slice %arg16[%c0_i32_84] : memref<1x!tpu.dma_semaphore, #tpu.memory_space<semaphore_mem>> -> memref<1x!tpu.dma_semaphore, #tpu.memory_space<semaphore_mem>>
    %255 = tpu.memref_squeeze %254 : memref<1x!tpu.dma_semaphore, #tpu.memory_space<semaphore_mem>> -> memref<!tpu.dma_semaphore, #tpu.memory_space<semaphore_mem>>
    tpu.wait_dma2 semaphore(%255 : memref<!tpu.dma_semaphore, #tpu.memory_space<semaphore_mem>>) src(%arg9 : memref<400x784xbf16, #tpu.memory_space<any>>) dst(%arg15 : memref<400x784xbf16, #tpu.memory_space<vmem>>)
    %256 = arith.truncf %253 : vector<100x400xf32> to vector<100x400xbf16>
    %c0_85 = arith.constant 0 : index
    %c0_86 = arith.constant 0 : index
    %257 = vector.load %arg15[%c0_85, %c0_86] : memref<400x784xbf16, #tpu.memory_space<vmem>>, vector<400x784xbf16>
    %cst_87 = arith.constant dense<0.000000e+00> : vector<100x784xf32>
    %258 = tpu.matmul %256, %257, %cst_87 {dimension_numbers = #tpu.dot_dimension_numbers<[1], [0], [0], [1], [0, 0, 1, 1], [], []>} : vector<100x400xbf16>, vector<400x784xbf16>, vector<100x784xf32> -> vector<100x784xf32>
    %c0_88 = arith.constant 0 : index
    %c0_89 = arith.constant 0 : index
    %259 = vector.load %arg10[%c0_88, %c0_89] : memref<1x784xf32, #tpu.memory_space<vmem>>, vector<1x784xf32>
    %260 = vector.broadcast %259 : vector<1x784xf32> to vector<100x784xf32>
    %261 = arith.addf %258, %260 : vector<100x784xf32>
    %262 = arith.negf %261 : vector<100x784xf32>
    %263 = math.exp %262 : vector<100x784xf32>
    %cst_90 = arith.constant 1.000000e+00 : f32
    %264 = vector.broadcast %cst_90 : f32 to vector<100x784xf32>
    %265 = arith.addf %264, %263 : vector<100x784xf32>
    %266 = arith.divf %264, %265 : vector<100x784xf32>
    %c0_91 = arith.constant 0 : index
    %c0_92 = arith.constant 0 : index
    %267 = vector.load %arg14[%c0_91, %c0_92] : memref<100x784xf32, #tpu.memory_space<vmem>>, vector<100x784xf32>
    tpu.vector_store %arg14[%c0_91, %c0_92], %266 {strides = array<i32>} : memref<100x784xf32, #tpu.memory_space<vmem>>, vector<100x784xf32>,
    return
  }
}

</mosaic_0001>

<llo_original>
// kernel: vgp_forward.1
$region0: #{vgp_forward.1}
  #allocation0 [shape = 'u32[]', space=smem, size = 0x4, offset = 0x4, fixed_abs, tag = 'smem constant byte address 0x4 - core index']
  #allocation1 [shape = 'u32[144,128]{1,0:T(1,128)}', space=vmem, size = 0x12000, scoped, tag = 'internal scratch']
  #allocation2 [shape = 'bf16[400,784]{1,0:T(16,128)(2,1)}', space=vmem, size = 0xaf000, scoped, tag = 'scratch operand']
  #allocation3 [shape = 's32[1]{0}', space=sflag, size = 0x4, scoped, tag = 'scratch operand']
  #allocation4 [shape = 'f32[1,1]{1,0:T(1,128)S(6)}', space=smem, size = 0x200, scoped, tag = 'scoped memory for vgp_forward.1']
  #allocation7 [shape = 's32[]', space=sflag, size = 0x4, offset = 0, fixed_abs, tag = 'sflag constant byte address 0x0 - dummy sync flag']
  %s0 = inlined_call_operand.vmem [shape: f32[4,784], index: 0, kind: input, shape index: {}]
  %s1 = inlined_call_operand.vmem [shape: bf16[784,400], index: 1, kind: input, shape index: {}]
  %s2 = inlined_call_operand.vmem [shape: f32[1,400], index: 2, kind: input, shape index: {}]
  %s3 = inlined_call_operand.vmem [shape: f32[400,512], index: 3, kind: input, shape index: {}]
  %s4 = inlined_call_operand.vmem [shape: f32[1,512], index: 4, kind: input, shape index: {}]
  %s5 = inlined_call_operand.vmem [shape: f32[1,128], index: 5, kind: input, shape index: {}]
  %s6 = inlined_call_operand.vmem [shape: f32[100,128], index: 6, kind: input, shape index: {}]
  %s7 = inlined_call_operand.vmem [shape: f32[128,400], index: 7, kind: input, shape index: {}]
  %s8 = inlined_call_operand.vmem [shape: f32[1,400], index: 8, kind: input, shape index: {}]
  %s9 = inlined_call_operand.vmem [shape: bf16[400,784], index: 9, kind: input, shape index: {}]
  %s10 = inlined_call_operand.vmem [shape: f32[1,784], index: 10, kind: input, shape index: {}]
  %s11 = inlined_call_operand.<no memory space> [shape: f32[1,1], index: 11, kind: input, shape index: {}]
  %s12 = inlined_call_operand.vmem [shape: f32[4,512], index: 12, kind: output, shape index: {0}]
  %s13 = inlined_call_operand.vmem [shape: f32[100,128], index: 13, kind: output, shape index: {1}]
  %s14 = inlined_call_operand.hbm [shape: f32[100,784], index: 14, kind: output, shape index: {2}]
  %15 = xla_tuple %s12, %s13, %s14
  %s16 = sld [smem:[#allocation0]]
  $region107: #{vgp_forward.1} parent=0
    _
  %s18 = ssub.s32 1, %s16
  %s19 = scalar_select 0, %s18, %s16
  %20 = sst [smem:[#allocation4]] %s11
  $region1: #{vgp_forward.1} parent=0
    #allocation5 [shape = 'u8[372736]{0}', space=vmem, size = 0x5b000, scoped, tag = 'output window, operand 2, single buffered']
    #allocation6 [shape = 's32[1]{0}', space=sflag, size = 0x4, scoped, tag = 'scoped memory for vgp_forward.1']
    %21 = vsyncpa [#allocation6], 0
    // Predicated region
    $region2: #{vgp_forward.1} parent=1 // pred_check
      _
    $region3: #{vgp_forward.1} parent=1 // pred_check_branch
      %23 = sbr.rel (0) target = $region5
    $region4: #{vgp_forward.1} parent=1 // pred_region
      _
    $region5: #{vgp_forward.1} parent=1 // pred_fallthru
      _
    // Predicated region
    $region6: #{vgp_forward.1} parent=1 // pred_check
      _
    $region7: #{vgp_forward.1} parent=1 // pred_check_branch
      %25 = sbr.rel (0) target = $region9
    $region8: #{vgp_forward.1} parent=1 // pred_region
      _
    $region9: #{vgp_forward.1} parent=1 // pred_fallthru
      _
    // Predicated region
    $region10: #{vgp_forward.1} parent=1 // pred_check
      _
    $region11: #{vgp_forward.1} parent=1 // pred_check_branch
      %27 = sbr.rel (0) target = $region13
    $region12: #{vgp_forward.1} parent=1 // pred_region
      _
    $region13: #{vgp_forward.1} parent=1 // pred_fallthru
      _
    // Predicated region
    $region14: #{vgp_forward.1} parent=1 // pred_check
      _
    $region15: #{vgp_forward.1} parent=1 // pred_check_branch
      %29 = sbr.rel (0) target = $region17
    $region16: #{vgp_forward.1} parent=1 // pred_region
      _
    $region17: #{vgp_forward.1} parent=1 // pred_fallthru
      _
    // Predicated region
    $region18: #{vgp_forward.1} parent=1 // pred_check
      _
    $region19: #{vgp_forward.1} parent=1 // pred_check_branch
      %31 = sbr.rel (0) target = $region21
    $region20: #{vgp_forward.1} parent=1 // pred_region
      _
    $region21: #{vgp_forward.1} parent=1 // pred_fallthru
      _
    // Predicated region
    $region22: #{vgp_forward.1} parent=1 // pred_check
      _
    $region23: #{vgp_forward.1} parent=1 // pred_check_branch
      %33 = sbr.rel (0) target = $region25
    $region24: #{vgp_forward.1} parent=1 // pred_region
      _
    $region25: #{vgp_forward.1} parent=1 // pred_fallthru
      _
    // Predicated region
    $region26: #{vgp_forward.1} parent=1 // pred_check
      _
    $region27: #{vgp_forward.1} parent=1 // pred_check_branch
      %35 = sbr.rel (0) target = $region29
    $region28: #{vgp_forward.1} parent=1 // pred_region
      _
    $region29: #{vgp_forward.1} parent=1 // pred_fallthru
      _
    // Predicated region
    $region30: #{vgp_forward.1} parent=1 // pred_check
      _
    $region31: #{vgp_forward.1} parent=1 // pred_check_branch
      %37 = sbr.rel (0) target = $region33
    $region32: #{vgp_forward.1} parent=1 // pred_region
      _
    $region33: #{vgp_forward.1} parent=1 // pred_fallthru
      _
    // Predicated region
    $region34: #{vgp_forward.1} parent=1 // pred_check
      _
    $region35: #{vgp_forward.1} parent=1 // pred_check_branch
      %39 = sbr.rel (0) target = $region37
    $region36: #{vgp_forward.1} parent=1 // pred_region
      _
    $region37: #{vgp_forward.1} parent=1 // pred_fallthru
      _
    // Predicated region
    $region38: #{vgp_forward.1} parent=1 // pred_check
      _
    $region39: #{vgp_forward.1} parent=1 // pred_check_branch
      %41 = sbr.rel (0) target = $region41
    $region40: #{vgp_forward.1} parent=1 // pred_region
      _
    $region41: #{vgp_forward.1} parent=1 // pred_fallthru
      _
    // Predicated region
    $region42: #{vgp_forward.1} parent=1 // pred_check
      _
    $region43: #{vgp_forward.1} parent=1 // pred_check_branch
      %43 = sbr.rel (0) target = $region45
    $region44: #{vgp_forward.1} parent=1 // pred_region
      _
    $region45: #{vgp_forward.1} parent=1 // pred_fallthru
      _
    %p46 = scmp.lt.u32.totalorder 4, 8
    %p47 = pneg %p46
    // Predicated region
    $region46: #{vgp_forward.1} parent=1 // pred_check
      _
    $region47: #{vgp_forward.1} parent=1 // pred_check_branch
      %49 = sbr.rel (%p46) target = $region49
    $region48: #{vgp_forward.1} parent=1 // pred_region
      %s762 = sand.u32 4, 7
      %p763 = scmp.eq.s32.totalorder %s762, 0
      %p764 = pneg %p763
      // Predicated region
      $region61: #{vgp_forward.1} parent=48 // pred_check
        _
      $region62: #{vgp_forward.1} parent=48 // pred_check_branch
        %766 = sbr.rel (%p763) target = $region64
      $region63: #{vgp_forward.1} parent=48 // pred_region
        %s767 = sand.u32 4, 7
        %s768 = ssub.s32 4, %s767
        %s769 = scalar_lea.vmem %s9, %s768
        %s770 = ssub.s32 4, %s767
        %s771 = scalar_lea.vmem [#allocation2], %s770
        loop: start=0, step=1, limit=1
        $region65: #{vgp_forward.1} parent=63 // loop_pre_header
          _
        $region66: #{vgp_forward.1} parent=63 // loop_header
          %s773 = sphi 0, %s777
          %p774 = scmp.ge.s32.totalorder %s773, 1
          %s778 = sphi %s9, %s9
          %s779 = sphi [#allocation2], [#allocation2]
        $region67: #{vgp_forward.1} parent=63 // loop_header_branch
          %776 = sbr.rel (%p774) target = $region71
        $region68: #{vgp_forward.1} parent=63 // loop_body
          _
        $region69: #{vgp_forward.1} parent=63 // loop_footer
          %s777 = sadd.s32 1, %s773
        $region70: #{vgp_forward.1} parent=63 // loop_footer_branch
          %772 = sbr.rel target = $region66
        $region71: #{vgp_forward.1} parent=63 // loop_exit
          _
        %s780 = sshllo.u32 0, %s767
        loop: start=0, step=1, limit=1
        $region72: #{vgp_forward.1} parent=63 // loop_pre_header
          _
        $region73: #{vgp_forward.1} parent=63 // loop_header
          %s782 = sphi 0, %s786
          %p783 = scmp.ge.s32.totalorder %s782, 1
          %s787 = sphi %s769, %s769
          %s788 = sphi %s771, %s771
        $region74: #{vgp_forward.1} parent=63 // loop_header_branch
          %785 = sbr.rel (%p783) target = $region78
        $region75: #{vgp_forward.1} parent=63 // loop_body
          %v789 = vld [vmem:[%s787] sm:%s780]
          %790 = vst [vmem:[%s788] sm:%s780] %v789
          %v791 = vld [vmem:[%s787 + $0x1c] sm:%s780]
          %792 = vst [vmem:[%s788 + $0x4] sm:%s780] %v791
          %v793 = vld [vmem:[%s787 + $0x4] sm:%s780]
          %794 = vst [vmem:[%s788 + $0x8] sm:%s780] %v793
          %v795 = vld [vmem:[%s787 + $0x20] sm:%s780]
          %796 = vst [vmem:[%s788 + $0xc] sm:%s780] %v795
          %v797 = vld [vmem:[%s787 + $0x8] sm:%s780]
          %798 = vst [vmem:[%s788 + $0x10] sm:%s780] %v797
          %v799 = vld [vmem:[%s787 + $0x24] sm:%s780]
          %800 = vst [vmem:[%s788 + $0x14] sm:%s780] %v799
          %v801 = vld [vmem:[%s787 + $0xc] sm:%s780]
          %802 = vst [vmem:[%s788 + $0x18] sm:%s780] %v801
          %v803 = vld [vmem:[%s787 + $0x28] sm:%s780]
          %804 = vst [vmem:[%s788 + $0x1c] sm:%s780] %v803
          %v805 = vld [vmem:[%s787 + $0x10] sm:%s780]
          %806 = vst [vmem:[%s788 + $0x20] sm:%s780] %v805
          %v807 = vld [vmem:[%s787 + $0x2c] sm:%s780]
          %808 = vst [vmem:[%s788 + $0x24] sm:%s780] %v807
          %v809 = vld [vmem:[%s787 + $0x14] sm:%s780]
          %810 = vst [vmem:[%s788 + $0x28] sm:%s780] %v809
          %v811 = vld [vmem:[%s787 + $0x30] sm:%s780]
          %812 = vst [vmem:[%s788 + $0x2c] sm:%s780] %v811
          %v813 = vld [vmem:[%s787 + $0x18] sm:%s780]
          %814 = vst [vmem:[%s788 + $0x30] sm:%s780] %v813
          %v815 = vld [vmem:[%s787 + $0x34] sm:%s780]
          %816 = vst [vmem:[%s788 + $0x34] sm:%s780] %v815
          %v817 = vld [vmem:[%s787 + $0x38] sm:%s780]
          %818 = vst [vmem:[%s788 + $0x38] sm:%s780] %v817
          %v819 = vld [vmem:[%s787 + $0x54] sm:%s780]
          %820 = vst [vmem:[%s788 + $0x3c] sm:%s780] %v819
          %v821 = vld [vmem:[%s787 + $0x3c] sm:%s780]
          %822 = vst [vmem:[%s788 + $0x40] sm:%s780] %v821
          %v823 = vld [vmem:[%s787 + $0x58] sm:%s780]
          %824 = vst [vmem:[%s788 + $0x44] sm:%s780] %v823
          %v825 = vld [vmem:[%s787 + $0x40] sm:%s780]
          %826 = vst [vmem:[%s788 + $0x48] sm:%s780] %v825
          %v827 = vld [vmem:[%s787 + $0x5c] sm:%s780]
          %828 = vst [vmem:[%s788 + $0x4c] sm:%s780] %v827
          %v829 = vld [vmem:[%s787 + $0x44] sm:%s780]
          %830 = vst [vmem:[%s788 + $0x50] sm:%s780] %v829
          %v831 = vld [vmem:[%s787 + $0x60] sm:%s780]
          %832 = vst [vmem:[%s788 + $0x54] sm:%s780] %v831
          %v833 = vld [vmem:[%s787 + $0x48] sm:%s780]
          %834 = vst [vmem:[%s788 + $0x58] sm:%s780] %v833
          %v835 = vld [vmem:[%s787 + $0x64] sm:%s780]
          %836 = vst [vmem:[%s788 + $0x5c] sm:%s780] %v835
          %v837 = vld [vmem:[%s787 + $0x4c] sm:%s780]
          %838 = vst [vmem:[%s788 + $0x60] sm:%s780] %v837
          %v839 = vld [vmem:[%s787 + $0x68] sm:%s780]
          %840 = vst [vmem:[%s788 + $0x64] sm:%s780] %v839
          %v841 = vld [vmem:[%s787 + $0x50] sm:%s780]
          %842 = vst [vmem:[%s788 + $0x68] sm:%s780] %v841
          %v843 = vld [vmem:[%s787 + $0x6c] sm:%s780]
          %844 = vst [vmem:[%s788 + $0x6c] sm:%s780] %v843
          %v845 = vld [vmem:[%s787 + $0x70] sm:%s780]
          %846 = vst [vmem:[%s788 + $0x70] sm:%s780] %v845
          %v847 = vld [vmem:[%s787 + $0x8c] sm:%s780]
          %848 = vst [vmem:[%s788 + $0x74] sm:%s780] %v847
          %v849 = vld [vmem:[%s787 + $0x74] sm:%s780]
          %850 = vst [vmem:[%s788 + $0x78] sm:%s780] %v849
          %v851 = vld [vmem:[%s787 + $0x90] sm:%s780]
          %852 = vst [vmem:[%s788 + $0x7c] sm:%s780] %v851
          %v853 = vld [vmem:[%s787 + $0x78] sm:%s780]
          %854 = vst [vmem:[%s788 + $0x80] sm:%s780] %v853
          %v855 = vld [vmem:[%s787 + $0x94] sm:%s780]
          %856 = vst [vmem:[%s788 + $0x84] sm:%s780] %v855
          %v857 = vld [vmem:[%s787 + $0x7c] sm:%s780]
          %858 = vst [vmem:[%s788 + $0x88] sm:%s780] %v857
          %v859 = vld [vmem:[%s787 + $0x98] sm:%s780]
          %860 = vst [vmem:[%s788 + $0x8c] sm:%s780] %v859
          %v861 = vld [vmem:[%s787 + $0x80] sm:%s780]
          %862 = vst [vmem:[%s788 + $0x90] sm:%s780] %v861
          %v863 = vld [vmem:[%s787 + $0x9c] sm:%s780]
          %864 = vst [vmem:[%s788 + $0x94] sm:%s780] %v863
          %v865 = vld [vmem:[%s787 + $0x84] sm:%s780]
          %866 = vst [vmem:[%s788 + $0x98] sm:%s780] %v865
          %v867 = vld [vmem:[%s787 + $0xa0] sm:%s780]
          %868 = vst [vmem:[%s788 + $0x9c] sm:%s780] %v867
          %v869 = vld [vmem:[%s787 + $0x88] sm:%s780]
          %870 = vst [vmem:[%s788 + $0xa0] sm:%s780] %v869
          %v871 = vld [vmem:[%s787 + $0xa4] sm:%s780]
          %872 = vst [vmem:[%s788 + $0xa4] sm:%s780] %v871
          %v873 = vld [vmem:[%s787 + $0xa8] sm:%s780]
          %874 = vst [vmem:[%s788 + $0xa8] sm:%s780] %v873
          %v875 = vld [vmem:[%s787 + $0xc4] sm:%s780]
          %876 = vst [vmem:[%s788 + $0xac] sm:%s780] %v875
          %v877 = vld [vmem:[%s787 + $0xac] sm:%s780]
          %878 = vst [vmem:[%s788 + $0xb0] sm:%s780] %v877
          %v879 = vld [vmem:[%s787 + $0xc8] sm:%s780]
          %880 = vst [vmem:[%s788 + $0xb4] sm:%s780] %v879
          %v881 = vld [vmem:[%s787 + $0xb0] sm:%s780]
          %882 = vst [vmem:[%s788 + $0xb8] sm:%s780] %v881
          %v883 = vld [vmem:[%s787 + $0xcc] sm:%s780]
          %884 = vst [vmem:[%s788 + $0xbc] sm:%s780] %v883
          %v885 = vld [vmem:[%s787 + $0xb4] sm:%s780]
          %886 = vst [vmem:[%s788 + $0xc0] sm:%s780] %v885
          %v887 = vld [vmem:[%s787 + $0xd0] sm:%s780]
          %888 = vst [vmem:[%s788 + $0xc4] sm:%s780] %v887
          %v889 = vld [vmem:[%s787 + $0xb8] sm:%s780]
          %890 = vst [vmem:[%s788 + $0xc8] sm:%s780] %v889
          %v891 = vld [vmem:[%s787 + $0xd4] sm:%s780]
          %892 = vst [vmem:[%s788 + $0xcc] sm:%s780] %v891
          %v893 = vld [vmem:[%s787 + $0xbc] sm:%s780]
          %894 = vst [vmem:[%s788 + $0xd0] sm:%s780] %v893
          %v895 = vld [vmem:[%s787 + $0xd8] sm:%s780]
          %896 = vst [vmem:[%s788 + $0xd4] sm:%s780] %v895
          %v897 = vld [vmem:[%s787 + $0xc0] sm:%s780]
          %898 = vst [vmem:[%s788 + $0xd8] sm:%s780] %v897
          %v899 = vld [vmem:[%s787 + $0xdc] sm:%s780]
          %900 = vst [vmem:[%s788 + $0xdc] sm:%s780] %v899
          %v901 = vld [vmem:[%s787 + $0xe0] sm:%s780]
          %902 = vst [vmem:[%s788 + $0xe0] sm:%s780] %v901
          %v903 = vld [vmem:[%s787 + $0xfc] sm:%s780]
          %904 = vst [vmem:[%s788 + $0xe4] sm:%s780] %v903
          %v905 = vld [vmem:[%s787 + $0xe4] sm:%s780]
          %906 = vst [vmem:[%s788 + $0xe8] sm:%s780] %v905
          %v907 = vld [vmem:[%s787 + $0x100] sm:%s780]
          %908 = vst [vmem:[%s788 + $0xec] sm:%s780] %v907
          %v909 = vld [vmem:[%s787 + $0xe8] sm:%s780]
          %910 = vst [vmem:[%s788 + $0xf0] sm:%s780] %v909
          %v911 = vld [vmem:[%s787 + $0x104] sm:%s780]
          %912 = vst [vmem:[%s788 + $0xf4] sm:%s780] %v911
          %v913 = vld [vmem:[%s787 + $0xec] sm:%s780]
          %914 = vst [vmem:[%s788 + $0xf8] sm:%s780] %v913
          %v915 = vld [vmem:[%s787 + $0x108] sm:%s780]
          %916 = vst [vmem:[%s788 + $0xfc] sm:%s780] %v915
          %v917 = vld [vmem:[%s787 + $0xf0] sm:%s780]
          %918 = vst [vmem:[%s788 + $0x100] sm:%s780] %v917
          %v919 = vld [vmem:[%s787 + $0x10c] sm:%s780]
          %920 = vst [vmem:[%s788 + $0x104] sm:%s780] %v919
          %v921 = vld [vmem:[%s787 + $0xf4] sm:%s780]
          %922 = vst [vmem:[%s788 + $0x108] sm:%s780] %v921
          %v923 = vld [vmem:[%s787 + $0x110] sm:%s780]
          %924 = vst [vmem:[%s788 + $0x10c] sm:%s780] %v923
          %v925 = vld [vmem:[%s787 + $0xf8] sm:%s780]
          %926 = vst [vmem:[%s788 + $0x110] sm:%s780] %v925
          %v927 = vld [vmem:[%s787 + $0x114] sm:%s780]
          %928 = vst [vmem:[%s788 + $0x114] sm:%s780] %v927
          %v929 = vld [vmem:[%s787 + $0x118] sm:%s780]
          %930 = vst [vmem:[%s788 + $0x118] sm:%s780] %v929
          %v931 = vld [vmem:[%s787 + $0x134] sm:%s780]
          %932 = vst [vmem:[%s788 + $0x11c] sm:%s780] %v931
          %v933 = vld [vmem:[%s787 + $0x11c] sm:%s780]
          %934 = vst [vmem:[%s788 + $0x120] sm:%s780] %v933
          %v935 = vld [vmem:[%s787 + $0x138] sm:%s780]
          %936 = vst [vmem:[%s788 + $0x124] sm:%s780] %v935
          %v937 = vld [vmem:[%s787 + $0x120] sm:%s780]
          %938 = vst [vmem:[%s788 + $0x128] sm:%s780] %v937
          %v939 = vld [vmem:[%s787 + $0x13c] sm:%s780]
          %940 = vst [vmem:[%s788 + $0x12c] sm:%s780] %v939
          %v941 = vld [vmem:[%s787 + $0x124] sm:%s780]
          %942 = vst [vmem:[%s788 + $0x130] sm:%s780] %v941
          %v943 = vld [vmem:[%s787 + $0x140] sm:%s780]
          %944 = vst [vmem:[%s788 + $0x134] sm:%s780] %v943
          %v945 = vld [vmem:[%s787 + $0x128] sm:%s780]
          %946 = vst [vmem:[%s788 + $0x138] sm:%s780] %v945
          %v947 = vld [vmem:[%s787 + $0x144] sm:%s780]
          %948 = vst [vmem:[%s788 + $0x13c] sm:%s780] %v947
          %v949 = vld [vmem:[%s787 + $0x12c] sm:%s780]
          %950 = vst [vmem:[%s788 + $0x140] sm:%s780] %v949
          %v951 = vld [vmem:[%s787 + $0x148] sm:%s780]
          %952 = vst [vmem:[%s788 + $0x144] sm:%s780] %v951
          %v953 = vld [vmem:[%s787 + $0x130] sm:%s780]
          %954 = vst [vmem:[%s788 + $0x148] sm:%s780] %v953
          %v955 = vld [vmem:[%s787 + $0x14c] sm:%s780]
          %956 = vst [vmem:[%s788 + $0x14c] sm:%s780] %v955
          %v957 = vld [vmem:[%s787 + $0x150] sm:%s780]
          %958 = vst [vmem:[%s788 + $0x150] sm:%s780] %v957
          %v959 = vld [vmem:[%s787 + $0x16c] sm:%s780]
          %960 = vst [vmem:[%s788 + $0x154] sm:%s780] %v959
          %v961 = vld [vmem:[%s787 + $0x154] sm:%s780]
          %962 = vst [vmem:[%s788 + $0x158] sm:%s780] %v961
          %v963 = vld [vmem:[%s787 + $0x170] sm:%s780]
          %964 = vst [vmem:[%s788 + $0x15c] sm:%s780] %v963
          %v965 = vld [vmem:[%s787 + $0x158] sm:%s780]
          %966 = vst [vmem:[%s788 + $0x160] sm:%s780] %v965
          %v967 = vld [vmem:[%s787 + $0x174] sm:%s780]
          %968 = vst [vmem:[%s788 + $0x164] sm:%s780] %v967
          %v969 = vld [vmem:[%s787 + $0x15c] sm:%s780]
          %970 = vst [vmem:[%s788 + $0x168] sm:%s780] %v969
          %v971 = vld [vmem:[%s787 + $0x178] sm:%s780]
          %972 = vst [vmem:[%s788 + $0x16c] sm:%s780] %v971
          %v973 = vld [vmem:[%s787 + $0x160] sm:%s780]
          %974 = vst [vmem:[%s788 + $0x170] sm:%s780] %v973
          %v975 = vld [vmem:[%s787 + $0x17c] sm:%s780]
          %976 = vst [vmem:[%s788 + $0x174] sm:%s780] %v975
          %v977 = vld [vmem:[%s787 + $0x164] sm:%s780]
          %978 = vst [vmem:[%s788 + $0x178] sm:%s780] %v977
          %v979 = vld [vmem:[%s787 + $0x180] sm:%s780]
          %980 = vst [vmem:[%s788 + $0x17c] sm:%s780] %v979
          %v981 = vld [vmem:[%s787 + $0x168] sm:%s780]
          %982 = vst [vmem:[%s788 + $0x180] sm:%s780] %v981
          %v983 = vld [vmem:[%s787 + $0x184] sm:%s780]
          %984 = vst [vmem:[%s788 + $0x184] sm:%s780] %v983
          %v985 = vld [vmem:[%s787 + $0x188] sm:%s780]
          %986 = vst [vmem:[%s788 + $0x188] sm:%s780] %v985
          %v987 = vld [vmem:[%s787 + $0x1a4] sm:%s780]
          %988 = vst [vmem:[%s788 + $0x18c] sm:%s780] %v987
          %v989 = vld [vmem:[%s787 + $0x18c] sm:%s780]
          %990 = vst [vmem:[%s788 + $0x190] sm:%s780] %v989
          %v991 = vld [vmem:[%s787 + $0x1a8] sm:%s780]
          %992 = vst [vmem:[%s788 + $0x194] sm:%s780] %v991
          %v993 = vld [vmem:[%s787 + $0x190] sm:%s780]
          %994 = vst [vmem:[%s788 + $0x198] sm:%s780] %v993
          %v995 = vld [vmem:[%s787 + $0x1ac] sm:%s780]
          %996 = vst [vmem:[%s788 + $0x19c] sm:%s780] %v995
          %v997 = vld [vmem:[%s787 + $0x194] sm:%s780]
          %998 = vst [vmem:[%s788 + $0x1a0] sm:%s780] %v997
          %v999 = vld [vmem:[%s787 + $0x1b0] sm:%s780]
          %1000 = vst [vmem:[%s788 + $0x1a4] sm:%s780] %v999
          %v1001 = vld [vmem:[%s787 + $0x198] sm:%s780]
          %1002 = vst [vmem:[%s788 + $0x1a8] sm:%s780] %v1001
          %v1003 = vld [vmem:[%s787 + $0x1b4] sm:%s780]
          %1004 = vst [vmem:[%s788 + $0x1ac] sm:%s780] %v1003
          %v1005 = vld [vmem:[%s787 + $0x19c] sm:%s780]
          %1006 = vst [vmem:[%s788 + $0x1b0] sm:%s780] %v1005
          %v1007 = vld [vmem:[%s787 + $0x1b8] sm:%s780]
          %1008 = vst [vmem:[%s788 + $0x1b4] sm:%s780] %v1007
          %v1009 = vld [vmem:[%s787 + $0x1a0] sm:%s780]
          %1010 = vst [vmem:[%s788 + $0x1b8] sm:%s780] %v1009
          %v1011 = vld [vmem:[%s787 + $0x1bc] sm:%s780]
          %1012 = vst [vmem:[%s788 + $0x1bc] sm:%s780] %v1011
          %v1013 = vld [vmem:[%s787 + $0x1c0] sm:%s780]
          %1014 = vst [vmem:[%s788 + $0x1c0] sm:%s780] %v1013
          %v1015 = vld [vmem:[%s787 + $0x1dc] sm:%s780]
          %1016 = vst [vmem:[%s788 + $0x1c4] sm:%s780] %v1015
          %v1017 = vld [vmem:[%s787 + $0x1c4] sm:%s780]
          %1018 = vst [vmem:[%s788 + $0x1c8] sm:%s780] %v1017
          %v1019 = vld [vmem:[%s787 + $0x1e0] sm:%s780]
          %1020 = vst [vmem:[%s788 + $0x1cc] sm:%s780] %v1019
          %v1021 = vld [vmem:[%s787 + $0x1c8] sm:%s780]
          %1022 = vst [vmem:[%s788 + $0x1d0] sm:%s780] %v1021
          %v1023 = vld [vmem:[%s787 + $0x1e4] sm:%s780]
          %1024 = vst [vmem:[%s788 + $0x1d4] sm:%s780] %v1023
          %v1025 = vld [vmem:[%s787 + $0x1cc] sm:%s780]
          %1026 = vst [vmem:[%s788 + $0x1d8] sm:%s780] %v1025
          %v1027 = vld [vmem:[%s787 + $0x1e8] sm:%s780]
          %1028 = vst [vmem:[%s788 + $0x1dc] sm:%s780] %v1027
          %v1029 = vld [vmem:[%s787 + $0x1d0] sm:%s780]
          %1030 = vst [vmem:[%s788 + $0x1e0] sm:%s780] %v1029
          %v1031 = vld [vmem:[%s787 + $0x1ec] sm:%s780]
          %1032 = vst [vmem:[%s788 + $0x1e4] sm:%s780] %v1031
          %v1033 = vld [vmem:[%s787 + $0x1d4] sm:%s780]
          %1034 = vst [vmem:[%s788 + $0x1e8] sm:%s780] %v1033
          %v1035 = vld [vmem:[%s787 + $0x1f0] sm:%s780]
          %1036 = vst [vmem:[%s788 + $0x1ec] sm:%s780] %v1035
          %v1037 = vld [vmem:[%s787 + $0x1d8] sm:%s780]
          %1038 = vst [vmem:[%s788 + $0x1f0] sm:%s780] %v1037
          %v1039 = vld [vmem:[%s787 + $0x1f4] sm:%s780]
          %1040 = vst [vmem:[%s788 + $0x1f4] sm:%s780] %v1039
          %v1041 = vld [vmem:[%s787 + $0x1f8] sm:%s780]
          %1042 = vst [vmem:[%s788 + $0x1f8] sm:%s780] %v1041
          %v1043 = vld [vmem:[%s787 + $0x214] sm:%s780]
          %1044 = vst [vmem:[%s788 + $0x1fc] sm:%s780] %v1043
          %v1045 = vld [vmem:[%s787 + $0x1fc] sm:%s780]
          %1046 = vst [vmem:[%s788 + $0x200] sm:%s780] %v1045
          %v1047 = vld [vmem:[%s787 + $0x218] sm:%s780]
          %1048 = vst [vmem:[%s788 + $0x204] sm:%s780] %v1047
          %v1049 = vld [vmem:[%s787 + $0x200] sm:%s780]
          %1050 = vst [vmem:[%s788 + $0x208] sm:%s780] %v1049
          %v1051 = vld [vmem:[%s787 + $0x21c] sm:%s780]
          %1052 = vst [vmem:[%s788 + $0x20c] sm:%s780] %v1051
          %v1053 = vld [vmem:[%s787 + $0x204] sm:%s780]
          %1054 = vst [vmem:[%s788 + $0x210] sm:%s780] %v1053
          %v1055 = vld [vmem:[%s787 + $0x220] sm:%s780]
          %1056 = vst [vmem:[%s788 + $0x214] sm:%s780] %v1055
          %v1057 = vld [vmem:[%s787 + $0x208] sm:%s780]
          %1058 = vst [vmem:[%s788 + $0x218] sm:%s780] %v1057
          %v1059 = vld [vmem:[%s787 + $0x224] sm:%s780]
          %1060 = vst [vmem:[%s788 + $0x21c] sm:%s780] %v1059
          %v1061 = vld [vmem:[%s787 + $0x20c] sm:%s780]
          %1062 = vst [vmem:[%s788 + $0x220] sm:%s780] %v1061
          %v1063 = vld [vmem:[%s787 + $0x228] sm:%s780]
          %1064 = vst [vmem:[%s788 + $0x224] sm:%s780] %v1063
          %v1065 = vld [vmem:[%s787 + $0x210] sm:%s780]
          %1066 = vst [vmem:[%s788 + $0x228] sm:%s780] %v1065
          %v1067 = vld [vmem:[%s787 + $0x22c] sm:%s780]
          %1068 = vst [vmem:[%s788 + $0x22c] sm:%s780] %v1067
          %v1069 = vld [vmem:[%s787 + $0x230] sm:%s780]
          %1070 = vst [vmem:[%s788 + $0x230] sm:%s780] %v1069
          %v1071 = vld [vmem:[%s787 + $0x24c] sm:%s780]
          %1072 = vst [vmem:[%s788 + $0x234] sm:%s780] %v1071
          %v1073 = vld [vmem:[%s787 + $0x234] sm:%s780]
          %1074 = vst [vmem:[%s788 + $0x238] sm:%s780] %v1073
          %v1075 = vld [vmem:[%s787 + $0x250] sm:%s780]
          %1076 = vst [vmem:[%s788 + $0x23c] sm:%s780] %v1075
          %v1077 = vld [vmem:[%s787 + $0x238] sm:%s780]
          %1078 = vst [vmem:[%s788 + $0x240] sm:%s780] %v1077
          %v1079 = vld [vmem:[%s787 + $0x254] sm:%s780]
          %1080 = vst [vmem:[%s788 + $0x244] sm:%s780] %v1079
          %v1081 = vld [vmem:[%s787 + $0x23c] sm:%s780]
          %1082 = vst [vmem:[%s788 + $0x248] sm:%s780] %v1081
          %v1083 = vld [vmem:[%s787 + $0x258] sm:%s780]
          %1084 = vst [vmem:[%s788 + $0x24c] sm:%s780] %v1083
          %v1085 = vld [vmem:[%s787 + $0x240] sm:%s780]
          %1086 = vst [vmem:[%s788 + $0x250] sm:%s780] %v1085
          %v1087 = vld [vmem:[%s787 + $0x25c] sm:%s780]
          %1088 = vst [vmem:[%s788 + $0x254] sm:%s780] %v1087
          %v1089 = vld [vmem:[%s787 + $0x244] sm:%s780]
          %1090 = vst [vmem:[%s788 + $0x258] sm:%s780] %v1089
          %v1091 = vld [vmem:[%s787 + $0x260] sm:%s780]
          %1092 = vst [vmem:[%s788 + $0x25c] sm:%s780] %v1091
          %v1093 = vld [vmem:[%s787 + $0x248] sm:%s780]
          %1094 = vst [vmem:[%s788 + $0x260] sm:%s780] %v1093
          %v1095 = vld [vmem:[%s787 + $0x264] sm:%s780]
          %1096 = vst [vmem:[%s788 + $0x264] sm:%s780] %v1095
          %v1097 = vld [vmem:[%s787 + $0x268] sm:%s780]
          %1098 = vst [vmem:[%s788 + $0x268] sm:%s780] %v1097
          %v1099 = vld [vmem:[%s787 + $0x284] sm:%s780]
          %1100 = vst [vmem:[%s788 + $0x26c] sm:%s780] %v1099
          %v1101 = vld [vmem:[%s787 + $0x26c] sm:%s780]
          %1102 = vst [vmem:[%s788 + $0x270] sm:%s780] %v1101
          %v1103 = vld [vmem:[%s787 + $0x288] sm:%s780]
          %1104 = vst [vmem:[%s788 + $0x274] sm:%s780] %v1103
          %v1105 = vld [vmem:[%s787 + $0x270] sm:%s780]
          %1106 = vst [vmem:[%s788 + $0x278] sm:%s780] %v1105
          %v1107 = vld [vmem:[%s787 + $0x28c] sm:%s780]
          %1108 = vst [vmem:[%s788 + $0x27c] sm:%s780] %v1107
          %v1109 = vld [vmem:[%s787 + $0x274] sm:%s780]
          %1110 = vst [vmem:[%s788 + $0x280] sm:%s780] %v1109
          %v1111 = vld [vmem:[%s787 + $0x290] sm:%s780]
          %1112 = vst [vmem:[%s788 + $0x284] sm:%s780] %v1111
          %v1113 = vld [vmem:[%s787 + $0x278] sm:%s780]
          %1114 = vst [vmem:[%s788 + $0x288] sm:%s780] %v1113
          %v1115 = vld [vmem:[%s787 + $0x294] sm:%s780]
          %1116 = vst [vmem:[%s788 + $0x28c] sm:%s780] %v1115
          %v1117 = vld [vmem:[%s787 + $0x27c] sm:%s780]
          %1118 = vst [vmem:[%s788 + $0x290] sm:%s780] %v1117
          %v1119 = vld [vmem:[%s787 + $0x298] sm:%s780]
          %1120 = vst [vmem:[%s788 + $0x294] sm:%s780] %v1119
          %v1121 = vld [vmem:[%s787 + $0x280] sm:%s780]
          %1122 = vst [vmem:[%s788 + $0x298] sm:%s780] %v1121
          %v1123 = vld [vmem:[%s787 + $0x29c] sm:%s780]
          %1124 = vst [vmem:[%s788 + $0x29c] sm:%s780] %v1123
          %v1125 = vld [vmem:[%s787 + $0x2a0] sm:%s780]
          %1126 = vst [vmem:[%s788 + $0x2a0] sm:%s780] %v1125
          %v1127 = vld [vmem:[%s787 + $0x2bc] sm:%s780]
          %1128 = vst [vmem:[%s788 + $0x2a4] sm:%s780] %v1127
          %v1129 = vld [vmem:[%s787 + $0x2a4] sm:%s780]
          %1130 = vst [vmem:[%s788 + $0x2a8] sm:%s780] %v1129
          %v1131 = vld [vmem:[%s787 + $0x2c0] sm:%s780]
          %1132 = vst [vmem:[%s788 + $0x2ac] sm:%s780] %v1131
          %v1133 = vld [vmem:[%s787 + $0x2a8] sm:%s780]
          %1134 = vst [vmem:[%s788 + $0x2b0] sm:%s780] %v1133
          %v1135 = vld [vmem:[%s787 + $0x2c4] sm:%s780]
          %1136 = vst [vmem:[%s788 + $0x2b4] sm:%s780] %v1135
          %v1137 = vld [vmem:[%s787 + $0x2ac] sm:%s780]
          %1138 = vst [vmem:[%s788 + $0x2b8] sm:%s780] %v1137
          %v1139 = vld [vmem:[%s787 + $0x2c8] sm:%s780]
          %1140 = vst [vmem:[%s788 + $0x2bc] sm:%s780] %v1139
          %v1141 = vld [vmem:[%s787 + $0x2b0] sm:%s780]
          %1142 = vst [vmem:[%s788 + $0x2c0] sm:%s780] %v1141
          %v1143 = vld [vmem:[%s787 + $0x2cc] sm:%s780]
          %1144 = vst [vmem:[%s788 + $0x2c4] sm:%s780] %v1143
          %v1145 = vld [vmem:[%s787 + $0x2b4] sm:%s780]
          %1146 = vst [vmem:[%s788 + $0x2c8] sm:%s780] %v1145
          %v1147 = vld [vmem:[%s787 + $0x2d0] sm:%s780]
          %1148 = vst [vmem:[%s788 + $0x2cc] sm:%s780] %v1147
          %v1149 = vld [vmem:[%s787 + $0x2b8] sm:%s780]
          %1150 = vst [vmem:[%s788 + $0x2d0] sm:%s780] %v1149
          %v1151 = vld [vmem:[%s787 + $0x2d4] sm:%s780]
          %1152 = vst [vmem:[%s788 + $0x2d4] sm:%s780] %v1151
          %v1153 = vld [vmem:[%s787 + $0x2d8] sm:%s780]
          %1154 = vst [vmem:[%s788 + $0x2d8] sm:%s780] %v1153
          %v1155 = vld [vmem:[%s787 + $0x2f4] sm:%s780]
          %1156 = vst [vmem:[%s788 + $0x2dc] sm:%s780] %v1155
          %v1157 = vld [vmem:[%s787 + $0x2dc] sm:%s780]
          %1158 = vst [vmem:[%s788 + $0x2e0] sm:%s780] %v1157
          %v1159 = vld [vmem:[%s787 + $0x2f8] sm:%s780]
          %1160 = vst [vmem:[%s788 + $0x2e4] sm:%s780] %v1159
          %v1161 = vld [vmem:[%s787 + $0x2e0] sm:%s780]
          %1162 = vst [vmem:[%s788 + $0x2e8] sm:%s780] %v1161
          %v1163 = vld [vmem:[%s787 + $0x2fc] sm:%s780]
          %1164 = vst [vmem:[%s788 + $0x2ec] sm:%s780] %v1163
          %v1165 = vld [vmem:[%s787 + $0x2e4] sm:%s780]
          %1166 = vst [vmem:[%s788 + $0x2f0] sm:%s780] %v1165
          %v1167 = vld [vmem:[%s787 + $0x300] sm:%s780]
          %1168 = vst [vmem:[%s788 + $0x2f4] sm:%s780] %v1167
          %v1169 = vld [vmem:[%s787 + $0x2e8] sm:%s780]
          %1170 = vst [vmem:[%s788 + $0x2f8] sm:%s780] %v1169
          %v1171 = vld [vmem:[%s787 + $0x304] sm:%s780]
          %1172 = vst [vmem:[%s788 + $0x2fc] sm:%s780] %v1171
          %v1173 = vld [vmem:[%s787 + $0x2ec] sm:%s780]
          %1174 = vst [vmem:[%s788 + $0x300] sm:%s780] %v1173
          %v1175 = vld [vmem:[%s787 + $0x308] sm:%s780]
          %1176 = vst [vmem:[%s788 + $0x304] sm:%s780] %v1175
          %v1177 = vld [vmem:[%s787 + $0x2f0] sm:%s780]
          %1178 = vst [vmem:[%s788 + $0x308] sm:%s780] %v1177
          %v1179 = vld [vmem:[%s787 + $0x30c] sm:%s780]
          %1180 = vst [vmem:[%s788 + $0x30c] sm:%s780] %v1179
          %v1181 = vld [vmem:[%s787 + $0x310] sm:%s780]
          %1182 = vst [vmem:[%s788 + $0x310] sm:%s780] %v1181
          %v1183 = vld [vmem:[%s787 + $0x32c] sm:%s780]
          %1184 = vst [vmem:[%s788 + $0x314] sm:%s780] %v1183
          %v1185 = vld [vmem:[%s787 + $0x314] sm:%s780]
          %1186 = vst [vmem:[%s788 + $0x318] sm:%s780] %v1185
          %v1187 = vld [vmem:[%s787 + $0x330] sm:%s780]
          %1188 = vst [vmem:[%s788 + $0x31c] sm:%s780] %v1187
          %v1189 = vld [vmem:[%s787 + $0x318] sm:%s780]
          %1190 = vst [vmem:[%s788 + $0x320] sm:%s780] %v1189
          %v1191 = vld [vmem:[%s787 + $0x334] sm:%s780]
          %1192 = vst [vmem:[%s788 + $0x324] sm:%s780] %v1191
          %v1193 = vld [vmem:[%s787 + $0x31c] sm:%s780]
          %1194 = vst [vmem:[%s788 + $0x328] sm:%s780] %v1193
          %v1195 = vld [vmem:[%s787 + $0x338] sm:%s780]
          %1196 = vst [vmem:[%s788 + $0x32c] sm:%s780] %v1195
          %v1197 = vld [vmem:[%s787 + $0x320] sm:%s780]
          %1198 = vst [vmem:[%s788 + $0x330] sm:%s780] %v1197
          %v1199 = vld [vmem:[%s787 + $0x33c] sm:%s780]
          %1200 = vst [vmem:[%s788 + $0x334] sm:%s780] %v1199
          %v1201 = vld [vmem:[%s787 + $0x324] sm:%s780]
          %1202 = vst [vmem:[%s788 + $0x338] sm:%s780] %v1201
          %v1203 = vld [vmem:[%s787 + $0x340] sm:%s780]
          %1204 = vst [vmem:[%s788 + $0x33c] sm:%s780] %v1203
          %v1205 = vld [vmem:[%s787 + $0x328] sm:%s780]
          %1206 = vst [vmem:[%s788 + $0x340] sm:%s780] %v1205
          %v1207 = vld [vmem:[%s787 + $0x344] sm:%s780]
          %1208 = vst [vmem:[%s788 + $0x344] sm:%s780] %v1207
          %v1209 = vld [vmem:[%s787 + $0x348] sm:%s780]
          %1210 = vst [vmem:[%s788 + $0x348] sm:%s780] %v1209
          %v1211 = vld [vmem:[%s787 + $0x364] sm:%s780]
          %1212 = vst [vmem:[%s788 + $0x34c] sm:%s780] %v1211
          %v1213 = vld [vmem:[%s787 + $0x34c] sm:%s780]
          %1214 = vst [vmem:[%s788 + $0x350] sm:%s780] %v1213
          %v1215 = vld [vmem:[%s787 + $0x368] sm:%s780]
          %1216 = vst [vmem:[%s788 + $0x354] sm:%s780] %v1215
          %v1217 = vld [vmem:[%s787 + $0x350] sm:%s780]
          %1218 = vst [vmem:[%s788 + $0x358] sm:%s780] %v1217
          %v1219 = vld [vmem:[%s787 + $0x36c] sm:%s780]
          %1220 = vst [vmem:[%s788 + $0x35c] sm:%s780] %v1219
          %v1221 = vld [vmem:[%s787 + $0x354] sm:%s780]
          %1222 = vst [vmem:[%s788 + $0x360] sm:%s780] %v1221
          %v1223 = vld [vmem:[%s787 + $0x370] sm:%s780]
          %1224 = vst [vmem:[%s788 + $0x364] sm:%s780] %v1223
          %v1225 = vld [vmem:[%s787 + $0x358] sm:%s780]
          %1226 = vst [vmem:[%s788 + $0x368] sm:%s780] %v1225
          %v1227 = vld [vmem:[%s787 + $0x374] sm:%s780]
          %1228 = vst [vmem:[%s788 + $0x36c] sm:%s780] %v1227
          %v1229 = vld [vmem:[%s787 + $0x35c] sm:%s780]
          %1230 = vst [vmem:[%s788 + $0x370] sm:%s780] %v1229
          %v1231 = vld [vmem:[%s787 + $0x378] sm:%s780]
          %1232 = vst [vmem:[%s788 + $0x374] sm:%s780] %v1231
          %v1233 = vld [vmem:[%s787 + $0x360] sm:%s780]
          %1234 = vst [vmem:[%s788 + $0x378] sm:%s780] %v1233
          %v1235 = vld [vmem:[%s787 + $0x37c] sm:%s780]
          %1236 = vst [vmem:[%s788 + $0x37c] sm:%s780] %v1235
          %v1237 = vld [vmem:[%s787 + $0x380] sm:%s780]
          %1238 = vst [vmem:[%s788 + $0x380] sm:%s780] %v1237
          %v1239 = vld [vmem:[%s787 + $0x39c] sm:%s780]
          %1240 = vst [vmem:[%s788 + $0x384] sm:%s780] %v1239
          %v1241 = vld [vmem:[%s787 + $0x384] sm:%s780]
          %1242 = vst [vmem:[%s788 + $0x388] sm:%s780] %v1241
          %v1243 = vld [vmem:[%s787 + $0x3a0] sm:%s780]
          %1244 = vst [vmem:[%s788 + $0x38c] sm:%s780] %v1243
          %v1245 = vld [vmem:[%s787 + $0x388] sm:%s780]
          %1246 = vst [vmem:[%s788 + $0x390] sm:%s780] %v1245
          %v1247 = vld [vmem:[%s787 + $0x3a4] sm:%s780]
          %1248 = vst [vmem:[%s788 + $0x394] sm:%s780] %v1247
          %v1249 = vld [vmem:[%s787 + $0x38c] sm:%s780]
          %1250 = vst [vmem:[%s788 + $0x398] sm:%s780] %v1249
          %v1251 = vld [vmem:[%s787 + $0x3a8] sm:%s780]
          %1252 = vst [vmem:[%s788 + $0x39c] sm:%s780] %v1251
          %v1253 = vld [vmem:[%s787 + $0x390] sm:%s780]
          %1254 = vst [vmem:[%s788 + $0x3a0] sm:%s780] %v1253
          %v1255 = vld [vmem:[%s787 + $0x3ac] sm:%s780]
          %1256 = vst [vmem:[%s788 + $0x3a4] sm:%s780] %v1255
          %v1257 = vld [vmem:[%s787 + $0x394] sm:%s780]
          %1258 = vst [vmem:[%s788 + $0x3a8] sm:%s780] %v1257
          %v1259 = vld [vmem:[%s787 + $0x3b0] sm:%s780]
          %1260 = vst [vmem:[%s788 + $0x3ac] sm:%s780] %v1259
          %v1261 = vld [vmem:[%s787 + $0x398] sm:%s780]
          %1262 = vst [vmem:[%s788 + $0x3b0] sm:%s780] %v1261
          %v1263 = vld [vmem:[%s787 + $0x3b4] sm:%s780]
          %1264 = vst [vmem:[%s788 + $0x3b4] sm:%s780] %v1263
          %v1265 = vld [vmem:[%s787 + $0x3b8] sm:%s780]
          %1266 = vst [vmem:[%s788 + $0x3b8] sm:%s780] %v1265
          %v1267 = vld [vmem:[%s787 + $0x3d4] sm:%s780]
          %1268 = vst [vmem:[%s788 + $0x3bc] sm:%s780] %v1267
          %v1269 = vld [vmem:[%s787 + $0x3bc] sm:%s780]
          %1270 = vst [vmem:[%s788 + $0x3c0] sm:%s780] %v1269
          %v1271 = vld [vmem:[%s787 + $0x3d8] sm:%s780]
          %1272 = vst [vmem:[%s788 + $0x3c4] sm:%s780] %v1271
          %v1273 = vld [vmem:[%s787 + $0x3c0] sm:%s780]
          %1274 = vst [vmem:[%s788 + $0x3c8] sm:%s780] %v1273
          %v1275 = vld [vmem:[%s787 + $0x3dc] sm:%s780]
          %1276 = vst [vmem:[%s788 + $0x3cc] sm:%s780] %v1275
          %v1277 = vld [vmem:[%s787 + $0x3c4] sm:%s780]
          %1278 = vst [vmem:[%s788 + $0x3d0] sm:%s780] %v1277
          %v1279 = vld [vmem:[%s787 + $0x3e0] sm:%s780]
          %1280 = vst [vmem:[%s788 + $0x3d4] sm:%s780] %v1279
          %v1281 = vld [vmem:[%s787 + $0x3c8] sm:%s780]
          %1282 = vst [vmem:[%s788 + $0x3d8] sm:%s780] %v1281
          %v1283 = vld [vmem:[%s787 + $0x3e4] sm:%s780]
          %1284 = vst [vmem:[%s788 + $0x3dc] sm:%s780] %v1283
          %v1285 = vld [vmem:[%s787 + $0x3cc] sm:%s780]
          %1286 = vst [vmem:[%s788 + $0x3e0] sm:%s780] %v1285
          %v1287 = vld [vmem:[%s787 + $0x3e8] sm:%s780]
          %1288 = vst [vmem:[%s788 + $0x3e4] sm:%s780] %v1287
          %v1289 = vld [vmem:[%s787 + $0x3d0] sm:%s780]
          %1290 = vst [vmem:[%s788 + $0x3e8] sm:%s780] %v1289
          %v1291 = vld [vmem:[%s787 + $0x3ec] sm:%s780]
          %1292 = vst [vmem:[%s788 + $0x3ec] sm:%s780] %v1291
          %v1293 = vld [vmem:[%s787 + $0x3f0] sm:%s780]
          %1294 = vst [vmem:[%s788 + $0x3f0] sm:%s780] %v1293
          %v1295 = vld [vmem:[%s787 + $0x40c] sm:%s780]
          %1296 = vst [vmem:[%s788 + $0x3f4] sm:%s780] %v1295
          %v1297 = vld [vmem:[%s787 + $0x3f4] sm:%s780]
          %1298 = vst [vmem:[%s788 + $0x3f8] sm:%s780] %v1297
          %v1299 = vld [vmem:[%s787 + $0x410] sm:%s780]
          %1300 = vst [vmem:[%s788 + $0x3fc] sm:%s780] %v1299
          %v1301 = vld [vmem:[%s787 + $0x3f8] sm:%s780]
          %1302 = vst [vmem:[%s788 + $0x400] sm:%s780] %v1301
          %v1303 = vld [vmem:[%s787 + $0x414] sm:%s780]
          %1304 = vst [vmem:[%s788 + $0x404] sm:%s780] %v1303
          %v1305 = vld [vmem:[%s787 + $0x3fc] sm:%s780]
          %1306 = vst [vmem:[%s788 + $0x408] sm:%s780] %v1305
          %v1307 = vld [vmem:[%s787 + $0x418] sm:%s780]
          %1308 = vst [vmem:[%s788 + $0x40c] sm:%s780] %v1307
          %v1309 = vld [vmem:[%s787 + $0x400] sm:%s780]
          %1310 = vst [vmem:[%s788 + $0x410] sm:%s780] %v1309
          %v1311 = vld [vmem:[%s787 + $0x41c] sm:%s780]
          %1312 = vst [vmem:[%s788 + $0x414] sm:%s780] %v1311
          %v1313 = vld [vmem:[%s787 + $0x404] sm:%s780]
          %1314 = vst [vmem:[%s788 + $0x418] sm:%s780] %v1313
          %v1315 = vld [vmem:[%s787 + $0x420] sm:%s780]
          %1316 = vst [vmem:[%s788 + $0x41c] sm:%s780] %v1315
          %v1317 = vld [vmem:[%s787 + $0x408] sm:%s780]
          %1318 = vst [vmem:[%s788 + $0x420] sm:%s780] %v1317
          %v1319 = vld [vmem:[%s787 + $0x424] sm:%s780]
          %1320 = vst [vmem:[%s788 + $0x424] sm:%s780] %v1319
          %v1321 = vld [vmem:[%s787 + $0x428] sm:%s780]
          %1322 = vst [vmem:[%s788 + $0x428] sm:%s780] %v1321
          %v1323 = vld [vmem:[%s787 + $0x444] sm:%s780]
          %1324 = vst [vmem:[%s788 + $0x42c] sm:%s780] %v1323
          %v1325 = vld [vmem:[%s787 + $0x42c] sm:%s780]
          %1326 = vst [vmem:[%s788 + $0x430] sm:%s780] %v1325
          %v1327 = vld [vmem:[%s787 + $0x448] sm:%s780]
          %1328 = vst [vmem:[%s788 + $0x434] sm:%s780] %v1327
          %v1329 = vld [vmem:[%s787 + $0x430] sm:%s780]
          %1330 = vst [vmem:[%s788 + $0x438] sm:%s780] %v1329
          %v1331 = vld [vmem:[%s787 + $0x44c] sm:%s780]
          %1332 = vst [vmem:[%s788 + $0x43c] sm:%s780] %v1331
          %v1333 = vld [vmem:[%s787 + $0x434] sm:%s780]
          %1334 = vst [vmem:[%s788 + $0x440] sm:%s780] %v1333
          %v1335 = vld [vmem:[%s787 + $0x450] sm:%s780]
          %1336 = vst [vmem:[%s788 + $0x444] sm:%s780] %v1335
          %v1337 = vld [vmem:[%s787 + $0x438] sm:%s780]
          %1338 = vst [vmem:[%s788 + $0x448] sm:%s780] %v1337
          %v1339 = vld [vmem:[%s787 + $0x454] sm:%s780]
          %1340 = vst [vmem:[%s788 + $0x44c] sm:%s780] %v1339
          %v1341 = vld [vmem:[%s787 + $0x43c] sm:%s780]
          %1342 = vst [vmem:[%s788 + $0x450] sm:%s780] %v1341
          %v1343 = vld [vmem:[%s787 + $0x458] sm:%s780]
          %1344 = vst [vmem:[%s788 + $0x454] sm:%s780] %v1343
          %v1345 = vld [vmem:[%s787 + $0x440] sm:%s780]
          %1346 = vst [vmem:[%s788 + $0x458] sm:%s780] %v1345
          %v1347 = vld [vmem:[%s787 + $0x45c] sm:%s780]
          %1348 = vst [vmem:[%s788 + $0x45c] sm:%s780] %v1347
          %v1349 = vld [vmem:[%s787 + $0x460] sm:%s780]
          %1350 = vst [vmem:[%s788 + $0x460] sm:%s780] %v1349
          %v1351 = vld [vmem:[%s787 + $0x47c] sm:%s780]
          %1352 = vst [vmem:[%s788 + $0x464] sm:%s780] %v1351
          %v1353 = vld [vmem:[%s787 + $0x464] sm:%s780]
          %1354 = vst [vmem:[%s788 + $0x468] sm:%s780] %v1353
          %v1355 = vld [vmem:[%s787 + $0x480] sm:%s780]
          %1356 = vst [vmem:[%s788 + $0x46c] sm:%s780] %v1355
          %v1357 = vld [vmem:[%s787 + $0x468] sm:%s780]
          %1358 = vst [vmem:[%s788 + $0x470] sm:%s780] %v1357
          %v1359 = vld [vmem:[%s787 + $0x484] sm:%s780]
          %1360 = vst [vmem:[%s788 + $0x474] sm:%s780] %v1359
          %v1361 = vld [vmem:[%s787 + $0x46c] sm:%s780]
          %1362 = vst [vmem:[%s788 + $0x478] sm:%s780] %v1361
          %v1363 = vld [vmem:[%s787 + $0x488] sm:%s780]
          %1364 = vst [vmem:[%s788 + $0x47c] sm:%s780] %v1363
          %v1365 = vld [vmem:[%s787 + $0x470] sm:%s780]
          %1366 = vst [vmem:[%s788 + $0x480] sm:%s780] %v1365
          %v1367 = vld [vmem:[%s787 + $0x48c] sm:%s780]
          %1368 = vst [vmem:[%s788 + $0x484] sm:%s780] %v1367
          %v1369 = vld [vmem:[%s787 + $0x474] sm:%s780]
          %1370 = vst [vmem:[%s788 + $0x488] sm:%s780] %v1369
          %v1371 = vld [vmem:[%s787 + $0x490] sm:%s780]
          %1372 = vst [vmem:[%s788 + $0x48c] sm:%s780] %v1371
          %v1373 = vld [vmem:[%s787 + $0x478] sm:%s780]
          %1374 = vst [vmem:[%s788 + $0x490] sm:%s780] %v1373
          %v1375 = vld [vmem:[%s787 + $0x494] sm:%s780]
          %1376 = vst [vmem:[%s788 + $0x494] sm:%s780] %v1375
          %v1377 = vld [vmem:[%s787 + $0x498] sm:%s780]
          %1378 = vst [vmem:[%s788 + $0x498] sm:%s780] %v1377
          %v1379 = vld [vmem:[%s787 + $0x4b4] sm:%s780]
          %1380 = vst [vmem:[%s788 + $0x49c] sm:%s780] %v1379
          %v1381 = vld [vmem:[%s787 + $0x49c] sm:%s780]
          %1382 = vst [vmem:[%s788 + $0x4a0] sm:%s780] %v1381
          %v1383 = vld [vmem:[%s787 + $0x4b8] sm:%s780]
          %1384 = vst [vmem:[%s788 + $0x4a4] sm:%s780] %v1383
          %v1385 = vld [vmem:[%s787 + $0x4a0] sm:%s780]
          %1386 = vst [vmem:[%s788 + $0x4a8] sm:%s780] %v1385
          %v1387 = vld [vmem:[%s787 + $0x4bc] sm:%s780]
          %1388 = vst [vmem:[%s788 + $0x4ac] sm:%s780] %v1387
          %v1389 = vld [vmem:[%s787 + $0x4a4] sm:%s780]
          %1390 = vst [vmem:[%s788 + $0x4b0] sm:%s780] %v1389
          %v1391 = vld [vmem:[%s787 + $0x4c0] sm:%s780]
          %1392 = vst [vmem:[%s788 + $0x4b4] sm:%s780] %v1391
          %v1393 = vld [vmem:[%s787 + $0x4a8] sm:%s780]
          %1394 = vst [vmem:[%s788 + $0x4b8] sm:%s780] %v1393
          %v1395 = vld [vmem:[%s787 + $0x4c4] sm:%s780]
          %1396 = vst [vmem:[%s788 + $0x4bc] sm:%s780] %v1395
          %v1397 = vld [vmem:[%s787 + $0x4ac] sm:%s780]
          %1398 = vst [vmem:[%s788 + $0x4c0] sm:%s780] %v1397
          %v1399 = vld [vmem:[%s787 + $0x4c8] sm:%s780]
          %1400 = vst [vmem:[%s788 + $0x4c4] sm:%s780] %v1399
          %v1401 = vld [vmem:[%s787 + $0x4b0] sm:%s780]
          %1402 = vst [vmem:[%s788 + $0x4c8] sm:%s780] %v1401
          %v1403 = vld [vmem:[%s787 + $0x4cc] sm:%s780]
          %1404 = vst [vmem:[%s788 + $0x4cc] sm:%s780] %v1403
          %v1405 = vld [vmem:[%s787 + $0x4d0] sm:%s780]
          %1406 = vst [vmem:[%s788 + $0x4d0] sm:%s780] %v1405
          %v1407 = vld [vmem:[%s787 + $0x4ec] sm:%s780]
          %1408 = vst [vmem:[%s788 + $0x4d4] sm:%s780] %v1407
          %v1409 = vld [vmem:[%s787 + $0x4d4] sm:%s780]
          %1410 = vst [vmem:[%s788 + $0x4d8] sm:%s780] %v1409
          %v1411 = vld [vmem:[%s787 + $0x4f0] sm:%s780]
          %1412 = vst [vmem:[%s788 + $0x4dc] sm:%s780] %v1411
          %v1413 = vld [vmem:[%s787 + $0x4d8] sm:%s780]
          %1414 = vst [vmem:[%s788 + $0x4e0] sm:%s780] %v1413
          %v1415 = vld [vmem:[%s787 + $0x4f4] sm:%s780]
          %1416 = vst [vmem:[%s788 + $0x4e4] sm:%s780] %v1415
          %v1417 = vld [vmem:[%s787 + $0x4dc] sm:%s780]
          %1418 = vst [vmem:[%s788 + $0x4e8] sm:%s780] %v1417
          %v1419 = vld [vmem:[%s787 + $0x4f8] sm:%s780]
          %1420 = vst [vmem:[%s788 + $0x4ec] sm:%s780] %v1419
          %v1421 = vld [vmem:[%s787 + $0x4e0] sm:%s780]
          %1422 = vst [vmem:[%s788 + $0x4f0] sm:%s780] %v1421
          %v1423 = vld [vmem:[%s787 + $0x4fc] sm:%s780]
          %1424 = vst [vmem:[%s788 + $0x4f4] sm:%s780] %v1423
          %v1425 = vld [vmem:[%s787 + $0x4e4] sm:%s780]
          %1426 = vst [vmem:[%s788 + $0x4f8] sm:%s780] %v1425
          %v1427 = vld [vmem:[%s787 + $0x500] sm:%s780]
          %1428 = vst [vmem:[%s788 + $0x4fc] sm:%s780] %v1427
          %v1429 = vld [vmem:[%s787 + $0x4e8] sm:%s780]
          %1430 = vst [vmem:[%s788 + $0x500] sm:%s780] %v1429
          %v1431 = vld [vmem:[%s787 + $0x504] sm:%s780]
          %1432 = vst [vmem:[%s788 + $0x504] sm:%s780] %v1431
          %v1433 = vld [vmem:[%s787 + $0x508] sm:%s780]
          %1434 = vst [vmem:[%s788 + $0x508] sm:%s780] %v1433
          %v1435 = vld [vmem:[%s787 + $0x524] sm:%s780]
          %1436 = vst [vmem:[%s788 + $0x50c] sm:%s780] %v1435
          %v1437 = vld [vmem:[%s787 + $0x50c] sm:%s780]
          %1438 = vst [vmem:[%s788 + $0x510] sm:%s780] %v1437
          %v1439 = vld [vmem:[%s787 + $0x528] sm:%s780]
          %1440 = vst [vmem:[%s788 + $0x514] sm:%s780] %v1439
          %v1441 = vld [vmem:[%s787 + $0x510] sm:%s780]
          %1442 = vst [vmem:[%s788 + $0x518] sm:%s780] %v1441
          %v1443 = vld [vmem:[%s787 + $0x52c] sm:%s780]
          %1444 = vst [vmem:[%s788 + $0x51c] sm:%s780] %v1443
          %v1445 = vld [vmem:[%s787 + $0x514] sm:%s780]
          %1446 = vst [vmem:[%s788 + $0x520] sm:%s780] %v1445
          %v1447 = vld [vmem:[%s787 + $0x530] sm:%s780]
          %1448 = vst [vmem:[%s788 + $0x524] sm:%s780] %v1447
          %v1449 = vld [vmem:[%s787 + $0x518] sm:%s780]
          %1450 = vst [vmem:[%s788 + $0x528] sm:%s780] %v1449
          %v1451 = vld [vmem:[%s787 + $0x534] sm:%s780]
          %1452 = vst [vmem:[%s788 + $0x52c] sm:%s780] %v1451
          %v1453 = vld [vmem:[%s787 + $0x51c] sm:%s780]
          %1454 = vst [vmem:[%s788 + $0x530] sm:%s780] %v1453
          %v1455 = vld [vmem:[%s787 + $0x538] sm:%s780]
          %1456 = vst [vmem:[%s788 + $0x534] sm:%s780] %v1455
          %v1457 = vld [vmem:[%s787 + $0x520] sm:%s780]
          %1458 = vst [vmem:[%s788 + $0x538] sm:%s780] %v1457
          %v1459 = vld [vmem:[%s787 + $0x53c] sm:%s780]
          %1460 = vst [vmem:[%s788 + $0x53c] sm:%s780] %v1459
          %v1461 = vld [vmem:[%s787 + $0x540] sm:%s780]
          %1462 = vst [vmem:[%s788 + $0x540] sm:%s780] %v1461
          %v1463 = vld [vmem:[%s787 + $0x55c] sm:%s780]
          %1464 = vst [vmem:[%s788 + $0x544] sm:%s780] %v1463
          %v1465 = vld [vmem:[%s787 + $0x544] sm:%s780]
          %1466 = vst [vmem:[%s788 + $0x548] sm:%s780] %v1465
          %v1467 = vld [vmem:[%s787 + $0x560] sm:%s780]
          %1468 = vst [vmem:[%s788 + $0x54c] sm:%s780] %v1467
          %v1469 = vld [vmem:[%s787 + $0x548] sm:%s780]
          %1470 = vst [vmem:[%s788 + $0x550] sm:%s780] %v1469
          %v1471 = vld [vmem:[%s787 + $0x564] sm:%s780]
          %1472 = vst [vmem:[%s788 + $0x554] sm:%s780] %v1471
          %v1473 = vld [vmem:[%s787 + $0x54c] sm:%s780]
          %1474 = vst [vmem:[%s788 + $0x558] sm:%s780] %v1473
          %v1475 = vld [vmem:[%s787 + $0x568] sm:%s780]
          %1476 = vst [vmem:[%s788 + $0x55c] sm:%s780] %v1475
          %v1477 = vld [vmem:[%s787 + $0x550] sm:%s780]
          %1478 = vst [vmem:[%s788 + $0x560] sm:%s780] %v1477
          %v1479 = vld [vmem:[%s787 + $0x56c] sm:%s780]
          %1480 = vst [vmem:[%s788 + $0x564] sm:%s780] %v1479
          %v1481 = vld [vmem:[%s787 + $0x554] sm:%s780]
          %1482 = vst [vmem:[%s788 + $0x568] sm:%s780] %v1481
          %v1483 = vld [vmem:[%s787 + $0x570] sm:%s780]
          %1484 = vst [vmem:[%s788 + $0x56c] sm:%s780] %v1483
          %v1485 = vld [vmem:[%s787 + $0x558] sm:%s780]
          %1486 = vst [vmem:[%s788 + $0x570] sm:%s780] %v1485
          %v1487 = vld [vmem:[%s787 + $0x574] sm:%s780]
          %1488 = vst [vmem:[%s788 + $0x574] sm:%s780] %v1487
        $region76: #{vgp_forward.1} parent=63 // loop_footer
          %s786 = sadd.s32 1, %s782
        $region77: #{vgp_forward.1} parent=63 // loop_footer_branch
          %781 = sbr.rel target = $region73
        $region78: #{vgp_forward.1} parent=63 // loop_exit
          _
      $region64: #{vgp_forward.1} parent=48 // pred_fallthru
        _
    $region49: #{vgp_forward.1} parent=1 // pred_fallthru
      _
    // Predicated region
    $region50: #{vgp_forward.1} parent=1 // pred_check
      %p50 = pneg %p46
    $region51: #{vgp_forward.1} parent=1 // pred_check_branch
      %52 = sbr.rel (%p50) target = $region53
    $region52: #{vgp_forward.1} parent=1 // pred_region
      %s53 = sshllo.u32 0, 4
      loop: start=0, step=1, limit=1
      $region54: #{vgp_forward.1} parent=52 // loop_pre_header
        _
      $region55: #{vgp_forward.1} parent=52 // loop_header
        %s55 = sphi 0, %s59
        %p56 = scmp.ge.s32.totalorder %s55, 1
        %s60 = sphi %s9, %s9
        %s61 = sphi [#allocation2], [#allocation2]
      $region56: #{vgp_forward.1} parent=52 // loop_header_branch
        %58 = sbr.rel (%p56) target = $region60
      $region57: #{vgp_forward.1} parent=52 // loop_body
        %v62 = vld [vmem:[%s60] sm:%s53]
        %63 = vst [vmem:[%s61] sm:%s53] %v62
        %v64 = vld [vmem:[%s60 + $0x1c] sm:%s53]
        %65 = vst [vmem:[%s61 + $0x4] sm:%s53] %v64
        %v66 = vld [vmem:[%s60 + $0x4] sm:%s53]
        %67 = vst [vmem:[%s61 + $0x8] sm:%s53] %v66
        %v68 = vld [vmem:[%s60 + $0x20] sm:%s53]
        %69 = vst [vmem:[%s61 + $0xc] sm:%s53] %v68
        %v70 = vld [vmem:[%s60 + $0x8] sm:%s53]
        %71 = vst [vmem:[%s61 + $0x10] sm:%s53] %v70
        %v72 = vld [vmem:[%s60 + $0x24] sm:%s53]
        %73 = vst [vmem:[%s61 + $0x14] sm:%s53] %v72
        %v74 = vld [vmem:[%s60 + $0xc] sm:%s53]
        %75 = vst [vmem:[%s61 + $0x18] sm:%s53] %v74
        %v76 = vld [vmem:[%s60 + $0x28] sm:%s53]
        %77 = vst [vmem:[%s61 + $0x1c] sm:%s53] %v76
        %v78 = vld [vmem:[%s60 + $0x10] sm:%s53]
        %79 = vst [vmem:[%s61 + $0x20] sm:%s53] %v78
        %v80 = vld [vmem:[%s60 + $0x2c] sm:%s53]
        %81 = vst [vmem:[%s61 + $0x24] sm:%s53] %v80
        %v82 = vld [vmem:[%s60 + $0x14] sm:%s53]
        %83 = vst [vmem:[%s61 + $0x28] sm:%s53] %v82
        %v84 = vld [vmem:[%s60 + $0x30] sm:%s53]
        %85 = vst [vmem:[%s61 + $0x2c] sm:%s53] %v84
        %v86 = vld [vmem:[%s60 + $0x18] sm:%s53]
        %87 = vst [vmem:[%s61 + $0x30] sm:%s53] %v86
        %v88 = vld [vmem:[%s60 + $0x34] sm:%s53]
        %89 = vst [vmem:[%s61 + $0x34] sm:%s53] %v88
        %v90 = vld [vmem:[%s60 + $0x38] sm:%s53]
        %91 = vst [vmem:[%s61 + $0x38] sm:%s53] %v90
        %v92 = vld [vmem:[%s60 + $0x54] sm:%s53]
        %93 = vst [vmem:[%s61 + $0x3c] sm:%s53] %v92
        %v94 = vld [vmem:[%s60 + $0x3c] sm:%s53]
        %95 = vst [vmem:[%s61 + $0x40] sm:%s53] %v94
        %v96 = vld [vmem:[%s60 + $0x58] sm:%s53]
        %97 = vst [vmem:[%s61 + $0x44] sm:%s53] %v96
        %v98 = vld [vmem:[%s60 + $0x40] sm:%s53]
        %99 = vst [vmem:[%s61 + $0x48] sm:%s53] %v98
        %v100 = vld [vmem:[%s60 + $0x5c] sm:%s53]
        %101 = vst [vmem:[%s61 + $0x4c] sm:%s53] %v100
        %v102 = vld [vmem:[%s60 + $0x44] sm:%s53]
        %103 = vst [vmem:[%s61 + $0x50] sm:%s53] %v102
        %v104 = vld [vmem:[%s60 + $0x60] sm:%s53]
        %105 = vst [vmem:[%s61 + $0x54] sm:%s53] %v104
        %v106 = vld [vmem:[%s60 + $0x48] sm:%s53]
        %107 = vst [vmem:[%s61 + $0x58] sm:%s53] %v106
        %v108 = vld [vmem:[%s60 + $0x64] sm:%s53]
        %109 = vst [vmem:[%s61 + $0x5c] sm:%s53] %v108
        %v110 = vld [vmem:[%s60 + $0x4c] sm:%s53]
        %111 = vst [vmem:[%s61 + $0x60] sm:%s53] %v110
        %v112 = vld [vmem:[%s60 + $0x68] sm:%s53]
        %113 = vst [vmem:[%s61 + $0x64] sm:%s53] %v112
        %v114 = vld [vmem:[%s60 + $0x50] sm:%s53]
        %115 = vst [vmem:[%s61 + $0x68] sm:%s53] %v114
        %v116 = vld [vmem:[%s60 + $0x6c] sm:%s53]
        %117 = vst [vmem:[%s61 + $0x6c] sm:%s53] %v116
        %v118 = vld [vmem:[%s60 + $0x70] sm:%s53]
        %119 = vst [vmem:[%s61 + $0x70] sm:%s53] %v118
        %v120 = vld [vmem:[%s60 + $0x8c] sm:%s53]
        %121 = vst [vmem:[%s61 + $0x74] sm:%s53] %v120
        %v122 = vld [vmem:[%s60 + $0x74] sm:%s53]
        %123 = vst [vmem:[%s61 + $0x78] sm:%s53] %v122
        %v124 = vld [vmem:[%s60 + $0x90] sm:%s53]
        %125 = vst [vmem:[%s61 + $0x7c] sm:%s53] %v124
        %v126 = vld [vmem:[%s60 + $0x78] sm:%s53]
        %127 = vst [vmem:[%s61 + $0x80] sm:%s53] %v126
        %v128 = vld [vmem:[%s60 + $0x94] sm:%s53]
        %129 = vst [vmem:[%s61 + $0x84] sm:%s53] %v128
        %v130 = vld [vmem:[%s60 + $0x7c] sm:%s53]
        %131 = vst [vmem:[%s61 + $0x88] sm:%s53] %v130
        %v132 = vld [vmem:[%s60 + $0x98] sm:%s53]
        %133 = vst [vmem:[%s61 + $0x8c] sm:%s53] %v132
        %v134 = vld [vmem:[%s60 + $0x80] sm:%s53]
        %135 = vst [vmem:[%s61 + $0x90] sm:%s53] %v134
        %v136 = vld [vmem:[%s60 + $0x9c] sm:%s53]
        %137 = vst [vmem:[%s61 + $0x94] sm:%s53] %v136
        %v138 = vld [vmem:[%s60 + $0x84] sm:%s53]
        %139 = vst [vmem:[%s61 + $0x98] sm:%s53] %v138
        %v140 = vld [vmem:[%s60 + $0xa0] sm:%s53]
        %141 = vst [vmem:[%s61 + $0x9c] sm:%s53] %v140
        %v142 = vld [vmem:[%s60 + $0x88] sm:%s53]
        %143 = vst [vmem:[%s61 + $0xa0] sm:%s53] %v142
        %v144 = vld [vmem:[%s60 + $0xa4] sm:%s53]
        %145 = vst [vmem:[%s61 + $0xa4] sm:%s53] %v144
        %v146 = vld [vmem:[%s60 + $0xa8] sm:%s53]
        %147 = vst [vmem:[%s61 + $0xa8] sm:%s53] %v146
        %v148 = vld [vmem:[%s60 + $0xc4] sm:%s53]
        %149 = vst [vmem:[%s61 + $0xac] sm:%s53] %v148
        %v150 = vld [vmem:[%s60 + $0xac] sm:%s53]
        %151 = vst [vmem:[%s61 + $0xb0] sm:%s53] %v150
        %v152 = vld [vmem:[%s60 + $0xc8] sm:%s53]
        %153 = vst [vmem:[%s61 + $0xb4] sm:%s53] %v152
        %v154 = vld [vmem:[%s60 + $0xb0] sm:%s53]
        %155 = vst [vmem:[%s61 + $0xb8] sm:%s53] %v154
        %v156 = vld [vmem:[%s60 + $0xcc] sm:%s53]
        %157 = vst [vmem:[%s61 + $0xbc] sm:%s53] %v156
        %v158 = vld [vmem:[%s60 + $0xb4] sm:%s53]
        %159 = vst [vmem:[%s61 + $0xc0] sm:%s53] %v158
        %v160 = vld [vmem:[%s60 + $0xd0] sm:%s53]
        %161 = vst [vmem:[%s61 + $0xc4] sm:%s53] %v160
        %v162 = vld [vmem:[%s60 + $0xb8] sm:%s53]
        %163 = vst [vmem:[%s61 + $0xc8] sm:%s53] %v162
        %v164 = vld [vmem:[%s60 + $0xd4] sm:%s53]
        %165 = vst [vmem:[%s61 + $0xcc] sm:%s53] %v164
        %v166 = vld [vmem:[%s60 + $0xbc] sm:%s53]
        %167 = vst [vmem:[%s61 + $0xd0] sm:%s53] %v166
        %v168 = vld [vmem:[%s60 + $0xd8] sm:%s53]
        %169 = vst [vmem:[%s61 + $0xd4] sm:%s53] %v168
        %v170 = vld [vmem:[%s60 + $0xc0] sm:%s53]
        %171 = vst [vmem:[%s61 + $0xd8] sm:%s53] %v170
        %v172 = vld [vmem:[%s60 + $0xdc] sm:%s53]
        %173 = vst [vmem:[%s61 + $0xdc] sm:%s53] %v172
        %v174 = vld [vmem:[%s60 + $0xe0] sm:%s53]
        %175 = vst [vmem:[%s61 + $0xe0] sm:%s53] %v174
        %v176 = vld [vmem:[%s60 + $0xfc] sm:%s53]
        %177 = vst [vmem:[%s61 + $0xe4] sm:%s53] %v176
        %v178 = vld [vmem:[%s60 + $0xe4] sm:%s53]
        %179 = vst [vmem:[%s61 + $0xe8] sm:%s53] %v178
        %v180 = vld [vmem:[%s60 + $0x100] sm:%s53]
        %181 = vst [vmem:[%s61 + $0xec] sm:%s53] %v180
        %v182 = vld [vmem:[%s60 + $0xe8] sm:%s53]
        %183 = vst [vmem:[%s61 + $0xf0] sm:%s53] %v182
        %v184 = vld [vmem:[%s60 + $0x104] sm:%s53]
        %185 = vst [vmem:[%s61 + $0xf4] sm:%s53] %v184
        %v186 = vld [vmem:[%s60 + $0xec] sm:%s53]
        %187 = vst [vmem:[%s61 + $0xf8] sm:%s53] %v186
        %v188 = vld [vmem:[%s60 + $0x108] sm:%s53]
        %189 = vst [vmem:[%s61 + $0xfc] sm:%s53] %v188
        %v190 = vld [vmem:[%s60 + $0xf0] sm:%s53]
        %191 = vst [vmem:[%s61 + $0x100] sm:%s53] %v190
        %v192 = vld [vmem:[%s60 + $0x10c] sm:%s53]
        %193 = vst [vmem:[%s61 + $0x104] sm:%s53] %v192
        %v194 = vld [vmem:[%s60 + $0xf4] sm:%s53]
        %195 = vst [vmem:[%s61 + $0x108] sm:%s53] %v194
        %v196 = vld [vmem:[%s60 + $0x110] sm:%s53]
        %197 = vst [vmem:[%s61 + $0x10c] sm:%s53] %v196
        %v198 = vld [vmem:[%s60 + $0xf8] sm:%s53]
        %199 = vst [vmem:[%s61 + $0x110] sm:%s53] %v198
        %v200 = vld [vmem:[%s60 + $0x114] sm:%s53]
        %201 = vst [vmem:[%s61 + $0x114] sm:%s53] %v200
        %v202 = vld [vmem:[%s60 + $0x118] sm:%s53]
        %203 = vst [vmem:[%s61 + $0x118] sm:%s53] %v202
        %v204 = vld [vmem:[%s60 + $0x134] sm:%s53]
        %205 = vst [vmem:[%s61 + $0x11c] sm:%s53] %v204
        %v206 = vld [vmem:[%s60 + $0x11c] sm:%s53]
        %207 = vst [vmem:[%s61 + $0x120] sm:%s53] %v206
        %v208 = vld [vmem:[%s60 + $0x138] sm:%s53]
        %209 = vst [vmem:[%s61 + $0x124] sm:%s53] %v208
        %v210 = vld [vmem:[%s60 + $0x120] sm:%s53]
        %211 = vst [vmem:[%s61 + $0x128] sm:%s53] %v210
        %v212 = vld [vmem:[%s60 + $0x13c] sm:%s53]
        %213 = vst [vmem:[%s61 + $0x12c] sm:%s53] %v212
        %v214 = vld [vmem:[%s60 + $0x124] sm:%s53]
        %215 = vst [vmem:[%s61 + $0x130] sm:%s53] %v214
        %v216 = vld [vmem:[%s60 + $0x140] sm:%s53]
        %217 = vst [vmem:[%s61 + $0x134] sm:%s53] %v216
        %v218 = vld [vmem:[%s60 + $0x128] sm:%s53]
        %219 = vst [vmem:[%s61 + $0x138] sm:%s53] %v218
        %v220 = vld [vmem:[%s60 + $0x144] sm:%s53]
        %221 = vst [vmem:[%s61 + $0x13c] sm:%s53] %v220
        %v222 = vld [vmem:[%s60 + $0x12c] sm:%s53]
        %223 = vst [vmem:[%s61 + $0x140] sm:%s53] %v222
        %v224 = vld [vmem:[%s60 + $0x148] sm:%s53]
        %225 = vst [vmem:[%s61 + $0x144] sm:%s53] %v224
        %v226 = vld [vmem:[%s60 + $0x130] sm:%s53]
        %227 = vst [vmem:[%s61 + $0x148] sm:%s53] %v226
        %v228 = vld [vmem:[%s60 + $0x14c] sm:%s53]
        %229 = vst [vmem:[%s61 + $0x14c] sm:%s53] %v228
        %v230 = vld [vmem:[%s60 + $0x150] sm:%s53]
        %231 = vst [vmem:[%s61 + $0x150] sm:%s53] %v230
        %v232 = vld [vmem:[%s60 + $0x16c] sm:%s53]
        %233 = vst [vmem:[%s61 + $0x154] sm:%s53] %v232
        %v234 = vld [vmem:[%s60 + $0x154] sm:%s53]
        %235 = vst [vmem:[%s61 + $0x158] sm:%s53] %v234
        %v236 = vld [vmem:[%s60 + $0x170] sm:%s53]
        %237 = vst [vmem:[%s61 + $0x15c] sm:%s53] %v236
        %v238 = vld [vmem:[%s60 + $0x158] sm:%s53]
        %239 = vst [vmem:[%s61 + $0x160] sm:%s53] %v238
        %v240 = vld [vmem:[%s60 + $0x174] sm:%s53]
        %241 = vst [vmem:[%s61 + $0x164] sm:%s53] %v240
        %v242 = vld [vmem:[%s60 + $0x15c] sm:%s53]
        %243 = vst [vmem:[%s61 + $0x168] sm:%s53] %v242
        %v244 = vld [vmem:[%s60 + $0x178] sm:%s53]
        %245 = vst [vmem:[%s61 + $0x16c] sm:%s53] %v244
        %v246 = vld [vmem:[%s60 + $0x160] sm:%s53]
        %247 = vst [vmem:[%s61 + $0x170] sm:%s53] %v246
        %v248 = vld [vmem:[%s60 + $0x17c] sm:%s53]
        %249 = vst [vmem:[%s61 + $0x174] sm:%s53] %v248
        %v250 = vld [vmem:[%s60 + $0x164] sm:%s53]
        %251 = vst [vmem:[%s61 + $0x178] sm:%s53] %v250
        %v252 = vld [vmem:[%s60 + $0x180] sm:%s53]
        %253 = vst [vmem:[%s61 + $0x17c] sm:%s53] %v252
        %v254 = vld [vmem:[%s60 + $0x168] sm:%s53]
        %255 = vst [vmem:[%s61 + $0x180] sm:%s53] %v254
        %v256 = vld [vmem:[%s60 + $0x184] sm:%s53]
        %257 = vst [vmem:[%s61 + $0x184] sm:%s53] %v256
        %v258 = vld [vmem:[%s60 + $0x188] sm:%s53]
        %259 = vst [vmem:[%s61 + $0x188] sm:%s53] %v258
        %v260 = vld [vmem:[%s60 + $0x1a4] sm:%s53]
        %261 = vst [vmem:[%s61 + $0x18c] sm:%s53] %v260
        %v262 = vld [vmem:[%s60 + $0x18c] sm:%s53]
        %263 = vst [vmem:[%s61 + $0x190] sm:%s53] %v262
        %v264 = vld [vmem:[%s60 + $0x1a8] sm:%s53]
        %265 = vst [vmem:[%s61 + $0x194] sm:%s53] %v264
        %v266 = vld [vmem:[%s60 + $0x190] sm:%s53]
        %267 = vst [vmem:[%s61 + $0x198] sm:%s53] %v266
        %v268 = vld [vmem:[%s60 + $0x1ac] sm:%s53]
        %269 = vst [vmem:[%s61 + $0x19c] sm:%s53] %v268
        %v270 = vld [vmem:[%s60 + $0x194] sm:%s53]
        %271 = vst [vmem:[%s61 + $0x1a0] sm:%s53] %v270
        %v272 = vld [vmem:[%s60 + $0x1b0] sm:%s53]
        %273 = vst [vmem:[%s61 + $0x1a4] sm:%s53] %v272
        %v274 = vld [vmem:[%s60 + $0x198] sm:%s53]
        %275 = vst [vmem:[%s61 + $0x1a8] sm:%s53] %v274
        %v276 = vld [vmem:[%s60 + $0x1b4] sm:%s53]
        %277 = vst [vmem:[%s61 + $0x1ac] sm:%s53] %v276
        %v278 = vld [vmem:[%s60 + $0x19c] sm:%s53]
        %279 = vst [vmem:[%s61 + $0x1b0] sm:%s53] %v278
        %v280 = vld [vmem:[%s60 + $0x1b8] sm:%s53]
        %281 = vst [vmem:[%s61 + $0x1b4] sm:%s53] %v280
        %v282 = vld [vmem:[%s60 + $0x1a0] sm:%s53]
        %283 = vst [vmem:[%s61 + $0x1b8] sm:%s53] %v282
        %v284 = vld [vmem:[%s60 + $0x1bc] sm:%s53]
        %285 = vst [vmem:[%s61 + $0x1bc] sm:%s53] %v284
        %v286 = vld [vmem:[%s60 + $0x1c0] sm:%s53]
        %287 = vst [vmem:[%s61 + $0x1c0] sm:%s53] %v286
        %v288 = vld [vmem:[%s60 + $0x1dc] sm:%s53]
        %289 = vst [vmem:[%s61 + $0x1c4] sm:%s53] %v288
        %v290 = vld [vmem:[%s60 + $0x1c4] sm:%s53]
        %291 = vst [vmem:[%s61 + $0x1c8] sm:%s53] %v290
        %v292 = vld [vmem:[%s60 + $0x1e0] sm:%s53]
        %293 = vst [vmem:[%s61 + $0x1cc] sm:%s53] %v292
        %v294 = vld [vmem:[%s60 + $0x1c8] sm:%s53]
        %295 = vst [vmem:[%s61 + $0x1d0] sm:%s53] %v294
        %v296 = vld [vmem:[%s60 + $0x1e4] sm:%s53]
        %297 = vst [vmem:[%s61 + $0x1d4] sm:%s53] %v296
        %v298 = vld [vmem:[%s60 + $0x1cc] sm:%s53]
        %299 = vst [vmem:[%s61 + $0x1d8] sm:%s53] %v298
        %v300 = vld [vmem:[%s60 + $0x1e8] sm:%s53]
        %301 = vst [vmem:[%s61 + $0x1dc] sm:%s53] %v300
        %v302 = vld [vmem:[%s60 + $0x1d0] sm:%s53]
        %303 = vst [vmem:[%s61 + $0x1e0] sm:%s53] %v302
        %v304 = vld [vmem:[%s60 + $0x1ec] sm:%s53]
        %305 = vst [vmem:[%s61 + $0x1e4] sm:%s53] %v304
        %v306 = vld [vmem:[%s60 + $0x1d4] sm:%s53]
        %307 = vst [vmem:[%s61 + $0x1e8] sm:%s53] %v306
        %v308 = vld [vmem:[%s60 + $0x1f0] sm:%s53]
        %309 = vst [vmem:[%s61 + $0x1ec] sm:%s53] %v308
        %v310 = vld [vmem:[%s60 + $0x1d8] sm:%s53]
        %311 = vst [vmem:[%s61 + $0x1f0] sm:%s53] %v310
        %v312 = vld [vmem:[%s60 + $0x1f4] sm:%s53]
        %313 = vst [vmem:[%s61 + $0x1f4] sm:%s53] %v312
        %v314 = vld [vmem:[%s60 + $0x1f8] sm:%s53]
        %315 = vst [vmem:[%s61 + $0x1f8] sm:%s53] %v314
        %v316 = vld [vmem:[%s60 + $0x214] sm:%s53]
        %317 = vst [vmem:[%s61 + $0x1fc] sm:%s53] %v316
        %v318 = vld [vmem:[%s60 + $0x1fc] sm:%s53]
        %319 = vst [vmem:[%s61 + $0x200] sm:%s53] %v318
        %v320 = vld [vmem:[%s60 + $0x218] sm:%s53]
        %321 = vst [vmem:[%s61 + $0x204] sm:%s53] %v320
        %v322 = vld [vmem:[%s60 + $0x200] sm:%s53]
        %323 = vst [vmem:[%s61 + $0x208] sm:%s53] %v322
        %v324 = vld [vmem:[%s60 + $0x21c] sm:%s53]
        %325 = vst [vmem:[%s61 + $0x20c] sm:%s53] %v324
        %v326 = vld [vmem:[%s60 + $0x204] sm:%s53]
        %327 = vst [vmem:[%s61 + $0x210] sm:%s53] %v326
        %v328 = vld [vmem:[%s60 + $0x220] sm:%s53]
        %329 = vst [vmem:[%s61 + $0x214] sm:%s53] %v328
        %v330 = vld [vmem:[%s60 + $0x208] sm:%s53]
        %331 = vst [vmem:[%s61 + $0x218] sm:%s53] %v330
        %v332 = vld [vmem:[%s60 + $0x224] sm:%s53]
        %333 = vst [vmem:[%s61 + $0x21c] sm:%s53] %v332
        %v334 = vld [vmem:[%s60 + $0x20c] sm:%s53]
        %335 = vst [vmem:[%s61 + $0x220] sm:%s53] %v334
        %v336 = vld [vmem:[%s60 + $0x228] sm:%s53]
        %337 = vst [vmem:[%s61 + $0x224] sm:%s53] %v336
        %v338 = vld [vmem:[%s60 + $0x210] sm:%s53]
        %339 = vst [vmem:[%s61 + $0x228] sm:%s53] %v338
        %v340 = vld [vmem:[%s60 + $0x22c] sm:%s53]
        %341 = vst [vmem:[%s61 + $0x22c] sm:%s53] %v340
        %v342 = vld [vmem:[%s60 + $0x230] sm:%s53]
        %343 = vst [vmem:[%s61 + $0x230] sm:%s53] %v342
        %v344 = vld [vmem:[%s60 + $0x24c] sm:%s53]
        %345 = vst [vmem:[%s61 + $0x234] sm:%s53] %v344
        %v346 = vld [vmem:[%s60 + $0x234] sm:%s53]
        %347 = vst [vmem:[%s61 + $0x238] sm:%s53] %v346
        %v348 = vld [vmem:[%s60 + $0x250] sm:%s53]
        %349 = vst [vmem:[%s61 + $0x23c] sm:%s53] %v348
        %v350 = vld [vmem:[%s60 + $0x238] sm:%s53]
        %351 = vst [vmem:[%s61 + $0x240] sm:%s53] %v350
        %v352 = vld [vmem:[%s60 + $0x254] sm:%s53]
        %353 = vst [vmem:[%s61 + $0x244] sm:%s53] %v352
        %v354 = vld [vmem:[%s60 + $0x23c] sm:%s53]
        %355 = vst [vmem:[%s61 + $0x248] sm:%s53] %v354
        %v356 = vld [vmem:[%s60 + $0x258] sm:%s53]
        %357 = vst [vmem:[%s61 + $0x24c] sm:%s53] %v356
        %v358 = vld [vmem:[%s60 + $0x240] sm:%s53]
        %359 = vst [vmem:[%s61 + $0x250] sm:%s53] %v358
        %v360 = vld [vmem:[%s60 + $0x25c] sm:%s53]
        %361 = vst [vmem:[%s61 + $0x254] sm:%s53] %v360
        %v362 = vld [vmem:[%s60 + $0x244] sm:%s53]
        %363 = vst [vmem:[%s61 + $0x258] sm:%s53] %v362
        %v364 = vld [vmem:[%s60 + $0x260] sm:%s53]
        %365 = vst [vmem:[%s61 + $0x25c] sm:%s53] %v364
        %v366 = vld [vmem:[%s60 + $0x248] sm:%s53]
        %367 = vst [vmem:[%s61 + $0x260] sm:%s53] %v366
        %v368 = vld [vmem:[%s60 + $0x264] sm:%s53]
        %369 = vst [vmem:[%s61 + $0x264] sm:%s53] %v368
        %v370 = vld [vmem:[%s60 + $0x268] sm:%s53]
        %371 = vst [vmem:[%s61 + $0x268] sm:%s53] %v370
        %v372 = vld [vmem:[%s60 + $0x284] sm:%s53]
        %373 = vst [vmem:[%s61 + $0x26c] sm:%s53] %v372
        %v374 = vld [vmem:[%s60 + $0x26c] sm:%s53]
        %375 = vst [vmem:[%s61 + $0x270] sm:%s53] %v374
        %v376 = vld [vmem:[%s60 + $0x288] sm:%s53]
        %377 = vst [vmem:[%s61 + $0x274] sm:%s53] %v376
        %v378 = vld [vmem:[%s60 + $0x270] sm:%s53]
        %379 = vst [vmem:[%s61 + $0x278] sm:%s53] %v378
        %v380 = vld [vmem:[%s60 + $0x28c] sm:%s53]
        %381 = vst [vmem:[%s61 + $0x27c] sm:%s53] %v380
        %v382 = vld [vmem:[%s60 + $0x274] sm:%s53]
        %383 = vst [vmem:[%s61 + $0x280] sm:%s53] %v382
        %v384 = vld [vmem:[%s60 + $0x290] sm:%s53]
        %385 = vst [vmem:[%s61 + $0x284] sm:%s53] %v384
        %v386 = vld [vmem:[%s60 + $0x278] sm:%s53]
        %387 = vst [vmem:[%s61 + $0x288] sm:%s53] %v386
        %v388 = vld [vmem:[%s60 + $0x294] sm:%s53]
        %389 = vst [vmem:[%s61 + $0x28c] sm:%s53] %v388
        %v390 = vld [vmem:[%s60 + $0x27c] sm:%s53]
        %391 = vst [vmem:[%s61 + $0x290] sm:%s53] %v390
        %v392 = vld [vmem:[%s60 + $0x298] sm:%s53]
        %393 = vst [vmem:[%s61 + $0x294] sm:%s53] %v392
        %v394 = vld [vmem:[%s60 + $0x280] sm:%s53]
        %395 = vst [vmem:[%s61 + $0x298] sm:%s53] %v394
        %v396 = vld [vmem:[%s60 + $0x29c] sm:%s53]
        %397 = vst [vmem:[%s61 + $0x29c] sm:%s53] %v396
        %v398 = vld [vmem:[%s60 + $0x2a0] sm:%s53]
        %399 = vst [vmem:[%s61 + $0x2a0] sm:%s53] %v398
        %v400 = vld [vmem:[%s60 + $0x2bc] sm:%s53]
        %401 = vst [vmem:[%s61 + $0x2a4] sm:%s53] %v400
        %v402 = vld [vmem:[%s60 + $0x2a4] sm:%s53]
        %403 = vst [vmem:[%s61 + $0x2a8] sm:%s53] %v402
        %v404 = vld [vmem:[%s60 + $0x2c0] sm:%s53]
        %405 = vst [vmem:[%s61 + $0x2ac] sm:%s53] %v404
        %v406 = vld [vmem:[%s60 + $0x2a8] sm:%s53]
        %407 = vst [vmem:[%s61 + $0x2b0] sm:%s53] %v406
        %v408 = vld [vmem:[%s60 + $0x2c4] sm:%s53]
        %409 = vst [vmem:[%s61 + $0x2b4] sm:%s53] %v408
        %v410 = vld [vmem:[%s60 + $0x2ac] sm:%s53]
        %411 = vst [vmem:[%s61 + $0x2b8] sm:%s53] %v410
        %v412 = vld [vmem:[%s60 + $0x2c8] sm:%s53]
        %413 = vst [vmem:[%s61 + $0x2bc] sm:%s53] %v412
        %v414 = vld [vmem:[%s60 + $0x2b0] sm:%s53]
        %415 = vst [vmem:[%s61 + $0x2c0] sm:%s53] %v414
        %v416 = vld [vmem:[%s60 + $0x2cc] sm:%s53]
        %417 = vst [vmem:[%s61 + $0x2c4] sm:%s53] %v416
        %v418 = vld [vmem:[%s60 + $0x2b4] sm:%s53]
        %419 = vst [vmem:[%s61 + $0x2c8] sm:%s53] %v418
        %v420 = vld [vmem:[%s60 + $0x2d0] sm:%s53]
        %421 = vst [vmem:[%s61 + $0x2cc] sm:%s53] %v420
        %v422 = vld [vmem:[%s60 + $0x2b8] sm:%s53]
        %423 = vst [vmem:[%s61 + $0x2d0] sm:%s53] %v422
        %v424 = vld [vmem:[%s60 + $0x2d4] sm:%s53]
        %425 = vst [vmem:[%s61 + $0x2d4] sm:%s53] %v424
        %v426 = vld [vmem:[%s60 + $0x2d8] sm:%s53]
        %427 = vst [vmem:[%s61 + $0x2d8] sm:%s53] %v426
        %v428 = vld [vmem:[%s60 + $0x2f4] sm:%s53]
        %429 = vst [vmem:[%s61 + $0x2dc] sm:%s53] %v428
        %v430 = vld [vmem:[%s60 + $0x2dc] sm:%s53]
        %431 = vst [vmem:[%s61 + $0x2e0] sm:%s53] %v430
        %v432 = vld [vmem:[%s60 + $0x2f8] sm:%s53]
        %433 = vst [vmem:[%s61 + $0x2e4] sm:%s53] %v432
        %v434 = vld [vmem:[%s60 + $0x2e0] sm:%s53]
        %435 = vst [vmem:[%s61 + $0x2e8] sm:%s53] %v434
        %v436 = vld [vmem:[%s60 + $0x2fc] sm:%s53]
        %437 = vst [vmem:[%s61 + $0x2ec] sm:%s53] %v436
        %v438 = vld [vmem:[%s60 + $0x2e4] sm:%s53]
        %439 = vst [vmem:[%s61 + $0x2f0] sm:%s53] %v438
        %v440 = vld [vmem:[%s60 + $0x300] sm:%s53]
        %441 = vst [vmem:[%s61 + $0x2f4] sm:%s53] %v440
        %v442 = vld [vmem:[%s60 + $0x2e8] sm:%s53]
        %443 = vst [vmem:[%s61 + $0x2f8] sm:%s53] %v442
        %v444 = vld [vmem:[%s60 + $0x304] sm:%s53]
        %445 = vst [vmem:[%s61 + $0x2fc] sm:%s53] %v444
        %v446 = vld [vmem:[%s60 + $0x2ec] sm:%s53]
        %447 = vst [vmem:[%s61 + $0x300] sm:%s53] %v446
        %v448 = vld [vmem:[%s60 + $0x308] sm:%s53]
        %449 = vst [vmem:[%s61 + $0x304] sm:%s53] %v448
        %v450 = vld [vmem:[%s60 + $0x2f0] sm:%s53]
        %451 = vst [vmem:[%s61 + $0x308] sm:%s53] %v450
        %v452 = vld [vmem:[%s60 + $0x30c] sm:%s53]
        %453 = vst [vmem:[%s61 + $0x30c] sm:%s53] %v452
        %v454 = vld [vmem:[%s60 + $0x310] sm:%s53]
        %455 = vst [vmem:[%s61 + $0x310] sm:%s53] %v454
        %v456 = vld [vmem:[%s60 + $0x32c] sm:%s53]
        %457 = vst [vmem:[%s61 + $0x314] sm:%s53] %v456
        %v458 = vld [vmem:[%s60 + $0x314] sm:%s53]
        %459 = vst [vmem:[%s61 + $0x318] sm:%s53] %v458
        %v460 = vld [vmem:[%s60 + $0x330] sm:%s53]
        %461 = vst [vmem:[%s61 + $0x31c] sm:%s53] %v460
        %v462 = vld [vmem:[%s60 + $0x318] sm:%s53]
        %463 = vst [vmem:[%s61 + $0x320] sm:%s53] %v462
        %v464 = vld [vmem:[%s60 + $0x334] sm:%s53]
        %465 = vst [vmem:[%s61 + $0x324] sm:%s53] %v464
        %v466 = vld [vmem:[%s60 + $0x31c] sm:%s53]
        %467 = vst [vmem:[%s61 + $0x328] sm:%s53] %v466
        %v468 = vld [vmem:[%s60 + $0x338] sm:%s53]
        %469 = vst [vmem:[%s61 + $0x32c] sm:%s53] %v468
        %v470 = vld [vmem:[%s60 + $0x320] sm:%s53]
        %471 = vst [vmem:[%s61 + $0x330] sm:%s53] %v470
        %v472 = vld [vmem:[%s60 + $0x33c] sm:%s53]
        %473 = vst [vmem:[%s61 + $0x334] sm:%s53] %v472
        %v474 = vld [vmem:[%s60 + $0x324] sm:%s53]
        %475 = vst [vmem:[%s61 + $0x338] sm:%s53] %v474
        %v476 = vld [vmem:[%s60 + $0x340] sm:%s53]
        %477 = vst [vmem:[%s61 + $0x33c] sm:%s53] %v476
        %v478 = vld [vmem:[%s60 + $0x328] sm:%s53]
        %479 = vst [vmem:[%s61 + $0x340] sm:%s53] %v478
        %v480 = vld [vmem:[%s60 + $0x344] sm:%s53]
        %481 = vst [vmem:[%s61 + $0x344] sm:%s53] %v480
        %v482 = vld [vmem:[%s60 + $0x348] sm:%s53]
        %483 = vst [vmem:[%s61 + $0x348] sm:%s53] %v482
        %v484 = vld [vmem:[%s60 + $0x364] sm:%s53]
        %485 = vst [vmem:[%s61 + $0x34c] sm:%s53] %v484
        %v486 = vld [vmem:[%s60 + $0x34c] sm:%s53]
        %487 = vst [vmem:[%s61 + $0x350] sm:%s53] %v486
        %v488 = vld [vmem:[%s60 + $0x368] sm:%s53]
        %489 = vst [vmem:[%s61 + $0x354] sm:%s53] %v488
        %v490 = vld [vmem:[%s60 + $0x350] sm:%s53]
        %491 = vst [vmem:[%s61 + $0x358] sm:%s53] %v490
        %v492 = vld [vmem:[%s60 + $0x36c] sm:%s53]
        %493 = vst [vmem:[%s61 + $0x35c] sm:%s53] %v492
        %v494 = vld [vmem:[%s60 + $0x354] sm:%s53]
        %495 = vst [vmem:[%s61 + $0x360] sm:%s53] %v494
        %v496 = vld [vmem:[%s60 + $0x370] sm:%s53]
        %497 = vst [vmem:[%s61 + $0x364] sm:%s53] %v496
        %v498 = vld [vmem:[%s60 + $0x358] sm:%s53]
        %499 = vst [vmem:[%s61 + $0x368] sm:%s53] %v498
        %v500 = vld [vmem:[%s60 + $0x374] sm:%s53]
        %501 = vst [vmem:[%s61 + $0x36c] sm:%s53] %v500
        %v502 = vld [vmem:[%s60 + $0x35c] sm:%s53]
        %503 = vst [vmem:[%s61 + $0x370] sm:%s53] %v502
        %v504 = vld [vmem:[%s60 + $0x378] sm:%s53]
        %505 = vst [vmem:[%s61 + $0x374] sm:%s53] %v504
        %v506 = vld [vmem:[%s60 + $0x360] sm:%s53]
        %507 = vst [vmem:[%s61 + $0x378] sm:%s53] %v506
        %v508 = vld [vmem:[%s60 + $0x37c] sm:%s53]
        %509 = vst [vmem:[%s61 + $0x37c] sm:%s53] %v508
        %v510 = vld [vmem:[%s60 + $0x380] sm:%s53]
        %511 = vst [vmem:[%s61 + $0x380] sm:%s53] %v510
        %v512 = vld [vmem:[%s60 + $0x39c] sm:%s53]
        %513 = vst [vmem:[%s61 + $0x384] sm:%s53] %v512
        %v514 = vld [vmem:[%s60 + $0x384] sm:%s53]
        %515 = vst [vmem:[%s61 + $0x388] sm:%s53] %v514
        %v516 = vld [vmem:[%s60 + $0x3a0] sm:%s53]
        %517 = vst [vmem:[%s61 + $0x38c] sm:%s53] %v516
        %v518 = vld [vmem:[%s60 + $0x388] sm:%s53]
        %519 = vst [vmem:[%s61 + $0x390] sm:%s53] %v518
        %v520 = vld [vmem:[%s60 + $0x3a4] sm:%s53]
        %521 = vst [vmem:[%s61 + $0x394] sm:%s53] %v520
        %v522 = vld [vmem:[%s60 + $0x38c] sm:%s53]
        %523 = vst [vmem:[%s61 + $0x398] sm:%s53] %v522
        %v524 = vld [vmem:[%s60 + $0x3a8] sm:%s53]
        %525 = vst [vmem:[%s61 + $0x39c] sm:%s53] %v524
        %v526 = vld [vmem:[%s60 + $0x390] sm:%s53]
        %527 = vst [vmem:[%s61 + $0x3a0] sm:%s53] %v526
        %v528 = vld [vmem:[%s60 + $0x3ac] sm:%s53]
        %529 = vst [vmem:[%s61 + $0x3a4] sm:%s53] %v528
        %v530 = vld [vmem:[%s60 + $0x394] sm:%s53]
        %531 = vst [vmem:[%s61 + $0x3a8] sm:%s53] %v530
        %v532 = vld [vmem:[%s60 + $0x3b0] sm:%s53]
        %533 = vst [vmem:[%s61 + $0x3ac] sm:%s53] %v532
        %v534 = vld [vmem:[%s60 + $0x398] sm:%s53]
        %535 = vst [vmem:[%s61 + $0x3b0] sm:%s53] %v534
        %v536 = vld [vmem:[%s60 + $0x3b4] sm:%s53]
        %537 = vst [vmem:[%s61 + $0x3b4] sm:%s53] %v536
        %v538 = vld [vmem:[%s60 + $0x3b8] sm:%s53]
        %539 = vst [vmem:[%s61 + $0x3b8] sm:%s53] %v538
        %v540 = vld [vmem:[%s60 + $0x3d4] sm:%s53]
        %541 = vst [vmem:[%s61 + $0x3bc] sm:%s53] %v540
        %v542 = vld [vmem:[%s60 + $0x3bc] sm:%s53]
        %543 = vst [vmem:[%s61 + $0x3c0] sm:%s53] %v542
        %v544 = vld [vmem:[%s60 + $0x3d8] sm:%s53]
        %545 = vst [vmem:[%s61 + $0x3c4] sm:%s53] %v544
        %v546 = vld [vmem:[%s60 + $0x3c0] sm:%s53]
        %547 = vst [vmem:[%s61 + $0x3c8] sm:%s53] %v546
        %v548 = vld [vmem:[%s60 + $0x3dc] sm:%s53]
        %549 = vst [vmem:[%s61 + $0x3cc] sm:%s53] %v548
        %v550 = vld [vmem:[%s60 + $0x3c4] sm:%s53]
        %551 = vst [vmem:[%s61 + $0x3d0] sm:%s53] %v550
        %v552 = vld [vmem:[%s60 + $0x3e0] sm:%s53]
        %553 = vst [vmem:[%s61 + $0x3d4] sm:%s53] %v552
        %v554 = vld [vmem:[%s60 + $0x3c8] sm:%s53]
        %555 = vst [vmem:[%s61 + $0x3d8] sm:%s53] %v554
        %v556 = vld [vmem:[%s60 + $0x3e4] sm:%s53]
        %557 = vst [vmem:[%s61 + $0x3dc] sm:%s53] %v556
        %v558 = vld [vmem:[%s60 + $0x3cc] sm:%s53]
        %559 = vst [vmem:[%s61 + $0x3e0] sm:%s53] %v558
        %v560 = vld [vmem:[%s60 + $0x3e8] sm:%s53]
        %561 = vst [vmem:[%s61 + $0x3e4] sm:%s53] %v560
        %v562 = vld [vmem:[%s60 + $0x3d0] sm:%s53]
        %563 = vst [vmem:[%s61 + $0x3e8] sm:%s53] %v562
        %v564 = vld [vmem:[%s60 + $0x3ec] sm:%s53]
        %565 = vst [vmem:[%s61 + $0x3ec] sm:%s53] %v564
        %v566 = vld [vmem:[%s60 + $0x3f0] sm:%s53]
        %567 = vst [vmem:[%s61 + $0x3f0] sm:%s53] %v566
        %v568 = vld [vmem:[%s60 + $0x40c] sm:%s53]
        %569 = vst [vmem:[%s61 + $0x3f4] sm:%s53] %v568
        %v570 = vld [vmem:[%s60 + $0x3f4] sm:%s53]
        %571 = vst [vmem:[%s61 + $0x3f8] sm:%s53] %v570
        %v572 = vld [vmem:[%s60 + $0x410] sm:%s53]
        %573 = vst [vmem:[%s61 + $0x3fc] sm:%s53] %v572
        %v574 = vld [vmem:[%s60 + $0x3f8] sm:%s53]
        %575 = vst [vmem:[%s61 + $0x400] sm:%s53] %v574
        %v576 = vld [vmem:[%s60 + $0x414] sm:%s53]
        %577 = vst [vmem:[%s61 + $0x404] sm:%s53] %v576
        %v578 = vld [vmem:[%s60 + $0x3fc] sm:%s53]
        %579 = vst [vmem:[%s61 + $0x408] sm:%s53] %v578
        %v580 = vld [vmem:[%s60 + $0x418] sm:%s53]
        %581 = vst [vmem:[%s61 + $0x40c] sm:%s53] %v580
        %v582 = vld [vmem:[%s60 + $0x400] sm:%s53]
        %583 = vst [vmem:[%s61 + $0x410] sm:%s53] %v582
        %v584 = vld [vmem:[%s60 + $0x41c] sm:%s53]
        %585 = vst [vmem:[%s61 + $0x414] sm:%s53] %v584
        %v586 = vld [vmem:[%s60 + $0x404] sm:%s53]
        %587 = vst [vmem:[%s61 + $0x418] sm:%s53] %v586
        %v588 = vld [vmem:[%s60 + $0x420] sm:%s53]
        %589 = vst [vmem:[%s61 + $0x41c] sm:%s53] %v588
        %v590 = vld [vmem:[%s60 + $0x408] sm:%s53]
        %591 = vst [vmem:[%s61 + $0x420] sm:%s53] %v590
        %v592 = vld [vmem:[%s60 + $0x424] sm:%s53]
        %593 = vst [vmem:[%s61 + $0x424] sm:%s53] %v592
        %v594 = vld [vmem:[%s60 + $0x428] sm:%s53]
        %595 = vst [vmem:[%s61 + $0x428] sm:%s53] %v594
        %v596 = vld [vmem:[%s60 + $0x444] sm:%s53]
        %597 = vst [vmem:[%s61 + $0x42c] sm:%s53] %v596
        %v598 = vld [vmem:[%s60 + $0x42c] sm:%s53]
        %599 = vst [vmem:[%s61 + $0x430] sm:%s53] %v598
        %v600 = vld [vmem:[%s60 + $0x448] sm:%s53]
        %601 = vst [vmem:[%s61 + $0x434] sm:%s53] %v600
        %v602 = vld [vmem:[%s60 + $0x430] sm:%s53]
        %603 = vst [vmem:[%s61 + $0x438] sm:%s53] %v602
        %v604 = vld [vmem:[%s60 + $0x44c] sm:%s53]
        %605 = vst [vmem:[%s61 + $0x43c] sm:%s53] %v604
        %v606 = vld [vmem:[%s60 + $0x434] sm:%s53]
        %607 = vst [vmem:[%s61 + $0x440] sm:%s53] %v606
        %v608 = vld [vmem:[%s60 + $0x450] sm:%s53]
        %609 = vst [vmem:[%s61 + $0x444] sm:%s53] %v608
        %v610 = vld [vmem:[%s60 + $0x438] sm:%s53]
        %611 = vst [vmem:[%s61 + $0x448] sm:%s53] %v610
        %v612 = vld [vmem:[%s60 + $0x454] sm:%s53]
        %613 = vst [vmem:[%s61 + $0x44c] sm:%s53] %v612
        %v614 = vld [vmem:[%s60 + $0x43c] sm:%s53]
        %615 = vst [vmem:[%s61 + $0x450] sm:%s53] %v614
        %v616 = vld [vmem:[%s60 + $0x458] sm:%s53]
        %617 = vst [vmem:[%s61 + $0x454] sm:%s53] %v616
        %v618 = vld [vmem:[%s60 + $0x440] sm:%s53]
        %619 = vst [vmem:[%s61 + $0x458] sm:%s53] %v618
        %v620 = vld [vmem:[%s60 + $0x45c] sm:%s53]
        %621 = vst [vmem:[%s61 + $0x45c] sm:%s53] %v620
        %v622 = vld [vmem:[%s60 + $0x460] sm:%s53]
        %623 = vst [vmem:[%s61 + $0x460] sm:%s53] %v622
        %v624 = vld [vmem:[%s60 + $0x47c] sm:%s53]
        %625 = vst [vmem:[%s61 + $0x464] sm:%s53] %v624
        %v626 = vld [vmem:[%s60 + $0x464] sm:%s53]
        %627 = vst [vmem:[%s61 + $0x468] sm:%s53] %v626
        %v628 = vld [vmem:[%s60 + $0x480] sm:%s53]
        %629 = vst [vmem:[%s61 + $0x46c] sm:%s53] %v628
        %v630 = vld [vmem:[%s60 + $0x468] sm:%s53]
        %631 = vst [vmem:[%s61 + $0x470] sm:%s53] %v630
        %v632 = vld [vmem:[%s60 + $0x484] sm:%s53]
        %633 = vst [vmem:[%s61 + $0x474] sm:%s53] %v632
        %v634 = vld [vmem:[%s60 + $0x46c] sm:%s53]
        %635 = vst [vmem:[%s61 + $0x478] sm:%s53] %v634
        %v636 = vld [vmem:[%s60 + $0x488] sm:%s53]
        %637 = vst [vmem:[%s61 + $0x47c] sm:%s53] %v636
        %v638 = vld [vmem:[%s60 + $0x470] sm:%s53]
        %639 = vst [vmem:[%s61 + $0x480] sm:%s53] %v638
        %v640 = vld [vmem:[%s60 + $0x48c] sm:%s53]
        %641 = vst [vmem:[%s61 + $0x484] sm:%s53] %v640
        %v642 = vld [vmem:[%s60 + $0x474] sm:%s53]
        %643 = vst [vmem:[%s61 + $0x488] sm:%s53] %v642
        %v644 = vld [vmem:[%s60 + $0x490] sm:%s53]
        %645 = vst [vmem:[%s61 + $0x48c] sm:%s53] %v644
        %v646 = vld [vmem:[%s60 + $0x478] sm:%s53]
        %647 = vst [vmem:[%s61 + $0x490] sm:%s53] %v646
        %v648 = vld [vmem:[%s60 + $0x494] sm:%s53]
        %649 = vst [vmem:[%s61 + $0x494] sm:%s53] %v648
        %v650 = vld [vmem:[%s60 + $0x498] sm:%s53]
        %651 = vst [vmem:[%s61 + $0x498] sm:%s53] %v650
        %v652 = vld [vmem:[%s60 + $0x4b4] sm:%s53]
        %653 = vst [vmem:[%s61 + $0x49c] sm:%s53] %v652
        %v654 = vld [vmem:[%s60 + $0x49c] sm:%s53]
        %655 = vst [vmem:[%s61 + $0x4a0] sm:%s53] %v654
        %v656 = vld [vmem:[%s60 + $0x4b8] sm:%s53]
        %657 = vst [vmem:[%s61 + $0x4a4] sm:%s53] %v656
        %v658 = vld [vmem:[%s60 + $0x4a0] sm:%s53]
        %659 = vst [vmem:[%s61 + $0x4a8] sm:%s53] %v658
        %v660 = vld [vmem:[%s60 + $0x4bc] sm:%s53]
        %661 = vst [vmem:[%s61 + $0x4ac] sm:%s53] %v660
        %v662 = vld [vmem:[%s60 + $0x4a4] sm:%s53]
        %663 = vst [vmem:[%s61 + $0x4b0] sm:%s53] %v662
        %v664 = vld [vmem:[%s60 + $0x4c0] sm:%s53]
        %665 = vst [vmem:[%s61 + $0x4b4] sm:%s53] %v664
        %v666 = vld [vmem:[%s60 + $0x4a8] sm:%s53]
        %667 = vst [vmem:[%s61 + $0x4b8] sm:%s53] %v666
        %v668 = vld [vmem:[%s60 + $0x4c4] sm:%s53]
        %669 = vst [vmem:[%s61 + $0x4bc] sm:%s53] %v668
        %v670 = vld [vmem:[%s60 + $0x4ac] sm:%s53]
        %671 = vst [vmem:[%s61 + $0x4c0] sm:%s53] %v670
        %v672 = vld [vmem:[%s60 + $0x4c8] sm:%s53]
        %673 = vst [vmem:[%s61 + $0x4c4] sm:%s53] %v672
        %v674 = vld [vmem:[%s60 + $0x4b0] sm:%s53]
        %675 = vst [vmem:[%s61 + $0x4c8] sm:%s53] %v674
        %v676 = vld [vmem:[%s60 + $0x4cc] sm:%s53]
        %677 = vst [vmem:[%s61 + $0x4cc] sm:%s53] %v676
        %v678 = vld [vmem:[%s60 + $0x4d0] sm:%s53]
        %679 = vst [vmem:[%s61 + $0x4d0] sm:%s53] %v678
        %v680 = vld [vmem:[%s60 + $0x4ec] sm:%s53]
        %681 = vst [vmem:[%s61 + $0x4d4] sm:%s53] %v680
        %v682 = vld [vmem:[%s60 + $0x4d4] sm:%s53]
        %683 = vst [vmem:[%s61 + $0x4d8] sm:%s53] %v682
        %v684 = vld [vmem:[%s60 + $0x4f0] sm:%s53]
        %685 = vst [vmem:[%s61 + $0x4dc] sm:%s53] %v684
        %v686 = vld [vmem:[%s60 + $0x4d8] sm:%s53]
        %687 = vst [vmem:[%s61 + $0x4e0] sm:%s53] %v686
        %v688 = vld [vmem:[%s60 + $0x4f4] sm:%s53]
        %689 = vst [vmem:[%s61 + $0x4e4] sm:%s53] %v688
        %v690 = vld [vmem:[%s60 + $0x4dc] sm:%s53]
        %691 = vst [vmem:[%s61 + $0x4e8] sm:%s53] %v690
        %v692 = vld [vmem:[%s60 + $0x4f8] sm:%s53]
        %693 = vst [vmem:[%s61 + $0x4ec] sm:%s53] %v692
        %v694 = vld [vmem:[%s60 + $0x4e0] sm:%s53]
        %695 = vst [vmem:[%s61 + $0x4f0] sm:%s53] %v694
        %v696 = vld [vmem:[%s60 + $0x4fc] sm:%s53]
        %697 = vst [vmem:[%s61 + $0x4f4] sm:%s53] %v696
        %v698 = vld [vmem:[%s60 + $0x4e4] sm:%s53]
        %699 = vst [vmem:[%s61 + $0x4f8] sm:%s53] %v698
        %v700 = vld [vmem:[%s60 + $0x500] sm:%s53]
        %701 = vst [vmem:[%s61 + $0x4fc] sm:%s53] %v700
        %v702 = vld [vmem:[%s60 + $0x4e8] sm:%s53]
        %703 = vst [vmem:[%s61 + $0x500] sm:%s53] %v702
        %v704 = vld [vmem:[%s60 + $0x504] sm:%s53]
        %705 = vst [vmem:[%s61 + $0x504] sm:%s53] %v704
        %v706 = vld [vmem:[%s60 + $0x508] sm:%s53]
        %707 = vst [vmem:[%s61 + $0x508] sm:%s53] %v706
        %v708 = vld [vmem:[%s60 + $0x524] sm:%s53]
        %709 = vst [vmem:[%s61 + $0x50c] sm:%s53] %v708
        %v710 = vld [vmem:[%s60 + $0x50c] sm:%s53]
        %711 = vst [vmem:[%s61 + $0x510] sm:%s53] %v710
        %v712 = vld [vmem:[%s60 + $0x528] sm:%s53]
        %713 = vst [vmem:[%s61 + $0x514] sm:%s53] %v712
        %v714 = vld [vmem:[%s60 + $0x510] sm:%s53]
        %715 = vst [vmem:[%s61 + $0x518] sm:%s53] %v714
        %v716 = vld [vmem:[%s60 + $0x52c] sm:%s53]
        %717 = vst [vmem:[%s61 + $0x51c] sm:%s53] %v716
        %v718 = vld [vmem:[%s60 + $0x514] sm:%s53]
        %719 = vst [vmem:[%s61 + $0x520] sm:%s53] %v718
        %v720 = vld [vmem:[%s60 + $0x530] sm:%s53]
        %721 = vst [vmem:[%s61 + $0x524] sm:%s53] %v720
        %v722 = vld [vmem:[%s60 + $0x518] sm:%s53]
        %723 = vst [vmem:[%s61 + $0x528] sm:%s53] %v722
        %v724 = vld [vmem:[%s60 + $0x534] sm:%s53]
        %725 = vst [vmem:[%s61 + $0x52c] sm:%s53] %v724
        %v726 = vld [vmem:[%s60 + $0x51c] sm:%s53]
        %727 = vst [vmem:[%s61 + $0x530] sm:%s53] %v726
        %v728 = vld [vmem:[%s60 + $0x538] sm:%s53]
        %729 = vst [vmem:[%s61 + $0x534] sm:%s53] %v728
        %v730 = vld [vmem:[%s60 + $0x520] sm:%s53]
        %731 = vst [vmem:[%s61 + $0x538] sm:%s53] %v730
        %v732 = vld [vmem:[%s60 + $0x53c] sm:%s53]
        %733 = vst [vmem:[%s61 + $0x53c] sm:%s53] %v732
        %v734 = vld [vmem:[%s60 + $0x540] sm:%s53]
        %735 = vst [vmem:[%s61 + $0x540] sm:%s53] %v734
        %v736 = vld [vmem:[%s60 + $0x55c] sm:%s53]
        %737 = vst [vmem:[%s61 + $0x544] sm:%s53] %v736
        %v738 = vld [vmem:[%s60 + $0x544] sm:%s53]
        %739 = vst [vmem:[%s61 + $0x548] sm:%s53] %v738
        %v740 = vld [vmem:[%s60 + $0x560] sm:%s53]
        %741 = vst [vmem:[%s61 + $0x54c] sm:%s53] %v740
        %v742 = vld [vmem:[%s60 + $0x548] sm:%s53]
        %743 = vst [vmem:[%s61 + $0x550] sm:%s53] %v742
        %v744 = vld [vmem:[%s60 + $0x564] sm:%s53]
        %745 = vst [vmem:[%s61 + $0x554] sm:%s53] %v744
        %v746 = vld [vmem:[%s60 + $0x54c] sm:%s53]
        %747 = vst [vmem:[%s61 + $0x558] sm:%s53] %v746
        %v748 = vld [vmem:[%s60 + $0x568] sm:%s53]
        %749 = vst [vmem:[%s61 + $0x55c] sm:%s53] %v748
        %v750 = vld [vmem:[%s60 + $0x550] sm:%s53]
        %751 = vst [vmem:[%s61 + $0x560] sm:%s53] %v750
        %v752 = vld [vmem:[%s60 + $0x56c] sm:%s53]
        %753 = vst [vmem:[%s61 + $0x564] sm:%s53] %v752
        %v754 = vld [vmem:[%s60 + $0x554] sm:%s53]
        %755 = vst [vmem:[%s61 + $0x568] sm:%s53] %v754
        %v756 = vld [vmem:[%s60 + $0x570] sm:%s53]
        %757 = vst [vmem:[%s61 + $0x56c] sm:%s53] %v756
        %v758 = vld [vmem:[%s60 + $0x558] sm:%s53]
        %759 = vst [vmem:[%s61 + $0x570] sm:%s53] %v758
        %v760 = vld [vmem:[%s60 + $0x574] sm:%s53]
        %761 = vst [vmem:[%s61 + $0x574] sm:%s53] %v760
      $region58: #{vgp_forward.1} parent=52 // loop_footer
        %s59 = sadd.s32 1, %s55
      $region59: #{vgp_forward.1} parent=52 // loop_footer_branch
        %54 = sbr.rel target = $region55
      $region60: #{vgp_forward.1} parent=52 // loop_exit
        _
    $region53: #{vgp_forward.1} parent=1 // pred_fallthru
      _
    // Predicated region
    $region79: #{vgp_forward.1} parent=1 // pred_check
      _
    $region80: #{vgp_forward.1} parent=1 // pred_check_branch
      %1491 = sbr.rel (0) target = $region82
    $region81: #{vgp_forward.1} parent=1 // pred_region
      %1492 = vsyncadd [#allocation3], 22400
    $region82: #{vgp_forward.1} parent=1 // pred_fallthru
      _
    %s1493 = sld [smem:[#allocation4]]
    %v1494 = vld [vmem:[%s0] sm:$0xff]
    %v1495 = vld [vmem:[%s0 + $0x8] sm:$0xff]
    %v1496 = vld [vmem:[%s0 + $0x10] sm:$0xff]
    %v1497 = vld [vmem:[%s0 + $0x18] sm:$0xf]
    %v1501 = vcombine.high %v1494, %v1494
    %v1502 = vcombine.high %v1495, %v1495
    %v1503 = vcombine.high %v1496, %v1496
    %v1507 = vpack.c.bf16 %v1494, %v1494
    %v1508 = vpack.c.bf16 %v1501, %v1501
    %v1509 = vpack.c.bf16 %v1495, %v1495
    %v1510 = vpack.c.bf16 %v1502, %v1502
    %v1511 = vpack.c.bf16 %v1496, %v1496
    %v1512 = vpack.c.bf16 %v1503, %v1503
    %v1513 = vpack.c.bf16 %v1497, %v1497
    %v1514 = vld [vmem:[%s1] sm:$0xff]
    %v1515 = vld [vmem:[%s1 + $0x8] sm:$0xff]
    %v1516 = vld [vmem:[%s1 + $0x10] sm:$0xff]
    %v1517 = vld [vmem:[%s1 + $0x18] sm:$0xff]
    %v1518 = vld [vmem:[%s1 + $0x20] sm:$0xff]
    %v1519 = vld [vmem:[%s1 + $0x28] sm:$0xff]
    %v1520 = vld [vmem:[%s1 + $0x30] sm:$0xff]
    %v1521 = vld [vmem:[%s1 + $0x38] sm:$0xff]
    %v1522 = vld [vmem:[%s1 + $0x40] sm:$0xff]
    %v1523 = vld [vmem:[%s1 + $0x48] sm:$0xff]
    %v1524 = vld [vmem:[%s1 + $0x50] sm:$0xff]
    %v1525 = vld [vmem:[%s1 + $0x58] sm:$0xff]
    %v1526 = vld [vmem:[%s1 + $0x60] sm:$0xff]
    %v1527 = vld [vmem:[%s1 + $0x68] sm:$0xff]
    %v1528 = vld [vmem:[%s1 + $0x70] sm:$0xff]
    %v1529 = vld [vmem:[%s1 + $0x78] sm:$0xff]
    %v1530 = vld [vmem:[%s1 + $0x80] sm:$0xff]
    %v1531 = vld [vmem:[%s1 + $0x88] sm:$0xff]
    %v1532 = vld [vmem:[%s1 + $0x90] sm:$0xff]
    %v1533 = vld [vmem:[%s1 + $0x98] sm:$0xff]
    %v1534 = vld [vmem:[%s1 + $0xa0] sm:$0xff]
    %v1535 = vld [vmem:[%s1 + $0xa8] sm:$0xff]
    %v1536 = vld [vmem:[%s1 + $0xb0] sm:$0xff]
    %v1537 = vld [vmem:[%s1 + $0xb8] sm:$0xff]
    %v1538 = vld [vmem:[%s1 + $0xc0] sm:$0xff]
    %v1539 = vld [vmem:[%s1 + $0xc8] sm:$0xff]
    %v1540 = vld [vmem:[%s1 + $0xd0] sm:$0xff]
    %v1541 = vld [vmem:[%s1 + $0xd8] sm:$0xff]
    %v1542 = vld [vmem:[%s1 + $0xe0] sm:$0xff]
    %v1543 = vld [vmem:[%s1 + $0xe8] sm:$0xff]
    %v1544 = vld [vmem:[%s1 + $0xf0] sm:$0xff]
    %v1545 = vld [vmem:[%s1 + $0xf8] sm:$0xff]
    %v1546 = vld [vmem:[%s1 + $0x100] sm:$0xff]
    %v1547 = vld [vmem:[%s1 + $0x108] sm:$0xff]
    %v1548 = vld [vmem:[%s1 + $0x110] sm:$0xff]
    %v1549 = vld [vmem:[%s1 + $0x118] sm:$0xff]
    %v1550 = vld [vmem:[%s1 + $0x120] sm:$0xff]
    %v1551 = vld [vmem:[%s1 + $0x128] sm:$0xff]
    %v1552 = vld [vmem:[%s1 + $0x130] sm:$0xff]
    %v1553 = vld [vmem:[%s1 + $0x138] sm:$0xff]
    %v1554 = vld [vmem:[%s1 + $0x140] sm:$0xff]
    %v1555 = vld [vmem:[%s1 + $0x148] sm:$0xff]
    %v1556 = vld [vmem:[%s1 + $0x150] sm:$0xff]
    %v1557 = vld [vmem:[%s1 + $0x158] sm:$0xff]
    %v1558 = vld [vmem:[%s1 + $0x160] sm:$0xff]
    %v1559 = vld [vmem:[%s1 + $0x168] sm:$0xff]
    %v1560 = vld [vmem:[%s1 + $0x170] sm:$0xff]
    %v1561 = vld [vmem:[%s1 + $0x178] sm:$0xff]
    %v1562 = vld [vmem:[%s1 + $0x180] sm:$0xff]
    %v1563 = vld [vmem:[%s1 + $0x188] sm:$0xff]
    %v1564 = vld [vmem:[%s1 + $0x190] sm:$0xff]
    %v1565 = vld [vmem:[%s1 + $0x198] sm:$0xff]
    %v1566 = vld [vmem:[%s1 + $0x1a0] sm:$0xff]
    %v1567 = vld [vmem:[%s1 + $0x1a8] sm:$0xff]
    %v1568 = vld [vmem:[%s1 + $0x1b0] sm:$0xff]
    %v1569 = vld [vmem:[%s1 + $0x1b8] sm:$0xff]
    %v1570 = vld [vmem:[%s1 + $0x1c0] sm:$0xff]
    %v1571 = vld [vmem:[%s1 + $0x1c8] sm:$0xff]
    %v1572 = vld [vmem:[%s1 + $0x1d0] sm:$0xff]
    %v1573 = vld [vmem:[%s1 + $0x1d8] sm:$0xff]
    %v1574 = vld [vmem:[%s1 + $0x1e0] sm:$0xff]
    %v1575 = vld [vmem:[%s1 + $0x1e8] sm:$0xff]
    %v1576 = vld [vmem:[%s1 + $0x1f0] sm:$0xff]
    %v1577 = vld [vmem:[%s1 + $0x1f8] sm:$0xff]
    %v1578 = vld [vmem:[%s1 + $0x200] sm:$0xff]
    %v1579 = vld [vmem:[%s1 + $0x208] sm:$0xff]
    %v1580 = vld [vmem:[%s1 + $0x210] sm:$0xff]
    %v1581 = vld [vmem:[%s1 + $0x218] sm:$0xff]
    %v1582 = vld [vmem:[%s1 + $0x220] sm:$0xff]
    %v1583 = vld [vmem:[%s1 + $0x228] sm:$0xff]
    %v1584 = vld [vmem:[%s1 + $0x230] sm:$0xff]
    %v1585 = vld [vmem:[%s1 + $0x238] sm:$0xff]
    %v1586 = vld [vmem:[%s1 + $0x240] sm:$0xff]
    %v1587 = vld [vmem:[%s1 + $0x248] sm:$0xff]
    %v1588 = vld [vmem:[%s1 + $0x250] sm:$0xff]
    %v1589 = vld [vmem:[%s1 + $0x258] sm:$0xff]
    %v1590 = vld [vmem:[%s1 + $0x260] sm:$0xff]
    %v1591 = vld [vmem:[%s1 + $0x268] sm:$0xff]
    %v1592 = vld [vmem:[%s1 + $0x270] sm:$0xff]
    %v1593 = vld [vmem:[%s1 + $0x278] sm:$0xff]
    %v1594 = vld [vmem:[%s1 + $0x280] sm:$0xff]
    %v1595 = vld [vmem:[%s1 + $0x288] sm:$0xff]
    %v1596 = vld [vmem:[%s1 + $0x290] sm:$0xff]
    %v1597 = vld [vmem:[%s1 + $0x298] sm:$0xff]
    %v1598 = vld [vmem:[%s1 + $0x2a0] sm:$0xff]
    %v1599 = vld [vmem:[%s1 + $0x2a8] sm:$0xff]
    %v1600 = vld [vmem:[%s1 + $0x2b0] sm:$0xff]
    %v1601 = vld [vmem:[%s1 + $0x2b8] sm:$0xff]
    %v1602 = vld [vmem:[%s1 + $0x2c0] sm:$0xff]
    %v1603 = vld [vmem:[%s1 + $0x2c8] sm:$0xff]
    %v1604 = vld [vmem:[%s1 + $0x2d0] sm:$0xff]
    %v1605 = vld [vmem:[%s1 + $0x2d8] sm:$0xff]
    %v1606 = vld [vmem:[%s1 + $0x2e0] sm:$0xff]
    %v1607 = vld [vmem:[%s1 + $0x2e8] sm:$0xff]
    %v1608 = vld [vmem:[%s1 + $0x2f0] sm:$0xff]
    %v1609 = vld [vmem:[%s1 + $0x2f8] sm:$0xff]
    %v1610 = vld [vmem:[%s1 + $0x300] sm:$0xff]
    %v1611 = vld [vmem:[%s1 + $0x308] sm:$0xff]
    %v1612 = vld [vmem:[%s1 + $0x310] sm:$0xff]
    %v1613 = vld [vmem:[%s1 + $0x318] sm:$0xff]
    %v1614 = vld [vmem:[%s1 + $0x320] sm:$0xff]
    %v1615 = vld [vmem:[%s1 + $0x328] sm:$0xff]
    %v1616 = vld [vmem:[%s1 + $0x330] sm:$0xff]
    %v1617 = vld [vmem:[%s1 + $0x338] sm:$0xff]
    %v1618 = vld [vmem:[%s1 + $0x340] sm:$0xff]
    %v1619 = vld [vmem:[%s1 + $0x348] sm:$0xff]
    %v1620 = vld [vmem:[%s1 + $0x350] sm:$0xff]
    %v1621 = vld [vmem:[%s1 + $0x358] sm:$0xff]
    %v1622 = vld [vmem:[%s1 + $0x360] sm:$0xff]
    %v1623 = vld [vmem:[%s1 + $0x368] sm:$0xff]
    %v1624 = vld [vmem:[%s1 + $0x370] sm:$0xff]
    %v1625 = vld [vmem:[%s1 + $0x378] sm:$0xff]
    %v1626 = vld [vmem:[%s1 + $0x380] sm:$0xff]
    %v1627 = vld [vmem:[%s1 + $0x388] sm:$0xff]
    %v1628 = vld [vmem:[%s1 + $0x390] sm:$0xff]
    %v1629 = vld [vmem:[%s1 + $0x398] sm:$0xff]
    %v1630 = vld [vmem:[%s1 + $0x3a0] sm:$0xff]
    %v1631 = vld [vmem:[%s1 + $0x3a8] sm:$0xff]
    %v1632 = vld [vmem:[%s1 + $0x3b0] sm:$0xff]
    %v1633 = vld [vmem:[%s1 + $0x3b8] sm:$0xff]
    %v1634 = vld [vmem:[%s1 + $0x3c0] sm:$0xff]
    %v1635 = vld [vmem:[%s1 + $0x3c8] sm:$0xff]
    %v1636 = vld [vmem:[%s1 + $0x3d0] sm:$0xff]
    %v1637 = vld [vmem:[%s1 + $0x3d8] sm:$0xff]
    %v1638 = vld [vmem:[%s1 + $0x3e0] sm:$0xff]
    %v1639 = vld [vmem:[%s1 + $0x3e8] sm:$0xff]
    %v1640 = vld [vmem:[%s1 + $0x3f0] sm:$0xff]
    %v1641 = vld [vmem:[%s1 + $0x3f8] sm:$0xff]
    %v1642 = vld [vmem:[%s1 + $0x400] sm:$0xff]
    %v1643 = vld [vmem:[%s1 + $0x408] sm:$0xff]
    %v1644 = vld [vmem:[%s1 + $0x410] sm:$0xff]
    %v1645 = vld [vmem:[%s1 + $0x418] sm:$0xff]
    %v1646 = vld [vmem:[%s1 + $0x420] sm:$0xff]
    %v1647 = vld [vmem:[%s1 + $0x428] sm:$0xff]
    %v1648 = vld [vmem:[%s1 + $0x430] sm:$0xff]
    %v1649 = vld [vmem:[%s1 + $0x438] sm:$0xff]
    %v1650 = vld [vmem:[%s1 + $0x440] sm:$0xff]
    %v1651 = vld [vmem:[%s1 + $0x448] sm:$0xff]
    %v1652 = vld [vmem:[%s1 + $0x450] sm:$0xff]
    %v1653 = vld [vmem:[%s1 + $0x458] sm:$0xff]
    %v1654 = vld [vmem:[%s1 + $0x460] sm:$0xff]
    %v1655 = vld [vmem:[%s1 + $0x468] sm:$0xff]
    %v1656 = vld [vmem:[%s1 + $0x470] sm:$0xff]
    %v1657 = vld [vmem:[%s1 + $0x478] sm:$0xff]
    %v1658 = vld [vmem:[%s1 + $0x480] sm:$0xff]
    %v1659 = vld [vmem:[%s1 + $0x488] sm:$0xff]
    %v1660 = vld [vmem:[%s1 + $0x490] sm:$0xff]
    %v1661 = vld [vmem:[%s1 + $0x498] sm:$0xff]
    %v1662 = vld [vmem:[%s1 + $0x4a0] sm:$0xff]
    %v1663 = vld [vmem:[%s1 + $0x4a8] sm:$0xff]
    %v1664 = vld [vmem:[%s1 + $0x4b0] sm:$0xff]
    %v1665 = vld [vmem:[%s1 + $0x4b8] sm:$0xff]
    %v1666 = vld [vmem:[%s1 + $0x4c0] sm:$0xff]
    %v1667 = vld [vmem:[%s1 + $0x4c8] sm:$0xff]
    %v1668 = vld [vmem:[%s1 + $0x4d0] sm:$0xff]
    %v1669 = vld [vmem:[%s1 + $0x4d8] sm:$0xff]
    %v1670 = vld [vmem:[%s1 + $0x4e0] sm:$0xff]
    %v1671 = vld [vmem:[%s1 + $0x4e8] sm:$0xff]
    %v1672 = vld [vmem:[%s1 + $0x4f0] sm:$0xff]
    %v1673 = vld [vmem:[%s1 + $0x4f8] sm:$0xff]
    %v1674 = vld [vmem:[%s1 + $0x500] sm:$0xff]
    %v1675 = vld [vmem:[%s1 + $0x508] sm:$0xff]
    %v1676 = vld [vmem:[%s1 + $0x510] sm:$0xff]
    %v1677 = vld [vmem:[%s1 + $0x518] sm:$0xff]
    %v1678 = vld [vmem:[%s1 + $0x520] sm:$0xff]
    %v1679 = vld [vmem:[%s1 + $0x528] sm:$0xff]
    %v1680 = vld [vmem:[%s1 + $0x530] sm:$0xff]
    %v1681 = vld [vmem:[%s1 + $0x538] sm:$0xff]
    %v1682 = vld [vmem:[%s1 + $0x540] sm:$0xff]
    %v1683 = vld [vmem:[%s1 + $0x548] sm:$0xff]
    %v1684 = vld [vmem:[%s1 + $0x550] sm:$0xff]
    %v1685 = vld [vmem:[%s1 + $0x558] sm:$0xff]
    %v1686 = vld [vmem:[%s1 + $0x560] sm:$0xff]
    %v1687 = vld [vmem:[%s1 + $0x568] sm:$0xff]
    %v1688 = vld [vmem:[%s1 + $0x570] sm:$0xff]
    %v1689 = vld [vmem:[%s1 + $0x578] sm:$0xff]
    %v1690 = vld [vmem:[%s1 + $0x580] sm:$0xff]
    %v1691 = vld [vmem:[%s1 + $0x588] sm:$0xff]
    %v1692 = vld [vmem:[%s1 + $0x590] sm:$0xff]
    %v1693 = vld [vmem:[%s1 + $0x598] sm:$0xff]
    %v1694 = vld [vmem:[%s1 + $0x5a0] sm:$0xff]
    %v1695 = vld [vmem:[%s1 + $0x5a8] sm:$0xff]
    %v1696 = vld [vmem:[%s1 + $0x5b0] sm:$0xff]
    %v1697 = vld [vmem:[%s1 + $0x5b8] sm:$0xff]
    %v1698 = vld [vmem:[%s1 + $0x5c0] sm:$0xff]
    %v1699 = vld [vmem:[%s1 + $0x5c8] sm:$0xff]
    %v1700 = vld [vmem:[%s1 + $0x5d0] sm:$0xff]
    %v1701 = vld [vmem:[%s1 + $0x5d8] sm:$0xff]
    %v1702 = vld [vmem:[%s1 + $0x5e0] sm:$0xff]
    %v1703 = vld [vmem:[%s1 + $0x5e8] sm:$0xff]
    %v1704 = vld [vmem:[%s1 + $0x5f0] sm:$0xff]
    %v1705 = vld [vmem:[%s1 + $0x5f8] sm:$0xff]
    %v1706 = vld [vmem:[%s1 + $0x600] sm:$0xff]
    %v1707 = vld [vmem:[%s1 + $0x608] sm:$0xff]
    %v1708 = vld [vmem:[%s1 + $0x610] sm:$0xff]
    %v1709 = vld [vmem:[%s1 + $0x618] sm:$0xff]
    %v1710 = vld [vmem:[%s2] sm:$0xf]
    %v1712 = vlaneseq
    %v1713 = vshrl.u32 %v1712, 7
    %v1714 = vsub.s32 0, %v1713
    %v1715 = vrot.slane %v1710, %v1714
    %v1716 = vlaneseq
    %v1717 = vshrl.u32 %v1716, 7
    %v1718 = vsub.s32 1, %v1717
    %v1719 = vrot.slane %v1710, %v1718
    %v1720 = vlaneseq
    %v1721 = vshrl.u32 %v1720, 7
    %v1722 = vsub.s32 2, %v1721
    %v1723 = vrot.slane %v1710, %v1722
    %v1724 = vlaneseq
    %v1725 = vshrl.u32 %v1724, 7
    %v1726 = vsub.s32 3, %v1725
    %v1727 = vrot.slane %v1710, %v1726
    %v1928 = vunpack.c.l.b16 %v1514
    %v1929 = vunpack.c.h.b16 %v1514
    %v1930 = vunpack.c.l.b16 %v1515
    %v1931 = vunpack.c.h.b16 %v1515
    %v1932 = vunpack.c.l.b16 %v1516
    %v1933 = vunpack.c.h.b16 %v1516
    %v1934 = vunpack.c.l.b16 %v1517
    %v1935 = vunpack.c.h.b16 %v1517
    %v1936 = vunpack.c.l.b16 %v1518
    %v1937 = vunpack.c.h.b16 %v1518
    %v1938 = vunpack.c.l.b16 %v1519
    %v1939 = vunpack.c.h.b16 %v1519
    %v1940 = vunpack.c.l.b16 %v1520
    %v1941 = vunpack.c.h.b16 %v1520
    %v1942 = vunpack.c.l.b16 %v1521
    %v1943 = vunpack.c.h.b16 %v1521
    %v1944 = vunpack.c.l.b16 %v1522
    %v1945 = vunpack.c.h.b16 %v1522
    %v1946 = vunpack.c.l.b16 %v1523
    %v1947 = vunpack.c.h.b16 %v1523
    %v1948 = vunpack.c.l.b16 %v1524
    %v1949 = vunpack.c.h.b16 %v1524
    %v1950 = vunpack.c.l.b16 %v1525
    %v1951 = vunpack.c.h.b16 %v1525
    %v1952 = vunpack.c.l.b16 %v1526
    %v1953 = vunpack.c.h.b16 %v1526
    %v1954 = vunpack.c.l.b16 %v1527
    %v1955 = vunpack.c.h.b16 %v1527
    %v1956 = vunpack.c.l.b16 %v1528
    %v1957 = vunpack.c.h.b16 %v1528
    %v1958 = vunpack.c.l.b16 %v1529
    %v1959 = vunpack.c.h.b16 %v1529
    %v1960 = vunpack.c.l.b16 %v1530
    %v1961 = vunpack.c.h.b16 %v1530
    %v1962 = vunpack.c.l.b16 %v1531
    %v1963 = vunpack.c.h.b16 %v1531
    %v1964 = vunpack.c.l.b16 %v1532
    %v1965 = vunpack.c.h.b16 %v1532
    %v1966 = vunpack.c.l.b16 %v1533
    %v1967 = vunpack.c.h.b16 %v1533
    %v1968 = vunpack.c.l.b16 %v1534
    %v1969 = vunpack.c.h.b16 %v1534
    %v1970 = vunpack.c.l.b16 %v1535
    %v1971 = vunpack.c.h.b16 %v1535
    %v1972 = vunpack.c.l.b16 %v1536
    %v1973 = vunpack.c.h.b16 %v1536
    %v1974 = vunpack.c.l.b16 %v1537
    %v1975 = vunpack.c.h.b16 %v1537
    %v1976 = vunpack.c.l.b16 %v1538
    %v1977 = vunpack.c.h.b16 %v1538
    %v1978 = vunpack.c.l.b16 %v1539
    %v1979 = vunpack.c.h.b16 %v1539
    %v1980 = vunpack.c.l.b16 %v1540
    %v1981 = vunpack.c.h.b16 %v1540
    %v1982 = vunpack.c.l.b16 %v1541
    %v1983 = vunpack.c.h.b16 %v1541
    %v1984 = vunpack.c.l.b16 %v1542
    %v1985 = vunpack.c.h.b16 %v1542
    %v1986 = vunpack.c.l.b16 %v1543
    %v1987 = vunpack.c.h.b16 %v1543
    %v1988 = vunpack.c.l.b16 %v1544
    %v1989 = vunpack.c.h.b16 %v1544
    %v1990 = vunpack.c.l.b16 %v1545
    %v1991 = vunpack.c.h.b16 %v1545
    %v1992 = vunpack.c.l.b16 %v1546
    %v1993 = vunpack.c.h.b16 %v1546
    %v1994 = vunpack.c.l.b16 %v1547
    %v1995 = vunpack.c.h.b16 %v1547
    %v1996 = vunpack.c.l.b16 %v1548
    %v1997 = vunpack.c.h.b16 %v1548
    %v1998 = vunpack.c.l.b16 %v1549
    %v1999 = vunpack.c.h.b16 %v1549
    %v2000 = vunpack.c.l.b16 %v1550
    %v2001 = vunpack.c.h.b16 %v1550
    %v2002 = vunpack.c.l.b16 %v1551
    %v2003 = vunpack.c.h.b16 %v1551
    %v2004 = vunpack.c.l.b16 %v1552
    %v2005 = vunpack.c.h.b16 %v1552
    %v2006 = vunpack.c.l.b16 %v1553
    %v2007 = vunpack.c.h.b16 %v1553
    %v2008 = vunpack.c.l.b16 %v1554
    %v2009 = vunpack.c.h.b16 %v1554
    %v2010 = vunpack.c.l.b16 %v1555
    %v2011 = vunpack.c.h.b16 %v1555
    %v2012 = vunpack.c.l.b16 %v1556
    %v2013 = vunpack.c.h.b16 %v1556
    %v2014 = vunpack.c.l.b16 %v1557
    %v2015 = vunpack.c.h.b16 %v1557
    %v2016 = vunpack.c.l.b16 %v1558
    %v2017 = vunpack.c.h.b16 %v1558
    %v2018 = vunpack.c.l.b16 %v1559
    %v2019 = vunpack.c.h.b16 %v1559
    %v2020 = vunpack.c.l.b16 %v1560
    %v2021 = vunpack.c.h.b16 %v1560
    %v2022 = vunpack.c.l.b16 %v1561
    %v2023 = vunpack.c.h.b16 %v1561
    %v2024 = vunpack.c.l.b16 %v1562
    %v2025 = vunpack.c.h.b16 %v1562
    %v2026 = vunpack.c.l.b16 %v1563
    %v2027 = vunpack.c.h.b16 %v1563
    %v2028 = vunpack.c.l.b16 %v1564
    %v2029 = vunpack.c.h.b16 %v1564
    %v2030 = vunpack.c.l.b16 %v1565
    %v2031 = vunpack.c.h.b16 %v1565
    %v2032 = vunpack.c.l.b16 %v1566
    %v2033 = vunpack.c.h.b16 %v1566
    %v2034 = vunpack.c.l.b16 %v1567
    %v2035 = vunpack.c.h.b16 %v1567
    %v2036 = vunpack.c.l.b16 %v1568
    %v2037 = vunpack.c.h.b16 %v1568
    %v2038 = vunpack.c.l.b16 %v1569
    %v2039 = vunpack.c.h.b16 %v1569
    %v2040 = vunpack.c.l.b16 %v1570
    %v2041 = vunpack.c.h.b16 %v1570
    %v2042 = vunpack.c.l.b16 %v1571
    %v2043 = vunpack.c.h.b16 %v1571
    %v2044 = vunpack.c.l.b16 %v1572
    %v2045 = vunpack.c.h.b16 %v1572
    %v2046 = vunpack.c.l.b16 %v1573
    %v2047 = vunpack.c.h.b16 %v1573
    %v2048 = vunpack.c.l.b16 %v1574
    %v2049 = vunpack.c.h.b16 %v1574
    %v2050 = vunpack.c.l.b16 %v1575
    %v2051 = vunpack.c.h.b16 %v1575
    %v2052 = vunpack.c.l.b16 %v1576
    %v2053 = vunpack.c.h.b16 %v1576
    %v2054 = vunpack.c.l.b16 %v1577
    %v2055 = vunpack.c.h.b16 %v1577
    %v2056 = vunpack.c.l.b16 %v1578
    %v2057 = vunpack.c.h.b16 %v1578
    %v2058 = vunpack.c.l.b16 %v1579
    %v2059 = vunpack.c.h.b16 %v1579
    %v2060 = vunpack.c.l.b16 %v1580
    %v2061 = vunpack.c.h.b16 %v1580
    %v2062 = vunpack.c.l.b16 %v1581
    %v2063 = vunpack.c.h.b16 %v1581
    %v2064 = vunpack.c.l.b16 %v1582
    %v2065 = vunpack.c.h.b16 %v1582
    %v2066 = vunpack.c.l.b16 %v1583
    %v2067 = vunpack.c.h.b16 %v1583
    %v2068 = vunpack.c.l.b16 %v1584
    %v2069 = vunpack.c.h.b16 %v1584
    %v2070 = vunpack.c.l.b16 %v1585
    %v2071 = vunpack.c.h.b16 %v1585
    %v2072 = vunpack.c.l.b16 %v1586
    %v2073 = vunpack.c.h.b16 %v1586
    %v2074 = vunpack.c.l.b16 %v1587
    %v2075 = vunpack.c.h.b16 %v1587
    %v2076 = vunpack.c.l.b16 %v1588
    %v2077 = vunpack.c.h.b16 %v1588
    %v2078 = vunpack.c.l.b16 %v1589
    %v2079 = vunpack.c.h.b16 %v1589
    %v2080 = vunpack.c.l.b16 %v1590
    %v2081 = vunpack.c.h.b16 %v1590
    %v2082 = vunpack.c.l.b16 %v1591
    %v2083 = vunpack.c.h.b16 %v1591
    %v2084 = vunpack.c.l.b16 %v1592
    %v2085 = vunpack.c.h.b16 %v1592
    %v2086 = vunpack.c.l.b16 %v1593
    %v2087 = vunpack.c.h.b16 %v1593
    %v2088 = vunpack.c.l.b16 %v1594
    %v2089 = vunpack.c.h.b16 %v1594
    %v2090 = vunpack.c.l.b16 %v1595
    %v2091 = vunpack.c.h.b16 %v1595
    %v2092 = vunpack.c.l.b16 %v1596
    %v2093 = vunpack.c.h.b16 %v1596
    %v2094 = vunpack.c.l.b16 %v1597
    %v2095 = vunpack.c.h.b16 %v1597
    %v2096 = vunpack.c.l.b16 %v1598
    %v2097 = vunpack.c.h.b16 %v1598
    %v2098 = vunpack.c.l.b16 %v1599
    %v2099 = vunpack.c.h.b16 %v1599
    %v2100 = vunpack.c.l.b16 %v1600
    %v2101 = vunpack.c.h.b16 %v1600
    %v2102 = vunpack.c.l.b16 %v1601
    %v2103 = vunpack.c.h.b16 %v1601
    %v2104 = vunpack.c.l.b16 %v1602
    %v2105 = vunpack.c.h.b16 %v1602
    %v2106 = vunpack.c.l.b16 %v1603
    %v2107 = vunpack.c.h.b16 %v1603
    %v2108 = vunpack.c.l.b16 %v1604
    %v2109 = vunpack.c.h.b16 %v1604
    %v2110 = vunpack.c.l.b16 %v1605
    %v2111 = vunpack.c.h.b16 %v1605
    %v2112 = vunpack.c.l.b16 %v1606
    %v2113 = vunpack.c.h.b16 %v1606
    %v2114 = vunpack.c.l.b16 %v1607
    %v2115 = vunpack.c.h.b16 %v1607
    %v2116 = vunpack.c.l.b16 %v1608
    %v2117 = vunpack.c.h.b16 %v1608
    %v2118 = vunpack.c.l.b16 %v1609
    %v2119 = vunpack.c.h.b16 %v1609
    %v2120 = vunpack.c.l.b16 %v1610
    %v2121 = vunpack.c.h.b16 %v1610
    %v2122 = vunpack.c.l.b16 %v1611
    %v2123 = vunpack.c.h.b16 %v1611
    %v2124 = vunpack.c.l.b16 %v1612
    %v2125 = vunpack.c.h.b16 %v1612
    %v2126 = vunpack.c.l.b16 %v1613
    %v2127 = vunpack.c.h.b16 %v1613
    %v2128 = vunpack.c.l.b16 %v1614
    %v2129 = vunpack.c.h.b16 %v1614
    %v2130 = vunpack.c.l.b16 %v1615
    %v2131 = vunpack.c.h.b16 %v1615
    %v2132 = vunpack.c.l.b16 %v1616
    %v2133 = vunpack.c.h.b16 %v1616
    %v2134 = vunpack.c.l.b16 %v1617
    %v2135 = vunpack.c.h.b16 %v1617
    %v2136 = vunpack.c.l.b16 %v1618
    %v2137 = vunpack.c.h.b16 %v1618
    %v2138 = vunpack.c.l.b16 %v1619
    %v2139 = vunpack.c.h.b16 %v1619
    %v2140 = vunpack.c.l.b16 %v1620
    %v2141 = vunpack.c.h.b16 %v1620
    %v2142 = vunpack.c.l.b16 %v1621
    %v2143 = vunpack.c.h.b16 %v1621
    %v2144 = vunpack.c.l.b16 %v1622
    %v2145 = vunpack.c.h.b16 %v1622
    %v2146 = vunpack.c.l.b16 %v1623
    %v2147 = vunpack.c.h.b16 %v1623
    %v2148 = vunpack.c.l.b16 %v1624
    %v2149 = vunpack.c.h.b16 %v1624
    %v2150 = vunpack.c.l.b16 %v1625
    %v2151 = vunpack.c.h.b16 %v1625
    %v2152 = vunpack.c.l.b16 %v1626
    %v2153 = vunpack.c.h.b16 %v1626
    %v2154 = vunpack.c.l.b16 %v1627
    %v2155 = vunpack.c.h.b16 %v1627
    %v2156 = vunpack.c.l.b16 %v1628
    %v2157 = vunpack.c.h.b16 %v1628
    %v2158 = vunpack.c.l.b16 %v1629
    %v2159 = vunpack.c.h.b16 %v1629
    %v2160 = vunpack.c.l.b16 %v1630
    %v2161 = vunpack.c.h.b16 %v1630
    %v2162 = vunpack.c.l.b16 %v1631
    %v2163 = vunpack.c.h.b16 %v1631
    %v2164 = vunpack.c.l.b16 %v1632
    %v2165 = vunpack.c.h.b16 %v1632
    %v2166 = vunpack.c.l.b16 %v1633
    %v2167 = vunpack.c.h.b16 %v1633
    %v2168 = vunpack.c.l.b16 %v1634
    %v2169 = vunpack.c.h.b16 %v1634
    %v2170 = vunpack.c.l.b16 %v1635
    %v2171 = vunpack.c.h.b16 %v1635
    %v2172 = vunpack.c.l.b16 %v1636
    %v2173 = vunpack.c.h.b16 %v1636
    %v2174 = vunpack.c.l.b16 %v1637
    %v2175 = vunpack.c.h.b16 %v1637
    %v2176 = vunpack.c.l.b16 %v1638
    %v2177 = vunpack.c.h.b16 %v1638
    %v2178 = vunpack.c.l.b16 %v1639
    %v2179 = vunpack.c.h.b16 %v1639
    %v2180 = vunpack.c.l.b16 %v1640
    %v2181 = vunpack.c.h.b16 %v1640
    %v2182 = vunpack.c.l.b16 %v1641
    %v2183 = vunpack.c.h.b16 %v1641
    %v2184 = vunpack.c.l.b16 %v1642
    %v2185 = vunpack.c.h.b16 %v1642
    %v2186 = vunpack.c.l.b16 %v1643
    %v2187 = vunpack.c.h.b16 %v1643
    %v2188 = vunpack.c.l.b16 %v1644
    %v2189 = vunpack.c.h.b16 %v1644
    %v2190 = vunpack.c.l.b16 %v1645
    %v2191 = vunpack.c.h.b16 %v1645
    %v2192 = vunpack.c.l.b16 %v1646
    %v2193 = vunpack.c.h.b16 %v1646
    %v2194 = vunpack.c.l.b16 %v1647
    %v2195 = vunpack.c.h.b16 %v1647
    %v2196 = vunpack.c.l.b16 %v1648
    %v2197 = vunpack.c.h.b16 %v1648
    %v2198 = vunpack.c.l.b16 %v1649
    %v2199 = vunpack.c.h.b16 %v1649
    %v2200 = vunpack.c.l.b16 %v1650
    %v2201 = vunpack.c.h.b16 %v1650
    %v2202 = vunpack.c.l.b16 %v1651
    %v2203 = vunpack.c.h.b16 %v1651
    %v2204 = vunpack.c.l.b16 %v1652
    %v2205 = vunpack.c.h.b16 %v1652
    %v2206 = vunpack.c.l.b16 %v1653
    %v2207 = vunpack.c.h.b16 %v1653
    %v2208 = vunpack.c.l.b16 %v1654
    %v2209 = vunpack.c.h.b16 %v1654
    %v2210 = vunpack.c.l.b16 %v1655
    %v2211 = vunpack.c.h.b16 %v1655
    %v2212 = vunpack.c.l.b16 %v1656
    %v2213 = vunpack.c.h.b16 %v1656
    %v2214 = vunpack.c.l.b16 %v1657
    %v2215 = vunpack.c.h.b16 %v1657
    %v2216 = vunpack.c.l.b16 %v1658
    %v2217 = vunpack.c.h.b16 %v1658
    %v2218 = vunpack.c.l.b16 %v1659
    %v2219 = vunpack.c.h.b16 %v1659
    %v2220 = vunpack.c.l.b16 %v1660
    %v2221 = vunpack.c.h.b16 %v1660
    %v2222 = vunpack.c.l.b16 %v1661
    %v2223 = vunpack.c.h.b16 %v1661
    %v2224 = vunpack.c.l.b16 %v1662
    %v2225 = vunpack.c.h.b16 %v1662
    %v2226 = vunpack.c.l.b16 %v1663
    %v2227 = vunpack.c.h.b16 %v1663
    %v2228 = vunpack.c.l.b16 %v1664
    %v2229 = vunpack.c.h.b16 %v1664
    %v2230 = vunpack.c.l.b16 %v1665
    %v2231 = vunpack.c.h.b16 %v1665
    %v2232 = vunpack.c.l.b16 %v1666
    %v2233 = vunpack.c.h.b16 %v1666
    %v2234 = vunpack.c.l.b16 %v1667
    %v2235 = vunpack.c.h.b16 %v1667
    %v2236 = vunpack.c.l.b16 %v1668
    %v2237 = vunpack.c.h.b16 %v1668
    %v2238 = vunpack.c.l.b16 %v1669
    %v2239 = vunpack.c.h.b16 %v1669
    %v2240 = vunpack.c.l.b16 %v1670
    %v2241 = vunpack.c.h.b16 %v1670
    %v2242 = vunpack.c.l.b16 %v1671
    %v2243 = vunpack.c.h.b16 %v1671
    %v2244 = vunpack.c.l.b16 %v1672
    %v2245 = vunpack.c.h.b16 %v1672
    %v2246 = vunpack.c.l.b16 %v1673
    %v2247 = vunpack.c.h.b16 %v1673
    %v2248 = vunpack.c.l.b16 %v1674
    %v2249 = vunpack.c.h.b16 %v1674
    %v2250 = vunpack.c.l.b16 %v1675
    %v2251 = vunpack.c.h.b16 %v1675
    %v2252 = vunpack.c.l.b16 %v1676
    %v2253 = vunpack.c.h.b16 %v1676
    %v2254 = vunpack.c.l.b16 %v1677
    %v2255 = vunpack.c.h.b16 %v1677
    %v2256 = vunpack.c.l.b16 %v1678
    %v2257 = vunpack.c.h.b16 %v1678
    %v2258 = vunpack.c.l.b16 %v1679
    %v2259 = vunpack.c.h.b16 %v1679
    %v2260 = vunpack.c.l.b16 %v1680
    %v2261 = vunpack.c.h.b16 %v1680
    %v2262 = vunpack.c.l.b16 %v1681
    %v2263 = vunpack.c.h.b16 %v1681
    %v2264 = vunpack.c.l.b16 %v1682
    %v2265 = vunpack.c.h.b16 %v1682
    %v2266 = vunpack.c.l.b16 %v1683
    %v2267 = vunpack.c.h.b16 %v1683
    %v2268 = vunpack.c.l.b16 %v1684
    %v2269 = vunpack.c.h.b16 %v1684
    %v2270 = vunpack.c.l.b16 %v1685
    %v2271 = vunpack.c.h.b16 %v1685
    %v2272 = vunpack.c.l.b16 %v1686
    %v2273 = vunpack.c.h.b16 %v1686
    %v2274 = vunpack.c.l.b16 %v1687
    %v2275 = vunpack.c.h.b16 %v1687
    %v2276 = vunpack.c.l.b16 %v1688
    %v2277 = vunpack.c.h.b16 %v1688
    %v2278 = vunpack.c.l.b16 %v1689
    %v2279 = vunpack.c.h.b16 %v1689
    %v2280 = vunpack.c.l.b16 %v1690
    %v2281 = vunpack.c.h.b16 %v1690
    %v2282 = vunpack.c.l.b16 %v1691
    %v2283 = vunpack.c.h.b16 %v1691
    %v2284 = vunpack.c.l.b16 %v1692
    %v2285 = vunpack.c.h.b16 %v1692
    %v2286 = vunpack.c.l.b16 %v1693
    %v2287 = vunpack.c.h.b16 %v1693
    %v2288 = vunpack.c.l.b16 %v1694
    %v2289 = vunpack.c.h.b16 %v1694
    %v2290 = vunpack.c.l.b16 %v1695
    %v2291 = vunpack.c.h.b16 %v1695
    %v2292 = vunpack.c.l.b16 %v1696
    %v2293 = vunpack.c.h.b16 %v1696
    %v2294 = vunpack.c.l.b16 %v1697
    %v2295 = vunpack.c.h.b16 %v1697
    %v2296 = vunpack.c.l.b16 %v1698
    %v2297 = vunpack.c.h.b16 %v1698
    %v2298 = vunpack.c.l.b16 %v1699
    %v2299 = vunpack.c.h.b16 %v1699
    %v2300 = vunpack.c.l.b16 %v1700
    %v2301 = vunpack.c.h.b16 %v1700
    %v2302 = vunpack.c.l.b16 %v1701
    %v2303 = vunpack.c.h.b16 %v1701
    %v2304 = vunpack.c.l.b16 %v1702
    %v2305 = vunpack.c.h.b16 %v1702
    %v2306 = vunpack.c.l.b16 %v1703
    %v2307 = vunpack.c.h.b16 %v1703
    %v2308 = vunpack.c.l.b16 %v1704
    %v2309 = vunpack.c.h.b16 %v1704
    %v2310 = vunpack.c.l.b16 %v1705
    %v2311 = vunpack.c.h.b16 %v1705
    %v2312 = vunpack.c.l.b16 %v1706
    %v2313 = vunpack.c.h.b16 %v1706
    %v2314 = vunpack.c.l.b16 %v1707
    %v2315 = vunpack.c.h.b16 %v1707
    %v2316 = vunpack.c.l.b16 %v1708
    %v2317 = vunpack.c.h.b16 %v1708
    %v2318 = vunpack.c.l.b16 %v1709
    %v2319 = vunpack.c.h.b16 %v1709
    %v2320 = vpack.c.b16 %v1932, %v1928
    %v2321 = vpack.c.b16 %v1933, %v1929
    %v2322 = vpack.c.b16 %v1934, %v1930
    %v2323 = vpack.c.b16 %v1935, %v1931
    %v2324 = vpack.c.b16 %v1940, %v1936
    %v2325 = vpack.c.b16 %v1941, %v1937
    %v2326 = vpack.c.b16 %v1942, %v1938
    %v2327 = vpack.c.b16 %v1943, %v1939
    %v2328 = vpack.c.b16 %v1948, %v1944
    %v2329 = vpack.c.b16 %v1949, %v1945
    %v2330 = vpack.c.b16 %v1950, %v1946
    %v2331 = vpack.c.b16 %v1951, %v1947
    %v2332 = vpack.c.b16 %v1956, %v1952
    %v2333 = vpack.c.b16 %v1957, %v1953
    %v2334 = vpack.c.b16 %v1958, %v1954
    %v2335 = vpack.c.b16 %v1959, %v1955
    %v2336 = vpack.c.b16 %v1964, %v1960
    %v2337 = vpack.c.b16 %v1965, %v1961
    %v2338 = vpack.c.b16 %v1966, %v1962
    %v2339 = vpack.c.b16 %v1967, %v1963
    %v2340 = vpack.c.b16 %v1972, %v1968
    %v2341 = vpack.c.b16 %v1973, %v1969
    %v2342 = vpack.c.b16 %v1974, %v1970
    %v2343 = vpack.c.b16 %v1975, %v1971
    %v2344 = vpack.c.b16 %v1980, %v1976
    %v2345 = vpack.c.b16 %v1981, %v1977
    %v2346 = vpack.c.b16 %v1982, %v1978
    %v2347 = vpack.c.b16 %v1983, %v1979
    %v2348 = vpack.c.b16 %v1988, %v1984
    %v2349 = vpack.c.b16 %v1989, %v1985
    %v2350 = vpack.c.b16 %v1990, %v1986
    %v2351 = vpack.c.b16 %v1991, %v1987
    %v2352 = vpack.c.b16 %v1996, %v1992
    %v2353 = vpack.c.b16 %v1997, %v1993
    %v2354 = vpack.c.b16 %v1998, %v1994
    %v2355 = vpack.c.b16 %v1999, %v1995
    %v2356 = vpack.c.b16 %v2004, %v2000
    %v2357 = vpack.c.b16 %v2005, %v2001
    %v2358 = vpack.c.b16 %v2006, %v2002
    %v2359 = vpack.c.b16 %v2007, %v2003
    %v2360 = vpack.c.b16 %v2012, %v2008
    %v2361 = vpack.c.b16 %v2013, %v2009
    %v2362 = vpack.c.b16 %v2014, %v2010
    %v2363 = vpack.c.b16 %v2015, %v2011
    %v2364 = vpack.c.b16 %v2020, %v2016
    %v2365 = vpack.c.b16 %v2021, %v2017
    %v2366 = vpack.c.b16 %v2022, %v2018
    %v2367 = vpack.c.b16 %v2023, %v2019
    %v2368 = vpack.c.b16 %v2028, %v2024
    %v2369 = vpack.c.b16 %v2029, %v2025
    %v2370 = vpack.c.b16 %v2030, %v2026
    %v2371 = vpack.c.b16 %v2031, %v2027
    %v2372 = vpack.c.b16 %v2036, %v2032
    %v2373 = vpack.c.b16 %v2037, %v2033
    %v2374 = vpack.c.b16 %v2038, %v2034
    %v2375 = vpack.c.b16 %v2039, %v2035
    %v2376 = vpack.c.b16 %v2044, %v2040
    %v2377 = vpack.c.b16 %v2045, %v2041
    %v2378 = vpack.c.b16 %v2046, %v2042
    %v2379 = vpack.c.b16 %v2047, %v2043
    %v2380 = vpack.c.b16 %v2052, %v2048
    %v2381 = vpack.c.b16 %v2053, %v2049
    %v2382 = vpack.c.b16 %v2054, %v2050
    %v2383 = vpack.c.b16 %v2055, %v2051
    %v2384 = vpack.c.b16 %v2060, %v2056
    %v2385 = vpack.c.b16 %v2061, %v2057
    %v2386 = vpack.c.b16 %v2062, %v2058
    %v2387 = vpack.c.b16 %v2063, %v2059
    %v2388 = vpack.c.b16 %v2068, %v2064
    %v2389 = vpack.c.b16 %v2069, %v2065
    %v2390 = vpack.c.b16 %v2070, %v2066
    %v2391 = vpack.c.b16 %v2071, %v2067
    %v2392 = vpack.c.b16 %v2076, %v2072
    %v2393 = vpack.c.b16 %v2077, %v2073
    %v2394 = vpack.c.b16 %v2078, %v2074
    %v2395 = vpack.c.b16 %v2079, %v2075
    %v2396 = vpack.c.b16 %v2084, %v2080
    %v2397 = vpack.c.b16 %v2085, %v2081
    %v2398 = vpack.c.b16 %v2086, %v2082
    %v2399 = vpack.c.b16 %v2087, %v2083
    %v2400 = vpack.c.b16 %v2092, %v2088
    %v2401 = vpack.c.b16 %v2093, %v2089
    %v2402 = vpack.c.b16 %v2094, %v2090
    %v2403 = vpack.c.b16 %v2095, %v2091
    %v2404 = vpack.c.b16 %v2100, %v2096
    %v2405 = vpack.c.b16 %v2101, %v2097
    %v2406 = vpack.c.b16 %v2102, %v2098
    %v2407 = vpack.c.b16 %v2103, %v2099
    %v2408 = vpack.c.b16 %v2108, %v2104
    %v2409 = vpack.c.b16 %v2109, %v2105
    %v2410 = vpack.c.b16 %v2110, %v2106
    %v2411 = vpack.c.b16 %v2111, %v2107
    %v2412 = vpack.c.b16 %v2116, %v2112
    %v2413 = vpack.c.b16 %v2117, %v2113
    %v2414 = vpack.c.b16 %v2118, %v2114
    %v2415 = vpack.c.b16 %v2119, %v2115
    %v2416 = vpack.c.b16 %v2124, %v2120
    %v2417 = vpack.c.b16 %v2125, %v2121
    %v2418 = vpack.c.b16 %v2126, %v2122
    %v2419 = vpack.c.b16 %v2127, %v2123
    %v2420 = vpack.c.b16 %v2132, %v2128
    %v2421 = vpack.c.b16 %v2133, %v2129
    %v2422 = vpack.c.b16 %v2134, %v2130
    %v2423 = vpack.c.b16 %v2135, %v2131
    %v2424 = vpack.c.b16 %v2140, %v2136
    %v2425 = vpack.c.b16 %v2141, %v2137
    %v2426 = vpack.c.b16 %v2142, %v2138
    %v2427 = vpack.c.b16 %v2143, %v2139
    %v2428 = vpack.c.b16 %v2148, %v2144
    %v2429 = vpack.c.b16 %v2149, %v2145
    %v2430 = vpack.c.b16 %v2150, %v2146
    %v2431 = vpack.c.b16 %v2151, %v2147
    %v2432 = vpack.c.b16 %v2156, %v2152
    %v2433 = vpack.c.b16 %v2157, %v2153
    %v2434 = vpack.c.b16 %v2158, %v2154
    %v2435 = vpack.c.b16 %v2159, %v2155
    %v2436 = vpack.c.b16 %v2164, %v2160
    %v2437 = vpack.c.b16 %v2165, %v2161
    %v2438 = vpack.c.b16 %v2166, %v2162
    %v2439 = vpack.c.b16 %v2167, %v2163
    %v2440 = vpack.c.b16 %v2172, %v2168
    %v2441 = vpack.c.b16 %v2173, %v2169
    %v2442 = vpack.c.b16 %v2174, %v2170
    %v2443 = vpack.c.b16 %v2175, %v2171
    %v2444 = vpack.c.b16 %v2180, %v2176
    %v2445 = vpack.c.b16 %v2181, %v2177
    %v2446 = vpack.c.b16 %v2182, %v2178
    %v2447 = vpack.c.b16 %v2183, %v2179
    %v2448 = vpack.c.b16 %v2188, %v2184
    %v2449 = vpack.c.b16 %v2189, %v2185
    %v2450 = vpack.c.b16 %v2190, %v2186
    %v2451 = vpack.c.b16 %v2191, %v2187
    %v2452 = vpack.c.b16 %v2196, %v2192
    %v2453 = vpack.c.b16 %v2197, %v2193
    %v2454 = vpack.c.b16 %v2198, %v2194
    %v2455 = vpack.c.b16 %v2199, %v2195
    %v2456 = vpack.c.b16 %v2204, %v2200
    %v2457 = vpack.c.b16 %v2205, %v2201
    %v2458 = vpack.c.b16 %v2206, %v2202
    %v2459 = vpack.c.b16 %v2207, %v2203
    %v2460 = vpack.c.b16 %v2212, %v2208
    %v2461 = vpack.c.b16 %v2213, %v2209
    %v2462 = vpack.c.b16 %v2214, %v2210
    %v2463 = vpack.c.b16 %v2215, %v2211
    %v2464 = vpack.c.b16 %v2220, %v2216
    %v2465 = vpack.c.b16 %v2221, %v2217
    %v2466 = vpack.c.b16 %v2222, %v2218
    %v2467 = vpack.c.b16 %v2223, %v2219
    %v2468 = vpack.c.b16 %v2228, %v2224
    %v2469 = vpack.c.b16 %v2229, %v2225
    %v2470 = vpack.c.b16 %v2230, %v2226
    %v2471 = vpack.c.b16 %v2231, %v2227
    %v2472 = vpack.c.b16 %v2236, %v2232
    %v2473 = vpack.c.b16 %v2237, %v2233
    %v2474 = vpack.c.b16 %v2238, %v2234
    %v2475 = vpack.c.b16 %v2239, %v2235
    %v2476 = vpack.c.b16 %v2244, %v2240
    %v2477 = vpack.c.b16 %v2245, %v2241
    %v2478 = vpack.c.b16 %v2246, %v2242
    %v2479 = vpack.c.b16 %v2247, %v2243
    %v2480 = vpack.c.b16 %v2252, %v2248
    %v2481 = vpack.c.b16 %v2253, %v2249
    %v2482 = vpack.c.b16 %v2254, %v2250
    %v2483 = vpack.c.b16 %v2255, %v2251
    %v2484 = vpack.c.b16 %v2260, %v2256
    %v2485 = vpack.c.b16 %v2261, %v2257
    %v2486 = vpack.c.b16 %v2262, %v2258
    %v2487 = vpack.c.b16 %v2263, %v2259
    %v2488 = vpack.c.b16 %v2268, %v2264
    %v2489 = vpack.c.b16 %v2269, %v2265
    %v2490 = vpack.c.b16 %v2270, %v2266
    %v2491 = vpack.c.b16 %v2271, %v2267
    %v2492 = vpack.c.b16 %v2276, %v2272
    %v2493 = vpack.c.b16 %v2277, %v2273
    %v2494 = vpack.c.b16 %v2278, %v2274
    %v2495 = vpack.c.b16 %v2279, %v2275
    %v2496 = vpack.c.b16 %v2284, %v2280
    %v2497 = vpack.c.b16 %v2285, %v2281
    %v2498 = vpack.c.b16 %v2286, %v2282
    %v2499 = vpack.c.b16 %v2287, %v2283
    %v2500 = vpack.c.b16 %v2292, %v2288
    %v2501 = vpack.c.b16 %v2293, %v2289
    %v2502 = vpack.c.b16 %v2294, %v2290
    %v2503 = vpack.c.b16 %v2295, %v2291
    %v2504 = vpack.c.b16 %v2300, %v2296
    %v2505 = vpack.c.b16 %v2301, %v2297
    %v2506 = vpack.c.b16 %v2302, %v2298
    %v2507 = vpack.c.b16 %v2303, %v2299
    %v2508 = vpack.c.b16 %v2308, %v2304
    %v2509 = vpack.c.b16 %v2309, %v2305
    %v2510 = vpack.c.b16 %v2310, %v2306
    %v2511 = vpack.c.b16 %v2311, %v2307
    %v2512 = vpack.c.b16 %v2316, %v2312
    %v2513 = vpack.c.b16 %v2317, %v2313
    %v2514 = vpack.c.b16 %v2318, %v2314
    %v2515 = vpack.c.b16 %v2319, %v2315
    %vm2712 = vcmask 130048
    %v2714 = vsel %vm2712, %v1513, 0
    %2716 = vmatprep.subr.bf16.mxu0 %v2321
    %2717 = vmatpush1.bf16.msra.mxu0 %v2320
    %2718 = vmatprep.subr.bf16.mxu0 %v2325
    %2719 = vmatpush1.bf16.msra.mxu0 %v2324
    %2720 = vmatprep.subr.bf16.mxu0 %v2329
    %2721 = vmatpush1.bf16.msra.mxu0 %v2328
    %2722 = vmatprep.subr.bf16.mxu0 %v2333
    %2723 = vmatpush1.bf16.msra.mxu0 %v2332
    %2724 = vmatprep.subr.bf16.mxu0 %v2337
    %2725 = vmatpush1.bf16.msra.mxu0 %v2336
    %2726 = vmatprep.subr.bf16.mxu0 %v2341
    %2727 = vmatpush1.bf16.msra.mxu0 %v2340
    %2728 = vmatprep.subr.bf16.mxu0 %v2345
    %2729 = vmatpush1.bf16.msra.mxu0 %v2344
    %2730 = vmatprep.subr.bf16.mxu0 %v2349
    %2731 = vmatpush1.bf16.msra.mxu0 %v2348
    %2732 = vmatprep.subr.bf16.mxu0 %v2353
    %2733 = vmatpush1.bf16.msra.mxu0 %v2352
    %2734 = vmatprep.subr.bf16.mxu0 %v2357
    %2735 = vmatpush1.bf16.msra.mxu0 %v2356
    %2736 = vmatprep.subr.bf16.mxu0 %v2361
    %2737 = vmatpush1.bf16.msra.mxu0 %v2360
    %2738 = vmatprep.subr.bf16.mxu0 %v2365
    %2739 = vmatpush1.bf16.msra.mxu0 %v2364
    %2740 = vmatprep.subr.bf16.mxu0 %v2369
    %2741 = vmatpush1.bf16.msra.mxu0 %v2368
    %2742 = vmatprep.subr.bf16.mxu0 %v2373
    %2743 = vmatpush1.bf16.msra.mxu0 %v2372
    %2744 = vmatprep.subr.bf16.mxu0 %v2377
    %2745 = vmatpush1.bf16.msra.mxu0 %v2376
    %2746 = vmatprep.subr.bf16.mxu0 %v2381
    %2747 = vmatpush1.bf16.msra.mxu0 %v2380
    %2748 = vmatprep.mubr.bf16.mxu0 %v1508
    %2749 = vmatmul.mubr.bf16.gmra.mrb[0].mxu0 %v1507
    %v2750 = vpop.f32.mrb[0].mxu0
    %v2751 = vadd.f32 %v1715, %v2750
    %v2752 = vpop.f32.mrb[0].mxu0
    %v2753 = vadd.f32 %v1719, %v2752
    %v2754 = vpop.f32.mrb[0].mxu0
    %v2755 = vpop.f32.mrb[0].mxu0
    %2756 = vdwg.mxu0
    %2757 = vmatprep.subr.bf16.mxu0 %v2385
    %2758 = vmatpush1.bf16.msra.mxu0 %v2384
    %2759 = vmatprep.subr.bf16.mxu0 %v2389
    %2760 = vmatpush1.bf16.msra.mxu0 %v2388
    %2761 = vmatprep.subr.bf16.mxu0 %v2393
    %2762 = vmatpush1.bf16.msra.mxu0 %v2392
    %2763 = vmatprep.subr.bf16.mxu0 %v2397
    %2764 = vmatpush1.bf16.msra.mxu0 %v2396
    %2765 = vmatprep.subr.bf16.mxu0 %v2401
    %2766 = vmatpush1.bf16.msra.mxu0 %v2400
    %2767 = vmatprep.subr.bf16.mxu0 %v2405
    %2768 = vmatpush1.bf16.msra.mxu0 %v2404
    %2769 = vmatprep.subr.bf16.mxu0 %v2409
    %2770 = vmatpush1.bf16.msra.mxu0 %v2408
    %2771 = vmatprep.subr.bf16.mxu0 %v2413
    %2772 = vmatpush1.bf16.msra.mxu0 %v2412
    %2773 = vmatprep.subr.bf16.mxu0 %v2417
    %2774 = vmatpush1.bf16.msra.mxu0 %v2416
    %2775 = vmatprep.subr.bf16.mxu0 %v2421
    %2776 = vmatpush1.bf16.msra.mxu0 %v2420
    %2777 = vmatprep.subr.bf16.mxu0 %v2425
    %2778 = vmatpush1.bf16.msra.mxu0 %v2424
    %2779 = vmatprep.subr.bf16.mxu0 %v2429
    %2780 = vmatpush1.bf16.msra.mxu0 %v2428
    %2781 = vmatprep.subr.bf16.mxu0 %v2433
    %2782 = vmatpush1.bf16.msra.mxu0 %v2432
    %2783 = vmatprep.subr.bf16.mxu0 %v2437
    %2784 = vmatpush1.bf16.msra.mxu0 %v2436
    %2785 = vmatprep.subr.bf16.mxu0 %v2441
    %2786 = vmatpush1.bf16.msra.mxu0 %v2440
    %2787 = vmatprep.subr.bf16.mxu0 %v2445
    %2788 = vmatpush1.bf16.msra.mxu0 %v2444
    %2789 = vmatprep.mubr.bf16.mxu0 %v1510
    %2790 = vmatmul.mubr.bf16.gmra.mrb[0].mxu0 %v1509
    %v2791 = vpop.f32.mrb[0].mxu0
    %v2792 = vadd.f32 %v2751, %v2791
    %v2793 = vpop.f32.mrb[0].mxu0
    %v2794 = vadd.f32 %v2753, %v2793
    %v2795 = vpop.f32.mrb[0].mxu0
    %v2796 = vpop.f32.mrb[0].mxu0
    %2797 = vdwg.mxu0
    %2798 = vmatprep.subr.bf16.mxu0 %v2449
    %2799 = vmatpush1.bf16.msra.mxu0 %v2448
    %2800 = vmatprep.subr.bf16.mxu0 %v2453
    %2801 = vmatpush1.bf16.msra.mxu0 %v2452
    %2802 = vmatprep.subr.bf16.mxu0 %v2457
    %2803 = vmatpush1.bf16.msra.mxu0 %v2456
    %2804 = vmatprep.subr.bf16.mxu0 %v2461
    %2805 = vmatpush1.bf16.msra.mxu0 %v2460
    %2806 = vmatprep.subr.bf16.mxu0 %v2465
    %2807 = vmatpush1.bf16.msra.mxu0 %v2464
    %2808 = vmatprep.subr.bf16.mxu0 %v2469
    %2809 = vmatpush1.bf16.msra.mxu0 %v2468
    %2810 = vmatprep.subr.bf16.mxu0 %v2473
    %2811 = vmatpush1.bf16.msra.mxu0 %v2472
    %2812 = vmatprep.subr.bf16.mxu0 %v2477
    %2813 = vmatpush1.bf16.msra.mxu0 %v2476
    %2814 = vmatprep.subr.bf16.mxu0 %v2481
    %2815 = vmatpush1.bf16.msra.mxu0 %v2480
    %2816 = vmatprep.subr.bf16.mxu0 %v2485
    %2817 = vmatpush1.bf16.msra.mxu0 %v2484
    %2818 = vmatprep.subr.bf16.mxu0 %v2489
    %2819 = vmatpush1.bf16.msra.mxu0 %v2488
    %2820 = vmatprep.subr.bf16.mxu0 %v2493
    %2821 = vmatpush1.bf16.msra.mxu0 %v2492
    %2822 = vmatprep.subr.bf16.mxu0 %v2497
    %2823 = vmatpush1.bf16.msra.mxu0 %v2496
    %2824 = vmatprep.subr.bf16.mxu0 %v2501
    %2825 = vmatpush1.bf16.msra.mxu0 %v2500
    %2826 = vmatprep.subr.bf16.mxu0 %v2505
    %2827 = vmatpush1.bf16.msra.mxu0 %v2504
    %2828 = vmatprep.subr.bf16.mxu0 %v2509
    %2829 = vmatpush1.bf16.msra.mxu0 %v2508
    %2830 = vmatprep.mubr.bf16.mxu0 %v1512
    %2831 = vmatmul.mubr.bf16.gmra.mrb[0].mxu0 %v1511
    %v2832 = vpop.f32.mrb[0].mxu0
    %v2833 = vadd.f32 %v2792, %v2832
    %v2834 = vpop.f32.mrb[0].mxu0
    %v2835 = vadd.f32 %v2794, %v2834
    %v2836 = vpop.f32.mrb[0].mxu0
    %v2837 = vpop.f32.mrb[0].mxu0
    %2838 = vdwg.mxu0
    %2839 = vmatprep.subr.bf16.mxu0 %v2513
    %2840 = vmatpush1.bf16.msra.mxu0 %v2512
    %2841 = vmatprep.subr.bf16.mxu0 0
    %2842 = vmatpush1.bf16.msra.mxu0 0
    %2843 = vmatprep.subr.bf16.mxu0 0
    %2844 = vmatpush1.bf16.msra.mxu0 0
    %2845 = vmatprep.subr.bf16.mxu0 0
    %2846 = vmatpush1.bf16.msra.mxu0 0
    %2847 = vmatprep.subr.bf16.mxu0 0
    %2848 = vmatpush1.bf16.msra.mxu0 0
    %2849 = vmatprep.subr.bf16.mxu0 0
    %2850 = vmatpush1.bf16.msra.mxu0 0
    %2851 = vmatprep.subr.bf16.mxu0 0
    %2852 = vmatpush1.bf16.msra.mxu0 0
    %2853 = vmatprep.subr.bf16.mxu0 0
    %2854 = vmatpush1.bf16.msra.mxu0 0
    %2855 = vmatprep.subr.bf16.mxu0 0
    %2856 = vmatpush1.bf16.msra.mxu0 0
    %2857 = vmatprep.subr.bf16.mxu0 0
    %2858 = vmatpush1.bf16.msra.mxu0 0
    %2859 = vmatprep.subr.bf16.mxu0 0
    %2860 = vmatpush1.bf16.msra.mxu0 0
    %2861 = vmatprep.subr.bf16.mxu0 0
    %2862 = vmatpush1.bf16.msra.mxu0 0
    %2863 = vmatprep.subr.bf16.mxu0 0
    %2864 = vmatpush1.bf16.msra.mxu0 0
    %2865 = vmatprep.subr.bf16.mxu0 0
    %2866 = vmatpush1.bf16.msra.mxu0 0
    %2867 = vmatprep.subr.bf16.mxu0 0
    %2868 = vmatpush1.bf16.msra.mxu0 0
    %2869 = vmatprep.subr.bf16.mxu0 0
    %2870 = vmatpush1.bf16.msra.mxu0 0
    %2871 = vmatprep.mubr.bf16.mxu0 0
    %2872 = vmatmul.mubr.bf16.gmra.mrb[0].mxu0 %v2714
    %v2873 = vpop.f32.mrb[0].mxu0
    %v2874 = vadd.f32 %v2833, %v2873
    %v2875 = vpop.f32.mrb[0].mxu0
    %v2876 = vadd.f32 %v2835, %v2875
    %v2877 = vpop.f32.mrb[0].mxu0
    %v2878 = vpop.f32.mrb[0].mxu0
    %2879 = vdwg.mxu0
    %2880 = vmatprep.subr.bf16.mxu0 %v2323
    %2881 = vmatpush1.bf16.msra.mxu0 %v2322
    %2882 = vmatprep.subr.bf16.mxu0 %v2327
    %2883 = vmatpush1.bf16.msra.mxu0 %v2326
    %2884 = vmatprep.subr.bf16.mxu0 %v2331
    %2885 = vmatpush1.bf16.msra.mxu0 %v2330
    %2886 = vmatprep.subr.bf16.mxu0 %v2335
    %2887 = vmatpush1.bf16.msra.mxu0 %v2334
    %2888 = vmatprep.subr.bf16.mxu0 %v2339
    %2889 = vmatpush1.bf16.msra.mxu0 %v2338
    %2890 = vmatprep.subr.bf16.mxu0 %v2343
    %2891 = vmatpush1.bf16.msra.mxu0 %v2342
    %2892 = vmatprep.subr.bf16.mxu0 %v2347
    %2893 = vmatpush1.bf16.msra.mxu0 %v2346
    %2894 = vmatprep.subr.bf16.mxu0 %v2351
    %2895 = vmatpush1.bf16.msra.mxu0 %v2350
    %2896 = vmatprep.subr.bf16.mxu0 %v2355
    %2897 = vmatpush1.bf16.msra.mxu0 %v2354
    %2898 = vmatprep.subr.bf16.mxu0 %v2359
    %2899 = vmatpush1.bf16.msra.mxu0 %v2358
    %2900 = vmatprep.subr.bf16.mxu0 %v2363
    %2901 = vmatpush1.bf16.msra.mxu0 %v2362
    %2902 = vmatprep.subr.bf16.mxu0 %v2367
    %2903 = vmatpush1.bf16.msra.mxu0 %v2366
    %2904 = vmatprep.subr.bf16.mxu0 %v2371
    %2905 = vmatpush1.bf16.msra.mxu0 %v2370
    %2906 = vmatprep.subr.bf16.mxu0 %v2375
    %2907 = vmatpush1.bf16.msra.mxu0 %v2374
    %2908 = vmatprep.subr.bf16.mxu0 %v2379
    %2909 = vmatpush1.bf16.msra.mxu0 %v2378
    %2910 = vmatprep.subr.bf16.mxu0 %v2383
    %2911 = vmatpush1.bf16.msra.mxu0 %v2382
    %2912 = vmatprep.mubr.bf16.mxu0 %v1508
    %2913 = vmatmul.mubr.bf16.gmra.mrb[0].mxu0 %v1507
    %v2914 = vpop.f32.mrb[0].mxu0
    %v2915 = vadd.f32 %v1723, %v2914
    %v2916 = vpop.f32.mrb[0].mxu0
    %v2917 = vadd.f32 %v1727, %v2916
    %v2918 = vpop.f32.mrb[0].mxu0
    %v2919 = vpop.f32.mrb[0].mxu0
    %2920 = vdwg.mxu0
    %2921 = vmatprep.subr.bf16.mxu0 %v2387
    %2922 = vmatpush1.bf16.msra.mxu0 %v2386
    %2923 = vmatprep.subr.bf16.mxu0 %v2391
    %2924 = vmatpush1.bf16.msra.mxu0 %v2390
    %2925 = vmatprep.subr.bf16.mxu0 %v2395
    %2926 = vmatpush1.bf16.msra.mxu0 %v2394
    %2927 = vmatprep.subr.bf16.mxu0 %v2399
    %2928 = vmatpush1.bf16.msra.mxu0 %v2398
    %2929 = vmatprep.subr.bf16.mxu0 %v2403
    %2930 = vmatpush1.bf16.msra.mxu0 %v2402
    %2931 = vmatprep.subr.bf16.mxu0 %v2407
    %2932 = vmatpush1.bf16.msra.mxu0 %v2406
    %2933 = vmatprep.subr.bf16.mxu0 %v2411
    %2934 = vmatpush1.bf16.msra.mxu0 %v2410
    %2935 = vmatprep.subr.bf16.mxu0 %v2415
    %2936 = vmatpush1.bf16.msra.mxu0 %v2414
    %2937 = vmatprep.subr.bf16.mxu0 %v2419
    %2938 = vmatpush1.bf16.msra.mxu0 %v2418
    %2939 = vmatprep.subr.bf16.mxu0 %v2423
    %2940 = vmatpush1.bf16.msra.mxu0 %v2422
    %2941 = vmatprep.subr.bf16.mxu0 %v2427
    %2942 = vmatpush1.bf16.msra.mxu0 %v2426
    %2943 = vmatprep.subr.bf16.mxu0 %v2431
    %2944 = vmatpush1.bf16.msra.mxu0 %v2430
    %2945 = vmatprep.subr.bf16.mxu0 %v2435
    %2946 = vmatpush1.bf16.msra.mxu0 %v2434
    %2947 = vmatprep.subr.bf16.mxu0 %v2439
    %2948 = vmatpush1.bf16.msra.mxu0 %v2438
    %2949 = vmatprep.subr.bf16.mxu0 %v2443
    %2950 = vmatpush1.bf16.msra.mxu0 %v2442
    %2951 = vmatprep.subr.bf16.mxu0 %v2447
    %2952 = vmatpush1.bf16.msra.mxu0 %v2446
    %2953 = vmatprep.mubr.bf16.mxu0 %v1510
    %2954 = vmatmul.mubr.bf16.gmra.mrb[0].mxu0 %v1509
    %v2955 = vpop.f32.mrb[0].mxu0
    %v2956 = vadd.f32 %v2915, %v2955
    %v2957 = vpop.f32.mrb[0].mxu0
    %v2958 = vadd.f32 %v2917, %v2957
    %v2959 = vpop.f32.mrb[0].mxu0
    %v2960 = vpop.f32.mrb[0].mxu0
    %2961 = vdwg.mxu0
    %2962 = vmatprep.subr.bf16.mxu0 %v2451
    %2963 = vmatpush1.bf16.msra.mxu0 %v2450
    %2964 = vmatprep.subr.bf16.mxu0 %v2455
    %2965 = vmatpush1.bf16.msra.mxu0 %v2454
    %2966 = vmatprep.subr.bf16.mxu0 %v2459
    %2967 = vmatpush1.bf16.msra.mxu0 %v2458
    %2968 = vmatprep.subr.bf16.mxu0 %v2463
    %2969 = vmatpush1.bf16.msra.mxu0 %v2462
    %2970 = vmatprep.subr.bf16.mxu0 %v2467
    %2971 = vmatpush1.bf16.msra.mxu0 %v2466
    %2972 = vmatprep.subr.bf16.mxu0 %v2471
    %2973 = vmatpush1.bf16.msra.mxu0 %v2470
    %2974 = vmatprep.subr.bf16.mxu0 %v2475
    %2975 = vmatpush1.bf16.msra.mxu0 %v2474
    %2976 = vmatprep.subr.bf16.mxu0 %v2479
    %2977 = vmatpush1.bf16.msra.mxu0 %v2478
    %2978 = vmatprep.subr.bf16.mxu0 %v2483
    %2979 = vmatpush1.bf16.msra.mxu0 %v2482
    %2980 = vmatprep.subr.bf16.mxu0 %v2487
    %2981 = vmatpush1.bf16.msra.mxu0 %v2486
    %2982 = vmatprep.subr.bf16.mxu0 %v2491
    %2983 = vmatpush1.bf16.msra.mxu0 %v2490
    %2984 = vmatprep.subr.bf16.mxu0 %v2495
    %2985 = vmatpush1.bf16.msra.mxu0 %v2494
    %2986 = vmatprep.subr.bf16.mxu0 %v2499
    %2987 = vmatpush1.bf16.msra.mxu0 %v2498
    %2988 = vmatprep.subr.bf16.mxu0 %v2503
    %2989 = vmatpush1.bf16.msra.mxu0 %v2502
    %2990 = vmatprep.subr.bf16.mxu0 %v2507
    %2991 = vmatpush1.bf16.msra.mxu0 %v2506
    %2992 = vmatprep.subr.bf16.mxu0 %v2511
    %2993 = vmatpush1.bf16.msra.mxu0 %v2510
    %2994 = vmatprep.mubr.bf16.mxu0 %v1512
    %2995 = vmatmul.mubr.bf16.gmra.mrb[0].mxu0 %v1511
    %v2996 = vpop.f32.mrb[0].mxu0
    %v2997 = vadd.f32 %v2956, %v2996
    %v2998 = vpop.f32.mrb[0].mxu0
    %v2999 = vadd.f32 %v2958, %v2998
    %v3000 = vpop.f32.mrb[0].mxu0
    %v3001 = vpop.f32.mrb[0].mxu0
    %3002 = vdwg.mxu0
    %3003 = vmatprep.subr.bf16.mxu0 %v2515
    %3004 = vmatpush1.bf16.msra.mxu0 %v2514
    %3005 = vmatprep.subr.bf16.mxu0 0
    %3006 = vmatpush1.bf16.msra.mxu0 0
    %3007 = vmatprep.subr.bf16.mxu0 0
    %3008 = vmatpush1.bf16.msra.mxu0 0
    %3009 = vmatprep.subr.bf16.mxu0 0
    %3010 = vmatpush1.bf16.msra.mxu0 0
    %3011 = vmatprep.subr.bf16.mxu0 0
    %3012 = vmatpush1.bf16.msra.mxu0 0
    %3013 = vmatprep.subr.bf16.mxu0 0
    %3014 = vmatpush1.bf16.msra.mxu0 0
    %3015 = vmatprep.subr.bf16.mxu0 0
    %3016 = vmatpush1.bf16.msra.mxu0 0
    %3017 = vmatprep.subr.bf16.mxu0 0
    %3018 = vmatpush1.bf16.msra.mxu0 0
    %3019 = vmatprep.subr.bf16.mxu0 0
    %3020 = vmatpush1.bf16.msra.mxu0 0
    %3021 = vmatprep.subr.bf16.mxu0 0
    %3022 = vmatpush1.bf16.msra.mxu0 0
    %3023 = vmatprep.subr.bf16.mxu0 0
    %3024 = vmatpush1.bf16.msra.mxu0 0
    %3025 = vmatprep.subr.bf16.mxu0 0
    %3026 = vmatpush1.bf16.msra.mxu0 0
    %3027 = vmatprep.subr.bf16.mxu0 0
    %3028 = vmatpush1.bf16.msra.mxu0 0
    %3029 = vmatprep.subr.bf16.mxu0 0
    %3030 = vmatpush1.bf16.msra.mxu0 0
    %3031 = vmatprep.subr.bf16.mxu0 0
    %3032 = vmatpush1.bf16.msra.mxu0 0
    %3033 = vmatprep.subr.bf16.mxu0 0
    %3034 = vmatpush1.bf16.msra.mxu0 0
    %3035 = vmatprep.mubr.bf16.mxu0 0
    %3036 = vmatmul.mubr.bf16.gmra.mrb[0].mxu0 %v2714
    %v3037 = vpop.f32.mrb[0].mxu0
    %v3038 = vadd.f32 %v2997, %v3037
    %v3039 = vpop.f32.mrb[0].mxu0
    %v3040 = vadd.f32 %v2999, %v3039
    %v3041 = vpop.f32.mrb[0].mxu0
    %v3042 = vpop.f32.mrb[0].mxu0
    %3043 = vdwg.mxu0
    %v3044 = vmax.f32 %v2874, 0.0
    %v3045 = vmax.f32 %v2876, 0.0
    %v3046 = vmax.f32 %v3038, 0.0
    %v3047 = vmax.f32 %v3040, 0.0
    %v3048 = vld [vmem:[%s3] sm:$0xff]
    %v3049 = vld [vmem:[%s3 + $0x8] sm:$0xff]
    %v3050 = vld [vmem:[%s3 + $0x10] sm:$0xff]
    %v3051 = vld [vmem:[%s3 + $0x18] sm:$0xff]
    %v3052 = vld [vmem:[%s3 + $0x20] sm:$0xff]
    %v3053 = vld [vmem:[%s3 + $0x28] sm:$0xff]
    %v3054 = vld [vmem:[%s3 + $0x30] sm:$0xff]
    %v3055 = vld [vmem:[%s3 + $0x38] sm:$0xff]
    %v3056 = vld [vmem:[%s3 + $0x40] sm:$0xff]
    %v3057 = vld [vmem:[%s3 + $0x48] sm:$0xff]
    %v3058 = vld [vmem:[%s3 + $0x50] sm:$0xff]
    %v3059 = vld [vmem:[%s3 + $0x58] sm:$0xff]
    %v3060 = vld [vmem:[%s3 + $0x60] sm:$0xff]
    %v3061 = vld [vmem:[%s3 + $0x68] sm:$0xff]
    %v3062 = vld [vmem:[%s3 + $0x70] sm:$0xff]
    %v3063 = vld [vmem:[%s3 + $0x78] sm:$0xff]
    %v3064 = vld [vmem:[%s3 + $0x80] sm:$0xff]
    %v3065 = vld [vmem:[%s3 + $0x88] sm:$0xff]
    %v3066 = vld [vmem:[%s3 + $0x90] sm:$0xff]
    %v3067 = vld [vmem:[%s3 + $0x98] sm:$0xff]
    %v3068 = vld [vmem:[%s3 + $0xa0] sm:$0xff]
    %v3069 = vld [vmem:[%s3 + $0xa8] sm:$0xff]
    %v3070 = vld [vmem:[%s3 + $0xb0] sm:$0xff]
    %v3071 = vld [vmem:[%s3 + $0xb8] sm:$0xff]
    %v3072 = vld [vmem:[%s3 + $0xc0] sm:$0xff]
    %v3073 = vld [vmem:[%s3 + $0xc8] sm:$0xff]
    %v3074 = vld [vmem:[%s3 + $0xd0] sm:$0xff]
    %v3075 = vld [vmem:[%s3 + $0xd8] sm:$0xff]
    %v3076 = vld [vmem:[%s3 + $0xe0] sm:$0xff]
    %v3077 = vld [vmem:[%s3 + $0xe8] sm:$0xff]
    %v3078 = vld [vmem:[%s3 + $0xf0] sm:$0xff]
    %v3079 = vld [vmem:[%s3 + $0xf8] sm:$0xff]
    %v3080 = vld [vmem:[%s3 + $0x100] sm:$0xff]
    %v3081 = vld [vmem:[%s3 + $0x108] sm:$0xff]
    %v3082 = vld [vmem:[%s3 + $0x110] sm:$0xff]
    %v3083 = vld [vmem:[%s3 + $0x118] sm:$0xff]
    %v3084 = vld [vmem:[%s3 + $0x120] sm:$0xff]
    %v3085 = vld [vmem:[%s3 + $0x128] sm:$0xff]
    %v3086 = vld [vmem:[%s3 + $0x130] sm:$0xff]
    %v3087 = vld [vmem:[%s3 + $0x138] sm:$0xff]
    %v3088 = vld [vmem:[%s3 + $0x140] sm:$0xff]
    %v3089 = vld [vmem:[%s3 + $0x148] sm:$0xff]
    %v3090 = vld [vmem:[%s3 + $0x150] sm:$0xff]
    %v3091 = vld [vmem:[%s3 + $0x158] sm:$0xff]
    %v3092 = vld [vmem:[%s3 + $0x160] sm:$0xff]
    %v3093 = vld [vmem:[%s3 + $0x168] sm:$0xff]
    %v3094 = vld [vmem:[%s3 + $0x170] sm:$0xff]
    %v3095 = vld [vmem:[%s3 + $0x178] sm:$0xff]
    %v3096 = vld [vmem:[%s3 + $0x180] sm:$0xff]
    %v3097 = vld [vmem:[%s3 + $0x188] sm:$0xff]
    %v3098 = vld [vmem:[%s3 + $0x190] sm:$0xff]
    %v3099 = vld [vmem:[%s3 + $0x198] sm:$0xff]
    %v3100 = vld [vmem:[%s3 + $0x1a0] sm:$0xff]
    %v3101 = vld [vmem:[%s3 + $0x1a8] sm:$0xff]
    %v3102 = vld [vmem:[%s3 + $0x1b0] sm:$0xff]
    %v3103 = vld [vmem:[%s3 + $0x1b8] sm:$0xff]
    %v3104 = vld [vmem:[%s3 + $0x1c0] sm:$0xff]
    %v3105 = vld [vmem:[%s3 + $0x1c8] sm:$0xff]
    %v3106 = vld [vmem:[%s3 + $0x1d0] sm:$0xff]
    %v3107 = vld [vmem:[%s3 + $0x1d8] sm:$0xff]
    %v3108 = vld [vmem:[%s3 + $0x1e0] sm:$0xff]
    %v3109 = vld [vmem:[%s3 + $0x1e8] sm:$0xff]
    %v3110 = vld [vmem:[%s3 + $0x1f0] sm:$0xff]
    %v3111 = vld [vmem:[%s3 + $0x1f8] sm:$0xff]
    %v3112 = vld [vmem:[%s3 + $0x200] sm:$0xff]
    %v3113 = vld [vmem:[%s3 + $0x208] sm:$0xff]
    %v3114 = vld [vmem:[%s3 + $0x210] sm:$0xff]
    %v3115 = vld [vmem:[%s3 + $0x218] sm:$0xff]
    %v3116 = vld [vmem:[%s3 + $0x220] sm:$0xff]
    %v3117 = vld [vmem:[%s3 + $0x228] sm:$0xff]
    %v3118 = vld [vmem:[%s3 + $0x230] sm:$0xff]
    %v3119 = vld [vmem:[%s3 + $0x238] sm:$0xff]
    %v3120 = vld [vmem:[%s3 + $0x240] sm:$0xff]
    %v3121 = vld [vmem:[%s3 + $0x248] sm:$0xff]
    %v3122 = vld [vmem:[%s3 + $0x250] sm:$0xff]
    %v3123 = vld [vmem:[%s3 + $0x258] sm:$0xff]
    %v3124 = vld [vmem:[%s3 + $0x260] sm:$0xff]
    %v3125 = vld [vmem:[%s3 + $0x268] sm:$0xff]
    %v3126 = vld [vmem:[%s3 + $0x270] sm:$0xff]
    %v3127 = vld [vmem:[%s3 + $0x278] sm:$0xff]
    %v3128 = vld [vmem:[%s3 + $0x280] sm:$0xff]
    %v3129 = vld [vmem:[%s3 + $0x288] sm:$0xff]
    %v3130 = vld [vmem:[%s3 + $0x290] sm:$0xff]
    %v3131 = vld [vmem:[%s3 + $0x298] sm:$0xff]
    %v3132 = vld [vmem:[%s3 + $0x2a0] sm:$0xff]
    %v3133 = vld [vmem:[%s3 + $0x2a8] sm:$0xff]
    %v3134 = vld [vmem:[%s3 + $0x2b0] sm:$0xff]
    %v3135 = vld [vmem:[%s3 + $0x2b8] sm:$0xff]
    %v3136 = vld [vmem:[%s3 + $0x2c0] sm:$0xff]
    %v3137 = vld [vmem:[%s3 + $0x2c8] sm:$0xff]
    %v3138 = vld [vmem:[%s3 + $0x2d0] sm:$0xff]
    %v3139 = vld [vmem:[%s3 + $0x2d8] sm:$0xff]
    %v3140 = vld [vmem:[%s3 + $0x2e0] sm:$0xff]
    %v3141 = vld [vmem:[%s3 + $0x2e8] sm:$0xff]
    %v3142 = vld [vmem:[%s3 + $0x2f0] sm:$0xff]
    %v3143 = vld [vmem:[%s3 + $0x2f8] sm:$0xff]
    %v3144 = vld [vmem:[%s3 + $0x300] sm:$0xff]
    %v3145 = vld [vmem:[%s3 + $0x308] sm:$0xff]
    %v3146 = vld [vmem:[%s3 + $0x310] sm:$0xff]
    %v3147 = vld [vmem:[%s3 + $0x318] sm:$0xff]
    %v3148 = vld [vmem:[%s3 + $0x320] sm:$0xff]
    %v3149 = vld [vmem:[%s3 + $0x328] sm:$0xff]
    %v3150 = vld [vmem:[%s3 + $0x330] sm:$0xff]
    %v3151 = vld [vmem:[%s3 + $0x338] sm:$0xff]
    %v3152 = vld [vmem:[%s3 + $0x340] sm:$0xff]
    %v3153 = vld [vmem:[%s3 + $0x348] sm:$0xff]
    %v3154 = vld [vmem:[%s3 + $0x350] sm:$0xff]
    %v3155 = vld [vmem:[%s3 + $0x358] sm:$0xff]
    %v3156 = vld [vmem:[%s3 + $0x360] sm:$0xff]
    %v3157 = vld [vmem:[%s3 + $0x368] sm:$0xff]
    %v3158 = vld [vmem:[%s3 + $0x370] sm:$0xff]
    %v3159 = vld [vmem:[%s3 + $0x378] sm:$0xff]
    %v3160 = vld [vmem:[%s3 + $0x380] sm:$0xff]
    %v3161 = vld [vmem:[%s3 + $0x388] sm:$0xff]
    %v3162 = vld [vmem:[%s3 + $0x390] sm:$0xff]
    %v3163 = vld [vmem:[%s3 + $0x398] sm:$0xff]
    %v3164 = vld [vmem:[%s3 + $0x3a0] sm:$0xff]
    %v3165 = vld [vmem:[%s3 + $0x3a8] sm:$0xff]
    %v3166 = vld [vmem:[%s3 + $0x3b0] sm:$0xff]
    %v3167 = vld [vmem:[%s3 + $0x3b8] sm:$0xff]
    %v3168 = vld [vmem:[%s3 + $0x3c0] sm:$0xff]
    %v3169 = vld [vmem:[%s3 + $0x3c8] sm:$0xff]
    %v3170 = vld [vmem:[%s3 + $0x3d0] sm:$0xff]
    %v3171 = vld [vmem:[%s3 + $0x3d8] sm:$0xff]
    %v3172 = vld [vmem:[%s3 + $0x3e0] sm:$0xff]
    %v3173 = vld [vmem:[%s3 + $0x3e8] sm:$0xff]
    %v3174 = vld [vmem:[%s3 + $0x3f0] sm:$0xff]
    %v3175 = vld [vmem:[%s3 + $0x3f8] sm:$0xff]
    %v3176 = vld [vmem:[%s3 + $0x400] sm:$0xff]
    %v3177 = vld [vmem:[%s3 + $0x408] sm:$0xff]
    %v3178 = vld [vmem:[%s3 + $0x410] sm:$0xff]
    %v3179 = vld [vmem:[%s3 + $0x418] sm:$0xff]
    %v3180 = vld [vmem:[%s3 + $0x420] sm:$0xff]
    %v3181 = vld [vmem:[%s3 + $0x428] sm:$0xff]
    %v3182 = vld [vmem:[%s3 + $0x430] sm:$0xff]
    %v3183 = vld [vmem:[%s3 + $0x438] sm:$0xff]
    %v3184 = vld [vmem:[%s3 + $0x440] sm:$0xff]
    %v3185 = vld [vmem:[%s3 + $0x448] sm:$0xff]
    %v3186 = vld [vmem:[%s3 + $0x450] sm:$0xff]
    %v3187 = vld [vmem:[%s3 + $0x458] sm:$0xff]
    %v3188 = vld [vmem:[%s3 + $0x460] sm:$0xff]
    %v3189 = vld [vmem:[%s3 + $0x468] sm:$0xff]
    %v3190 = vld [vmem:[%s3 + $0x470] sm:$0xff]
    %v3191 = vld [vmem:[%s3 + $0x478] sm:$0xff]
    %v3192 = vld [vmem:[%s3 + $0x480] sm:$0xff]
    %v3193 = vld [vmem:[%s3 + $0x488] sm:$0xff]
    %v3194 = vld [vmem:[%s3 + $0x490] sm:$0xff]
    %v3195 = vld [vmem:[%s3 + $0x498] sm:$0xff]
    %v3196 = vld [vmem:[%s3 + $0x4a0] sm:$0xff]
    %v3197 = vld [vmem:[%s3 + $0x4a8] sm:$0xff]
    %v3198 = vld [vmem:[%s3 + $0x4b0] sm:$0xff]
    %v3199 = vld [vmem:[%s3 + $0x4b8] sm:$0xff]
    %v3200 = vld [vmem:[%s3 + $0x4c0] sm:$0xff]
    %v3201 = vld [vmem:[%s3 + $0x4c8] sm:$0xff]
    %v3202 = vld [vmem:[%s3 + $0x4d0] sm:$0xff]
    %v3203 = vld [vmem:[%s3 + $0x4d8] sm:$0xff]
    %v3204 = vld [vmem:[%s3 + $0x4e0] sm:$0xff]
    %v3205 = vld [vmem:[%s3 + $0x4e8] sm:$0xff]
    %v3206 = vld [vmem:[%s3 + $0x4f0] sm:$0xff]
    %v3207 = vld [vmem:[%s3 + $0x4f8] sm:$0xff]
    %v3208 = vld [vmem:[%s3 + $0x500] sm:$0xff]
    %v3209 = vld [vmem:[%s3 + $0x508] sm:$0xff]
    %v3210 = vld [vmem:[%s3 + $0x510] sm:$0xff]
    %v3211 = vld [vmem:[%s3 + $0x518] sm:$0xff]
    %v3212 = vld [vmem:[%s3 + $0x520] sm:$0xff]
    %v3213 = vld [vmem:[%s3 + $0x528] sm:$0xff]
    %v3214 = vld [vmem:[%s3 + $0x530] sm:$0xff]
    %v3215 = vld [vmem:[%s3 + $0x538] sm:$0xff]
    %v3216 = vld [vmem:[%s3 + $0x540] sm:$0xff]
    %v3217 = vld [vmem:[%s3 + $0x548] sm:$0xff]
    %v3218 = vld [vmem:[%s3 + $0x550] sm:$0xff]
    %v3219 = vld [vmem:[%s3 + $0x558] sm:$0xff]
    %v3220 = vld [vmem:[%s3 + $0x560] sm:$0xff]
    %v3221 = vld [vmem:[%s3 + $0x568] sm:$0xff]
    %v3222 = vld [vmem:[%s3 + $0x570] sm:$0xff]
    %v3223 = vld [vmem:[%s3 + $0x578] sm:$0xff]
    %v3224 = vld [vmem:[%s3 + $0x580] sm:$0xff]
    %v3225 = vld [vmem:[%s3 + $0x588] sm:$0xff]
    %v3226 = vld [vmem:[%s3 + $0x590] sm:$0xff]
    %v3227 = vld [vmem:[%s3 + $0x598] sm:$0xff]
    %v3228 = vld [vmem:[%s3 + $0x5a0] sm:$0xff]
    %v3229 = vld [vmem:[%s3 + $0x5a8] sm:$0xff]
    %v3230 = vld [vmem:[%s3 + $0x5b0] sm:$0xff]
    %v3231 = vld [vmem:[%s3 + $0x5b8] sm:$0xff]
    %v3232 = vld [vmem:[%s3 + $0x5c0] sm:$0xff]
    %v3233 = vld [vmem:[%s3 + $0x5c8] sm:$0xff]
    %v3234 = vld [vmem:[%s3 + $0x5d0] sm:$0xff]
    %v3235 = vld [vmem:[%s3 + $0x5d8] sm:$0xff]
    %v3236 = vld [vmem:[%s3 + $0x5e0] sm:$0xff]
    %v3237 = vld [vmem:[%s3 + $0x5e8] sm:$0xff]
    %v3238 = vld [vmem:[%s3 + $0x5f0] sm:$0xff]
    %v3239 = vld [vmem:[%s3 + $0x5f8] sm:$0xff]
    %v3240 = vld [vmem:[%s3 + $0x600] sm:$0xff]
    %v3241 = vld [vmem:[%s3 + $0x608] sm:$0xff]
    %v3242 = vld [vmem:[%s3 + $0x610] sm:$0xff]
    %v3243 = vld [vmem:[%s3 + $0x618] sm:$0xff]
    %v3244 = vld [vmem:[%s3 + $0x620] sm:$0xff]
    %v3245 = vld [vmem:[%s3 + $0x628] sm:$0xff]
    %v3246 = vld [vmem:[%s3 + $0x630] sm:$0xff]
    %v3247 = vld [vmem:[%s3 + $0x638] sm:$0xff]
    %v3248 = vld [vmem:[%s4] sm:$0xf]
    %v3250 = vlaneseq
    %v3251 = vshrl.u32 %v3250, 7
    %v3252 = vsub.s32 0, %v3251
    %v3253 = vrot.slane %v3248, %v3252
    %v3254 = vlaneseq
    %v3255 = vshrl.u32 %v3254, 7
    %v3256 = vsub.s32 1, %v3255
    %v3257 = vrot.slane %v3248, %v3256
    %v3258 = vlaneseq
    %v3259 = vshrl.u32 %v3258, 7
    %v3260 = vsub.s32 2, %v3259
    %v3261 = vrot.slane %v3248, %v3260
    %v3262 = vlaneseq
    %v3263 = vshrl.u32 %v3262, 7
    %v3264 = vsub.s32 3, %v3263
    %v3265 = vrot.slane %v3248, %v3264
    %v3271 = vsel %vm2712, %v3047, 0
    %3273 = vmatprep.subr.mxu0 %v3049
    %3274 = vmatpush1.msra.mxu0 %v3048
    %3275 = vmatprep.subr.mxu0 %v3053
    %3276 = vmatpush1.msra.mxu0 %v3052
    %3277 = vmatprep.subr.mxu0 %v3057
    %3278 = vmatpush1.msra.mxu0 %v3056
    %3279 = vmatprep.subr.mxu0 %v3061
    %3280 = vmatpush1.msra.mxu0 %v3060
    %3281 = vmatprep.subr.mxu0 %v3065
    %3282 = vmatpush1.msra.mxu0 %v3064
    %3283 = vmatprep.subr.mxu0 %v3069
    %3284 = vmatpush1.msra.mxu0 %v3068
    %3285 = vmatprep.subr.mxu0 %v3073
    %3286 = vmatpush1.msra.mxu0 %v3072
    %3287 = vmatprep.subr.mxu0 %v3077
    %3288 = vmatpush1.msra.mxu0 %v3076
    %3289 = vmatprep.subr.mxu0 %v3081
    %3290 = vmatpush1.msra.mxu0 %v3080
    %3291 = vmatprep.subr.mxu0 %v3085
    %3292 = vmatpush1.msra.mxu0 %v3084
    %3293 = vmatprep.subr.mxu0 %v3089
    %3294 = vmatpush1.msra.mxu0 %v3088
    %3295 = vmatprep.subr.mxu0 %v3093
    %3296 = vmatpush1.msra.mxu0 %v3092
    %3297 = vmatprep.subr.mxu0 %v3097
    %3298 = vmatpush1.msra.mxu0 %v3096
    %3299 = vmatprep.subr.mxu0 %v3101
    %3300 = vmatpush1.msra.mxu0 %v3100
    %3301 = vmatprep.subr.mxu0 %v3105
    %3302 = vmatpush1.msra.mxu0 %v3104
    %3303 = vmatprep.subr.mxu0 %v3109
    %3304 = vmatpush1.msra.mxu0 %v3108
    %3305 = vmatprep.subr.mxu0 %v3113
    %3306 = vmatpush1.msra.mxu0 %v3112
    %3307 = vmatprep.subr.mxu0 %v3117
    %3308 = vmatpush1.msra.mxu0 %v3116
    %3309 = vmatprep.subr.mxu0 %v3121
    %3310 = vmatpush1.msra.mxu0 %v3120
    %3311 = vmatprep.subr.mxu0 %v3125
    %3312 = vmatpush1.msra.mxu0 %v3124
    %3313 = vmatprep.subr.mxu0 %v3129
    %3314 = vmatpush1.msra.mxu0 %v3128
    %3315 = vmatprep.subr.mxu0 %v3133
    %3316 = vmatpush1.msra.mxu0 %v3132
    %3317 = vmatprep.subr.mxu0 %v3137
    %3318 = vmatpush1.msra.mxu0 %v3136
    %3319 = vmatprep.subr.mxu0 %v3141
    %3320 = vmatpush1.msra.mxu0 %v3140
    %3321 = vmatprep.subr.mxu0 %v3145
    %3322 = vmatpush1.msra.mxu0 %v3144
    %3323 = vmatprep.subr.mxu0 %v3149
    %3324 = vmatpush1.msra.mxu0 %v3148
    %3325 = vmatprep.subr.mxu0 %v3153
    %3326 = vmatpush1.msra.mxu0 %v3152
    %3327 = vmatprep.subr.mxu0 %v3157
    %3328 = vmatpush1.msra.mxu0 %v3156
    %3329 = vmatprep.subr.mxu0 %v3161
    %3330 = vmatpush1.msra.mxu0 %v3160
    %3331 = vmatprep.subr.mxu0 %v3165
    %3332 = vmatpush1.msra.mxu0 %v3164
    %3333 = vmatprep.subr.mxu0 %v3169
    %3334 = vmatpush1.msra.mxu0 %v3168
    %3335 = vmatprep.subr.mxu0 %v3173
    %3336 = vmatpush1.msra.mxu0 %v3172
    %3337 = vmatprep.mubr.f32.mxu0 %v3045
    %3338 = vmatmul.mubr.f32.gmra.mrb[0].mxu0 %v3044
    %v3339 = vpop.f32.mrb[0].mxu0
    %v3340 = vadd.f32 %v3253, %v3339
    %v3341 = vpop.f32.mrb[0].mxu0
    %v3342 = vadd.f32 %v3257, %v3341
    %3343 = vdwg.mxu0
    %3344 = vmatprep.subr.mxu0 %v3177
    %3345 = vmatpush1.msra.mxu0 %v3176
    %3346 = vmatprep.subr.mxu0 %v3181
    %3347 = vmatpush1.msra.mxu0 %v3180
    %3348 = vmatprep.subr.mxu0 %v3185
    %3349 = vmatpush1.msra.mxu0 %v3184
    %3350 = vmatprep.subr.mxu0 %v3189
    %3351 = vmatpush1.msra.mxu0 %v3188
    %3352 = vmatprep.subr.mxu0 %v3193
    %3353 = vmatpush1.msra.mxu0 %v3192
    %3354 = vmatprep.subr.mxu0 %v3197
    %3355 = vmatpush1.msra.mxu0 %v3196
    %3356 = vmatprep.subr.mxu0 %v3201
    %3357 = vmatpush1.msra.mxu0 %v3200
    %3358 = vmatprep.subr.mxu0 %v3205
    %3359 = vmatpush1.msra.mxu0 %v3204
    %3360 = vmatprep.subr.mxu0 %v3209
    %3361 = vmatpush1.msra.mxu0 %v3208
    %3362 = vmatprep.subr.mxu0 %v3213
    %3363 = vmatpush1.msra.mxu0 %v3212
    %3364 = vmatprep.subr.mxu0 %v3217
    %3365 = vmatpush1.msra.mxu0 %v3216
    %3366 = vmatprep.subr.mxu0 %v3221
    %3367 = vmatpush1.msra.mxu0 %v3220
    %3368 = vmatprep.subr.mxu0 %v3225
    %3369 = vmatpush1.msra.mxu0 %v3224
    %3370 = vmatprep.subr.mxu0 %v3229
    %3371 = vmatpush1.msra.mxu0 %v3228
    %3372 = vmatprep.subr.mxu0 %v3233
    %3373 = vmatpush1.msra.mxu0 %v3232
    %3374 = vmatprep.subr.mxu0 %v3237
    %3375 = vmatpush1.msra.mxu0 %v3236
    %3376 = vmatprep.subr.mxu0 %v3241
    %3377 = vmatpush1.msra.mxu0 %v3240
    %3378 = vmatprep.subr.mxu0 %v3245
    %3379 = vmatpush1.msra.mxu0 %v3244
    %3380 = vmatprep.subr.mxu0 0.0
    %3381 = vmatpush1.msra.mxu0 0.0
    %3382 = vmatprep.subr.mxu0 0.0
    %3383 = vmatpush1.msra.mxu0 0.0
    %3384 = vmatprep.subr.mxu0 0.0
    %3385 = vmatpush1.msra.mxu0 0.0
    %3386 = vmatprep.subr.mxu0 0.0
    %3387 = vmatpush1.msra.mxu0 0.0
    %3388 = vmatprep.subr.mxu0 0.0
    %3389 = vmatpush1.msra.mxu0 0.0
    %3390 = vmatprep.subr.mxu0 0.0
    %3391 = vmatpush1.msra.mxu0 0.0
    %3392 = vmatprep.subr.mxu0 0.0
    %3393 = vmatpush1.msra.mxu0 0.0
    %3394 = vmatprep.subr.mxu0 0.0
    %3395 = vmatpush1.msra.mxu0 0.0
    %3396 = vmatprep.subr.mxu0 0.0
    %3397 = vmatpush1.msra.mxu0 0.0
    %3398 = vmatprep.subr.mxu0 0.0
    %3399 = vmatpush1.msra.mxu0 0.0
    %3400 = vmatprep.subr.mxu0 0.0
    %3401 = vmatpush1.msra.mxu0 0.0
    %3402 = vmatprep.subr.mxu0 0.0
    %3403 = vmatpush1.msra.mxu0 0.0
    %3404 = vmatprep.subr.mxu0 0.0
    %3405 = vmatpush1.msra.mxu0 0.0
    %3406 = vmatprep.subr.mxu0 0.0
    %3407 = vmatpush1.msra.mxu0 0.0
    %3408 = vmatprep.mubr.f32.mxu0 %v3271
    %3409 = vmatmul.mubr.f32.gmra.mrb[0].mxu0 %v3046
    %v3410 = vpop.f32.mrb[0].mxu0
    %v3411 = vadd.f32 %v3340, %v3410
    %v3412 = vpop.f32.mrb[0].mxu0
    %v3413 = vadd.f32 %v3342, %v3412
    %3414 = vdwg.mxu0
    %3415 = vmatprep.subr.mxu0 %v3051
    %3416 = vmatpush1.msra.mxu0 %v3050
    %3417 = vmatprep.subr.mxu0 %v3055
    %3418 = vmatpush1.msra.mxu0 %v3054
    %3419 = vmatprep.subr.mxu0 %v3059
    %3420 = vmatpush1.msra.mxu0 %v3058
    %3421 = vmatprep.subr.mxu0 %v3063
    %3422 = vmatpush1.msra.mxu0 %v3062
    %3423 = vmatprep.subr.mxu0 %v3067
    %3424 = vmatpush1.msra.mxu0 %v3066
    %3425 = vmatprep.subr.mxu0 %v3071
    %3426 = vmatpush1.msra.mxu0 %v3070
    %3427 = vmatprep.subr.mxu0 %v3075
    %3428 = vmatpush1.msra.mxu0 %v3074
    %3429 = vmatprep.subr.mxu0 %v3079
    %3430 = vmatpush1.msra.mxu0 %v3078
    %3431 = vmatprep.subr.mxu0 %v3083
    %3432 = vmatpush1.msra.mxu0 %v3082
    %3433 = vmatprep.subr.mxu0 %v3087
    %3434 = vmatpush1.msra.mxu0 %v3086
    %3435 = vmatprep.subr.mxu0 %v3091
    %3436 = vmatpush1.msra.mxu0 %v3090
    %3437 = vmatprep.subr.mxu0 %v3095
    %3438 = vmatpush1.msra.mxu0 %v3094
    %3439 = vmatprep.subr.mxu0 %v3099
    %3440 = vmatpush1.msra.mxu0 %v3098
    %3441 = vmatprep.subr.mxu0 %v3103
    %3442 = vmatpush1.msra.mxu0 %v3102
    %3443 = vmatprep.subr.mxu0 %v3107
    %3444 = vmatpush1.msra.mxu0 %v3106
    %3445 = vmatprep.subr.mxu0 %v3111
    %3446 = vmatpush1.msra.mxu0 %v3110
    %3447 = vmatprep.subr.mxu0 %v3115
    %3448 = vmatpush1.msra.mxu0 %v3114
    %3449 = vmatprep.subr.mxu0 %v3119
    %3450 = vmatpush1.msra.mxu0 %v3118
    %3451 = vmatprep.subr.mxu0 %v3123
    %3452 = vmatpush1.msra.mxu0 %v3122
    %3453 = vmatprep.subr.mxu0 %v3127
    %3454 = vmatpush1.msra.mxu0 %v3126
    %3455 = vmatprep.subr.mxu0 %v3131
    %3456 = vmatpush1.msra.mxu0 %v3130
    %3457 = vmatprep.subr.mxu0 %v3135
    %3458 = vmatpush1.msra.mxu0 %v3134
    %3459 = vmatprep.subr.mxu0 %v3139
    %3460 = vmatpush1.msra.mxu0 %v3138
    %3461 = vmatprep.subr.mxu0 %v3143
    %3462 = vmatpush1.msra.mxu0 %v3142
    %3463 = vmatprep.subr.mxu0 %v3147
    %3464 = vmatpush1.msra.mxu0 %v3146
    %3465 = vmatprep.subr.mxu0 %v3151
    %3466 = vmatpush1.msra.mxu0 %v3150
    %3467 = vmatprep.subr.mxu0 %v3155
    %3468 = vmatpush1.msra.mxu0 %v3154
    %3469 = vmatprep.subr.mxu0 %v3159
    %3470 = vmatpush1.msra.mxu0 %v3158
    %3471 = vmatprep.subr.mxu0 %v3163
    %3472 = vmatpush1.msra.mxu0 %v3162
    %3473 = vmatprep.subr.mxu0 %v3167
    %3474 = vmatpush1.msra.mxu0 %v3166
    %3475 = vmatprep.subr.mxu0 %v3171
    %3476 = vmatpush1.msra.mxu0 %v3170
    %3477 = vmatprep.subr.mxu0 %v3175
    %3478 = vmatpush1.msra.mxu0 %v3174
    %3479 = vmatprep.mubr.f32.mxu0 %v3045
    %3480 = vmatmul.mubr.f32.gmra.mrb[0].mxu0 %v3044
    %v3481 = vpop.f32.mrb[0].mxu0
    %v3482 = vadd.f32 %v3261, %v3481
    %v3483 = vpop.f32.mrb[0].mxu0
    %v3484 = vadd.f32 %v3265, %v3483
    %3485 = vdwg.mxu0
    %3486 = vmatprep.subr.mxu0 %v3179
    %3487 = vmatpush1.msra.mxu0 %v3178
    %3488 = vmatprep.subr.mxu0 %v3183
    %3489 = vmatpush1.msra.mxu0 %v3182
    %3490 = vmatprep.subr.mxu0 %v3187
    %3491 = vmatpush1.msra.mxu0 %v3186
    %3492 = vmatprep.subr.mxu0 %v3191
    %3493 = vmatpush1.msra.mxu0 %v3190
    %3494 = vmatprep.subr.mxu0 %v3195
    %3495 = vmatpush1.msra.mxu0 %v3194
    %3496 = vmatprep.subr.mxu0 %v3199
    %3497 = vmatpush1.msra.mxu0 %v3198
    %3498 = vmatprep.subr.mxu0 %v3203
    %3499 = vmatpush1.msra.mxu0 %v3202
    %3500 = vmatprep.subr.mxu0 %v3207
    %3501 = vmatpush1.msra.mxu0 %v3206
    %3502 = vmatprep.subr.mxu0 %v3211
    %3503 = vmatpush1.msra.mxu0 %v3210
    %3504 = vmatprep.subr.mxu0 %v3215
    %3505 = vmatpush1.msra.mxu0 %v3214
    %3506 = vmatprep.subr.mxu0 %v3219
    %3507 = vmatpush1.msra.mxu0 %v3218
    %3508 = vmatprep.subr.mxu0 %v3223
    %3509 = vmatpush1.msra.mxu0 %v3222
    %3510 = vmatprep.subr.mxu0 %v3227
    %3511 = vmatpush1.msra.mxu0 %v3226
    %3512 = vmatprep.subr.mxu0 %v3231
    %3513 = vmatpush1.msra.mxu0 %v3230
    %3514 = vmatprep.subr.mxu0 %v3235
    %3515 = vmatpush1.msra.mxu0 %v3234
    %3516 = vmatprep.subr.mxu0 %v3239
    %3517 = vmatpush1.msra.mxu0 %v3238
    %3518 = vmatprep.subr.mxu0 %v3243
    %3519 = vmatpush1.msra.mxu0 %v3242
    %3520 = vmatprep.subr.mxu0 %v3247
    %3521 = vmatpush1.msra.mxu0 %v3246
    %3522 = vmatprep.subr.mxu0 0.0
    %3523 = vmatpush1.msra.mxu0 0.0
    %3524 = vmatprep.subr.mxu0 0.0
    %3525 = vmatpush1.msra.mxu0 0.0
    %3526 = vmatprep.subr.mxu0 0.0
    %3527 = vmatpush1.msra.mxu0 0.0
    %3528 = vmatprep.subr.mxu0 0.0
    %3529 = vmatpush1.msra.mxu0 0.0
    %3530 = vmatprep.subr.mxu0 0.0
    %3531 = vmatpush1.msra.mxu0 0.0
    %3532 = vmatprep.subr.mxu0 0.0
    %3533 = vmatpush1.msra.mxu0 0.0
    %3534 = vmatprep.subr.mxu0 0.0
    %3535 = vmatpush1.msra.mxu0 0.0
    %3536 = vmatprep.subr.mxu0 0.0
    %3537 = vmatpush1.msra.mxu0 0.0
    %3538 = vmatprep.subr.mxu0 0.0
    %3539 = vmatpush1.msra.mxu0 0.0
    %3540 = vmatprep.subr.mxu0 0.0
    %3541 = vmatpush1.msra.mxu0 0.0
    %3542 = vmatprep.subr.mxu0 0.0
    %3543 = vmatpush1.msra.mxu0 0.0
    %3544 = vmatprep.subr.mxu0 0.0
    %3545 = vmatpush1.msra.mxu0 0.0
    %3546 = vmatprep.subr.mxu0 0.0
    %3547 = vmatpush1.msra.mxu0 0.0
    %3548 = vmatprep.subr.mxu0 0.0
    %3549 = vmatpush1.msra.mxu0 0.0
    %3550 = vmatprep.mubr.f32.mxu0 %v3271
    %3551 = vmatmul.mubr.f32.gmra.mrb[0].mxu0 %v3046
    %v3552 = vpop.f32.mrb[0].mxu0
    %v3553 = vadd.f32 %v3482, %v3552
    %v3554 = vpop.f32.mrb[0].mxu0
    %v3555 = vadd.f32 %v3484, %v3554
    %3556 = vdwg.mxu0
    %v3561 = vcombine.low %v3411, %v3413
    %v3562 = vcombine.low %v3553, %v3555
    %3565 = vst [vmem:[%s12] sm:$0xff] %v3561
    %3566 = vst [vmem:[%s12 + $0x8] sm:$0xff] %v3562
    %v3567 = vld [vmem:[%s5] sm:$0x1]
    %v3569 = vlaneseq
    %v3570 = vshrl.u32 %v3569, 7
    %v3571 = vsub.s32 0, %v3570
    %v3572 = vrot.slane %v3567, %v3571
    %v3574 = vmul.f32 %v3411, %v3572
    %v3575 = vmul.f32 %v3574, %v3574
    %3576 = vmatprep.subr.mxu0 0.0
    %3577 = vmatpush1.xpose.msra.mxu0 %v3574
    %3578 = vmatprep.subr.mxu0 0.0
    %3579 = vmatpush1.xpose.msra.mxu0 0.0
    %3580 = vmatprep.subr.mxu0 0.0
    %3581 = vmatpush1.xpose.msra.mxu0 0.0
    %3582 = vmatprep.subr.mxu0 0.0
    %3583 = vmatpush1.xpose.msra.mxu0 0.0
    %3584 = vmatprep.subr.mxu0 0.0
    %3585 = vmatpush1.xpose.msra.mxu0 0.0
    %3586 = vmatprep.subr.mxu0 0.0
    %3587 = vmatpush1.xpose.msra.mxu0 0.0
    %3588 = vmatprep.subr.mxu0 0.0
    %3589 = vmatpush1.xpose.msra.mxu0 0.0
    %3590 = vmatprep.subr.mxu0 0.0
    %3591 = vmatpush1.xpose.msra.mxu0 0.0
    %3592 = vmatprep.subr.mxu0 0.0
    %3593 = vmatpush1.xpose.msra.mxu0 0.0
    %3594 = vmatprep.subr.mxu0 0.0
    %3595 = vmatpush1.xpose.msra.mxu0 0.0
    %3596 = vmatprep.subr.mxu0 0.0
    %3597 = vmatpush1.xpose.msra.mxu0 0.0
    %3598 = vmatprep.subr.mxu0 0.0
    %3599 = vmatpush1.xpose.msra.mxu0 0.0
    %3600 = vmatprep.subr.mxu0 0.0
    %3601 = vmatpush1.xpose.msra.mxu0 0.0
    %3602 = vmatprep.subr.mxu0 0.0
    %3603 = vmatpush1.xpose.msra.mxu0 0.0
    %3604 = vmatprep.subr.mxu0 0.0
    %3605 = vmatpush1.xpose.msra.mxu0 0.0
    %3606 = vmatprep.subr.mxu0 0.0
    %3607 = vmatpush1.xpose.msra.mxu0 0.0
    %3608 = vmatprep.subr.mxu0 0.0
    %3609 = vmatpush1.xpose.msra.mxu0 0.0
    %3610 = vmatprep.subr.mxu0 0.0
    %3611 = vmatpush1.xpose.msra.mxu0 0.0
    %3612 = vmatprep.subr.mxu0 0.0
    %3613 = vmatpush1.xpose.msra.mxu0 0.0
    %3614 = vmatprep.subr.mxu0 0.0
    %3615 = vmatpush1.xpose.msra.mxu0 0.0
    %3616 = vmatprep.subr.mxu0 0.0
    %3617 = vmatpush1.xpose.msra.mxu0 0.0
    %3618 = vmatprep.subr.mxu0 0.0
    %3619 = vmatpush1.xpose.msra.mxu0 0.0
    %3620 = vmatprep.subr.mxu0 0.0
    %3621 = vmatpush1.xpose.msra.mxu0 0.0
    %3622 = vmatprep.subr.mxu0 0.0
    %3623 = vmatpush1.xpose.msra.mxu0 0.0
    %3624 = vmatprep.subr.mxu0 0.0
    %3625 = vmatpush1.xpose.msra.mxu0 0.0
    %3626 = vmatprep.subr.mxu0 0.0
    %3627 = vmatpush1.xpose.msra.mxu0 0.0
    %3628 = vmatprep.subr.mxu0 0.0
    %3629 = vmatpush1.xpose.msra.mxu0 0.0
    %3630 = vmatprep.subr.mxu0 0.0
    %3631 = vmatpush1.xpose.msra.mxu0 0.0
    %3632 = vmatprep.subr.mxu0 0.0
    %3633 = vmatpush1.xpose.msra.mxu0 0.0
    %3634 = vmatprep.subr.mxu0 0.0
    %3635 = vmatpush1.xpose.msra.mxu0 0.0
    %3636 = vmatprep.subr.mxu0 0.0
    %3637 = vmatpush1.xpose.msra.mxu0 0.0
    %3638 = vmatprep.subr.mxu0 0.0
    %3639 = vmatpush1.xpose.msra.mxu0 0.0
    %3640 = vmatprep.mubr.f32.mxu0 0.0
    %3641 = vmatmul.mubr.f32.gmra.mrb[0].mxu0 %v3574
    %v3642 = vpop.f32.mrb[0].mxu0
    %v3643 = vadd.f32 0.0, %v3642
    %v3644 = vpop.f32.mrb[0].mxu0
    %3645 = vdwg.mxu0
    %3646 = vmatprep.subr.mxu0 0.0
    %3647 = vmatpush1.xpose.msra.mxu0 %v3575
    %3648 = vmatprep.subr.mxu0 0.0
    %3649 = vmatpush1.xpose.msra.mxu0 0.0
    %3650 = vmatprep.subr.mxu0 0.0
    %3651 = vmatpush1.xpose.msra.mxu0 0.0
    %3652 = vmatprep.subr.mxu0 0.0
    %3653 = vmatpush1.xpose.msra.mxu0 0.0
    %3654 = vmatprep.subr.mxu0 0.0
    %3655 = vmatpush1.xpose.msra.mxu0 0.0
    %3656 = vmatprep.subr.mxu0 0.0
    %3657 = vmatpush1.xpose.msra.mxu0 0.0
    %3658 = vmatprep.subr.mxu0 0.0
    %3659 = vmatpush1.xpose.msra.mxu0 0.0
    %3660 = vmatprep.subr.mxu0 0.0
    %3661 = vmatpush1.xpose.msra.mxu0 0.0
    %3662 = vmatprep.subr.mxu0 0.0
    %3663 = vmatpush1.xpose.msra.mxu0 0.0
    %3664 = vmatprep.subr.mxu0 0.0
    %3665 = vmatpush1.xpose.msra.mxu0 0.0
    %3666 = vmatprep.subr.mxu0 0.0
    %3667 = vmatpush1.xpose.msra.mxu0 0.0
    %3668 = vmatprep.subr.mxu0 0.0
    %3669 = vmatpush1.xpose.msra.mxu0 0.0
    %3670 = vmatprep.subr.mxu0 0.0
    %3671 = vmatpush1.xpose.msra.mxu0 0.0
    %3672 = vmatprep.subr.mxu0 0.0
    %3673 = vmatpush1.xpose.msra.mxu0 0.0
    %3674 = vmatprep.subr.mxu0 0.0
    %3675 = vmatpush1.xpose.msra.mxu0 0.0
    %3676 = vmatprep.subr.mxu0 0.0
    %3677 = vmatpush1.xpose.msra.mxu0 0.0
    %3678 = vmatprep.subr.mxu0 0.0
    %3679 = vmatpush1.xpose.msra.mxu0 0.0
    %3680 = vmatprep.subr.mxu0 0.0
    %3681 = vmatpush1.xpose.msra.mxu0 0.0
    %3682 = vmatprep.subr.mxu0 0.0
    %3683 = vmatpush1.xpose.msra.mxu0 0.0
    %3684 = vmatprep.subr.mxu0 0.0
    %3685 = vmatpush1.xpose.msra.mxu0 0.0
    %3686 = vmatprep.subr.mxu0 0.0
    %3687 = vmatpush1.xpose.msra.mxu0 0.0
    %3688 = vmatprep.subr.mxu0 0.0
    %3689 = vmatpush1.xpose.msra.mxu0 0.0
    %3690 = vmatprep.subr.mxu0 0.0
    %3691 = vmatpush1.xpose.msra.mxu0 0.0
    %3692 = vmatprep.subr.mxu0 0.0
    %3693 = vmatpush1.xpose.msra.mxu0 0.0
    %3694 = vmatprep.subr.mxu0 0.0
    %3695 = vmatpush1.xpose.msra.mxu0 0.0
    %3696 = vmatprep.subr.mxu0 0.0
    %3697 = vmatpush1.xpose.msra.mxu0 0.0
    %3698 = vmatprep.subr.mxu0 0.0
    %3699 = vmatpush1.xpose.msra.mxu0 0.0
    %3700 = vmatprep.subr.mxu0 0.0
    %3701 = vmatpush1.xpose.msra.mxu0 0.0
    %3702 = vmatprep.subr.mxu0 0.0
    %3703 = vmatpush1.xpose.msra.mxu0 0.0
    %3704 = vmatprep.subr.mxu0 0.0
    %3705 = vmatpush1.xpose.msra.mxu0 0.0
    %3706 = vmatprep.subr.mxu0 0.0
    %3707 = vmatpush1.xpose.msra.mxu0 0.0
    %3708 = vmatprep.subr.mxu0 0.0
    %3709 = vmatpush1.xpose.msra.mxu0 0.0
    %3710 = vmatprep.mubr.f32.mxu0 0.0
    %3711 = vmatmul.mubr.f32.gmra.mrb[0].mxu0 1.0
    %v3712 = vpop.f32.mrb[0].mxu0
    %v3713 = vadd.f32 0.0, %v3712
    %v3714 = vpop.f32.mrb[0].mxu0
    %3715 = vdwg.mxu0
    %vm3716 = vcmask 1043456
    %v3717 = vsel %vm3716, %v3575, 0.0
    %3718 = vadd.xlane.f32.xlu0 %v3717
    %v3719 = vpop.xlane.xlu0 %3718
    %v3720 = vadd.f32 %v3719, %v3713
    %v3721 = vmul.f32 %v3643, 2.0
    %v3722 = vsub.f32 %v3720, %v3721
    %v3723 = vmax.f32 %v3722, 0.0
    %v3724 = vmul.f32 %v3723, -0.5
    %v3725 = vmul.f32 %v3724, 1.442695
    %v3726 = vpow.pop %v3725
    %v3727 = vstv %s1493
    %v3728 = vmul.f32 %v3727, %v3726
    %v3729 = vlaneseq
    %v3730 = vshrl.u32 %v3729, 7
    %v3731 = vlaneseq
    %v3732 = vand.u32 %v3731, 127
    %vm3733 = vcmp.eq.s32.totalorder %v3730, %v3732
    %v3734 = vsel %vm3733, 1, 0
    %v3735 = vcvt.s32.f32 %v3734
    %vm3736 = vcmp.eq.s32.totalorder %v3730, 0
    %vm3737 = vcmp.eq.s32.totalorder %v3732, 0
    %vm3738 = vmand %vm3736, %vm3737
    %v3739 = vsel %vm3738, %v3728, 0.0
    %vm3740 = vcmask 27648
    %v3741 = vsel %vm3740, %v3739, 0.0
    %3742 = vadd.xlane.f32.xlu0 %v3741
    %v3743 = vpop.xlane.xlu0 %3742
    %v3744 = vrot.slane %v3743, 4
    %v3745 = vadd.f32 %v3743, %v3744
    %v3746 = vrot.slane %v3745, 2
    %v3747 = vadd.f32 %v3745, %v3746
    %v3748 = vrot.slane %v3747, 1
    %v3749 = vadd.f32 %v3747, %v3748
    %s3750 = vtos %v3749
    %v3751 = vstv %s3750
    %v3752 = vrcp.pop %v3751
    %v3753 = vmul.f32 1.0, %v3752
    %v3754 = vsel %vm3736, %v3728, 0.0
    %v3755 = vsel %vm3740, %v3754, 0.0
    %v3756 = vrot.slane %v3755, 4
    %v3757 = vadd.f32 %v3755, %v3756
    %v3758 = vrot.slane %v3757, 2
    %v3759 = vadd.f32 %v3757, %v3758
    %v3760 = vrot.slane %v3759, 1
    %v3761 = vadd.f32 %v3759, %v3760
    %v3762 = vmul.f32 %v3761, %v3753
    %v3763 = vsel %vm3736, %v3735, 0.0
    %v3764 = vsel %vm3740, %v3763, 0.0
    %v3765 = vrot.slane %v3764, 4
    %v3766 = vadd.f32 %v3764, %v3765
    %v3767 = vrot.slane %v3766, 2
    %v3768 = vadd.f32 %v3766, %v3767
    %v3769 = vrot.slane %v3768, 1
    %v3770 = vadd.f32 %v3768, %v3769
    %v3771 = vmul.f32 %v3770, %v3753
    %v3772 = vsel %vm3737, %v3728, 0.0
    %v3773 = vsel %vm3740, %v3772, 0.0
    %3774 = vadd.xlane.f32.xlu0 %v3773
    %v3775 = vpop.xlane.xlu0 %3774
    %v3776 = vmul.f32 %v3775, %v3762
    %v3777 = vsub.f32 %v3728, %v3776
    %v3778 = vsel %vm3736, %v3762, %v3777
    %v3779 = vmul.f32 %v3775, %v3771
    %v3780 = vsub.f32 %v3735, %v3779
    %v3781 = vsel %vm3736, %v3771, %v3780
    %vm3782 = vcmp.eq.s32.totalorder %v3730, 1
    %vm3783 = vcmp.eq.s32.totalorder %v3732, 1
    %vm3784 = vmand %vm3782, %vm3783
    %v3785 = vsel %vm3784, %v3778, 0.0
    %v3786 = vsel %vm3740, %v3785, 0.0
    %3787 = vadd.xlane.f32.xlu0 %v3786
    %v3788 = vpop.xlane.xlu0 %3787
    %v3789 = vrot.slane %v3788, 4
    %v3790 = vadd.f32 %v3788, %v3789
    %v3791 = vrot.slane %v3790, 2
    %v3792 = vadd.f32 %v3790, %v3791
    %v3793 = vrot.slane %v3792, 1
    %v3794 = vadd.f32 %v3792, %v3793
    %s3795 = vtos %v3794
    %v3796 = vstv %s3795
    %v3797 = vrcp.pop %v3796
    %v3798 = vmul.f32 1.0, %v3797
    %v3799 = vsel %vm3782, %v3778, 0.0
    %v3800 = vsel %vm3740, %v3799, 0.0
    %v3801 = vrot.slane %v3800, 4
    %v3802 = vadd.f32 %v3800, %v3801
    %v3803 = vrot.slane %v3802, 2
    %v3804 = vadd.f32 %v3802, %v3803
    %v3805 = vrot.slane %v3804, 1
    %v3806 = vadd.f32 %v3804, %v3805
    %v3807 = vmul.f32 %v3806, %v3798
    %v3808 = vsel %vm3782, %v3781, 0.0
    %v3809 = vsel %vm3740, %v3808, 0.0
    %v3810 = vrot.slane %v3809, 4
    %v3811 = vadd.f32 %v3809, %v3810
    %v3812 = vrot.slane %v3811, 2
    %v3813 = vadd.f32 %v3811, %v3812
    %v3814 = vrot.slane %v3813, 1
    %v3815 = vadd.f32 %v3813, %v3814
    %v3816 = vmul.f32 %v3815, %v3798
    %v3817 = vsel %vm3783, %v3778, 0.0
    %v3818 = vsel %vm3740, %v3817, 0.0
    %3819 = vadd.xlane.f32.xlu0 %v3818
    %v3820 = vpop.xlane.xlu0 %3819
    %v3821 = vmul.f32 %v3820, %v3807
    %v3822 = vsub.f32 %v3778, %v3821
    %v3823 = vsel %vm3782, %v3807, %v3822
    %v3824 = vmul.f32 %v3820, %v3816
    %v3825 = vsub.f32 %v3781, %v3824
    %v3826 = vsel %vm3782, %v3816, %v3825
    %vm3827 = vcmp.eq.s32.totalorder %v3730, 2
    %vm3828 = vcmp.eq.s32.totalorder %v3732, 2
    %vm3829 = vmand %vm3827, %vm3828
    %v3830 = vsel %vm3829, %v3823, 0.0
    %v3831 = vsel %vm3740, %v3830, 0.0
    %3832 = vadd.xlane.f32.xlu0 %v3831
    %v3833 = vpop.xlane.xlu0 %3832
    %v3834 = vrot.slane %v3833, 4
    %v3835 = vadd.f32 %v3833, %v3834
    %v3836 = vrot.slane %v3835, 2
    %v3837 = vadd.f32 %v3835, %v3836
    %v3838 = vrot.slane %v3837, 1
    %v3839 = vadd.f32 %v3837, %v3838
    %s3840 = vtos %v3839
    %v3841 = vstv %s3840
    %v3842 = vrcp.pop %v3841
    %v3843 = vmul.f32 1.0, %v3842
    %v3844 = vsel %vm3827, %v3823, 0.0
    %v3845 = vsel %vm3740, %v3844, 0.0
    %v3846 = vrot.slane %v3845, 4
    %v3847 = vadd.f32 %v3845, %v3846
    %v3848 = vrot.slane %v3847, 2
    %v3849 = vadd.f32 %v3847, %v3848
    %v3850 = vrot.slane %v3849, 1
    %v3851 = vadd.f32 %v3849, %v3850
    %v3852 = vmul.f32 %v3851, %v3843
    %v3853 = vsel %vm3827, %v3826, 0.0
    %v3854 = vsel %vm3740, %v3853, 0.0
    %v3855 = vrot.slane %v3854, 4
    %v3856 = vadd.f32 %v3854, %v3855
    %v3857 = vrot.slane %v3856, 2
    %v3858 = vadd.f32 %v3856, %v3857
    %v3859 = vrot.slane %v3858, 1
    %v3860 = vadd.f32 %v3858, %v3859
    %v3861 = vmul.f32 %v3860, %v3843
    %v3862 = vsel %vm3828, %v3823, 0.0
    %v3863 = vsel %vm3740, %v3862, 0.0
    %3864 = vadd.xlane.f32.xlu0 %v3863
    %v3865 = vpop.xlane.xlu0 %3864
    %v3866 = vmul.f32 %v3865, %v3852
    %v3867 = vsub.f32 %v3823, %v3866
    %v3868 = vsel %vm3827, %v3852, %v3867
    %v3869 = vmul.f32 %v3865, %v3861
    %v3870 = vsub.f32 %v3826, %v3869
    %v3871 = vsel %vm3827, %v3861, %v3870
    %vm3872 = vcmp.eq.s32.totalorder %v3730, 3
    %vm3873 = vcmp.eq.s32.totalorder %v3732, 3
    %vm3874 = vmand %vm3872, %vm3873
    %v3875 = vsel %vm3874, %v3868, 0.0
    %v3876 = vsel %vm3740, %v3875, 0.0
    %3877 = vadd.xlane.f32.xlu0 %v3876
    %v3878 = vpop.xlane.xlu0 %3877
    %v3879 = vrot.slane %v3878, 4
    %v3880 = vadd.f32 %v3878, %v3879
    %v3881 = vrot.slane %v3880, 2
    %v3882 = vadd.f32 %v3880, %v3881
    %v3883 = vrot.slane %v3882, 1
    %v3884 = vadd.f32 %v3882, %v3883
    %s3885 = vtos %v3884
    %v3886 = vstv %s3885
    %v3887 = vrcp.pop %v3886
    %v3888 = vmul.f32 1.0, %v3887
    %v3889 = vsel %vm3872, %v3871, 0.0
    %v3890 = vsel %vm3740, %v3889, 0.0
    %v3891 = vrot.slane %v3890, 4
    %v3892 = vadd.f32 %v3890, %v3891
    %v3893 = vrot.slane %v3892, 2
    %v3894 = vadd.f32 %v3892, %v3893
    %v3895 = vrot.slane %v3894, 1
    %v3896 = vadd.f32 %v3894, %v3895
    %v3897 = vmul.f32 %v3896, %v3888
    %v3898 = vsel %vm3873, %v3868, 0.0
    %v3899 = vsel %vm3740, %v3898, 0.0
    %3900 = vadd.xlane.f32.xlu0 %v3899
    %v3901 = vpop.xlane.xlu0 %3900
    %v3902 = vmul.f32 %v3901, %v3897
    %v3903 = vsub.f32 %v3871, %v3902
    %v3904 = vsel %vm3872, %v3897, %v3903
    %v3905 = vld [vmem:[%s6] sm:$0xff]
    %v3906 = vld [vmem:[%s6 + $0x8] sm:$0xff]
    %v3907 = vld [vmem:[%s6 + $0x10] sm:$0xff]
    %v3908 = vld [vmem:[%s6 + $0x18] sm:$0xff]
    %v3909 = vld [vmem:[%s6 + $0x20] sm:$0xff]
    %v3910 = vld [vmem:[%s6 + $0x28] sm:$0xff]
    %v3911 = vld [vmem:[%s6 + $0x30] sm:$0xff]
    %v3912 = vld [vmem:[%s6 + $0x38] sm:$0xff]
    %v3913 = vld [vmem:[%s6 + $0x40] sm:$0xff]
    %v3914 = vld [vmem:[%s6 + $0x48] sm:$0xff]
    %v3915 = vld [vmem:[%s6 + $0x50] sm:$0xff]
    %v3916 = vld [vmem:[%s6 + $0x58] sm:$0xff]
    %v3917 = vld [vmem:[%s6 + $0x60] sm:$0xf]
    %3918 = vmatprep.subr.mxu0 0.0
    %3919 = vmatpush1.xpose.msra.mxu0 %v3574
    %3920 = vmatprep.subr.mxu0 0.0
    %3921 = vmatpush1.xpose.msra.mxu0 0.0
    %3922 = vmatprep.subr.mxu0 0.0
    %3923 = vmatpush1.xpose.msra.mxu0 0.0
    %3924 = vmatprep.subr.mxu0 0.0
    %3925 = vmatpush1.xpose.msra.mxu0 0.0
    %3926 = vmatprep.subr.mxu0 0.0
    %3927 = vmatpush1.xpose.msra.mxu0 0.0
    %3928 = vmatprep.subr.mxu0 0.0
    %3929 = vmatpush1.xpose.msra.mxu0 0.0
    %3930 = vmatprep.subr.mxu0 0.0
    %3931 = vmatpush1.xpose.msra.mxu0 0.0
    %3932 = vmatprep.subr.mxu0 0.0
    %3933 = vmatpush1.xpose.msra.mxu0 0.0
    %3934 = vmatprep.subr.mxu0 0.0
    %3935 = vmatpush1.xpose.msra.mxu0 0.0
    %3936 = vmatprep.subr.mxu0 0.0
    %3937 = vmatpush1.xpose.msra.mxu0 0.0
    %3938 = vmatprep.subr.mxu0 0.0
    %3939 = vmatpush1.xpose.msra.mxu0 0.0
    %3940 = vmatprep.subr.mxu0 0.0
    %3941 = vmatpush1.xpose.msra.mxu0 0.0
    %3942 = vmatprep.subr.mxu0 0.0
    %3943 = vmatpush1.xpose.msra.mxu0 0.0
    %3944 = vmatprep.subr.mxu0 0.0
    %3945 = vmatpush1.xpose.msra.mxu0 0.0
    %3946 = vmatprep.subr.mxu0 0.0
    %3947 = vmatpush1.xpose.msra.mxu0 0.0
    %3948 = vmatprep.subr.mxu0 0.0
    %3949 = vmatpush1.xpose.msra.mxu0 0.0
    %3950 = vmatprep.subr.mxu0 0.0
    %3951 = vmatpush1.xpose.msra.mxu0 0.0
    %3952 = vmatprep.subr.mxu0 0.0
    %3953 = vmatpush1.xpose.msra.mxu0 0.0
    %3954 = vmatprep.subr.mxu0 0.0
    %3955 = vmatpush1.xpose.msra.mxu0 0.0
    %3956 = vmatprep.subr.mxu0 0.0
    %3957 = vmatpush1.xpose.msra.mxu0 0.0
    %3958 = vmatprep.subr.mxu0 0.0
    %3959 = vmatpush1.xpose.msra.mxu0 0.0
    %3960 = vmatprep.subr.mxu0 0.0
    %3961 = vmatpush1.xpose.msra.mxu0 0.0
    %3962 = vmatprep.subr.mxu0 0.0
    %3963 = vmatpush1.xpose.msra.mxu0 0.0
    %3964 = vmatprep.subr.mxu0 0.0
    %3965 = vmatpush1.xpose.msra.mxu0 0.0
    %3966 = vmatprep.subr.mxu0 0.0
    %3967 = vmatpush1.xpose.msra.mxu0 0.0
    %3968 = vmatprep.subr.mxu0 0.0
    %3969 = vmatpush1.xpose.msra.mxu0 0.0
    %3970 = vmatprep.subr.mxu0 0.0
    %3971 = vmatpush1.xpose.msra.mxu0 0.0
    %3972 = vmatprep.subr.mxu0 0.0
    %3973 = vmatpush1.xpose.msra.mxu0 0.0
    %3974 = vmatprep.subr.mxu0 0.0
    %3975 = vmatpush1.xpose.msra.mxu0 0.0
    %3976 = vmatprep.subr.mxu0 0.0
    %3977 = vmatpush1.xpose.msra.mxu0 0.0
    %3978 = vmatprep.subr.mxu0 0.0
    %3979 = vmatpush1.xpose.msra.mxu0 0.0
    %3980 = vmatprep.subr.mxu0 0.0
    %3981 = vmatpush1.xpose.msra.mxu0 0.0
    %3982 = vmatprep.mubr.f32.mxu0 0.0
    %3983 = vmatmul.mubr.f32.gmra.mrb[0].mxu0 %v3905
    %v3984 = vpop.f32.mrb[0].mxu0
    %v3985 = vadd.f32 0.0, %v3984
    %v3986 = vpop.f32.mrb[0].mxu0
    %3987 = vmatprep.mubr.f32.mxu0 0.0
    %3988 = vmatmul.mubr.f32.gmra.mrb[0].mxu0 %v3906
    %v3989 = vpop.f32.mrb[0].mxu0
    %v3990 = vadd.f32 0.0, %v3989
    %v3991 = vpop.f32.mrb[0].mxu0
    %3992 = vmatprep.mubr.f32.mxu0 0.0
    %3993 = vmatmul.mubr.f32.gmra.mrb[0].mxu0 %v3907
    %v3994 = vpop.f32.mrb[0].mxu0
    %v3995 = vadd.f32 0.0, %v3994
    %v3996 = vpop.f32.mrb[0].mxu0
    %3997 = vmatprep.mubr.f32.mxu0 0.0
    %3998 = vmatmul.mubr.f32.gmra.mrb[0].mxu0 %v3908
    %v3999 = vpop.f32.mrb[0].mxu0
    %v4000 = vadd.f32 0.0, %v3999
    %v4001 = vpop.f32.mrb[0].mxu0
    %4002 = vmatprep.mubr.f32.mxu0 0.0
    %4003 = vmatmul.mubr.f32.gmra.mrb[0].mxu0 %v3909
    %v4004 = vpop.f32.mrb[0].mxu0
    %v4005 = vadd.f32 0.0, %v4004
    %v4006 = vpop.f32.mrb[0].mxu0
    %4007 = vmatprep.mubr.f32.mxu0 0.0
    %4008 = vmatmul.mubr.f32.gmra.mrb[0].mxu0 %v3910
    %v4009 = vpop.f32.mrb[0].mxu0
    %v4010 = vadd.f32 0.0, %v4009
    %v4011 = vpop.f32.mrb[0].mxu0
    %4012 = vmatprep.mubr.f32.mxu0 0.0
    %4013 = vmatmul.mubr.f32.gmra.mrb[0].mxu0 %v3911
    %v4014 = vpop.f32.mrb[0].mxu0
    %v4015 = vadd.f32 0.0, %v4014
    %v4016 = vpop.f32.mrb[0].mxu0
    %4017 = vmatprep.mubr.f32.mxu0 0.0
    %4018 = vmatmul.mubr.f32.gmra.mrb[0].mxu0 %v3912
    %v4019 = vpop.f32.mrb[0].mxu0
    %v4020 = vadd.f32 0.0, %v4019
    %v4021 = vpop.f32.mrb[0].mxu0
    %4022 = vmatprep.mubr.f32.mxu0 0.0
    %4023 = vmatmul.mubr.f32.gmra.mrb[0].mxu0 %v3913
    %v4024 = vpop.f32.mrb[0].mxu0
    %v4025 = vadd.f32 0.0, %v4024
    %v4026 = vpop.f32.mrb[0].mxu0
    %4027 = vmatprep.mubr.f32.mxu0 0.0
    %4028 = vmatmul.mubr.f32.gmra.mrb[0].mxu0 %v3914
    %v4029 = vpop.f32.mrb[0].mxu0
    %v4030 = vadd.f32 0.0, %v4029
    %v4031 = vpop.f32.mrb[0].mxu0
    %4032 = vmatprep.mubr.f32.mxu0 0.0
    %4033 = vmatmul.mubr.f32.gmra.mrb[0].mxu0 %v3915
    %v4034 = vpop.f32.mrb[0].mxu0
    %v4035 = vadd.f32 0.0, %v4034
    %v4036 = vpop.f32.mrb[0].mxu0
    %4037 = vmatprep.mubr.f32.mxu0 0.0
    %4038 = vmatmul.mubr.f32.gmra.mrb[0].mxu0 %v3916
    %v4039 = vpop.f32.mrb[0].mxu0
    %v4040 = vadd.f32 0.0, %v4039
    %v4041 = vpop.f32.mrb[0].mxu0
    %4042 = vmatprep.mubr.f32.mxu0 0.0
    %4043 = vmatmul.mubr.f32.gmra.mrb[0].mxu0 %v3917
    %v4044 = vpop.f32.mrb[0].mxu0
    %v4045 = vadd.f32 0.0, %v4044
    %v4046 = vpop.f32.mrb[0].mxu0
    %4047 = vdwg.mxu0
    %4048 = vmatprep.subr.mxu0 0.0
    %4049 = vmatpush1.xpose.msra.mxu0 %v3575
    %4050 = vmatprep.subr.mxu0 0.0
    %4051 = vmatpush1.xpose.msra.mxu0 0.0
    %4052 = vmatprep.subr.mxu0 0.0
    %4053 = vmatpush1.xpose.msra.mxu0 0.0
    %4054 = vmatprep.subr.mxu0 0.0
    %4055 = vmatpush1.xpose.msra.mxu0 0.0
    %4056 = vmatprep.subr.mxu0 0.0
    %4057 = vmatpush1.xpose.msra.mxu0 0.0
    %4058 = vmatprep.subr.mxu0 0.0
    %4059 = vmatpush1.xpose.msra.mxu0 0.0
    %4060 = vmatprep.subr.mxu0 0.0
    %4061 = vmatpush1.xpose.msra.mxu0 0.0
    %4062 = vmatprep.subr.mxu0 0.0
    %4063 = vmatpush1.xpose.msra.mxu0 0.0
    %4064 = vmatprep.subr.mxu0 0.0
    %4065 = vmatpush1.xpose.msra.mxu0 0.0
    %4066 = vmatprep.subr.mxu0 0.0
    %4067 = vmatpush1.xpose.msra.mxu0 0.0
    %4068 = vmatprep.subr.mxu0 0.0
    %4069 = vmatpush1.xpose.msra.mxu0 0.0
    %4070 = vmatprep.subr.mxu0 0.0
    %4071 = vmatpush1.xpose.msra.mxu0 0.0
    %4072 = vmatprep.subr.mxu0 0.0
    %4073 = vmatpush1.xpose.msra.mxu0 0.0
    %4074 = vmatprep.subr.mxu0 0.0
    %4075 = vmatpush1.xpose.msra.mxu0 0.0
    %4076 = vmatprep.subr.mxu0 0.0
    %4077 = vmatpush1.xpose.msra.mxu0 0.0
    %4078 = vmatprep.subr.mxu0 0.0
    %4079 = vmatpush1.xpose.msra.mxu0 0.0
    %4080 = vmatprep.subr.mxu0 0.0
    %4081 = vmatpush1.xpose.msra.mxu0 0.0
    %4082 = vmatprep.subr.mxu0 0.0
    %4083 = vmatpush1.xpose.msra.mxu0 0.0
    %4084 = vmatprep.subr.mxu0 0.0
    %4085 = vmatpush1.xpose.msra.mxu0 0.0
    %4086 = vmatprep.subr.mxu0 0.0
    %4087 = vmatpush1.xpose.msra.mxu0 0.0
    %4088 = vmatprep.subr.mxu0 0.0
    %4089 = vmatpush1.xpose.msra.mxu0 0.0
    %4090 = vmatprep.subr.mxu0 0.0
    %4091 = vmatpush1.xpose.msra.mxu0 0.0
    %4092 = vmatprep.subr.mxu0 0.0
    %4093 = vmatpush1.xpose.msra.mxu0 0.0
    %4094 = vmatprep.subr.mxu0 0.0
    %4095 = vmatpush1.xpose.msra.mxu0 0.0
    %4096 = vmatprep.subr.mxu0 0.0
    %4097 = vmatpush1.xpose.msra.mxu0 0.0
    %4098 = vmatprep.subr.mxu0 0.0
    %4099 = vmatpush1.xpose.msra.mxu0 0.0
    %4100 = vmatprep.subr.mxu0 0.0
    %4101 = vmatpush1.xpose.msra.mxu0 0.0
    %4102 = vmatprep.subr.mxu0 0.0
    %4103 = vmatpush1.xpose.msra.mxu0 0.0
    %4104 = vmatprep.subr.mxu0 0.0
    %4105 = vmatpush1.xpose.msra.mxu0 0.0
    %4106 = vmatprep.subr.mxu0 0.0
    %4107 = vmatpush1.xpose.msra.mxu0 0.0
    %4108 = vmatprep.subr.mxu0 0.0
    %4109 = vmatpush1.xpose.msra.mxu0 0.0
    %4110 = vmatprep.subr.mxu0 0.0
    %4111 = vmatpush1.xpose.msra.mxu0 0.0
    %4112 = vmatprep.mubr.f32.mxu0 0.0
    %4113 = vmatmul.mubr.f32.gmra.mrb[0].mxu0 1.0
    %v4114 = vpop.f32.mrb[0].mxu0
    %v4115 = vadd.f32 0.0, %v4114
    %v4116 = vpop.f32.mrb[0].mxu0
    %4117 = vmatprep.mubr.f32.mxu0 0.0
    %4118 = vmatmul.mubr.f32.gmra.mrb[0].mxu0 1.0
    %v4119 = vpop.f32.mrb[0].mxu0
    %v4120 = vadd.f32 0.0, %v4119
    %v4121 = vpop.f32.mrb[0].mxu0
    %4122 = vmatprep.mubr.f32.mxu0 0.0
    %4123 = vmatmul.mubr.f32.gmra.mrb[0].mxu0 1.0
    %v4124 = vpop.f32.mrb[0].mxu0
    %v4125 = vadd.f32 0.0, %v4124
    %v4126 = vpop.f32.mrb[0].mxu0
    %4127 = vmatprep.mubr.f32.mxu0 0.0
    %4128 = vmatmul.mubr.f32.gmra.mrb[0].mxu0 1.0
    %v4129 = vpop.f32.mrb[0].mxu0
    %v4130 = vadd.f32 0.0, %v4129
    %v4131 = vpop.f32.mrb[0].mxu0
    %4132 = vmatprep.mubr.f32.mxu0 0.0
    %4133 = vmatmul.mubr.f32.gmra.mrb[0].mxu0 1.0
    %v4134 = vpop.f32.mrb[0].mxu0
    %v4135 = vadd.f32 0.0, %v4134
    %v4136 = vpop.f32.mrb[0].mxu0
    %4137 = vmatprep.mubr.f32.mxu0 0.0
    %4138 = vmatmul.mubr.f32.gmra.mrb[0].mxu0 1.0
    %v4139 = vpop.f32.mrb[0].mxu0
    %v4140 = vadd.f32 0.0, %v4139
    %v4141 = vpop.f32.mrb[0].mxu0
    %4142 = vmatprep.mubr.f32.mxu0 0.0
    %4143 = vmatmul.mubr.f32.gmra.mrb[0].mxu0 1.0
    %v4144 = vpop.f32.mrb[0].mxu0
    %v4145 = vadd.f32 0.0, %v4144
    %v4146 = vpop.f32.mrb[0].mxu0
    %4147 = vmatprep.mubr.f32.mxu0 0.0
    %4148 = vmatmul.mubr.f32.gmra.mrb[0].mxu0 1.0
    %v4149 = vpop.f32.mrb[0].mxu0
    %v4150 = vadd.f32 0.0, %v4149
    %v4151 = vpop.f32.mrb[0].mxu0
    %4152 = vmatprep.mubr.f32.mxu0 0.0
    %4153 = vmatmul.mubr.f32.gmra.mrb[0].mxu0 1.0
    %v4154 = vpop.f32.mrb[0].mxu0
    %v4155 = vadd.f32 0.0, %v4154
    %v4156 = vpop.f32.mrb[0].mxu0
    %4157 = vmatprep.mubr.f32.mxu0 0.0
    %4158 = vmatmul.mubr.f32.gmra.mrb[0].mxu0 1.0
    %v4159 = vpop.f32.mrb[0].mxu0
    %v4160 = vadd.f32 0.0, %v4159
    %v4161 = vpop.f32.mrb[0].mxu0
    %4162 = vmatprep.mubr.f32.mxu0 0.0
    %4163 = vmatmul.mubr.f32.gmra.mrb[0].mxu0 1.0
    %v4164 = vpop.f32.mrb[0].mxu0
    %v4165 = vadd.f32 0.0, %v4164
    %v4166 = vpop.f32.mrb[0].mxu0
    %4167 = vmatprep.mubr.f32.mxu0 0.0
    %4168 = vmatmul.mubr.f32.gmra.mrb[0].mxu0 1.0
    %v4169 = vpop.f32.mrb[0].mxu0
    %v4170 = vadd.f32 0.0, %v4169
    %v4171 = vpop.f32.mrb[0].mxu0
    %4172 = vmatprep.mubr.f32.mxu0 0.0
    %4173 = vmatmul.mubr.f32.gmra.mrb[0].mxu0 1.0
    %v4174 = vpop.f32.mrb[0].mxu0
    %v4175 = vadd.f32 0.0, %v4174
    %v4176 = vpop.f32.mrb[0].mxu0
    %4177 = vdwg.mxu0
    %v4178 = vmul.f32 %v3905, %v3905
    %v4179 = vmul.f32 %v3906, %v3906
    %v4180 = vmul.f32 %v3907, %v3907
    %v4181 = vmul.f32 %v3908, %v3908
    %v4182 = vmul.f32 %v3909, %v3909
    %v4183 = vmul.f32 %v3910, %v3910
    %v4184 = vmul.f32 %v3911, %v3911
    %v4185 = vmul.f32 %v3912, %v3912
    %v4186 = vmul.f32 %v3913, %v3913
    %v4187 = vmul.f32 %v3914, %v3914
    %v4188 = vmul.f32 %v3915, %v3915
    %v4189 = vmul.f32 %v3916, %v3916
    %v4190 = vmul.f32 %v3917, %v3917
    %4191 = vadd.xlane.f32.xlu0 %v4178
    %v4192 = vpop.xlane.xlu0 %4191
    %4193 = vadd.xlane.f32.xlu0 %v4179
    %v4194 = vpop.xlane.xlu0 %4193
    %4195 = vadd.xlane.f32.xlu0 %v4180
    %v4196 = vpop.xlane.xlu0 %4195
    %4197 = vadd.xlane.f32.xlu0 %v4181
    %v4198 = vpop.xlane.xlu0 %4197
    %4199 = vadd.xlane.f32.xlu0 %v4182
    %v4200 = vpop.xlane.xlu0 %4199
    %4201 = vadd.xlane.f32.xlu0 %v4183
    %v4202 = vpop.xlane.xlu0 %4201
    %4203 = vadd.xlane.f32.xlu0 %v4184
    %v4204 = vpop.xlane.xlu0 %4203
    %4205 = vadd.xlane.f32.xlu0 %v4185
    %v4206 = vpop.xlane.xlu0 %4205
    %4207 = vadd.xlane.f32.xlu0 %v4186
    %v4208 = vpop.xlane.xlu0 %4207
    %4209 = vadd.xlane.f32.xlu0 %v4187
    %v4210 = vpop.xlane.xlu0 %4209
    %4211 = vadd.xlane.f32.xlu0 %v4188
    %v4212 = vpop.xlane.xlu0 %4211
    %4213 = vadd.xlane.f32.xlu0 %v4189
    %v4214 = vpop.xlane.xlu0 %4213
    %v4215 = vsel %vm3716, %v4190, 0.0
    %4216 = vadd.xlane.f32.xlu0 %v4215
    %v4217 = vpop.xlane.xlu0 %4216
    %v4218 = vadd.f32 %v4192, %v4115
    %v4219 = vadd.f32 %v4194, %v4120
    %v4220 = vadd.f32 %v4196, %v4125
    %v4221 = vadd.f32 %v4198, %v4130
    %v4222 = vadd.f32 %v4200, %v4135
    %v4223 = vadd.f32 %v4202, %v4140
    %v4224 = vadd.f32 %v4204, %v4145
    %v4225 = vadd.f32 %v4206, %v4150
    %v4226 = vadd.f32 %v4208, %v4155
    %v4227 = vadd.f32 %v4210, %v4160
    %v4228 = vadd.f32 %v4212, %v4165
    %v4229 = vadd.f32 %v4214, %v4170
    %v4230 = vadd.f32 %v4217, %v4175
    %v4231 = vmul.f32 %v3985, 2.0
    %v4232 = vmul.f32 %v3990, 2.0
    %v4233 = vmul.f32 %v3995, 2.0
    %v4234 = vmul.f32 %v4000, 2.0
    %v4235 = vmul.f32 %v4005, 2.0
    %v4236 = vmul.f32 %v4010, 2.0
    %v4237 = vmul.f32 %v4015, 2.0
    %v4238 = vmul.f32 %v4020, 2.0
    %v4239 = vmul.f32 %v4025, 2.0
    %v4240 = vmul.f32 %v4030, 2.0
    %v4241 = vmul.f32 %v4035, 2.0
    %v4242 = vmul.f32 %v4040, 2.0
    %v4243 = vmul.f32 %v4045, 2.0
    %v4244 = vsub.f32 %v4218, %v4231
    %v4245 = vsub.f32 %v4219, %v4232
    %v4246 = vsub.f32 %v4220, %v4233
    %v4247 = vsub.f32 %v4221, %v4234
    %v4248 = vsub.f32 %v4222, %v4235
    %v4249 = vsub.f32 %v4223, %v4236
    %v4250 = vsub.f32 %v4224, %v4237
    %v4251 = vsub.f32 %v4225, %v4238
    %v4252 = vsub.f32 %v4226, %v4239
    %v4253 = vsub.f32 %v4227, %v4240
    %v4254 = vsub.f32 %v4228, %v4241
    %v4255 = vsub.f32 %v4229, %v4242
    %v4256 = vsub.f32 %v4230, %v4243
    %v4257 = vmax.f32 %v4244, 0.0
    %v4258 = vmax.f32 %v4245, 0.0
    %v4259 = vmax.f32 %v4246, 0.0
    %v4260 = vmax.f32 %v4247, 0.0
    %v4261 = vmax.f32 %v4248, 0.0
    %v4262 = vmax.f32 %v4249, 0.0
    %v4263 = vmax.f32 %v4250, 0.0
    %v4264 = vmax.f32 %v4251, 0.0
    %v4265 = vmax.f32 %v4252, 0.0
    %v4266 = vmax.f32 %v4253, 0.0
    %v4267 = vmax.f32 %v4254, 0.0
    %v4268 = vmax.f32 %v4255, 0.0
    %v4269 = vmax.f32 %v4256, 0.0
    %v4270 = vmul.f32 %v4257, -0.5
    %v4271 = vmul.f32 %v4258, -0.5
    %v4272 = vmul.f32 %v4259, -0.5
    %v4273 = vmul.f32 %v4260, -0.5
    %v4274 = vmul.f32 %v4261, -0.5
    %v4275 = vmul.f32 %v4262, -0.5
    %v4276 = vmul.f32 %v4263, -0.5
    %v4277 = vmul.f32 %v4264, -0.5
    %v4278 = vmul.f32 %v4265, -0.5
    %v4279 = vmul.f32 %v4266, -0.5
    %v4280 = vmul.f32 %v4267, -0.5
    %v4281 = vmul.f32 %v4268, -0.5
    %v4282 = vmul.f32 %v4269, -0.5
    %v4283 = vmul.f32 %v4270, 1.442695
    %v4284 = vpow.pop %v4283
    %v4285 = vmul.f32 %v4271, 1.442695
    %v4286 = vpow.pop %v4285
    %v4287 = vmul.f32 %v4272, 1.442695
    %v4288 = vpow.pop %v4287
    %v4289 = vmul.f32 %v4273, 1.442695
    %v4290 = vpow.pop %v4289
    %v4291 = vmul.f32 %v4274, 1.442695
    %v4292 = vpow.pop %v4291
    %v4293 = vmul.f32 %v4275, 1.442695
    %v4294 = vpow.pop %v4293
    %v4295 = vmul.f32 %v4276, 1.442695
    %v4296 = vpow.pop %v4295
    %v4297 = vmul.f32 %v4277, 1.442695
    %v4298 = vpow.pop %v4297
    %v4299 = vmul.f32 %v4278, 1.442695
    %v4300 = vpow.pop %v4299
    %v4301 = vmul.f32 %v4279, 1.442695
    %v4302 = vpow.pop %v4301
    %v4303 = vmul.f32 %v4280, 1.442695
    %v4304 = vpow.pop %v4303
    %v4305 = vmul.f32 %v4281, 1.442695
    %v4306 = vpow.pop %v4305
    %v4307 = vmul.f32 %v4282, 1.442695
    %v4308 = vpow.pop %v4307
    %v4309 = vmul.f32 %v3727, %v4284
    %v4310 = vmul.f32 %v3727, %v4286
    %v4311 = vmul.f32 %v3727, %v4288
    %v4312 = vmul.f32 %v3727, %v4290
    %v4313 = vmul.f32 %v3727, %v4292
    %v4314 = vmul.f32 %v3727, %v4294
    %v4315 = vmul.f32 %v3727, %v4296
    %v4316 = vmul.f32 %v3727, %v4298
    %v4317 = vmul.f32 %v3727, %v4300
    %v4318 = vmul.f32 %v3727, %v4302
    %v4319 = vmul.f32 %v3727, %v4304
    %v4320 = vmul.f32 %v3727, %v4306
    %v4321 = vmul.f32 %v3727, %v4308
    %vm4322 = vcmask 31744
    %v4324 = vsel %vm4322, %v4309, 0
    %v4327 = vsel %vm4322, %v4310, 0
    %v4330 = vsel %vm4322, %v4311, 0
    %v4333 = vsel %vm4322, %v4312, 0
    %v4336 = vsel %vm4322, %v4313, 0
    %v4339 = vsel %vm4322, %v4314, 0
    %v4342 = vsel %vm4322, %v4315, 0
    %v4345 = vsel %vm4322, %v4316, 0
    %v4348 = vsel %vm4322, %v4317, 0
    %v4351 = vsel %vm4322, %v4318, 0
    %v4354 = vsel %vm4322, %v4319, 0
    %v4357 = vsel %vm4322, %v4320, 0
    %v4360 = vsel %vm4322, %v4321, 0
    %v4363 = vsel %vm3716, %v3904, 0
    %4365 = vmatprep.subr.mxu0 0.0
    %4366 = vmatpush1.msra.mxu0 %v4363
    %4367 = vmatprep.subr.mxu0 0.0
    %4368 = vmatpush1.msra.mxu0 0.0
    %4369 = vmatprep.subr.mxu0 0.0
    %4370 = vmatpush1.msra.mxu0 0.0
    %4371 = vmatprep.subr.mxu0 0.0
    %4372 = vmatpush1.msra.mxu0 0.0
    %4373 = vmatprep.subr.mxu0 0.0
    %4374 = vmatpush1.msra.mxu0 0.0
    %4375 = vmatprep.subr.mxu0 0.0
    %4376 = vmatpush1.msra.mxu0 0.0
    %4377 = vmatprep.subr.mxu0 0.0
    %4378 = vmatpush1.msra.mxu0 0.0
    %4379 = vmatprep.subr.mxu0 0.0
    %4380 = vmatpush1.msra.mxu0 0.0
    %4381 = vmatprep.subr.mxu0 0.0
    %4382 = vmatpush1.msra.mxu0 0.0
    %4383 = vmatprep.subr.mxu0 0.0
    %4384 = vmatpush1.msra.mxu0 0.0
    %4385 = vmatprep.subr.mxu0 0.0
    %4386 = vmatpush1.msra.mxu0 0.0
    %4387 = vmatprep.subr.mxu0 0.0
    %4388 = vmatpush1.msra.mxu0 0.0
    %4389 = vmatprep.subr.mxu0 0.0
    %4390 = vmatpush1.msra.mxu0 0.0
    %4391 = vmatprep.subr.mxu0 0.0
    %4392 = vmatpush1.msra.mxu0 0.0
    %4393 = vmatprep.subr.mxu0 0.0
    %4394 = vmatpush1.msra.mxu0 0.0
    %4395 = vmatprep.subr.mxu0 0.0
    %4396 = vmatpush1.msra.mxu0 0.0
    %4397 = vmatprep.subr.mxu0 0.0
    %4398 = vmatpush1.msra.mxu0 0.0
    %4399 = vmatprep.subr.mxu0 0.0
    %4400 = vmatpush1.msra.mxu0 0.0
    %4401 = vmatprep.subr.mxu0 0.0
    %4402 = vmatpush1.msra.mxu0 0.0
    %4403 = vmatprep.subr.mxu0 0.0
    %4404 = vmatpush1.msra.mxu0 0.0
    %4405 = vmatprep.subr.mxu0 0.0
    %4406 = vmatpush1.msra.mxu0 0.0
    %4407 = vmatprep.subr.mxu0 0.0
    %4408 = vmatpush1.msra.mxu0 0.0
    %4409 = vmatprep.subr.mxu0 0.0
    %4410 = vmatpush1.msra.mxu0 0.0
    %4411 = vmatprep.subr.mxu0 0.0
    %4412 = vmatpush1.msra.mxu0 0.0
    %4413 = vmatprep.subr.mxu0 0.0
    %4414 = vmatpush1.msra.mxu0 0.0
    %4415 = vmatprep.subr.mxu0 0.0
    %4416 = vmatpush1.msra.mxu0 0.0
    %4417 = vmatprep.subr.mxu0 0.0
    %4418 = vmatpush1.msra.mxu0 0.0
    %4419 = vmatprep.subr.mxu0 0.0
    %4420 = vmatpush1.msra.mxu0 0.0
    %4421 = vmatprep.subr.mxu0 0.0
    %4422 = vmatpush1.msra.mxu0 0.0
    %4423 = vmatprep.subr.mxu0 0.0
    %4424 = vmatpush1.msra.mxu0 0.0
    %4425 = vmatprep.subr.mxu0 0.0
    %4426 = vmatpush1.msra.mxu0 0.0
    %4427 = vmatprep.subr.mxu0 0.0
    %4428 = vmatpush1.msra.mxu0 0.0
    %4429 = vmatprep.mubr.f32.mxu0 0.0
    %4430 = vmatmul.mubr.f32.gmra.mrb[0].mxu0 %v4324
    %v4431 = vpop.f32.mrb[0].mxu0
    %v4432 = vadd.f32 0.0, %v4431
    %v4433 = vpop.f32.mrb[0].mxu0
    %4434 = vmatprep.mubr.f32.mxu0 0.0
    %4435 = vmatmul.mubr.f32.gmra.mrb[0].mxu0 %v4327
    %v4436 = vpop.f32.mrb[0].mxu0
    %v4437 = vadd.f32 0.0, %v4436
    %v4438 = vpop.f32.mrb[0].mxu0
    %4439 = vmatprep.mubr.f32.mxu0 0.0
    %4440 = vmatmul.mubr.f32.gmra.mrb[0].mxu0 %v4330
    %v4441 = vpop.f32.mrb[0].mxu0
    %v4442 = vadd.f32 0.0, %v4441
    %v4443 = vpop.f32.mrb[0].mxu0
    %4444 = vmatprep.mubr.f32.mxu0 0.0
    %4445 = vmatmul.mubr.f32.gmra.mrb[0].mxu0 %v4333
    %v4446 = vpop.f32.mrb[0].mxu0
    %v4447 = vadd.f32 0.0, %v4446
    %v4448 = vpop.f32.mrb[0].mxu0
    %4449 = vmatprep.mubr.f32.mxu0 0.0
    %4450 = vmatmul.mubr.f32.gmra.mrb[0].mxu0 %v4336
    %v4451 = vpop.f32.mrb[0].mxu0
    %v4452 = vadd.f32 0.0, %v4451
    %v4453 = vpop.f32.mrb[0].mxu0
    %4454 = vmatprep.mubr.f32.mxu0 0.0
    %4455 = vmatmul.mubr.f32.gmra.mrb[0].mxu0 %v4339
    %v4456 = vpop.f32.mrb[0].mxu0
    %v4457 = vadd.f32 0.0, %v4456
    %v4458 = vpop.f32.mrb[0].mxu0
    %4459 = vmatprep.mubr.f32.mxu0 0.0
    %4460 = vmatmul.mubr.f32.gmra.mrb[0].mxu0 %v4342
    %v4461 = vpop.f32.mrb[0].mxu0
    %v4462 = vadd.f32 0.0, %v4461
    %v4463 = vpop.f32.mrb[0].mxu0
    %4464 = vmatprep.mubr.f32.mxu0 0.0
    %4465 = vmatmul.mubr.f32.gmra.mrb[0].mxu0 %v4345
    %v4466 = vpop.f32.mrb[0].mxu0
    %v4467 = vadd.f32 0.0, %v4466
    %v4468 = vpop.f32.mrb[0].mxu0
    %4469 = vmatprep.mubr.f32.mxu0 0.0
    %4470 = vmatmul.mubr.f32.gmra.mrb[0].mxu0 %v4348
    %v4471 = vpop.f32.mrb[0].mxu0
    %v4472 = vadd.f32 0.0, %v4471
    %v4473 = vpop.f32.mrb[0].mxu0
    %4474 = vmatprep.mubr.f32.mxu0 0.0
    %4475 = vmatmul.mubr.f32.gmra.mrb[0].mxu0 %v4351
    %v4476 = vpop.f32.mrb[0].mxu0
    %v4477 = vadd.f32 0.0, %v4476
    %v4478 = vpop.f32.mrb[0].mxu0
    %4479 = vmatprep.mubr.f32.mxu0 0.0
    %4480 = vmatmul.mubr.f32.gmra.mrb[0].mxu0 %v4354
    %v4481 = vpop.f32.mrb[0].mxu0
    %v4482 = vadd.f32 0.0, %v4481
    %v4483 = vpop.f32.mrb[0].mxu0
    %4484 = vmatprep.mubr.f32.mxu0 0.0
    %4485 = vmatmul.mubr.f32.gmra.mrb[0].mxu0 %v4357
    %v4486 = vpop.f32.mrb[0].mxu0
    %v4487 = vadd.f32 0.0, %v4486
    %v4488 = vpop.f32.mrb[0].mxu0
    %4489 = vmatprep.mubr.f32.mxu0 0.0
    %4490 = vmatmul.mubr.f32.gmra.mrb[0].mxu0 %v4360
    %v4491 = vpop.f32.mrb[0].mxu0
    %v4492 = vadd.f32 0.0, %v4491
    %v4493 = vpop.f32.mrb[0].mxu0
    %4494 = vdwg.mxu0
    %v4496 = vsel %vm4322, %v4432, 0
    %v4499 = vsel %vm4322, %v4437, 0
    %v4502 = vsel %vm4322, %v4442, 0
    %v4505 = vsel %vm4322, %v4447, 0
    %v4508 = vsel %vm4322, %v4452, 0
    %v4511 = vsel %vm4322, %v4457, 0
    %v4514 = vsel %vm4322, %v4462, 0
    %v4517 = vsel %vm4322, %v4467, 0
    %v4520 = vsel %vm4322, %v4472, 0
    %v4523 = vsel %vm4322, %v4477, 0
    %v4526 = vsel %vm4322, %v4482, 0
    %v4529 = vsel %vm4322, %v4487, 0
    %v4532 = vsel %vm4322, %v4492, 0
    %v4534 = vsel %vm3716, %v3553, 0
    %4536 = vmatprep.subr.mxu0 0.0
    %4537 = vmatpush1.msra.mxu0 %v4534
    %4538 = vmatprep.subr.mxu0 0.0
    %4539 = vmatpush1.msra.mxu0 0.0
    %4540 = vmatprep.subr.mxu0 0.0
    %4541 = vmatpush1.msra.mxu0 0.0
    %4542 = vmatprep.subr.mxu0 0.0
    %4543 = vmatpush1.msra.mxu0 0.0
    %4544 = vmatprep.subr.mxu0 0.0
    %4545 = vmatpush1.msra.mxu0 0.0
    %4546 = vmatprep.subr.mxu0 0.0
    %4547 = vmatpush1.msra.mxu0 0.0
    %4548 = vmatprep.subr.mxu0 0.0
    %4549 = vmatpush1.msra.mxu0 0.0
    %4550 = vmatprep.subr.mxu0 0.0
    %4551 = vmatpush1.msra.mxu0 0.0
    %4552 = vmatprep.subr.mxu0 0.0
    %4553 = vmatpush1.msra.mxu0 0.0
    %4554 = vmatprep.subr.mxu0 0.0
    %4555 = vmatpush1.msra.mxu0 0.0
    %4556 = vmatprep.subr.mxu0 0.0
    %4557 = vmatpush1.msra.mxu0 0.0
    %4558 = vmatprep.subr.mxu0 0.0
    %4559 = vmatpush1.msra.mxu0 0.0
    %4560 = vmatprep.subr.mxu0 0.0
    %4561 = vmatpush1.msra.mxu0 0.0
    %4562 = vmatprep.subr.mxu0 0.0
    %4563 = vmatpush1.msra.mxu0 0.0
    %4564 = vmatprep.subr.mxu0 0.0
    %4565 = vmatpush1.msra.mxu0 0.0
    %4566 = vmatprep.subr.mxu0 0.0
    %4567 = vmatpush1.msra.mxu0 0.0
    %4568 = vmatprep.subr.mxu0 0.0
    %4569 = vmatpush1.msra.mxu0 0.0
    %4570 = vmatprep.subr.mxu0 0.0
    %4571 = vmatpush1.msra.mxu0 0.0
    %4572 = vmatprep.subr.mxu0 0.0
    %4573 = vmatpush1.msra.mxu0 0.0
    %4574 = vmatprep.subr.mxu0 0.0
    %4575 = vmatpush1.msra.mxu0 0.0
    %4576 = vmatprep.subr.mxu0 0.0
    %4577 = vmatpush1.msra.mxu0 0.0
    %4578 = vmatprep.subr.mxu0 0.0
    %4579 = vmatpush1.msra.mxu0 0.0
    %4580 = vmatprep.subr.mxu0 0.0
    %4581 = vmatpush1.msra.mxu0 0.0
    %4582 = vmatprep.subr.mxu0 0.0
    %4583 = vmatpush1.msra.mxu0 0.0
    %4584 = vmatprep.subr.mxu0 0.0
    %4585 = vmatpush1.msra.mxu0 0.0
    %4586 = vmatprep.subr.mxu0 0.0
    %4587 = vmatpush1.msra.mxu0 0.0
    %4588 = vmatprep.subr.mxu0 0.0
    %4589 = vmatpush1.msra.mxu0 0.0
    %4590 = vmatprep.subr.mxu0 0.0
    %4591 = vmatpush1.msra.mxu0 0.0
    %4592 = vmatprep.subr.mxu0 0.0
    %4593 = vmatpush1.msra.mxu0 0.0
    %4594 = vmatprep.subr.mxu0 0.0
    %4595 = vmatpush1.msra.mxu0 0.0
    %4596 = vmatprep.subr.mxu0 0.0
    %4597 = vmatpush1.msra.mxu0 0.0
    %4598 = vmatprep.subr.mxu0 0.0
    %4599 = vmatpush1.msra.mxu0 0.0
    %4600 = vmatprep.mubr.f32.mxu0 0.0
    %4601 = vmatmul.mubr.f32.gmra.mrb[0].mxu0 %v4496
    %v4602 = vpop.f32.mrb[0].mxu0
    %v4603 = vadd.f32 0.0, %v4602
    %v4604 = vpop.f32.mrb[0].mxu0
    %4605 = vmatprep.mubr.f32.mxu0 0.0
    %4606 = vmatmul.mubr.f32.gmra.mrb[0].mxu0 %v4499
    %v4607 = vpop.f32.mrb[0].mxu0
    %v4608 = vadd.f32 0.0, %v4607
    %v4609 = vpop.f32.mrb[0].mxu0
    %4610 = vmatprep.mubr.f32.mxu0 0.0
    %4611 = vmatmul.mubr.f32.gmra.mrb[0].mxu0 %v4502
    %v4612 = vpop.f32.mrb[0].mxu0
    %v4613 = vadd.f32 0.0, %v4612
    %v4614 = vpop.f32.mrb[0].mxu0
    %4615 = vmatprep.mubr.f32.mxu0 0.0
    %4616 = vmatmul.mubr.f32.gmra.mrb[0].mxu0 %v4505
    %v4617 = vpop.f32.mrb[0].mxu0
    %v4618 = vadd.f32 0.0, %v4617
    %v4619 = vpop.f32.mrb[0].mxu0
    %4620 = vmatprep.mubr.f32.mxu0 0.0
    %4621 = vmatmul.mubr.f32.gmra.mrb[0].mxu0 %v4508
    %v4622 = vpop.f32.mrb[0].mxu0
    %v4623 = vadd.f32 0.0, %v4622
    %v4624 = vpop.f32.mrb[0].mxu0
    %4625 = vmatprep.mubr.f32.mxu0 0.0
    %4626 = vmatmul.mubr.f32.gmra.mrb[0].mxu0 %v4511
    %v4627 = vpop.f32.mrb[0].mxu0
    %v4628 = vadd.f32 0.0, %v4627
    %v4629 = vpop.f32.mrb[0].mxu0
    %4630 = vmatprep.mubr.f32.mxu0 0.0
    %4631 = vmatmul.mubr.f32.gmra.mrb[0].mxu0 %v4514
    %v4632 = vpop.f32.mrb[0].mxu0
    %v4633 = vadd.f32 0.0, %v4632
    %v4634 = vpop.f32.mrb[0].mxu0
    %4635 = vmatprep.mubr.f32.mxu0 0.0
    %4636 = vmatmul.mubr.f32.gmra.mrb[0].mxu0 %v4517
    %v4637 = vpop.f32.mrb[0].mxu0
    %v4638 = vadd.f32 0.0, %v4637
    %v4639 = vpop.f32.mrb[0].mxu0
    %4640 = vmatprep.mubr.f32.mxu0 0.0
    %4641 = vmatmul.mubr.f32.gmra.mrb[0].mxu0 %v4520
    %v4642 = vpop.f32.mrb[0].mxu0
    %v4643 = vadd.f32 0.0, %v4642
    %v4644 = vpop.f32.mrb[0].mxu0
    %4645 = vmatprep.mubr.f32.mxu0 0.0
    %4646 = vmatmul.mubr.f32.gmra.mrb[0].mxu0 %v4523
    %v4647 = vpop.f32.mrb[0].mxu0
    %v4648 = vadd.f32 0.0, %v4647
    %v4649 = vpop.f32.mrb[0].mxu0
    %4650 = vmatprep.mubr.f32.mxu0 0.0
    %4651 = vmatmul.mubr.f32.gmra.mrb[0].mxu0 %v4526
    %v4652 = vpop.f32.mrb[0].mxu0
    %v4653 = vadd.f32 0.0, %v4652
    %v4654 = vpop.f32.mrb[0].mxu0
    %4655 = vmatprep.mubr.f32.mxu0 0.0
    %4656 = vmatmul.mubr.f32.gmra.mrb[0].mxu0 %v4529
    %v4657 = vpop.f32.mrb[0].mxu0
    %v4658 = vadd.f32 0.0, %v4657
    %v4659 = vpop.f32.mrb[0].mxu0
    %4660 = vmatprep.mubr.f32.mxu0 0.0
    %4661 = vmatmul.mubr.f32.gmra.mrb[0].mxu0 %v4532
    %v4662 = vpop.f32.mrb[0].mxu0
    %v4663 = vadd.f32 0.0, %v4662
    %v4664 = vpop.f32.mrb[0].mxu0
    %4665 = vdwg.mxu0
    %v4666 = vmul.f32 %v4432, %v4309
    %v4667 = vmul.f32 %v4437, %v4310
    %v4668 = vmul.f32 %v4442, %v4311
    %v4669 = vmul.f32 %v4447, %v4312
    %v4670 = vmul.f32 %v4452, %v4313
    %v4671 = vmul.f32 %v4457, %v4314
    %v4672 = vmul.f32 %v4462, %v4315
    %v4673 = vmul.f32 %v4467, %v4316
    %v4674 = vmul.f32 %v4472, %v4317
    %v4675 = vmul.f32 %v4477, %v4318
    %v4676 = vmul.f32 %v4482, %v4319
    %v4677 = vmul.f32 %v4487, %v4320
    %v4678 = vmul.f32 %v4492, %v4321
    %v4679 = vsel %vm4322, %v4666, 0.0
    %4680 = vadd.xlane.f32.xlu0 %v4679
    %v4681 = vpop.xlane.xlu0 %4680
    %v4682 = vsel %vm4322, %v4667, 0.0
    %4683 = vadd.xlane.f32.xlu0 %v4682
    %v4684 = vpop.xlane.xlu0 %4683
    %v4685 = vsel %vm4322, %v4668, 0.0
    %4686 = vadd.xlane.f32.xlu0 %v4685
    %v4687 = vpop.xlane.xlu0 %4686
    %v4688 = vsel %vm4322, %v4669, 0.0
    %4689 = vadd.xlane.f32.xlu0 %v4688
    %v4690 = vpop.xlane.xlu0 %4689
    %v4691 = vsel %vm4322, %v4670, 0.0
    %4692 = vadd.xlane.f32.xlu0 %v4691
    %v4693 = vpop.xlane.xlu0 %4692
    %v4694 = vsel %vm4322, %v4671, 0.0
    %4695 = vadd.xlane.f32.xlu0 %v4694
    %v4696 = vpop.xlane.xlu0 %4695
    %v4697 = vsel %vm4322, %v4672, 0.0
    %4698 = vadd.xlane.f32.xlu0 %v4697
    %v4699 = vpop.xlane.xlu0 %4698
    %v4700 = vsel %vm4322, %v4673, 0.0
    %4701 = vadd.xlane.f32.xlu0 %v4700
    %v4702 = vpop.xlane.xlu0 %4701
    %v4703 = vsel %vm4322, %v4674, 0.0
    %4704 = vadd.xlane.f32.xlu0 %v4703
    %v4705 = vpop.xlane.xlu0 %4704
    %v4706 = vsel %vm4322, %v4675, 0.0
    %4707 = vadd.xlane.f32.xlu0 %v4706
    %v4708 = vpop.xlane.xlu0 %4707
    %v4709 = vsel %vm4322, %v4676, 0.0
    %4710 = vadd.xlane.f32.xlu0 %v4709
    %v4711 = vpop.xlane.xlu0 %4710
    %v4712 = vsel %vm4322, %v4677, 0.0
    %4713 = vadd.xlane.f32.xlu0 %v4712
    %v4714 = vpop.xlane.xlu0 %4713
    %v4715 = vsel %vm3740, %v4678, 0.0
    %4716 = vadd.xlane.f32.xlu0 %v4715
    %v4717 = vpop.xlane.xlu0 %4716
    %v4718 = vsub.f32 %v3727, %v4681
    %v4719 = vsub.f32 %v3727, %v4684
    %v4720 = vsub.f32 %v3727, %v4687
    %v4721 = vsub.f32 %v3727, %v4690
    %v4722 = vsub.f32 %v3727, %v4693
    %v4723 = vsub.f32 %v3727, %v4696
    %v4724 = vsub.f32 %v3727, %v4699
    %v4725 = vsub.f32 %v3727, %v4702
    %v4726 = vsub.f32 %v3727, %v4705
    %v4727 = vsub.f32 %v3727, %v4708
    %v4728 = vsub.f32 %v3727, %v4711
    %v4729 = vsub.f32 %v3727, %v4714
    %v4730 = vsub.f32 %v3727, %v4717
    %vm4731 = vcmp.ge.s32.totalorder %v3732, 64
    %vm4732 = vcmp.lt.s32.totalorder %v3732, 94
    %vm4733 = vmand %vm4731, %vm4732
    %v4734 = vsel %vm4733, %v4718, 0.0
    %v4735 = vsel %vm4733, %v4719, 0.0
    %v4736 = vsel %vm4733, %v4720, 0.0
    %v4737 = vsel %vm4733, %v4721, 0.0
    %v4738 = vsel %vm4733, %v4722, 0.0
    %v4739 = vsel %vm4733, %v4723, 0.0
    %v4740 = vsel %vm4733, %v4724, 0.0
    %v4741 = vsel %vm4733, %v4725, 0.0
    %v4742 = vsel %vm4733, %v4726, 0.0
    %v4743 = vsel %vm4733, %v4727, 0.0
    %v4744 = vsel %vm4733, %v4728, 0.0
    %v4745 = vsel %vm4733, %v4729, 0.0
    %v4746 = vsel %vm4733, %v4730, 0.0
    %v4747 = vadd.f32 %v4603, %v4734
    %v4748 = vadd.f32 %v4608, %v4735
    %v4749 = vadd.f32 %v4613, %v4736
    %v4750 = vadd.f32 %v4618, %v4737
    %v4751 = vadd.f32 %v4623, %v4738
    %v4752 = vadd.f32 %v4628, %v4739
    %v4753 = vadd.f32 %v4633, %v4740
    %v4754 = vadd.f32 %v4638, %v4741
    %v4755 = vadd.f32 %v4643, %v4742
    %v4756 = vadd.f32 %v4648, %v4743
    %v4757 = vadd.f32 %v4653, %v4744
    %v4758 = vadd.f32 %v4658, %v4745
    %v4759 = vadd.f32 %v4663, %v4746
    %4760 = vst [vmem:[%s13] sm:$0xff] %v4747
    %4761 = vst [vmem:[%s13 + $0x8] sm:$0xff] %v4748
    %4762 = vst [vmem:[%s13 + $0x10] sm:$0xff] %v4749
    %4763 = vst [vmem:[%s13 + $0x18] sm:$0xff] %v4750
    %4764 = vst [vmem:[%s13 + $0x20] sm:$0xff] %v4751
    %4765 = vst [vmem:[%s13 + $0x28] sm:$0xff] %v4752
    %4766 = vst [vmem:[%s13 + $0x30] sm:$0xff] %v4753
    %4767 = vst [vmem:[%s13 + $0x38] sm:$0xff] %v4754
    %4768 = vst [vmem:[%s13 + $0x40] sm:$0xff] %v4755
    %4769 = vst [vmem:[%s13 + $0x48] sm:$0xff] %v4756
    %4770 = vst [vmem:[%s13 + $0x50] sm:$0xff] %v4757
    %4771 = vst [vmem:[%s13 + $0x58] sm:$0xff] %v4758
    %4772 = vst [vmem:[%s13 + $0x60] sm:$0xf] %v4759
    %v4773 = vld [vmem:[%s7] sm:$0xff]
    %v4774 = vld [vmem:[%s7 + $0x8] sm:$0xff]
    %v4775 = vld [vmem:[%s7 + $0x10] sm:$0xff]
    %v4776 = vld [vmem:[%s7 + $0x18] sm:$0xff]
    %v4777 = vld [vmem:[%s7 + $0x20] sm:$0xff]
    %v4778 = vld [vmem:[%s7 + $0x28] sm:$0xff]
    %v4779 = vld [vmem:[%s7 + $0x30] sm:$0xff]
    %v4780 = vld [vmem:[%s7 + $0x38] sm:$0xff]
    %v4781 = vld [vmem:[%s7 + $0x40] sm:$0xff]
    %v4782 = vld [vmem:[%s7 + $0x48] sm:$0xff]
    %v4783 = vld [vmem:[%s7 + $0x50] sm:$0xff]
    %v4784 = vld [vmem:[%s7 + $0x58] sm:$0xff]
    %v4785 = vld [vmem:[%s7 + $0x60] sm:$0xff]
    %v4786 = vld [vmem:[%s7 + $0x68] sm:$0xff]
    %v4787 = vld [vmem:[%s7 + $0x70] sm:$0xff]
    %v4788 = vld [vmem:[%s7 + $0x78] sm:$0xff]
    %v4789 = vld [vmem:[%s7 + $0x80] sm:$0xff]
    %v4790 = vld [vmem:[%s7 + $0x88] sm:$0xff]
    %v4791 = vld [vmem:[%s7 + $0x90] sm:$0xff]
    %v4792 = vld [vmem:[%s7 + $0x98] sm:$0xff]
    %v4793 = vld [vmem:[%s7 + $0xa0] sm:$0xff]
    %v4794 = vld [vmem:[%s7 + $0xa8] sm:$0xff]
    %v4795 = vld [vmem:[%s7 + $0xb0] sm:$0xff]
    %v4796 = vld [vmem:[%s7 + $0xb8] sm:$0xff]
    %v4797 = vld [vmem:[%s7 + $0xc0] sm:$0xff]
    %v4798 = vld [vmem:[%s7 + $0xc8] sm:$0xff]
    %v4799 = vld [vmem:[%s7 + $0xd0] sm:$0xff]
    %v4800 = vld [vmem:[%s7 + $0xd8] sm:$0xff]
    %v4801 = vld [vmem:[%s7 + $0xe0] sm:$0xff]
    %v4802 = vld [vmem:[%s7 + $0xe8] sm:$0xff]
    %v4803 = vld [vmem:[%s7 + $0xf0] sm:$0xff]
    %v4804 = vld [vmem:[%s7 + $0xf8] sm:$0xff]
    %v4805 = vld [vmem:[%s7 + $0x100] sm:$0xff]
    %v4806 = vld [vmem:[%s7 + $0x108] sm:$0xff]
    %v4807 = vld [vmem:[%s7 + $0x110] sm:$0xff]
    %v4808 = vld [vmem:[%s7 + $0x118] sm:$0xff]
    %v4809 = vld [vmem:[%s7 + $0x120] sm:$0xff]
    %v4810 = vld [vmem:[%s7 + $0x128] sm:$0xff]
    %v4811 = vld [vmem:[%s7 + $0x130] sm:$0xff]
    %v4812 = vld [vmem:[%s7 + $0x138] sm:$0xff]
    %v4813 = vld [vmem:[%s7 + $0x140] sm:$0xff]
    %v4814 = vld [vmem:[%s7 + $0x148] sm:$0xff]
    %v4815 = vld [vmem:[%s7 + $0x150] sm:$0xff]
    %v4816 = vld [vmem:[%s7 + $0x158] sm:$0xff]
    %v4817 = vld [vmem:[%s7 + $0x160] sm:$0xff]
    %v4818 = vld [vmem:[%s7 + $0x168] sm:$0xff]
    %v4819 = vld [vmem:[%s7 + $0x170] sm:$0xff]
    %v4820 = vld [vmem:[%s7 + $0x178] sm:$0xff]
    %v4821 = vld [vmem:[%s7 + $0x180] sm:$0xff]
    %v4822 = vld [vmem:[%s7 + $0x188] sm:$0xff]
    %v4823 = vld [vmem:[%s7 + $0x190] sm:$0xff]
    %v4824 = vld [vmem:[%s7 + $0x198] sm:$0xff]
    %v4825 = vld [vmem:[%s7 + $0x1a0] sm:$0xff]
    %v4826 = vld [vmem:[%s7 + $0x1a8] sm:$0xff]
    %v4827 = vld [vmem:[%s7 + $0x1b0] sm:$0xff]
    %v4828 = vld [vmem:[%s7 + $0x1b8] sm:$0xff]
    %v4829 = vld [vmem:[%s7 + $0x1c0] sm:$0xff]
    %v4830 = vld [vmem:[%s7 + $0x1c8] sm:$0xff]
    %v4831 = vld [vmem:[%s7 + $0x1d0] sm:$0xff]
    %v4832 = vld [vmem:[%s7 + $0x1d8] sm:$0xff]
    %v4833 = vld [vmem:[%s7 + $0x1e0] sm:$0xff]
    %v4834 = vld [vmem:[%s7 + $0x1e8] sm:$0xff]
    %v4835 = vld [vmem:[%s7 + $0x1f0] sm:$0xff]
    %v4836 = vld [vmem:[%s7 + $0x1f8] sm:$0xff]
    %v4837 = vld [vmem:[%s8] sm:$0xf]
    %v4839 = vlaneseq
    %v4840 = vshrl.u32 %v4839, 7
    %v4841 = vsub.s32 0, %v4840
    %v4842 = vrot.slane %v4837, %v4841
    %v4843 = vlaneseq
    %v4844 = vshrl.u32 %v4843, 7
    %v4845 = vsub.s32 1, %v4844
    %v4846 = vrot.slane %v4837, %v4845
    %v4847 = vlaneseq
    %v4848 = vshrl.u32 %v4847, 7
    %v4849 = vsub.s32 2, %v4848
    %v4850 = vrot.slane %v4837, %v4849
    %v4851 = vlaneseq
    %v4852 = vshrl.u32 %v4851, 7
    %v4853 = vsub.s32 3, %v4852
    %v4854 = vrot.slane %v4837, %v4853
    %4859 = vmatprep.subr.mxu0 %v4774
    %4860 = vmatpush1.msra.mxu0 %v4773
    %4861 = vmatprep.subr.mxu0 %v4778
    %4862 = vmatpush1.msra.mxu0 %v4777
    %4863 = vmatprep.subr.mxu0 %v4782
    %4864 = vmatpush1.msra.mxu0 %v4781
    %4865 = vmatprep.subr.mxu0 %v4786
    %4866 = vmatpush1.msra.mxu0 %v4785
    %4867 = vmatprep.subr.mxu0 %v4790
    %4868 = vmatpush1.msra.mxu0 %v4789
    %4869 = vmatprep.subr.mxu0 %v4794
    %4870 = vmatpush1.msra.mxu0 %v4793
    %4871 = vmatprep.subr.mxu0 %v4798
    %4872 = vmatpush1.msra.mxu0 %v4797
    %4873 = vmatprep.subr.mxu0 %v4802
    %4874 = vmatpush1.msra.mxu0 %v4801
    %4875 = vmatprep.subr.mxu0 %v4806
    %4876 = vmatpush1.msra.mxu0 %v4805
    %4877 = vmatprep.subr.mxu0 %v4810
    %4878 = vmatpush1.msra.mxu0 %v4809
    %4879 = vmatprep.subr.mxu0 %v4814
    %4880 = vmatpush1.msra.mxu0 %v4813
    %4881 = vmatprep.subr.mxu0 %v4818
    %4882 = vmatpush1.msra.mxu0 %v4817
    %4883 = vmatprep.subr.mxu0 %v4822
    %4884 = vmatpush1.msra.mxu0 %v4821
    %4885 = vmatprep.subr.mxu0 %v4826
    %4886 = vmatpush1.msra.mxu0 %v4825
    %4887 = vmatprep.subr.mxu0 %v4830
    %4888 = vmatpush1.msra.mxu0 %v4829
    %4889 = vmatprep.subr.mxu0 %v4834
    %4890 = vmatpush1.msra.mxu0 %v4833
    %4891 = vmatprep.subr.mxu0 0.0
    %4892 = vmatpush1.msra.mxu0 0.0
    %4893 = vmatprep.subr.mxu0 0.0
    %4894 = vmatpush1.msra.mxu0 0.0
    %4895 = vmatprep.subr.mxu0 0.0
    %4896 = vmatpush1.msra.mxu0 0.0
    %4897 = vmatprep.subr.mxu0 0.0
    %4898 = vmatpush1.msra.mxu0 0.0
    %4899 = vmatprep.subr.mxu0 0.0
    %4900 = vmatpush1.msra.mxu0 0.0
    %4901 = vmatprep.subr.mxu0 0.0
    %4902 = vmatpush1.msra.mxu0 0.0
    %4903 = vmatprep.subr.mxu0 0.0
    %4904 = vmatpush1.msra.mxu0 0.0
    %4905 = vmatprep.subr.mxu0 0.0
    %4906 = vmatpush1.msra.mxu0 0.0
    %4907 = vmatprep.subr.mxu0 0.0
    %4908 = vmatpush1.msra.mxu0 0.0
    %4909 = vmatprep.subr.mxu0 0.0
    %4910 = vmatpush1.msra.mxu0 0.0
    %4911 = vmatprep.subr.mxu0 0.0
    %4912 = vmatpush1.msra.mxu0 0.0
    %4913 = vmatprep.subr.mxu0 0.0
    %4914 = vmatpush1.msra.mxu0 0.0
    %4915 = vmatprep.subr.mxu0 0.0
    %4916 = vmatpush1.msra.mxu0 0.0
    %4917 = vmatprep.subr.mxu0 0.0
    %4918 = vmatpush1.msra.mxu0 0.0
    %4919 = vmatprep.subr.mxu0 0.0
    %4920 = vmatpush1.msra.mxu0 0.0
    %4921 = vmatprep.subr.mxu0 0.0
    %4922 = vmatpush1.msra.mxu0 0.0
    %4923 = vmatprep.mubr.f32.mxu0 0.0
    %4924 = vmatmul.mubr.f32.gmra.mrb[0].mxu0 %v4603
    %v4925 = vpop.f32.mrb[0].mxu0
    %v4926 = vadd.f32 %v4842, %v4925
    %v4927 = vpop.f32.mrb[0].mxu0
    %v4928 = vadd.f32 %v4846, %v4927
    %4929 = vmatprep.mubr.f32.mxu0 0.0
    %4930 = vmatmul.mubr.f32.gmra.mrb[0].mxu0 %v4608
    %v4931 = vpop.f32.mrb[0].mxu0
    %v4932 = vadd.f32 %v4842, %v4931
    %v4933 = vpop.f32.mrb[0].mxu0
    %v4934 = vadd.f32 %v4846, %v4933
    %4935 = vmatprep.mubr.f32.mxu0 0.0
    %4936 = vmatmul.mubr.f32.gmra.mrb[0].mxu0 %v4613
    %v4937 = vpop.f32.mrb[0].mxu0
    %v4938 = vadd.f32 %v4842, %v4937
    %v4939 = vpop.f32.mrb[0].mxu0
    %v4940 = vadd.f32 %v4846, %v4939
    %4941 = vmatprep.mubr.f32.mxu0 0.0
    %4942 = vmatmul.mubr.f32.gmra.mrb[0].mxu0 %v4618
    %v4943 = vpop.f32.mrb[0].mxu0
    %v4944 = vadd.f32 %v4842, %v4943
    %v4945 = vpop.f32.mrb[0].mxu0
    %v4946 = vadd.f32 %v4846, %v4945
    %4947 = vmatprep.mubr.f32.mxu0 0.0
    %4948 = vmatmul.mubr.f32.gmra.mrb[0].mxu0 %v4623
    %v4949 = vpop.f32.mrb[0].mxu0
    %v4950 = vadd.f32 %v4842, %v4949
    %v4951 = vpop.f32.mrb[0].mxu0
    %v4952 = vadd.f32 %v4846, %v4951
    %4953 = vmatprep.mubr.f32.mxu0 0.0
    %4954 = vmatmul.mubr.f32.gmra.mrb[0].mxu0 %v4628
    %v4955 = vpop.f32.mrb[0].mxu0
    %v4956 = vadd.f32 %v4842, %v4955
    %v4957 = vpop.f32.mrb[0].mxu0
    %v4958 = vadd.f32 %v4846, %v4957
    %4959 = vmatprep.mubr.f32.mxu0 0.0
    %4960 = vmatmul.mubr.f32.gmra.mrb[0].mxu0 %v4633
    %v4961 = vpop.f32.mrb[0].mxu0
    %v4962 = vadd.f32 %v4842, %v4961
    %v4963 = vpop.f32.mrb[0].mxu0
    %v4964 = vadd.f32 %v4846, %v4963
    %4965 = vmatprep.mubr.f32.mxu0 0.0
    %4966 = vmatmul.mubr.f32.gmra.mrb[0].mxu0 %v4638
    %v4967 = vpop.f32.mrb[0].mxu0
    %v4968 = vadd.f32 %v4842, %v4967
    %v4969 = vpop.f32.mrb[0].mxu0
    %v4970 = vadd.f32 %v4846, %v4969
    %4971 = vmatprep.mubr.f32.mxu0 0.0
    %4972 = vmatmul.mubr.f32.gmra.mrb[0].mxu0 %v4643
    %v4973 = vpop.f32.mrb[0].mxu0
    %v4974 = vadd.f32 %v4842, %v4973
    %v4975 = vpop.f32.mrb[0].mxu0
    %v4976 = vadd.f32 %v4846, %v4975
    %4977 = vmatprep.mubr.f32.mxu0 0.0
    %4978 = vmatmul.mubr.f32.gmra.mrb[0].mxu0 %v4648
    %v4979 = vpop.f32.mrb[0].mxu0
    %v4980 = vadd.f32 %v4842, %v4979
    %v4981 = vpop.f32.mrb[0].mxu0
    %v4982 = vadd.f32 %v4846, %v4981
    %4983 = vmatprep.mubr.f32.mxu0 0.0
    %4984 = vmatmul.mubr.f32.gmra.mrb[0].mxu0 %v4653
    %v4985 = vpop.f32.mrb[0].mxu0
    %v4986 = vadd.f32 %v4842, %v4985
    %v4987 = vpop.f32.mrb[0].mxu0
    %v4988 = vadd.f32 %v4846, %v4987
    %4989 = vmatprep.mubr.f32.mxu0 0.0
    %4990 = vmatmul.mubr.f32.gmra.mrb[0].mxu0 %v4658
    %v4991 = vpop.f32.mrb[0].mxu0
    %v4992 = vadd.f32 %v4842, %v4991
    %v4993 = vpop.f32.mrb[0].mxu0
    %v4994 = vadd.f32 %v4846, %v4993
    %4995 = vmatprep.mubr.f32.mxu0 0.0
    %4996 = vmatmul.mubr.f32.gmra.mrb[0].mxu0 %v4663
    %v4997 = vpop.f32.mrb[0].mxu0
    %v4998 = vadd.f32 %v4842, %v4997
    %v4999 = vpop.f32.mrb[0].mxu0
    %v5000 = vadd.f32 %v4846, %v4999
    %5001 = vdwg.mxu0
    %5002 = vmatprep.subr.mxu0 %v4776
    %5003 = vmatpush1.msra.mxu0 %v4775
    %5004 = vmatprep.subr.mxu0 %v4780
    %5005 = vmatpush1.msra.mxu0 %v4779
    %5006 = vmatprep.subr.mxu0 %v4784
    %5007 = vmatpush1.msra.mxu0 %v4783
    %5008 = vmatprep.subr.mxu0 %v4788
    %5009 = vmatpush1.msra.mxu0 %v4787
    %5010 = vmatprep.subr.mxu0 %v4792
    %5011 = vmatpush1.msra.mxu0 %v4791
    %5012 = vmatprep.subr.mxu0 %v4796
    %5013 = vmatpush1.msra.mxu0 %v4795
    %5014 = vmatprep.subr.mxu0 %v4800
    %5015 = vmatpush1.msra.mxu0 %v4799
    %5016 = vmatprep.subr.mxu0 %v4804
    %5017 = vmatpush1.msra.mxu0 %v4803
    %5018 = vmatprep.subr.mxu0 %v4808
    %5019 = vmatpush1.msra.mxu0 %v4807
    %5020 = vmatprep.subr.mxu0 %v4812
    %5021 = vmatpush1.msra.mxu0 %v4811
    %5022 = vmatprep.subr.mxu0 %v4816
    %5023 = vmatpush1.msra.mxu0 %v4815
    %5024 = vmatprep.subr.mxu0 %v4820
    %5025 = vmatpush1.msra.mxu0 %v4819
    %5026 = vmatprep.subr.mxu0 %v4824
    %5027 = vmatpush1.msra.mxu0 %v4823
    %5028 = vmatprep.subr.mxu0 %v4828
    %5029 = vmatpush1.msra.mxu0 %v4827
    %5030 = vmatprep.subr.mxu0 %v4832
    %5031 = vmatpush1.msra.mxu0 %v4831
    %5032 = vmatprep.subr.mxu0 %v4836
    %5033 = vmatpush1.msra.mxu0 %v4835
    %5034 = vmatprep.subr.mxu0 0.0
    %5035 = vmatpush1.msra.mxu0 0.0
    %5036 = vmatprep.subr.mxu0 0.0
    %5037 = vmatpush1.msra.mxu0 0.0
    %5038 = vmatprep.subr.mxu0 0.0
    %5039 = vmatpush1.msra.mxu0 0.0
    %5040 = vmatprep.subr.mxu0 0.0
    %5041 = vmatpush1.msra.mxu0 0.0
    %5042 = vmatprep.subr.mxu0 0.0
    %5043 = vmatpush1.msra.mxu0 0.0
    %5044 = vmatprep.subr.mxu0 0.0
    %5045 = vmatpush1.msra.mxu0 0.0
    %5046 = vmatprep.subr.mxu0 0.0
    %5047 = vmatpush1.msra.mxu0 0.0
    %5048 = vmatprep.subr.mxu0 0.0
    %5049 = vmatpush1.msra.mxu0 0.0
    %5050 = vmatprep.subr.mxu0 0.0
    %5051 = vmatpush1.msra.mxu0 0.0
    %5052 = vmatprep.subr.mxu0 0.0
    %5053 = vmatpush1.msra.mxu0 0.0
    %5054 = vmatprep.subr.mxu0 0.0
    %5055 = vmatpush1.msra.mxu0 0.0
    %5056 = vmatprep.subr.mxu0 0.0
    %5057 = vmatpush1.msra.mxu0 0.0
    %5058 = vmatprep.subr.mxu0 0.0
    %5059 = vmatpush1.msra.mxu0 0.0
    %5060 = vmatprep.subr.mxu0 0.0
    %5061 = vmatpush1.msra.mxu0 0.0
    %5062 = vmatprep.subr.mxu0 0.0
    %5063 = vmatpush1.msra.mxu0 0.0
    %5064 = vmatprep.subr.mxu0 0.0
    %5065 = vmatpush1.msra.mxu0 0.0
    %5066 = vmatprep.mubr.f32.mxu0 0.0
    %5067 = vmatmul.mubr.f32.gmra.mrb[0].mxu0 %v4603
    %v5068 = vpop.f32.mrb[0].mxu0
    %v5069 = vadd.f32 %v4850, %v5068
    %v5070 = vpop.f32.mrb[0].mxu0
    %v5071 = vadd.f32 %v4854, %v5070
    %5072 = vmatprep.mubr.f32.mxu0 0.0
    %5073 = vmatmul.mubr.f32.gmra.mrb[0].mxu0 %v4608
    %v5074 = vpop.f32.mrb[0].mxu0
    %v5075 = vadd.f32 %v4850, %v5074
    %v5076 = vpop.f32.mrb[0].mxu0
    %v5077 = vadd.f32 %v4854, %v5076
    %5078 = vmatprep.mubr.f32.mxu0 0.0
    %5079 = vmatmul.mubr.f32.gmra.mrb[0].mxu0 %v4613
    %v5080 = vpop.f32.mrb[0].mxu0
    %v5081 = vadd.f32 %v4850, %v5080
    %v5082 = vpop.f32.mrb[0].mxu0
    %v5083 = vadd.f32 %v4854, %v5082
    %5084 = vmatprep.mubr.f32.mxu0 0.0
    %5085 = vmatmul.mubr.f32.gmra.mrb[0].mxu0 %v4618
    %v5086 = vpop.f32.mrb[0].mxu0
    %v5087 = vadd.f32 %v4850, %v5086
    %v5088 = vpop.f32.mrb[0].mxu0
    %v5089 = vadd.f32 %v4854, %v5088
    %5090 = vmatprep.mubr.f32.mxu0 0.0
    %5091 = vmatmul.mubr.f32.gmra.mrb[0].mxu0 %v4623
    %v5092 = vpop.f32.mrb[0].mxu0
    %v5093 = vadd.f32 %v4850, %v5092
    %v5094 = vpop.f32.mrb[0].mxu0
    %v5095 = vadd.f32 %v4854, %v5094
    %5096 = vmatprep.mubr.f32.mxu0 0.0
    %5097 = vmatmul.mubr.f32.gmra.mrb[0].mxu0 %v4628
    %v5098 = vpop.f32.mrb[0].mxu0
    %v5099 = vadd.f32 %v4850, %v5098
    %v5100 = vpop.f32.mrb[0].mxu0
    %v5101 = vadd.f32 %v4854, %v5100
    %5102 = vmatprep.mubr.f32.mxu0 0.0
    %5103 = vmatmul.mubr.f32.gmra.mrb[0].mxu0 %v4633
    %v5104 = vpop.f32.mrb[0].mxu0
    %v5105 = vadd.f32 %v4850, %v5104
    %v5106 = vpop.f32.mrb[0].mxu0
    %v5107 = vadd.f32 %v4854, %v5106
    %5108 = vmatprep.mubr.f32.mxu0 0.0
    %5109 = vmatmul.mubr.f32.gmra.mrb[0].mxu0 %v4638
    %v5110 = vpop.f32.mrb[0].mxu0
    %v5111 = vadd.f32 %v4850, %v5110
    %v5112 = vpop.f32.mrb[0].mxu0
    %v5113 = vadd.f32 %v4854, %v5112
    %5114 = vmatprep.mubr.f32.mxu0 0.0
    %5115 = vmatmul.mubr.f32.gmra.mrb[0].mxu0 %v4643
    %v5116 = vpop.f32.mrb[0].mxu0
    %v5117 = vadd.f32 %v4850, %v5116
    %v5118 = vpop.f32.mrb[0].mxu0
    %v5119 = vadd.f32 %v4854, %v5118
    %5120 = vmatprep.mubr.f32.mxu0 0.0
    %5121 = vmatmul.mubr.f32.gmra.mrb[0].mxu0 %v4648
    %v5122 = vpop.f32.mrb[0].mxu0
    %v5123 = vadd.f32 %v4850, %v5122
    %v5124 = vpop.f32.mrb[0].mxu0
    %v5125 = vadd.f32 %v4854, %v5124
    %5126 = vmatprep.mubr.f32.mxu0 0.0
    %5127 = vmatmul.mubr.f32.gmra.mrb[0].mxu0 %v4653
    %v5128 = vpop.f32.mrb[0].mxu0
    %v5129 = vadd.f32 %v4850, %v5128
    %v5130 = vpop.f32.mrb[0].mxu0
    %v5131 = vadd.f32 %v4854, %v5130
    %5132 = vmatprep.mubr.f32.mxu0 0.0
    %5133 = vmatmul.mubr.f32.gmra.mrb[0].mxu0 %v4658
    %v5134 = vpop.f32.mrb[0].mxu0
    %v5135 = vadd.f32 %v4850, %v5134
    %v5136 = vpop.f32.mrb[0].mxu0
    %v5137 = vadd.f32 %v4854, %v5136
    %5138 = vmatprep.mubr.f32.mxu0 0.0
    %5139 = vmatmul.mubr.f32.gmra.mrb[0].mxu0 %v4663
    %v5140 = vpop.f32.mrb[0].mxu0
    %v5141 = vadd.f32 %v4850, %v5140
    %v5142 = vpop.f32.mrb[0].mxu0
    %v5143 = vadd.f32 %v4854, %v5142
    %5144 = vdwg.mxu0
    %v5145 = vmax.f32 %v4926, 0.0
    %v5146 = vmax.f32 %v4928, 0.0
    %v5147 = vmax.f32 %v5069, 0.0
    %v5148 = vmax.f32 %v5071, 0.0
    %v5149 = vmax.f32 %v4932, 0.0
    %v5150 = vmax.f32 %v4934, 0.0
    %v5151 = vmax.f32 %v5075, 0.0
    %v5152 = vmax.f32 %v5077, 0.0
    %v5153 = vmax.f32 %v4938, 0.0
    %v5154 = vmax.f32 %v4940, 0.0
    %v5155 = vmax.f32 %v5081, 0.0
    %v5156 = vmax.f32 %v5083, 0.0
    %v5157 = vmax.f32 %v4944, 0.0
    %v5158 = vmax.f32 %v4946, 0.0
    %v5159 = vmax.f32 %v5087, 0.0
    %v5160 = vmax.f32 %v5089, 0.0
    %v5161 = vmax.f32 %v4950, 0.0
    %v5162 = vmax.f32 %v4952, 0.0
    %v5163 = vmax.f32 %v5093, 0.0
    %v5164 = vmax.f32 %v5095, 0.0
    %v5165 = vmax.f32 %v4956, 0.0
    %v5166 = vmax.f32 %v4958, 0.0
    %v5167 = vmax.f32 %v5099, 0.0
    %v5168 = vmax.f32 %v5101, 0.0
    %v5169 = vmax.f32 %v4962, 0.0
    %v5170 = vmax.f32 %v4964, 0.0
    %v5171 = vmax.f32 %v5105, 0.0
    %v5172 = vmax.f32 %v5107, 0.0
    %v5173 = vmax.f32 %v4968, 0.0
    %v5174 = vmax.f32 %v4970, 0.0
    %v5175 = vmax.f32 %v5111, 0.0
    %v5176 = vmax.f32 %v5113, 0.0
    %v5177 = vmax.f32 %v4974, 0.0
    %v5178 = vmax.f32 %v4976, 0.0
    %v5179 = vmax.f32 %v5117, 0.0
    %v5180 = vmax.f32 %v5119, 0.0
    %v5181 = vmax.f32 %v4980, 0.0
    %v5182 = vmax.f32 %v4982, 0.0
    %v5183 = vmax.f32 %v5123, 0.0
    %v5184 = vmax.f32 %v5125, 0.0
    %v5185 = vmax.f32 %v4986, 0.0
    %v5186 = vmax.f32 %v4988, 0.0
    %v5187 = vmax.f32 %v5129, 0.0
    %v5188 = vmax.f32 %v5131, 0.0
    %v5189 = vmax.f32 %v4992, 0.0
    %v5190 = vmax.f32 %v4994, 0.0
    %v5191 = vmax.f32 %v5135, 0.0
    %v5192 = vmax.f32 %v5137, 0.0
    %v5193 = vmax.f32 %v4998, 0.0
    %v5194 = vmax.f32 %v5000, 0.0
    %v5195 = vmax.f32 %v5141, 0.0
    %v5196 = vmax.f32 %v5143, 0.0
    %s5197 = smul.u32 4, 50
    %s5198 = smul.u32 %s5197, 7
    %s5199 = sshll.u32 %s5198, 4
    %5200 = dma.done [#allocation3], %s5199
    %v5201 = vpack.c.bf16 %v5149, %v5145
    %v5202 = vpack.c.bf16 %v5150, %v5146
    %v5203 = vpack.c.bf16 %v5151, %v5147
    %v5204 = vpack.c.bf16 %v5152, %v5148
    %v5205 = vpack.c.bf16 %v5157, %v5153
    %v5206 = vpack.c.bf16 %v5158, %v5154
    %v5207 = vpack.c.bf16 %v5159, %v5155
    %v5208 = vpack.c.bf16 %v5160, %v5156
    %v5209 = vpack.c.bf16 %v5165, %v5161
    %v5210 = vpack.c.bf16 %v5166, %v5162
    %v5211 = vpack.c.bf16 %v5167, %v5163
    %v5212 = vpack.c.bf16 %v5168, %v5164
    %v5213 = vpack.c.bf16 %v5173, %v5169
    %v5214 = vpack.c.bf16 %v5174, %v5170
    %v5215 = vpack.c.bf16 %v5175, %v5171
    %v5216 = vpack.c.bf16 %v5176, %v5172
    %v5217 = vpack.c.bf16 %v5181, %v5177
    %v5218 = vpack.c.bf16 %v5182, %v5178
    %v5219 = vpack.c.bf16 %v5183, %v5179
    %v5220 = vpack.c.bf16 %v5184, %v5180
    %v5221 = vpack.c.bf16 %v5189, %v5185
    %v5222 = vpack.c.bf16 %v5190, %v5186
    %v5223 = vpack.c.bf16 %v5191, %v5187
    %v5224 = vpack.c.bf16 %v5192, %v5188
    %v5225 = vpack.c.bf16 %v5193, %v5193
    %v5226 = vpack.c.bf16 %v5194, %v5194
    %v5227 = vpack.c.bf16 %v5195, %v5195
    %v5228 = vpack.c.bf16 %v5196, %v5196
    %v5229 = vld [vmem:[#allocation2] sm:$0xff]
    %v5230 = vld [vmem:[#allocation2 + $0x8] sm:$0xff]
    %v5231 = vld [vmem:[#allocation2 + $0x10] sm:$0xff]
    %v5232 = vld [vmem:[#allocation2 + $0x18] sm:$0xff]
    %v5233 = vld [vmem:[#allocation2 + $0x20] sm:$0xff]
    %v5234 = vld [vmem:[#allocation2 + $0x28] sm:$0xff]
    %v5235 = vld [vmem:[#allocation2 + $0x30] sm:$0xff]
    %v5236 = vld [vmem:[#allocation2 + $0x38] sm:$0xff]
    %v5237 = vld [vmem:[#allocation2 + $0x40] sm:$0xff]
    %v5238 = vld [vmem:[#allocation2 + $0x48] sm:$0xff]
    %v5239 = vld [vmem:[#allocation2 + $0x50] sm:$0xff]
    %v5240 = vld [vmem:[#allocation2 + $0x58] sm:$0xff]
    %v5241 = vld [vmem:[#allocation2 + $0x60] sm:$0xff]
    %v5242 = vld [vmem:[#allocation2 + $0x68] sm:$0xff]
    %v5243 = vld [vmem:[#allocation2 + $0x70] sm:$0xff]
    %v5244 = vld [vmem:[#allocation2 + $0x78] sm:$0xff]
    %v5245 = vld [vmem:[#allocation2 + $0x80] sm:$0xff]
    %v5246 = vld [vmem:[#allocation2 + $0x88] sm:$0xff]
    %v5247 = vld [vmem:[#allocation2 + $0x90] sm:$0xff]
    %v5248 = vld [vmem:[#allocation2 + $0x98] sm:$0xff]
    %v5249 = vld [vmem:[#allocation2 + $0xa0] sm:$0xff]
    %v5250 = vld [vmem:[#allocation2 + $0xa8] sm:$0xff]
    %v5251 = vld [vmem:[#allocation2 + $0xb0] sm:$0xff]
    %v5252 = vld [vmem:[#allocation2 + $0xb8] sm:$0xff]
    %v5253 = vld [vmem:[#allocation2 + $0xc0] sm:$0xff]
    %v5254 = vld [vmem:[#allocation2 + $0xc8] sm:$0xff]
    %v5255 = vld [vmem:[#allocation2 + $0xd0] sm:$0xff]
    %v5256 = vld [vmem:[#allocation2 + $0xd8] sm:$0xff]
    %v5257 = vld [vmem:[#allocation2 + $0xe0] sm:$0xff]
    %v5258 = vld [vmem:[#allocation2 + $0xe8] sm:$0xff]
    %v5259 = vld [vmem:[#allocation2 + $0xf0] sm:$0xff]
    %v5260 = vld [vmem:[#allocation2 + $0xf8] sm:$0xff]
    %v5261 = vld [vmem:[#allocation2 + $0x100] sm:$0xff]
    %v5262 = vld [vmem:[#allocation2 + $0x108] sm:$0xff]
    %v5263 = vld [vmem:[#allocation2 + $0x110] sm:$0xff]
    %v5264 = vld [vmem:[#allocation2 + $0x118] sm:$0xff]
    %v5265 = vld [vmem:[#allocation2 + $0x120] sm:$0xff]
    %v5266 = vld [vmem:[#allocation2 + $0x128] sm:$0xff]
    %v5267 = vld [vmem:[#allocation2 + $0x130] sm:$0xff]
    %v5268 = vld [vmem:[#allocation2 + $0x138] sm:$0xff]
    %v5269 = vld [vmem:[#allocation2 + $0x140] sm:$0xff]
    %v5270 = vld [vmem:[#allocation2 + $0x148] sm:$0xff]
    %v5271 = vld [vmem:[#allocation2 + $0x150] sm:$0xff]
    %v5272 = vld [vmem:[#allocation2 + $0x158] sm:$0xff]
    %v5273 = vld [vmem:[#allocation2 + $0x160] sm:$0xff]
    %v5274 = vld [vmem:[#allocation2 + $0x168] sm:$0xff]
    %v5275 = vld [vmem:[#allocation2 + $0x170] sm:$0xff]
    %v5276 = vld [vmem:[#allocation2 + $0x178] sm:$0xff]
    %v5277 = vld [vmem:[#allocation2 + $0x180] sm:$0xff]
    %v5278 = vld [vmem:[#allocation2 + $0x188] sm:$0xff]
    %v5279 = vld [vmem:[#allocation2 + $0x190] sm:$0xff]
    %v5280 = vld [vmem:[#allocation2 + $0x198] sm:$0xff]
    %v5281 = vld [vmem:[#allocation2 + $0x1a0] sm:$0xff]
    %v5282 = vld [vmem:[#allocation2 + $0x1a8] sm:$0xff]
    %v5283 = vld [vmem:[#allocation2 + $0x1b0] sm:$0xff]
    %v5284 = vld [vmem:[#allocation2 + $0x1b8] sm:$0xff]
    %v5285 = vld [vmem:[#allocation2 + $0x1c0] sm:$0xff]
    %v5286 = vld [vmem:[#allocation2 + $0x1c8] sm:$0xff]
    %v5287 = vld [vmem:[#allocation2 + $0x1d0] sm:$0xff]
    %v5288 = vld [vmem:[#allocation2 + $0x1d8] sm:$0xff]
    %v5289 = vld [vmem:[#allocation2 + $0x1e0] sm:$0xff]
    %v5290 = vld [vmem:[#allocation2 + $0x1e8] sm:$0xff]
    %v5291 = vld [vmem:[#allocation2 + $0x1f0] sm:$0xff]
    %v5292 = vld [vmem:[#allocation2 + $0x1f8] sm:$0xff]
    %v5293 = vld [vmem:[#allocation2 + $0x200] sm:$0xff]
    %v5294 = vld [vmem:[#allocation2 + $0x208] sm:$0xff]
    %v5295 = vld [vmem:[#allocation2 + $0x210] sm:$0xff]
    %v5296 = vld [vmem:[#allocation2 + $0x218] sm:$0xff]
    %v5297 = vld [vmem:[#allocation2 + $0x220] sm:$0xff]
    %v5298 = vld [vmem:[#allocation2 + $0x228] sm:$0xff]
    %v5299 = vld [vmem:[#allocation2 + $0x230] sm:$0xff]
    %v5300 = vld [vmem:[#allocation2 + $0x238] sm:$0xff]
    %v5301 = vld [vmem:[#allocation2 + $0x240] sm:$0xff]
    %v5302 = vld [vmem:[#allocation2 + $0x248] sm:$0xff]
    %v5303 = vld [vmem:[#allocation2 + $0x250] sm:$0xff]
    %v5304 = vld [vmem:[#allocation2 + $0x258] sm:$0xff]
    %v5305 = vld [vmem:[#allocation2 + $0x260] sm:$0xff]
    %v5306 = vld [vmem:[#allocation2 + $0x268] sm:$0xff]
    %v5307 = vld [vmem:[#allocation2 + $0x270] sm:$0xff]
    %v5308 = vld [vmem:[#allocation2 + $0x278] sm:$0xff]
    %v5309 = vld [vmem:[#allocation2 + $0x280] sm:$0xff]
    %v5310 = vld [vmem:[#allocation2 + $0x288] sm:$0xff]
    %v5311 = vld [vmem:[#allocation2 + $0x290] sm:$0xff]
    %v5312 = vld [vmem:[#allocation2 + $0x298] sm:$0xff]
    %v5313 = vld [vmem:[#allocation2 + $0x2a0] sm:$0xff]
    %v5314 = vld [vmem:[#allocation2 + $0x2a8] sm:$0xff]
    %v5315 = vld [vmem:[#allocation2 + $0x2b0] sm:$0xff]
    %v5316 = vld [vmem:[#allocation2 + $0x2b8] sm:$0xff]
    %v5317 = vld [vmem:[#allocation2 + $0x2c0] sm:$0xff]
    %v5318 = vld [vmem:[#allocation2 + $0x2c8] sm:$0xff]
    %v5319 = vld [vmem:[#allocation2 + $0x2d0] sm:$0xff]
    %v5320 = vld [vmem:[#allocation2 + $0x2d8] sm:$0xff]
    %v5321 = vld [vmem:[#allocation2 + $0x2e0] sm:$0xff]
    %v5322 = vld [vmem:[#allocation2 + $0x2e8] sm:$0xff]
    %v5323 = vld [vmem:[#allocation2 + $0x2f0] sm:$0xff]
    %v5324 = vld [vmem:[#allocation2 + $0x2f8] sm:$0xff]
    %v5325 = vld [vmem:[#allocation2 + $0x300] sm:$0xff]
    %v5326 = vld [vmem:[#allocation2 + $0x308] sm:$0xff]
    %v5327 = vld [vmem:[#allocation2 + $0x310] sm:$0xff]
    %v5328 = vld [vmem:[#allocation2 + $0x318] sm:$0xff]
    %v5329 = vld [vmem:[#allocation2 + $0x320] sm:$0xff]
    %v5330 = vld [vmem:[#allocation2 + $0x328] sm:$0xff]
    %v5331 = vld [vmem:[#allocation2 + $0x330] sm:$0xff]
    %v5332 = vld [vmem:[#allocation2 + $0x338] sm:$0xff]
    %v5333 = vld [vmem:[#allocation2 + $0x340] sm:$0xff]
    %v5334 = vld [vmem:[#allocation2 + $0x348] sm:$0xff]
    %v5335 = vld [vmem:[#allocation2 + $0x350] sm:$0xff]
    %v5336 = vld [vmem:[#allocation2 + $0x358] sm:$0xff]
    %v5337 = vld [vmem:[#allocation2 + $0x360] sm:$0xff]
    %v5338 = vld [vmem:[#allocation2 + $0x368] sm:$0xff]
    %v5339 = vld [vmem:[#allocation2 + $0x370] sm:$0xff]
    %v5340 = vld [vmem:[#allocation2 + $0x378] sm:$0xff]
    %v5341 = vld [vmem:[#allocation2 + $0x380] sm:$0xff]
    %v5342 = vld [vmem:[#allocation2 + $0x388] sm:$0xff]
    %v5343 = vld [vmem:[#allocation2 + $0x390] sm:$0xff]
    %v5344 = vld [vmem:[#allocation2 + $0x398] sm:$0xff]
    %v5345 = vld [vmem:[#allocation2 + $0x3a0] sm:$0xff]
    %v5346 = vld [vmem:[#allocation2 + $0x3a8] sm:$0xff]
    %v5347 = vld [vmem:[#allocation2 + $0x3b0] sm:$0xff]
    %v5348 = vld [vmem:[#allocation2 + $0x3b8] sm:$0xff]
    %v5349 = vld [vmem:[#allocation2 + $0x3c0] sm:$0xff]
    %v5350 = vld [vmem:[#allocation2 + $0x3c8] sm:$0xff]
    %v5351 = vld [vmem:[#allocation2 + $0x3d0] sm:$0xff]
    %v5352 = vld [vmem:[#allocation2 + $0x3d8] sm:$0xff]
    %v5353 = vld [vmem:[#allocation2 + $0x3e0] sm:$0xff]
    %v5354 = vld [vmem:[#allocation2 + $0x3e8] sm:$0xff]
    %v5355 = vld [vmem:[#allocation2 + $0x3f0] sm:$0xff]
    %v5356 = vld [vmem:[#allocation2 + $0x3f8] sm:$0xff]
    %v5357 = vld [vmem:[#allocation2 + $0x400] sm:$0xff]
    %v5358 = vld [vmem:[#allocation2 + $0x408] sm:$0xff]
    %v5359 = vld [vmem:[#allocation2 + $0x410] sm:$0xff]
    %v5360 = vld [vmem:[#allocation2 + $0x418] sm:$0xff]
    %v5361 = vld [vmem:[#allocation2 + $0x420] sm:$0xff]
    %v5362 = vld [vmem:[#allocation2 + $0x428] sm:$0xff]
    %v5363 = vld [vmem:[#allocation2 + $0x430] sm:$0xff]
    %v5364 = vld [vmem:[#allocation2 + $0x438] sm:$0xff]
    %v5365 = vld [vmem:[#allocation2 + $0x440] sm:$0xff]
    %v5366 = vld [vmem:[#allocation2 + $0x448] sm:$0xff]
    %v5367 = vld [vmem:[#allocation2 + $0x450] sm:$0xff]
    %v5368 = vld [vmem:[#allocation2 + $0x458] sm:$0xff]
    %v5369 = vld [vmem:[#allocation2 + $0x460] sm:$0xff]
    %v5370 = vld [vmem:[#allocation2 + $0x468] sm:$0xff]
    %v5371 = vld [vmem:[#allocation2 + $0x470] sm:$0xff]
    %v5372 = vld [vmem:[#allocation2 + $0x478] sm:$0xff]
    %v5373 = vld [vmem:[#allocation2 + $0x480] sm:$0xff]
    %v5374 = vld [vmem:[#allocation2 + $0x488] sm:$0xff]
    %v5375 = vld [vmem:[#allocation2 + $0x490] sm:$0xff]
    %v5376 = vld [vmem:[#allocation2 + $0x498] sm:$0xff]
    %v5377 = vld [vmem:[#allocation2 + $0x4a0] sm:$0xff]
    %v5378 = vld [vmem:[#allocation2 + $0x4a8] sm:$0xff]
    %v5379 = vld [vmem:[#allocation2 + $0x4b0] sm:$0xff]
    %v5380 = vld [vmem:[#allocation2 + $0x4b8] sm:$0xff]
    %v5381 = vld [vmem:[#allocation2 + $0x4c0] sm:$0xff]
    %v5382 = vld [vmem:[#allocation2 + $0x4c8] sm:$0xff]
    %v5383 = vld [vmem:[#allocation2 + $0x4d0] sm:$0xff]
    %v5384 = vld [vmem:[#allocation2 + $0x4d8] sm:$0xff]
    %v5385 = vld [vmem:[#allocation2 + $0x4e0] sm:$0xff]
    %v5386 = vld [vmem:[#allocation2 + $0x4e8] sm:$0xff]
    %v5387 = vld [vmem:[#allocation2 + $0x4f0] sm:$0xff]
    %v5388 = vld [vmem:[#allocation2 + $0x4f8] sm:$0xff]
    %v5389 = vld [vmem:[#allocation2 + $0x500] sm:$0xff]
    %v5390 = vld [vmem:[#allocation2 + $0x508] sm:$0xff]
    %v5391 = vld [vmem:[#allocation2 + $0x510] sm:$0xff]
    %v5392 = vld [vmem:[#allocation2 + $0x518] sm:$0xff]
    %v5393 = vld [vmem:[#allocation2 + $0x520] sm:$0xff]
    %v5394 = vld [vmem:[#allocation2 + $0x528] sm:$0xff]
    %v5395 = vld [vmem:[#allocation2 + $0x530] sm:$0xff]
    %v5396 = vld [vmem:[#allocation2 + $0x538] sm:$0xff]
    %v5397 = vld [vmem:[#allocation2 + $0x540] sm:$0xff]
    %v5398 = vld [vmem:[#allocation2 + $0x548] sm:$0xff]
    %v5399 = vld [vmem:[#allocation2 + $0x550] sm:$0xff]
    %v5400 = vld [vmem:[#allocation2 + $0x558] sm:$0xff]
    %v5401 = vld [vmem:[#allocation2 + $0x560] sm:$0xff]
    %v5402 = vld [vmem:[#allocation2 + $0x568] sm:$0xff]
    %v5403 = vld [vmem:[#allocation2 + $0x570] sm:$0xff]
    %v5404 = vld [vmem:[%s10] sm:$0x7f]
    %v5406 = vlaneseq
    %v5407 = vshrl.u32 %v5406, 7
    %v5408 = vsub.s32 0, %v5407
    %v5409 = vrot.slane %v5404, %v5408
    %v5410 = vlaneseq
    %v5411 = vshrl.u32 %v5410, 7
    %v5412 = vsub.s32 1, %v5411
    %v5413 = vrot.slane %v5404, %v5412
    %v5414 = vlaneseq
    %v5415 = vshrl.u32 %v5414, 7
    %v5416 = vsub.s32 2, %v5415
    %v5417 = vrot.slane %v5404, %v5416
    %v5418 = vlaneseq
    %v5419 = vshrl.u32 %v5418, 7
    %v5420 = vsub.s32 3, %v5419
    %v5421 = vrot.slane %v5404, %v5420
    %v5422 = vlaneseq
    %v5423 = vshrl.u32 %v5422, 7
    %v5424 = vsub.s32 4, %v5423
    %v5425 = vrot.slane %v5404, %v5424
    %v5426 = vlaneseq
    %v5427 = vshrl.u32 %v5426, 7
    %v5428 = vsub.s32 5, %v5427
    %v5429 = vrot.slane %v5404, %v5428
    %v5430 = vlaneseq
    %v5431 = vshrl.u32 %v5430, 7
    %v5432 = vsub.s32 6, %v5431
    %v5433 = vrot.slane %v5404, %v5432
    %v5442 = vsel %vm2712, %v5204, 0
    %v5445 = vsel %vm2712, %v5208, 0
    %v5448 = vsel %vm2712, %v5212, 0
    %v5451 = vsel %vm2712, %v5216, 0
    %v5454 = vsel %vm2712, %v5220, 0
    %v5457 = vsel %vm2712, %v5224, 0
    %v5460 = vsel %vm2712, %v5228, 0
    %5462 = vmatprep.subr.bf16.mxu0 %v5230
    %5463 = vmatpush1.bf16.msra.mxu0 %v5229
    %5464 = vmatprep.subr.bf16.mxu0 %v5237
    %5465 = vmatpush1.bf16.msra.mxu0 %v5236
    %5466 = vmatprep.subr.bf16.mxu0 %v5244
    %5467 = vmatpush1.bf16.msra.mxu0 %v5243
    %5468 = vmatprep.subr.bf16.mxu0 %v5251
    %5469 = vmatpush1.bf16.msra.mxu0 %v5250
    %5470 = vmatprep.subr.bf16.mxu0 %v5258
    %5471 = vmatpush1.bf16.msra.mxu0 %v5257
    %5472 = vmatprep.subr.bf16.mxu0 %v5265
    %5473 = vmatpush1.bf16.msra.mxu0 %v5264
    %5474 = vmatprep.subr.bf16.mxu0 %v5272
    %5475 = vmatpush1.bf16.msra.mxu0 %v5271
    %5476 = vmatprep.subr.bf16.mxu0 %v5279
    %5477 = vmatpush1.bf16.msra.mxu0 %v5278
    %5478 = vmatprep.subr.bf16.mxu0 %v5286
    %5479 = vmatpush1.bf16.msra.mxu0 %v5285
    %5480 = vmatprep.subr.bf16.mxu0 %v5293
    %5481 = vmatpush1.bf16.msra.mxu0 %v5292
    %5482 = vmatprep.subr.bf16.mxu0 %v5300
    %5483 = vmatpush1.bf16.msra.mxu0 %v5299
    %5484 = vmatprep.subr.bf16.mxu0 %v5307
    %5485 = vmatpush1.bf16.msra.mxu0 %v5306
    %5486 = vmatprep.subr.bf16.mxu0 %v5314
    %5487 = vmatpush1.bf16.msra.mxu0 %v5313
    %5488 = vmatprep.subr.bf16.mxu0 %v5321
    %5489 = vmatpush1.bf16.msra.mxu0 %v5320
    %5490 = vmatprep.subr.bf16.mxu0 %v5328
    %5491 = vmatpush1.bf16.msra.mxu0 %v5327
    %5492 = vmatprep.subr.bf16.mxu0 %v5335
    %5493 = vmatpush1.bf16.msra.mxu0 %v5334
    %5494 = vmatprep.mubr.bf16.mxu0 %v5202
    %5495 = vmatmul.mubr.bf16.gmra.mrb[0].mxu0 %v5201
    %v5496 = vpop.f32.mrb[0].mxu0
    %v5497 = vadd.f32 %v5409, %v5496
    %v5498 = vpop.f32.mrb[0].mxu0
    %v5499 = vadd.f32 %v5413, %v5498
    %v5500 = vpop.f32.mrb[0].mxu0
    %v5501 = vadd.f32 %v5409, %v5500
    %v5502 = vpop.f32.mrb[0].mxu0
    %v5503 = vadd.f32 %v5413, %v5502
    %5504 = vmatprep.mubr.bf16.mxu0 %v5206
    %5505 = vmatmul.mubr.bf16.gmra.mrb[0].mxu0 %v5205
    %v5506 = vpop.f32.mrb[0].mxu0
    %v5507 = vadd.f32 %v5409, %v5506
    %v5508 = vpop.f32.mrb[0].mxu0
    %v5509 = vadd.f32 %v5413, %v5508
    %v5510 = vpop.f32.mrb[0].mxu0
    %v5511 = vadd.f32 %v5409, %v5510
    %v5512 = vpop.f32.mrb[0].mxu0
    %v5513 = vadd.f32 %v5413, %v5512
    %5514 = vmatprep.mubr.bf16.mxu0 %v5210
    %5515 = vmatmul.mubr.bf16.gmra.mrb[0].mxu0 %v5209
    %v5516 = vpop.f32.mrb[0].mxu0
    %v5517 = vadd.f32 %v5409, %v5516
    %v5518 = vpop.f32.mrb[0].mxu0
    %v5519 = vadd.f32 %v5413, %v5518
    %v5520 = vpop.f32.mrb[0].mxu0
    %v5521 = vadd.f32 %v5409, %v5520
    %v5522 = vpop.f32.mrb[0].mxu0
    %v5523 = vadd.f32 %v5413, %v5522
    %5524 = vmatprep.mubr.bf16.mxu0 %v5214
    %5525 = vmatmul.mubr.bf16.gmra.mrb[0].mxu0 %v5213
    %v5526 = vpop.f32.mrb[0].mxu0
    %v5527 = vadd.f32 %v5409, %v5526
    %v5528 = vpop.f32.mrb[0].mxu0
    %v5529 = vadd.f32 %v5413, %v5528
    %v5530 = vpop.f32.mrb[0].mxu0
    %v5531 = vadd.f32 %v5409, %v5530
    %v5532 = vpop.f32.mrb[0].mxu0
    %v5533 = vadd.f32 %v5413, %v5532
    %5534 = vmatprep.mubr.bf16.mxu0 %v5218
    %5535 = vmatmul.mubr.bf16.gmra.mrb[0].mxu0 %v5217
    %v5536 = vpop.f32.mrb[0].mxu0
    %v5537 = vadd.f32 %v5409, %v5536
    %v5538 = vpop.f32.mrb[0].mxu0
    %v5539 = vadd.f32 %v5413, %v5538
    %v5540 = vpop.f32.mrb[0].mxu0
    %v5541 = vadd.f32 %v5409, %v5540
    %v5542 = vpop.f32.mrb[0].mxu0
    %v5543 = vadd.f32 %v5413, %v5542
    %5544 = vmatprep.mubr.bf16.mxu0 %v5222
    %5545 = vmatmul.mubr.bf16.gmra.mrb[0].mxu0 %v5221
    %v5546 = vpop.f32.mrb[0].mxu0
    %v5547 = vadd.f32 %v5409, %v5546
    %v5548 = vpop.f32.mrb[0].mxu0
    %v5549 = vadd.f32 %v5413, %v5548
    %v5550 = vpop.f32.mrb[0].mxu0
    %v5551 = vadd.f32 %v5409, %v5550
    %v5552 = vpop.f32.mrb[0].mxu0
    %v5553 = vadd.f32 %v5413, %v5552
    %5554 = vmatprep.mubr.bf16.mxu0 %v5226
    %5555 = vmatmul.mubr.bf16.gmra.mrb[0].mxu0 %v5225
    %v5556 = vpop.f32.mrb[0].mxu0
    %v5557 = vadd.f32 %v5409, %v5556
    %v5558 = vpop.f32.mrb[0].mxu0
    %v5559 = vadd.f32 %v5413, %v5558
    %v5560 = vpop.f32.mrb[0].mxu0
    %v5561 = vpop.f32.mrb[0].mxu0
    %5562 = vdwg.mxu0
    %5563 = vmatprep.subr.bf16.mxu0 %v5342
    %5564 = vmatpush1.bf16.msra.mxu0 %v5341
    %5565 = vmatprep.subr.bf16.mxu0 %v5349
    %5566 = vmatpush1.bf16.msra.mxu0 %v5348
    %5567 = vmatprep.subr.bf16.mxu0 %v5356
    %5568 = vmatpush1.bf16.msra.mxu0 %v5355
    %5569 = vmatprep.subr.bf16.mxu0 %v5363
    %5570 = vmatpush1.bf16.msra.mxu0 %v5362
    %5571 = vmatprep.subr.bf16.mxu0 %v5370
    %5572 = vmatpush1.bf16.msra.mxu0 %v5369
    %5573 = vmatprep.subr.bf16.mxu0 %v5377
    %5574 = vmatpush1.bf16.msra.mxu0 %v5376
    %5575 = vmatprep.subr.bf16.mxu0 %v5384
    %5576 = vmatpush1.bf16.msra.mxu0 %v5383
    %5577 = vmatprep.subr.bf16.mxu0 %v5391
    %5578 = vmatpush1.bf16.msra.mxu0 %v5390
    %5579 = vmatprep.subr.bf16.mxu0 %v5398
    %5580 = vmatpush1.bf16.msra.mxu0 %v5397
    %5581 = vmatprep.subr.bf16.mxu0 0
    %5582 = vmatpush1.bf16.msra.mxu0 0
    %5583 = vmatprep.subr.bf16.mxu0 0
    %5584 = vmatpush1.bf16.msra.mxu0 0
    %5585 = vmatprep.subr.bf16.mxu0 0
    %5586 = vmatpush1.bf16.msra.mxu0 0
    %5587 = vmatprep.subr.bf16.mxu0 0
    %5588 = vmatpush1.bf16.msra.mxu0 0
    %5589 = vmatprep.subr.bf16.mxu0 0
    %5590 = vmatpush1.bf16.msra.mxu0 0
    %5591 = vmatprep.subr.bf16.mxu0 0
    %5592 = vmatpush1.bf16.msra.mxu0 0
    %5593 = vmatprep.subr.bf16.mxu0 0
    %5594 = vmatpush1.bf16.msra.mxu0 0
    %5595 = vmatprep.mubr.bf16.mxu0 %v5442
    %5596 = vmatmul.mubr.bf16.gmra.mrb[0].mxu0 %v5203
    %v5597 = vpop.f32.mrb[0].mxu0
    %v5598 = vadd.f32 %v5497, %v5597
    %v5599 = vpop.f32.mrb[0].mxu0
    %v5600 = vadd.f32 %v5499, %v5599
    %v5601 = vpop.f32.mrb[0].mxu0
    %v5602 = vadd.f32 %v5501, %v5601
    %v5603 = vpop.f32.mrb[0].mxu0
    %v5604 = vadd.f32 %v5503, %v5603
    %5605 = vmatprep.mubr.bf16.mxu0 %v5445
    %5606 = vmatmul.mubr.bf16.gmra.mrb[0].mxu0 %v5207
    %v5607 = vpop.f32.mrb[0].mxu0
    %v5608 = vadd.f32 %v5507, %v5607
    %v5609 = vpop.f32.mrb[0].mxu0
    %v5610 = vadd.f32 %v5509, %v5609
    %v5611 = vpop.f32.mrb[0].mxu0
    %v5612 = vadd.f32 %v5511, %v5611
    %v5613 = vpop.f32.mrb[0].mxu0
    %v5614 = vadd.f32 %v5513, %v5613
    %5615 = vmatprep.mubr.bf16.mxu0 %v5448
    %5616 = vmatmul.mubr.bf16.gmra.mrb[0].mxu0 %v5211
    %v5617 = vpop.f32.mrb[0].mxu0
    %v5618 = vadd.f32 %v5517, %v5617
    %v5619 = vpop.f32.mrb[0].mxu0
    %v5620 = vadd.f32 %v5519, %v5619
    %v5621 = vpop.f32.mrb[0].mxu0
    %v5622 = vadd.f32 %v5521, %v5621
    %v5623 = vpop.f32.mrb[0].mxu0
    %v5624 = vadd.f32 %v5523, %v5623
    %5625 = vmatprep.mubr.bf16.mxu0 %v5451
    %5626 = vmatmul.mubr.bf16.gmra.mrb[0].mxu0 %v5215
    %v5627 = vpop.f32.mrb[0].mxu0
    %v5628 = vadd.f32 %v5527, %v5627
    %v5629 = vpop.f32.mrb[0].mxu0
    %v5630 = vadd.f32 %v5529, %v5629
    %v5631 = vpop.f32.mrb[0].mxu0
    %v5632 = vadd.f32 %v5531, %v5631
    %v5633 = vpop.f32.mrb[0].mxu0
    %v5634 = vadd.f32 %v5533, %v5633
    %5635 = vmatprep.mubr.bf16.mxu0 %v5454
    %5636 = vmatmul.mubr.bf16.gmra.mrb[0].mxu0 %v5219
    %v5637 = vpop.f32.mrb[0].mxu0
    %v5638 = vadd.f32 %v5537, %v5637
    %v5639 = vpop.f32.mrb[0].mxu0
    %v5640 = vadd.f32 %v5539, %v5639
    %v5641 = vpop.f32.mrb[0].mxu0
    %v5642 = vadd.f32 %v5541, %v5641
    %v5643 = vpop.f32.mrb[0].mxu0
    %v5644 = vadd.f32 %v5543, %v5643
    %5645 = vmatprep.mubr.bf16.mxu0 %v5457
    %5646 = vmatmul.mubr.bf16.gmra.mrb[0].mxu0 %v5223
    %v5647 = vpop.f32.mrb[0].mxu0
    %v5648 = vadd.f32 %v5547, %v5647
    %v5649 = vpop.f32.mrb[0].mxu0
    %v5650 = vadd.f32 %v5549, %v5649
    %v5651 = vpop.f32.mrb[0].mxu0
    %v5652 = vadd.f32 %v5551, %v5651
    %v5653 = vpop.f32.mrb[0].mxu0
    %v5654 = vadd.f32 %v5553, %v5653
    %5655 = vmatprep.mubr.bf16.mxu0 %v5460
    %5656 = vmatmul.mubr.bf16.gmra.mrb[0].mxu0 %v5227
    %v5657 = vpop.f32.mrb[0].mxu0
    %v5658 = vadd.f32 %v5557, %v5657
    %v5659 = vpop.f32.mrb[0].mxu0
    %v5660 = vadd.f32 %v5559, %v5659
    %v5661 = vpop.f32.mrb[0].mxu0
    %v5662 = vpop.f32.mrb[0].mxu0
    %5663 = vdwg.mxu0
    %5664 = vmatprep.subr.bf16.mxu0 %v5232
    %5665 = vmatpush1.bf16.msra.mxu0 %v5231
    %5666 = vmatprep.subr.bf16.mxu0 %v5239
    %5667 = vmatpush1.bf16.msra.mxu0 %v5238
    %5668 = vmatprep.subr.bf16.mxu0 %v5246
    %5669 = vmatpush1.bf16.msra.mxu0 %v5245
    %5670 = vmatprep.subr.bf16.mxu0 %v5253
    %5671 = vmatpush1.bf16.msra.mxu0 %v5252
    %5672 = vmatprep.subr.bf16.mxu0 %v5260
    %5673 = vmatpush1.bf16.msra.mxu0 %v5259
    %5674 = vmatprep.subr.bf16.mxu0 %v5267
    %5675 = vmatpush1.bf16.msra.mxu0 %v5266
    %5676 = vmatprep.subr.bf16.mxu0 %v5274
    %5677 = vmatpush1.bf16.msra.mxu0 %v5273
    %5678 = vmatprep.subr.bf16.mxu0 %v5281
    %5679 = vmatpush1.bf16.msra.mxu0 %v5280
    %5680 = vmatprep.subr.bf16.mxu0 %v5288
    %5681 = vmatpush1.bf16.msra.mxu0 %v5287
    %5682 = vmatprep.subr.bf16.mxu0 %v5295
    %5683 = vmatpush1.bf16.msra.mxu0 %v5294
    %5684 = vmatprep.subr.bf16.mxu0 %v5302
    %5685 = vmatpush1.bf16.msra.mxu0 %v5301
    %5686 = vmatprep.subr.bf16.mxu0 %v5309
    %5687 = vmatpush1.bf16.msra.mxu0 %v5308
    %5688 = vmatprep.subr.bf16.mxu0 %v5316
    %5689 = vmatpush1.bf16.msra.mxu0 %v5315
    %5690 = vmatprep.subr.bf16.mxu0 %v5323
    %5691 = vmatpush1.bf16.msra.mxu0 %v5322
    %5692 = vmatprep.subr.bf16.mxu0 %v5330
    %5693 = vmatpush1.bf16.msra.mxu0 %v5329
    %5694 = vmatprep.subr.bf16.mxu0 %v5337
    %5695 = vmatpush1.bf16.msra.mxu0 %v5336
    %5696 = vmatprep.mubr.bf16.mxu0 %v5202
    %5697 = vmatmul.mubr.bf16.gmra.mrb[0].mxu0 %v5201
    %v5698 = vpop.f32.mrb[0].mxu0
    %v5699 = vadd.f32 %v5417, %v5698
    %v5700 = vpop.f32.mrb[0].mxu0
    %v5701 = vadd.f32 %v5421, %v5700
    %v5702 = vpop.f32.mrb[0].mxu0
    %v5703 = vadd.f32 %v5417, %v5702
    %v5704 = vpop.f32.mrb[0].mxu0
    %v5705 = vadd.f32 %v5421, %v5704
    %5706 = vmatprep.mubr.bf16.mxu0 %v5206
    %5707 = vmatmul.mubr.bf16.gmra.mrb[0].mxu0 %v5205
    %v5708 = vpop.f32.mrb[0].mxu0
    %v5709 = vadd.f32 %v5417, %v5708
    %v5710 = vpop.f32.mrb[0].mxu0
    %v5711 = vadd.f32 %v5421, %v5710
    %v5712 = vpop.f32.mrb[0].mxu0
    %v5713 = vadd.f32 %v5417, %v5712
    %v5714 = vpop.f32.mrb[0].mxu0
    %v5715 = vadd.f32 %v5421, %v5714
    %5716 = vmatprep.mubr.bf16.mxu0 %v5210
    %5717 = vmatmul.mubr.bf16.gmra.mrb[0].mxu0 %v5209
    %v5718 = vpop.f32.mrb[0].mxu0
    %v5719 = vadd.f32 %v5417, %v5718
    %v5720 = vpop.f32.mrb[0].mxu0
    %v5721 = vadd.f32 %v5421, %v5720
    %v5722 = vpop.f32.mrb[0].mxu0
    %v5723 = vadd.f32 %v5417, %v5722
    %v5724 = vpop.f32.mrb[0].mxu0
    %v5725 = vadd.f32 %v5421, %v5724
    %5726 = vmatprep.mubr.bf16.mxu0 %v5214
    %5727 = vmatmul.mubr.bf16.gmra.mrb[0].mxu0 %v5213
    %v5728 = vpop.f32.mrb[0].mxu0
    %v5729 = vadd.f32 %v5417, %v5728
    %v5730 = vpop.f32.mrb[0].mxu0
    %v5731 = vadd.f32 %v5421, %v5730
    %v5732 = vpop.f32.mrb[0].mxu0
    %v5733 = vadd.f32 %v5417, %v5732
    %v5734 = vpop.f32.mrb[0].mxu0
    %v5735 = vadd.f32 %v5421, %v5734
    %5736 = vmatprep.mubr.bf16.mxu0 %v5218
    %5737 = vmatmul.mubr.bf16.gmra.mrb[0].mxu0 %v5217
    %v5738 = vpop.f32.mrb[0].mxu0
    %v5739 = vadd.f32 %v5417, %v5738
    %v5740 = vpop.f32.mrb[0].mxu0
    %v5741 = vadd.f32 %v5421, %v5740
    %v5742 = vpop.f32.mrb[0].mxu0
    %v5743 = vadd.f32 %v5417, %v5742
    %v5744 = vpop.f32.mrb[0].mxu0
    %v5745 = vadd.f32 %v5421, %v5744
    %5746 = vmatprep.mubr.bf16.mxu0 %v5222
    %5747 = vmatmul.mubr.bf16.gmra.mrb[0].mxu0 %v5221
    %v5748 = vpop.f32.mrb[0].mxu0
    %v5749 = vadd.f32 %v5417, %v5748
    %v5750 = vpop.f32.mrb[0].mxu0
    %v5751 = vadd.f32 %v5421, %v5750
    %v5752 = vpop.f32.mrb[0].mxu0
    %v5753 = vadd.f32 %v5417, %v5752
    %v5754 = vpop.f32.mrb[0].mxu0
    %v5755 = vadd.f32 %v5421, %v5754
    %5756 = vmatprep.mubr.bf16.mxu0 %v5226
    %5757 = vmatmul.mubr.bf16.gmra.mrb[0].mxu0 %v5225
    %v5758 = vpop.f32.mrb[0].mxu0
    %v5759 = vadd.f32 %v5417, %v5758
    %v5760 = vpop.f32.mrb[0].mxu0
    %v5761 = vadd.f32 %v5421, %v5760
    %v5762 = vpop.f32.mrb[0].mxu0
    %v5763 = vpop.f32.mrb[0].mxu0
    %5764 = vdwg.mxu0
    %5765 = vmatprep.subr.bf16.mxu0 %v5344
    %5766 = vmatpush1.bf16.msra.mxu0 %v5343
    %5767 = vmatprep.subr.bf16.mxu0 %v5351
    %5768 = vmatpush1.bf16.msra.mxu0 %v5350
    %5769 = vmatprep.subr.bf16.mxu0 %v5358
    %5770 = vmatpush1.bf16.msra.mxu0 %v5357
    %5771 = vmatprep.subr.bf16.mxu0 %v5365
    %5772 = vmatpush1.bf16.msra.mxu0 %v5364
    %5773 = vmatprep.subr.bf16.mxu0 %v5372
    %5774 = vmatpush1.bf16.msra.mxu0 %v5371
    %5775 = vmatprep.subr.bf16.mxu0 %v5379
    %5776 = vmatpush1.bf16.msra.mxu0 %v5378
    %5777 = vmatprep.subr.bf16.mxu0 %v5386
    %5778 = vmatpush1.bf16.msra.mxu0 %v5385
    %5779 = vmatprep.subr.bf16.mxu0 %v5393
    %5780 = vmatpush1.bf16.msra.mxu0 %v5392
    %5781 = vmatprep.subr.bf16.mxu0 %v5400
    %5782 = vmatpush1.bf16.msra.mxu0 %v5399
    %5783 = vmatprep.subr.bf16.mxu0 0
    %5784 = vmatpush1.bf16.msra.mxu0 0
    %5785 = vmatprep.subr.bf16.mxu0 0
    %5786 = vmatpush1.bf16.msra.mxu0 0
    %5787 = vmatprep.subr.bf16.mxu0 0
    %5788 = vmatpush1.bf16.msra.mxu0 0
    %5789 = vmatprep.subr.bf16.mxu0 0
    %5790 = vmatpush1.bf16.msra.mxu0 0
    %5791 = vmatprep.subr.bf16.mxu0 0
    %5792 = vmatpush1.bf16.msra.mxu0 0
    %5793 = vmatprep.subr.bf16.mxu0 0
    %5794 = vmatpush1.bf16.msra.mxu0 0
    %5795 = vmatprep.subr.bf16.mxu0 0
    %5796 = vmatpush1.bf16.msra.mxu0 0
    %5797 = vmatprep.mubr.bf16.mxu0 %v5442
    %5798 = vmatmul.mubr.bf16.gmra.mrb[0].mxu0 %v5203
    %v5799 = vpop.f32.mrb[0].mxu0
    %v5800 = vadd.f32 %v5699, %v5799
    %v5801 = vpop.f32.mrb[0].mxu0
    %v5802 = vadd.f32 %v5701, %v5801
    %v5803 = vpop.f32.mrb[0].mxu0
    %v5804 = vadd.f32 %v5703, %v5803
    %v5805 = vpop.f32.mrb[0].mxu0
    %v5806 = vadd.f32 %v5705, %v5805
    %5807 = vmatprep.mubr.bf16.mxu0 %v5445
    %5808 = vmatmul.mubr.bf16.gmra.mrb[0].mxu0 %v5207
    %v5809 = vpop.f32.mrb[0].mxu0
    %v5810 = vadd.f32 %v5709, %v5809
    %v5811 = vpop.f32.mrb[0].mxu0
    %v5812 = vadd.f32 %v5711, %v5811
    %v5813 = vpop.f32.mrb[0].mxu0
    %v5814 = vadd.f32 %v5713, %v5813
    %v5815 = vpop.f32.mrb[0].mxu0
    %v5816 = vadd.f32 %v5715, %v5815
    %5817 = vmatprep.mubr.bf16.mxu0 %v5448
    %5818 = vmatmul.mubr.bf16.gmra.mrb[0].mxu0 %v5211
    %v5819 = vpop.f32.mrb[0].mxu0
    %v5820 = vadd.f32 %v5719, %v5819
    %v5821 = vpop.f32.mrb[0].mxu0
    %v5822 = vadd.f32 %v5721, %v5821
    %v5823 = vpop.f32.mrb[0].mxu0
    %v5824 = vadd.f32 %v5723, %v5823
    %v5825 = vpop.f32.mrb[0].mxu0
    %v5826 = vadd.f32 %v5725, %v5825
    %5827 = vmatprep.mubr.bf16.mxu0 %v5451
    %5828 = vmatmul.mubr.bf16.gmra.mrb[0].mxu0 %v5215
    %v5829 = vpop.f32.mrb[0].mxu0
    %v5830 = vadd.f32 %v5729, %v5829
    %v5831 = vpop.f32.mrb[0].mxu0
    %v5832 = vadd.f32 %v5731, %v5831
    %v5833 = vpop.f32.mrb[0].mxu0
    %v5834 = vadd.f32 %v5733, %v5833
    %v5835 = vpop.f32.mrb[0].mxu0
    %v5836 = vadd.f32 %v5735, %v5835
    %5837 = vmatprep.mubr.bf16.mxu0 %v5454
    %5838 = vmatmul.mubr.bf16.gmra.mrb[0].mxu0 %v5219
    %v5839 = vpop.f32.mrb[0].mxu0
    %v5840 = vadd.f32 %v5739, %v5839
    %v5841 = vpop.f32.mrb[0].mxu0
    %v5842 = vadd.f32 %v5741, %v5841
    %v5843 = vpop.f32.mrb[0].mxu0
    %v5844 = vadd.f32 %v5743, %v5843
    %v5845 = vpop.f32.mrb[0].mxu0
    %v5846 = vadd.f32 %v5745, %v5845
    %5847 = vmatprep.mubr.bf16.mxu0 %v5457
    %5848 = vmatmul.mubr.bf16.gmra.mrb[0].mxu0 %v5223
    %v5849 = vpop.f32.mrb[0].mxu0
    %v5850 = vadd.f32 %v5749, %v5849
    %v5851 = vpop.f32.mrb[0].mxu0
    %v5852 = vadd.f32 %v5751, %v5851
    %v5853 = vpop.f32.mrb[0].mxu0
    %v5854 = vadd.f32 %v5753, %v5853
    %v5855 = vpop.f32.mrb[0].mxu0
    %v5856 = vadd.f32 %v5755, %v5855
    %5857 = vmatprep.mubr.bf16.mxu0 %v5460
    %5858 = vmatmul.mubr.bf16.gmra.mrb[0].mxu0 %v5227
    %v5859 = vpop.f32.mrb[0].mxu0
    %v5860 = vadd.f32 %v5759, %v5859
    %v5861 = vpop.f32.mrb[0].mxu0
    %v5862 = vadd.f32 %v5761, %v5861
    %v5863 = vpop.f32.mrb[0].mxu0
    %v5864 = vpop.f32.mrb[0].mxu0
    %5865 = vdwg.mxu0
    %5866 = vmatprep.subr.bf16.mxu0 %v5234
    %5867 = vmatpush1.bf16.msra.mxu0 %v5233
    %5868 = vmatprep.subr.bf16.mxu0 %v5241
    %5869 = vmatpush1.bf16.msra.mxu0 %v5240
    %5870 = vmatprep.subr.bf16.mxu0 %v5248
    %5871 = vmatpush1.bf16.msra.mxu0 %v5247
    %5872 = vmatprep.subr.bf16.mxu0 %v5255
    %5873 = vmatpush1.bf16.msra.mxu0 %v5254
    %5874 = vmatprep.subr.bf16.mxu0 %v5262
    %5875 = vmatpush1.bf16.msra.mxu0 %v5261
    %5876 = vmatprep.subr.bf16.mxu0 %v5269
    %5877 = vmatpush1.bf16.msra.mxu0 %v5268
    %5878 = vmatprep.subr.bf16.mxu0 %v5276
    %5879 = vmatpush1.bf16.msra.mxu0 %v5275
    %5880 = vmatprep.subr.bf16.mxu0 %v5283
    %5881 = vmatpush1.bf16.msra.mxu0 %v5282
    %5882 = vmatprep.subr.bf16.mxu0 %v5290
    %5883 = vmatpush1.bf16.msra.mxu0 %v5289
    %5884 = vmatprep.subr.bf16.mxu0 %v5297
    %5885 = vmatpush1.bf16.msra.mxu0 %v5296
    %5886 = vmatprep.subr.bf16.mxu0 %v5304
    %5887 = vmatpush1.bf16.msra.mxu0 %v5303
    %5888 = vmatprep.subr.bf16.mxu0 %v5311
    %5889 = vmatpush1.bf16.msra.mxu0 %v5310
    %5890 = vmatprep.subr.bf16.mxu0 %v5318
    %5891 = vmatpush1.bf16.msra.mxu0 %v5317
    %5892 = vmatprep.subr.bf16.mxu0 %v5325
    %5893 = vmatpush1.bf16.msra.mxu0 %v5324
    %5894 = vmatprep.subr.bf16.mxu0 %v5332
    %5895 = vmatpush1.bf16.msra.mxu0 %v5331
    %5896 = vmatprep.subr.bf16.mxu0 %v5339
    %5897 = vmatpush1.bf16.msra.mxu0 %v5338
    %5898 = vmatprep.mubr.bf16.mxu0 %v5202
    %5899 = vmatmul.mubr.bf16.gmra.mrb[0].mxu0 %v5201
    %v5900 = vpop.f32.mrb[0].mxu0
    %v5901 = vadd.f32 %v5425, %v5900
    %v5902 = vpop.f32.mrb[0].mxu0
    %v5903 = vadd.f32 %v5429, %v5902
    %v5904 = vpop.f32.mrb[0].mxu0
    %v5905 = vadd.f32 %v5425, %v5904
    %v5906 = vpop.f32.mrb[0].mxu0
    %v5907 = vadd.f32 %v5429, %v5906
    %5908 = vmatprep.mubr.bf16.mxu0 %v5206
    %5909 = vmatmul.mubr.bf16.gmra.mrb[0].mxu0 %v5205
    %v5910 = vpop.f32.mrb[0].mxu0
    %v5911 = vadd.f32 %v5425, %v5910
    %v5912 = vpop.f32.mrb[0].mxu0
    %v5913 = vadd.f32 %v5429, %v5912
    %v5914 = vpop.f32.mrb[0].mxu0
    %v5915 = vadd.f32 %v5425, %v5914
    %v5916 = vpop.f32.mrb[0].mxu0
    %v5917 = vadd.f32 %v5429, %v5916
    %5918 = vmatprep.mubr.bf16.mxu0 %v5210
    %5919 = vmatmul.mubr.bf16.gmra.mrb[0].mxu0 %v5209
    %v5920 = vpop.f32.mrb[0].mxu0
    %v5921 = vadd.f32 %v5425, %v5920
    %v5922 = vpop.f32.mrb[0].mxu0
    %v5923 = vadd.f32 %v5429, %v5922
    %v5924 = vpop.f32.mrb[0].mxu0
    %v5925 = vadd.f32 %v5425, %v5924
    %v5926 = vpop.f32.mrb[0].mxu0
    %v5927 = vadd.f32 %v5429, %v5926
    %5928 = vmatprep.mubr.bf16.mxu0 %v5214
    %5929 = vmatmul.mubr.bf16.gmra.mrb[0].mxu0 %v5213
    %v5930 = vpop.f32.mrb[0].mxu0
    %v5931 = vadd.f32 %v5425, %v5930
    %v5932 = vpop.f32.mrb[0].mxu0
    %v5933 = vadd.f32 %v5429, %v5932
    %v5934 = vpop.f32.mrb[0].mxu0
    %v5935 = vadd.f32 %v5425, %v5934
    %v5936 = vpop.f32.mrb[0].mxu0
    %v5937 = vadd.f32 %v5429, %v5936
    %5938 = vmatprep.mubr.bf16.mxu0 %v5218
    %5939 = vmatmul.mubr.bf16.gmra.mrb[0].mxu0 %v5217
    %v5940 = vpop.f32.mrb[0].mxu0
    %v5941 = vadd.f32 %v5425, %v5940
    %v5942 = vpop.f32.mrb[0].mxu0
    %v5943 = vadd.f32 %v5429, %v5942
    %v5944 = vpop.f32.mrb[0].mxu0
    %v5945 = vadd.f32 %v5425, %v5944
    %v5946 = vpop.f32.mrb[0].mxu0
    %v5947 = vadd.f32 %v5429, %v5946
    %5948 = vmatprep.mubr.bf16.mxu0 %v5222
    %5949 = vmatmul.mubr.bf16.gmra.mrb[0].mxu0 %v5221
    %v5950 = vpop.f32.mrb[0].mxu0
    %v5951 = vadd.f32 %v5425, %v5950
    %v5952 = vpop.f32.mrb[0].mxu0
    %v5953 = vadd.f32 %v5429, %v5952
    %v5954 = vpop.f32.mrb[0].mxu0
    %v5955 = vadd.f32 %v5425, %v5954
    %v5956 = vpop.f32.mrb[0].mxu0
    %v5957 = vadd.f32 %v5429, %v5956
    %5958 = vmatprep.mubr.bf16.mxu0 %v5226
    %5959 = vmatmul.mubr.bf16.gmra.mrb[0].mxu0 %v5225
    %v5960 = vpop.f32.mrb[0].mxu0
    %v5961 = vadd.f32 %v5425, %v5960
    %v5962 = vpop.f32.mrb[0].mxu0
    %v5963 = vadd.f32 %v5429, %v5962
    %v5964 = vpop.f32.mrb[0].mxu0
    %v5965 = vpop.f32.mrb[0].mxu0
    %5966 = vdwg.mxu0
    %5967 = vmatprep.subr.bf16.mxu0 %v5346
    %5968 = vmatpush1.bf16.msra.mxu0 %v5345
    %5969 = vmatprep.subr.bf16.mxu0 %v5353
    %5970 = vmatpush1.bf16.msra.mxu0 %v5352
    %5971 = vmatprep.subr.bf16.mxu0 %v5360
    %5972 = vmatpush1.bf16.msra.mxu0 %v5359
    %5973 = vmatprep.subr.bf16.mxu0 %v5367
    %5974 = vmatpush1.bf16.msra.mxu0 %v5366
    %5975 = vmatprep.subr.bf16.mxu0 %v5374
    %5976 = vmatpush1.bf16.msra.mxu0 %v5373
    %5977 = vmatprep.subr.bf16.mxu0 %v5381
    %5978 = vmatpush1.bf16.msra.mxu0 %v5380
    %5979 = vmatprep.subr.bf16.mxu0 %v5388
    %5980 = vmatpush1.bf16.msra.mxu0 %v5387
    %5981 = vmatprep.subr.bf16.mxu0 %v5395
    %5982 = vmatpush1.bf16.msra.mxu0 %v5394
    %5983 = vmatprep.subr.bf16.mxu0 %v5402
    %5984 = vmatpush1.bf16.msra.mxu0 %v5401
    %5985 = vmatprep.subr.bf16.mxu0 0
    %5986 = vmatpush1.bf16.msra.mxu0 0
    %5987 = vmatprep.subr.bf16.mxu0 0
    %5988 = vmatpush1.bf16.msra.mxu0 0
    %5989 = vmatprep.subr.bf16.mxu0 0
    %5990 = vmatpush1.bf16.msra.mxu0 0
    %5991 = vmatprep.subr.bf16.mxu0 0
    %5992 = vmatpush1.bf16.msra.mxu0 0
    %5993 = vmatprep.subr.bf16.mxu0 0
    %5994 = vmatpush1.bf16.msra.mxu0 0
    %5995 = vmatprep.subr.bf16.mxu0 0
    %5996 = vmatpush1.bf16.msra.mxu0 0
    %5997 = vmatprep.subr.bf16.mxu0 0
    %5998 = vmatpush1.bf16.msra.mxu0 0
    %5999 = vmatprep.mubr.bf16.mxu0 %v5442
    %6000 = vmatmul.mubr.bf16.gmra.mrb[0].mxu0 %v5203
    %v6001 = vpop.f32.mrb[0].mxu0
    %v6002 = vadd.f32 %v5901, %v6001
    %v6003 = vpop.f32.mrb[0].mxu0
    %v6004 = vadd.f32 %v5903, %v6003
    %v6005 = vpop.f32.mrb[0].mxu0
    %v6006 = vadd.f32 %v5905, %v6005
    %v6007 = vpop.f32.mrb[0].mxu0
    %v6008 = vadd.f32 %v5907, %v6007
    %6009 = vmatprep.mubr.bf16.mxu0 %v5445
    %6010 = vmatmul.mubr.bf16.gmra.mrb[0].mxu0 %v5207
    %v6011 = vpop.f32.mrb[0].mxu0
    %v6012 = vadd.f32 %v5911, %v6011
    %v6013 = vpop.f32.mrb[0].mxu0
    %v6014 = vadd.f32 %v5913, %v6013
    %v6015 = vpop.f32.mrb[0].mxu0
    %v6016 = vadd.f32 %v5915, %v6015
    %v6017 = vpop.f32.mrb[0].mxu0
    %v6018 = vadd.f32 %v5917, %v6017
    %6019 = vmatprep.mubr.bf16.mxu0 %v5448
    %6020 = vmatmul.mubr.bf16.gmra.mrb[0].mxu0 %v5211
    %v6021 = vpop.f32.mrb[0].mxu0
    %v6022 = vadd.f32 %v5921, %v6021
    %v6023 = vpop.f32.mrb[0].mxu0
    %v6024 = vadd.f32 %v5923, %v6023
    %v6025 = vpop.f32.mrb[0].mxu0
    %v6026 = vadd.f32 %v5925, %v6025
    %v6027 = vpop.f32.mrb[0].mxu0
    %v6028 = vadd.f32 %v5927, %v6027
    %6029 = vmatprep.mubr.bf16.mxu0 %v5451
    %6030 = vmatmul.mubr.bf16.gmra.mrb[0].mxu0 %v5215
    %v6031 = vpop.f32.mrb[0].mxu0
    %v6032 = vadd.f32 %v5931, %v6031
    %v6033 = vpop.f32.mrb[0].mxu0
    %v6034 = vadd.f32 %v5933, %v6033
    %v6035 = vpop.f32.mrb[0].mxu0
    %v6036 = vadd.f32 %v5935, %v6035
    %v6037 = vpop.f32.mrb[0].mxu0
    %v6038 = vadd.f32 %v5937, %v6037
    %6039 = vmatprep.mubr.bf16.mxu0 %v5454
    %6040 = vmatmul.mubr.bf16.gmra.mrb[0].mxu0 %v5219
    %v6041 = vpop.f32.mrb[0].mxu0
    %v6042 = vadd.f32 %v5941, %v6041
    %v6043 = vpop.f32.mrb[0].mxu0
    %v6044 = vadd.f32 %v5943, %v6043
    %v6045 = vpop.f32.mrb[0].mxu0
    %v6046 = vadd.f32 %v5945, %v6045
    %v6047 = vpop.f32.mrb[0].mxu0
    %v6048 = vadd.f32 %v5947, %v6047
    %6049 = vmatprep.mubr.bf16.mxu0 %v5457
    %6050 = vmatmul.mubr.bf16.gmra.mrb[0].mxu0 %v5223
    %v6051 = vpop.f32.mrb[0].mxu0
    %v6052 = vadd.f32 %v5951, %v6051
    %v6053 = vpop.f32.mrb[0].mxu0
    %v6054 = vadd.f32 %v5953, %v6053
    %v6055 = vpop.f32.mrb[0].mxu0
    %v6056 = vadd.f32 %v5955, %v6055
    %v6057 = vpop.f32.mrb[0].mxu0
    %v6058 = vadd.f32 %v5957, %v6057
    %6059 = vmatprep.mubr.bf16.mxu0 %v5460
    %6060 = vmatmul.mubr.bf16.gmra.mrb[0].mxu0 %v5227
    %v6061 = vpop.f32.mrb[0].mxu0
    %v6062 = vadd.f32 %v5961, %v6061
    %v6063 = vpop.f32.mrb[0].mxu0
    %v6064 = vadd.f32 %v5963, %v6063
    %v6065 = vpop.f32.mrb[0].mxu0
    %v6066 = vpop.f32.mrb[0].mxu0
    %6067 = vdwg.mxu0
    %6068 = vmatprep.subr.bf16.mxu0 0
    %6069 = vmatpush1.bf16.msra.mxu0 %v5235
    %6070 = vmatprep.subr.bf16.mxu0 0
    %6071 = vmatpush1.bf16.msra.mxu0 %v5242
    %6072 = vmatprep.subr.bf16.mxu0 0
    %6073 = vmatpush1.bf16.msra.mxu0 %v5249
    %6074 = vmatprep.subr.bf16.mxu0 0
    %6075 = vmatpush1.bf16.msra.mxu0 %v5256
    %6076 = vmatprep.subr.bf16.mxu0 0
    %6077 = vmatpush1.bf16.msra.mxu0 %v5263
    %6078 = vmatprep.subr.bf16.mxu0 0
    %6079 = vmatpush1.bf16.msra.mxu0 %v5270
    %6080 = vmatprep.subr.bf16.mxu0 0
    %6081 = vmatpush1.bf16.msra.mxu0 %v5277
    %6082 = vmatprep.subr.bf16.mxu0 0
    %6083 = vmatpush1.bf16.msra.mxu0 %v5284
    %6084 = vmatprep.subr.bf16.mxu0 0
    %6085 = vmatpush1.bf16.msra.mxu0 %v5291
    %6086 = vmatprep.subr.bf16.mxu0 0
    %6087 = vmatpush1.bf16.msra.mxu0 %v5298
    %6088 = vmatprep.subr.bf16.mxu0 0
    %6089 = vmatpush1.bf16.msra.mxu0 %v5305
    %6090 = vmatprep.subr.bf16.mxu0 0
    %6091 = vmatpush1.bf16.msra.mxu0 %v5312
    %6092 = vmatprep.subr.bf16.mxu0 0
    %6093 = vmatpush1.bf16.msra.mxu0 %v5319
    %6094 = vmatprep.subr.bf16.mxu0 0
    %6095 = vmatpush1.bf16.msra.mxu0 %v5326
    %6096 = vmatprep.subr.bf16.mxu0 0
    %6097 = vmatpush1.bf16.msra.mxu0 %v5333
    %6098 = vmatprep.subr.bf16.mxu0 0
    %6099 = vmatpush1.bf16.msra.mxu0 %v5340
    %6100 = vmatprep.mubr.bf16.mxu0 %v5202
    %6101 = vmatmul.mubr.bf16.gmra.mrb[0].mxu0 %v5201
    %v6102 = vpop.f32.mrb[0].mxu0
    %v6103 = vadd.f32 %v5433, %v6102
    %v6104 = vpop.f32.mrb[0].mxu0
    %v6105 = vpop.f32.mrb[0].mxu0
    %v6106 = vadd.f32 %v5433, %v6105
    %v6107 = vpop.f32.mrb[0].mxu0
    %6108 = vmatprep.mubr.bf16.mxu0 %v5206
    %6109 = vmatmul.mubr.bf16.gmra.mrb[0].mxu0 %v5205
    %v6110 = vpop.f32.mrb[0].mxu0
    %v6111 = vadd.f32 %v5433, %v6110
    %v6112 = vpop.f32.mrb[0].mxu0
    %v6113 = vpop.f32.mrb[0].mxu0
    %v6114 = vadd.f32 %v5433, %v6113
    %v6115 = vpop.f32.mrb[0].mxu0
    %6116 = vmatprep.mubr.bf16.mxu0 %v5210
    %6117 = vmatmul.mubr.bf16.gmra.mrb[0].mxu0 %v5209
    %v6118 = vpop.f32.mrb[0].mxu0
    %v6119 = vadd.f32 %v5433, %v6118
    %v6120 = vpop.f32.mrb[0].mxu0
    %v6121 = vpop.f32.mrb[0].mxu0
    %v6122 = vadd.f32 %v5433, %v6121
    %v6123 = vpop.f32.mrb[0].mxu0
    %6124 = vmatprep.mubr.bf16.mxu0 %v5214
    %6125 = vmatmul.mubr.bf16.gmra.mrb[0].mxu0 %v5213
    %v6126 = vpop.f32.mrb[0].mxu0
    %v6127 = vadd.f32 %v5433, %v6126
    %v6128 = vpop.f32.mrb[0].mxu0
    %v6129 = vpop.f32.mrb[0].mxu0
    %v6130 = vadd.f32 %v5433, %v6129
    %v6131 = vpop.f32.mrb[0].mxu0
    %6132 = vmatprep.mubr.bf16.mxu0 %v5218
    %6133 = vmatmul.mubr.bf16.gmra.mrb[0].mxu0 %v5217
    %v6134 = vpop.f32.mrb[0].mxu0
    %v6135 = vadd.f32 %v5433, %v6134
    %v6136 = vpop.f32.mrb[0].mxu0
    %v6137 = vpop.f32.mrb[0].mxu0
    %v6138 = vadd.f32 %v5433, %v6137
    %v6139 = vpop.f32.mrb[0].mxu0
    %6140 = vmatprep.mubr.bf16.mxu0 %v5222
    %6141 = vmatmul.mubr.bf16.gmra.mrb[0].mxu0 %v5221
    %v6142 = vpop.f32.mrb[0].mxu0
    %v6143 = vadd.f32 %v5433, %v6142
    %v6144 = vpop.f32.mrb[0].mxu0
    %v6145 = vpop.f32.mrb[0].mxu0
    %v6146 = vadd.f32 %v5433, %v6145
    %v6147 = vpop.f32.mrb[0].mxu0
    %6148 = vmatprep.mubr.bf16.mxu0 %v5226
    %6149 = vmatmul.mubr.bf16.gmra.mrb[0].mxu0 %v5225
    %v6150 = vpop.f32.mrb[0].mxu0
    %v6151 = vadd.f32 %v5433, %v6150
    %v6152 = vpop.f32.mrb[0].mxu0
    %v6153 = vpop.f32.mrb[0].mxu0
    %v6154 = vpop.f32.mrb[0].mxu0
    %6155 = vdwg.mxu0
    %6156 = vmatprep.subr.bf16.mxu0 0
    %6157 = vmatpush1.bf16.msra.mxu0 %v5347
    %6158 = vmatprep.subr.bf16.mxu0 0
    %6159 = vmatpush1.bf16.msra.mxu0 %v5354
    %6160 = vmatprep.subr.bf16.mxu0 0
    %6161 = vmatpush1.bf16.msra.mxu0 %v5361
    %6162 = vmatprep.subr.bf16.mxu0 0
    %6163 = vmatpush1.bf16.msra.mxu0 %v5368
    %6164 = vmatprep.subr.bf16.mxu0 0
    %6165 = vmatpush1.bf16.msra.mxu0 %v5375
    %6166 = vmatprep.subr.bf16.mxu0 0
    %6167 = vmatpush1.bf16.msra.mxu0 %v5382
    %6168 = vmatprep.subr.bf16.mxu0 0
    %6169 = vmatpush1.bf16.msra.mxu0 %v5389
    %6170 = vmatprep.subr.bf16.mxu0 0
    %6171 = vmatpush1.bf16.msra.mxu0 %v5396
    %6172 = vmatprep.subr.bf16.mxu0 0
    %6173 = vmatpush1.bf16.msra.mxu0 %v5403
    %6174 = vmatprep.subr.bf16.mxu0 0
    %6175 = vmatpush1.bf16.msra.mxu0 0
    %6176 = vmatprep.subr.bf16.mxu0 0
    %6177 = vmatpush1.bf16.msra.mxu0 0
    %6178 = vmatprep.subr.bf16.mxu0 0
    %6179 = vmatpush1.bf16.msra.mxu0 0
    %6180 = vmatprep.subr.bf16.mxu0 0
    %6181 = vmatpush1.bf16.msra.mxu0 0
    %6182 = vmatprep.subr.bf16.mxu0 0
    %6183 = vmatpush1.bf16.msra.mxu0 0
    %6184 = vmatprep.subr.bf16.mxu0 0
    %6185 = vmatpush1.bf16.msra.mxu0 0
    %6186 = vmatprep.subr.bf16.mxu0 0
    %6187 = vmatpush1.bf16.msra.mxu0 0
    %6188 = vmatprep.mubr.bf16.mxu0 %v5442
    %6189 = vmatmul.mubr.bf16.gmra.mrb[0].mxu0 %v5203
    %v6190 = vpop.f32.mrb[0].mxu0
    %v6191 = vadd.f32 %v6103, %v6190
    %v6192 = vpop.f32.mrb[0].mxu0
    %v6193 = vpop.f32.mrb[0].mxu0
    %v6194 = vadd.f32 %v6106, %v6193
    %v6195 = vpop.f32.mrb[0].mxu0
    %6196 = vmatprep.mubr.bf16.mxu0 %v5445
    %6197 = vmatmul.mubr.bf16.gmra.mrb[0].mxu0 %v5207
    %v6198 = vpop.f32.mrb[0].mxu0
    %v6199 = vadd.f32 %v6111, %v6198
    %v6200 = vpop.f32.mrb[0].mxu0
    %v6201 = vpop.f32.mrb[0].mxu0
    %v6202 = vadd.f32 %v6114, %v6201
    %v6203 = vpop.f32.mrb[0].mxu0
    %6204 = vmatprep.mubr.bf16.mxu0 %v5448
    %6205 = vmatmul.mubr.bf16.gmra.mrb[0].mxu0 %v5211
    %v6206 = vpop.f32.mrb[0].mxu0
    %v6207 = vadd.f32 %v6119, %v6206
    %v6208 = vpop.f32.mrb[0].mxu0
    %v6209 = vpop.f32.mrb[0].mxu0
    %v6210 = vadd.f32 %v6122, %v6209
    %v6211 = vpop.f32.mrb[0].mxu0
    %6212 = vmatprep.mubr.bf16.mxu0 %v5451
    %6213 = vmatmul.mubr.bf16.gmra.mrb[0].mxu0 %v5215
    %v6214 = vpop.f32.mrb[0].mxu0
    %v6215 = vadd.f32 %v6127, %v6214
    %v6216 = vpop.f32.mrb[0].mxu0
    %v6217 = vpop.f32.mrb[0].mxu0
    %v6218 = vadd.f32 %v6130, %v6217
    %v6219 = vpop.f32.mrb[0].mxu0
    %6220 = vmatprep.mubr.bf16.mxu0 %v5454
    %6221 = vmatmul.mubr.bf16.gmra.mrb[0].mxu0 %v5219
    %v6222 = vpop.f32.mrb[0].mxu0
    %v6223 = vadd.f32 %v6135, %v6222
    %v6224 = vpop.f32.mrb[0].mxu0
    %v6225 = vpop.f32.mrb[0].mxu0
    %v6226 = vadd.f32 %v6138, %v6225
    %v6227 = vpop.f32.mrb[0].mxu0
    %6228 = vmatprep.mubr.bf16.mxu0 %v5457
    %6229 = vmatmul.mubr.bf16.gmra.mrb[0].mxu0 %v5223
    %v6230 = vpop.f32.mrb[0].mxu0
    %v6231 = vadd.f32 %v6143, %v6230
    %v6232 = vpop.f32.mrb[0].mxu0
    %v6233 = vpop.f32.mrb[0].mxu0
    %v6234 = vadd.f32 %v6146, %v6233
    %v6235 = vpop.f32.mrb[0].mxu0
    %6236 = vmatprep.mubr.bf16.mxu0 %v5460
    %6237 = vmatmul.mubr.bf16.gmra.mrb[0].mxu0 %v5227
    %v6238 = vpop.f32.mrb[0].mxu0
    %v6239 = vadd.f32 %v6151, %v6238
    %v6240 = vpop.f32.mrb[0].mxu0
    %v6241 = vpop.f32.mrb[0].mxu0
    %v6242 = vpop.f32.mrb[0].mxu0
    %6243 = vdwg.mxu0
    %v6244 = vxor.u32 %v5598, 2147483648
    %v6245 = vxor.u32 %v5600, 2147483648
    %v6246 = vxor.u32 %v5800, 2147483648
    %v6247 = vxor.u32 %v5802, 2147483648
    %v6248 = vxor.u32 %v6002, 2147483648
    %v6249 = vxor.u32 %v6004, 2147483648
    %v6250 = vxor.u32 %v6191, 2147483648
    %v6251 = vxor.u32 %v5602, 2147483648
    %v6252 = vxor.u32 %v5604, 2147483648
    %v6253 = vxor.u32 %v5804, 2147483648
    %v6254 = vxor.u32 %v5806, 2147483648
    %v6255 = vxor.u32 %v6006, 2147483648
    %v6256 = vxor.u32 %v6008, 2147483648
    %v6257 = vxor.u32 %v6194, 2147483648
    %v6258 = vxor.u32 %v5608, 2147483648
    %v6259 = vxor.u32 %v5610, 2147483648
    %v6260 = vxor.u32 %v5810, 2147483648
    %v6261 = vxor.u32 %v5812, 2147483648
    %v6262 = vxor.u32 %v6012, 2147483648
    %v6263 = vxor.u32 %v6014, 2147483648
    %v6264 = vxor.u32 %v6199, 2147483648
    %v6265 = vxor.u32 %v5612, 2147483648
    %v6266 = vxor.u32 %v5614, 2147483648
    %v6267 = vxor.u32 %v5814, 2147483648
    %v6268 = vxor.u32 %v5816, 2147483648
    %v6269 = vxor.u32 %v6016, 2147483648
    %v6270 = vxor.u32 %v6018, 2147483648
    %v6271 = vxor.u32 %v6202, 2147483648
    %v6272 = vxor.u32 %v5618, 2147483648
    %v6273 = vxor.u32 %v5620, 2147483648
    %v6274 = vxor.u32 %v5820, 2147483648
    %v6275 = vxor.u32 %v5822, 2147483648
    %v6276 = vxor.u32 %v6022, 2147483648
    %v6277 = vxor.u32 %v6024, 2147483648
    %v6278 = vxor.u32 %v6207, 2147483648
    %v6279 = vxor.u32 %v5622, 2147483648
    %v6280 = vxor.u32 %v5624, 2147483648
    %v6281 = vxor.u32 %v5824, 2147483648
    %v6282 = vxor.u32 %v5826, 2147483648
    %v6283 = vxor.u32 %v6026, 2147483648
    %v6284 = vxor.u32 %v6028, 2147483648
    %v6285 = vxor.u32 %v6210, 2147483648
    %v6286 = vxor.u32 %v5628, 2147483648
    %v6287 = vxor.u32 %v5630, 2147483648
    %v6288 = vxor.u32 %v5830, 2147483648
    %v6289 = vxor.u32 %v5832, 2147483648
    %v6290 = vxor.u32 %v6032, 2147483648
    %v6291 = vxor.u32 %v6034, 2147483648
    %v6292 = vxor.u32 %v6215, 2147483648
    %v6293 = vxor.u32 %v5632, 2147483648
    %v6294 = vxor.u32 %v5634, 2147483648
    %v6295 = vxor.u32 %v5834, 2147483648
    %v6296 = vxor.u32 %v5836, 2147483648
    %v6297 = vxor.u32 %v6036, 2147483648
    %v6298 = vxor.u32 %v6038, 2147483648
    %v6299 = vxor.u32 %v6218, 2147483648
    %v6300 = vxor.u32 %v5638, 2147483648
    %v6301 = vxor.u32 %v5640, 2147483648
    %v6302 = vxor.u32 %v5840, 2147483648
    %v6303 = vxor.u32 %v5842, 2147483648
    %v6304 = vxor.u32 %v6042, 2147483648
    %v6305 = vxor.u32 %v6044, 2147483648
    %v6306 = vxor.u32 %v6223, 2147483648
    %v6307 = vxor.u32 %v5642, 2147483648
    %v6308 = vxor.u32 %v5644, 2147483648
    %v6309 = vxor.u32 %v5844, 2147483648
    %v6310 = vxor.u32 %v5846, 2147483648
    %v6311 = vxor.u32 %v6046, 2147483648
    %v6312 = vxor.u32 %v6048, 2147483648
    %v6313 = vxor.u32 %v6226, 2147483648
    %v6314 = vxor.u32 %v5648, 2147483648
    %v6315 = vxor.u32 %v5650, 2147483648
    %v6316 = vxor.u32 %v5850, 2147483648
    %v6317 = vxor.u32 %v5852, 2147483648
    %v6318 = vxor.u32 %v6052, 2147483648
    %v6319 = vxor.u32 %v6054, 2147483648
    %v6320 = vxor.u32 %v6231, 2147483648
    %v6321 = vxor.u32 %v5652, 2147483648
    %v6322 = vxor.u32 %v5654, 2147483648
    %v6323 = vxor.u32 %v5854, 2147483648
    %v6324 = vxor.u32 %v5856, 2147483648
    %v6325 = vxor.u32 %v6056, 2147483648
    %v6326 = vxor.u32 %v6058, 2147483648
    %v6327 = vxor.u32 %v6234, 2147483648
    %v6328 = vxor.u32 %v5658, 2147483648
    %v6329 = vxor.u32 %v5660, 2147483648
    %v6330 = vxor.u32 %v5860, 2147483648
    %v6331 = vxor.u32 %v5862, 2147483648
    %v6332 = vxor.u32 %v6062, 2147483648
    %v6333 = vxor.u32 %v6064, 2147483648
    %v6334 = vxor.u32 %v6239, 2147483648
    %v6335 = vmul.f32 %v6244, 1.442695
    %v6336 = vpow.pop %v6335
    %v6337 = vmul.f32 %v6245, 1.442695
    %v6338 = vpow.pop %v6337
    %v6339 = vmul.f32 %v6246, 1.442695
    %v6340 = vpow.pop %v6339
    %v6341 = vmul.f32 %v6247, 1.442695
    %v6342 = vpow.pop %v6341
    %v6343 = vmul.f32 %v6248, 1.442695
    %v6344 = vpow.pop %v6343
    %v6345 = vmul.f32 %v6249, 1.442695
    %v6346 = vpow.pop %v6345
    %v6347 = vmul.f32 %v6250, 1.442695
    %v6348 = vpow.pop %v6347
    %v6349 = vmul.f32 %v6251, 1.442695
    %v6350 = vpow.pop %v6349
    %v6351 = vmul.f32 %v6252, 1.442695
    %v6352 = vpow.pop %v6351
    %v6353 = vmul.f32 %v6253, 1.442695
    %v6354 = vpow.pop %v6353
    %v6355 = vmul.f32 %v6254, 1.442695
    %v6356 = vpow.pop %v6355
    %v6357 = vmul.f32 %v6255, 1.442695
    %v6358 = vpow.pop %v6357
    %v6359 = vmul.f32 %v6256, 1.442695
    %v6360 = vpow.pop %v6359
    %v6361 = vmul.f32 %v6257, 1.442695
    %v6362 = vpow.pop %v6361
    %v6363 = vmul.f32 %v6258, 1.442695
    %v6364 = vpow.pop %v6363
    %v6365 = vmul.f32 %v6259, 1.442695
    %v6366 = vpow.pop %v6365
    %v6367 = vmul.f32 %v6260, 1.442695
    %v6368 = vpow.pop %v6367
    %v6369 = vmul.f32 %v6261, 1.442695
    %v6370 = vpow.pop %v6369
    %v6371 = vmul.f32 %v6262, 1.442695
    %v6372 = vpow.pop %v6371
    %v6373 = vmul.f32 %v6263, 1.442695
    %v6374 = vpow.pop %v6373
    %v6375 = vmul.f32 %v6264, 1.442695
    %v6376 = vpow.pop %v6375
    %v6377 = vmul.f32 %v6265, 1.442695
    %v6378 = vpow.pop %v6377
    %v6379 = vmul.f32 %v6266, 1.442695
    %v6380 = vpow.pop %v6379
    %v6381 = vmul.f32 %v6267, 1.442695
    %v6382 = vpow.pop %v6381
    %v6383 = vmul.f32 %v6268, 1.442695
    %v6384 = vpow.pop %v6383
    %v6385 = vmul.f32 %v6269, 1.442695
    %v6386 = vpow.pop %v6385
    %v6387 = vmul.f32 %v6270, 1.442695
    %v6388 = vpow.pop %v6387
    %v6389 = vmul.f32 %v6271, 1.442695
    %v6390 = vpow.pop %v6389
    %v6391 = vmul.f32 %v6272, 1.442695
    %v6392 = vpow.pop %v6391
    %v6393 = vmul.f32 %v6273, 1.442695
    %v6394 = vpow.pop %v6393
    %v6395 = vmul.f32 %v6274, 1.442695
    %v6396 = vpow.pop %v6395
    %v6397 = vmul.f32 %v6275, 1.442695
    %v6398 = vpow.pop %v6397
    %v6399 = vmul.f32 %v6276, 1.442695
    %v6400 = vpow.pop %v6399
    %v6401 = vmul.f32 %v6277, 1.442695
    %v6402 = vpow.pop %v6401
    %v6403 = vmul.f32 %v6278, 1.442695
    %v6404 = vpow.pop %v6403
    %v6405 = vmul.f32 %v6279, 1.442695
    %v6406 = vpow.pop %v6405
    %v6407 = vmul.f32 %v6280, 1.442695
    %v6408 = vpow.pop %v6407
    %v6409 = vmul.f32 %v6281, 1.442695
    %v6410 = vpow.pop %v6409
    %v6411 = vmul.f32 %v6282, 1.442695
    %v6412 = vpow.pop %v6411
    %v6413 = vmul.f32 %v6283, 1.442695
    %v6414 = vpow.pop %v6413
    %v6415 = vmul.f32 %v6284, 1.442695
    %v6416 = vpow.pop %v6415
    %v6417 = vmul.f32 %v6285, 1.442695
    %v6418 = vpow.pop %v6417
    %v6419 = vmul.f32 %v6286, 1.442695
    %v6420 = vpow.pop %v6419
    %v6421 = vmul.f32 %v6287, 1.442695
    %v6422 = vpow.pop %v6421
    %v6423 = vmul.f32 %v6288, 1.442695
    %v6424 = vpow.pop %v6423
    %v6425 = vmul.f32 %v6289, 1.442695
    %v6426 = vpow.pop %v6425
    %v6427 = vmul.f32 %v6290, 1.442695
    %v6428 = vpow.pop %v6427
    %v6429 = vmul.f32 %v6291, 1.442695
    %v6430 = vpow.pop %v6429
    %v6431 = vmul.f32 %v6292, 1.442695
    %v6432 = vpow.pop %v6431
    %v6433 = vmul.f32 %v6293, 1.442695
    %v6434 = vpow.pop %v6433
    %v6435 = vmul.f32 %v6294, 1.442695
    %v6436 = vpow.pop %v6435
    %v6437 = vmul.f32 %v6295, 1.442695
    %v6438 = vpow.pop %v6437
    %v6439 = vmul.f32 %v6296, 1.442695
    %v6440 = vpow.pop %v6439
    %v6441 = vmul.f32 %v6297, 1.442695
    %v6442 = vpow.pop %v6441
    %v6443 = vmul.f32 %v6298, 1.442695
    %v6444 = vpow.pop %v6443
    %v6445 = vmul.f32 %v6299, 1.442695
    %v6446 = vpow.pop %v6445
    %v6447 = vmul.f32 %v6300, 1.442695
    %v6448 = vpow.pop %v6447
    %v6449 = vmul.f32 %v6301, 1.442695
    %v6450 = vpow.pop %v6449
    %v6451 = vmul.f32 %v6302, 1.442695
    %v6452 = vpow.pop %v6451
    %v6453 = vmul.f32 %v6303, 1.442695
    %v6454 = vpow.pop %v6453
    %v6455 = vmul.f32 %v6304, 1.442695
    %v6456 = vpow.pop %v6455
    %v6457 = vmul.f32 %v6305, 1.442695
    %v6458 = vpow.pop %v6457
    %v6459 = vmul.f32 %v6306, 1.442695
    %v6460 = vpow.pop %v6459
    %v6461 = vmul.f32 %v6307, 1.442695
    %v6462 = vpow.pop %v6461
    %v6463 = vmul.f32 %v6308, 1.442695
    %v6464 = vpow.pop %v6463
    %v6465 = vmul.f32 %v6309, 1.442695
    %v6466 = vpow.pop %v6465
    %v6467 = vmul.f32 %v6310, 1.442695
    %v6468 = vpow.pop %v6467
    %v6469 = vmul.f32 %v6311, 1.442695
    %v6470 = vpow.pop %v6469
    %v6471 = vmul.f32 %v6312, 1.442695
    %v6472 = vpow.pop %v6471
    %v6473 = vmul.f32 %v6313, 1.442695
    %v6474 = vpow.pop %v6473
    %v6475 = vmul.f32 %v6314, 1.442695
    %v6476 = vpow.pop %v6475
    %v6477 = vmul.f32 %v6315, 1.442695
    %v6478 = vpow.pop %v6477
    %v6479 = vmul.f32 %v6316, 1.442695
    %v6480 = vpow.pop %v6479
    %v6481 = vmul.f32 %v6317, 1.442695
    %v6482 = vpow.pop %v6481
    %v6483 = vmul.f32 %v6318, 1.442695
    %v6484 = vpow.pop %v6483
    %v6485 = vmul.f32 %v6319, 1.442695
    %v6486 = vpow.pop %v6485
    %v6487 = vmul.f32 %v6320, 1.442695
    %v6488 = vpow.pop %v6487
    %v6489 = vmul.f32 %v6321, 1.442695
    %v6490 = vpow.pop %v6489
    %v6491 = vmul.f32 %v6322, 1.442695
    %v6492 = vpow.pop %v6491
    %v6493 = vmul.f32 %v6323, 1.442695
    %v6494 = vpow.pop %v6493
    %v6495 = vmul.f32 %v6324, 1.442695
    %v6496 = vpow.pop %v6495
    %v6497 = vmul.f32 %v6325, 1.442695
    %v6498 = vpow.pop %v6497
    %v6499 = vmul.f32 %v6326, 1.442695
    %v6500 = vpow.pop %v6499
    %v6501 = vmul.f32 %v6327, 1.442695
    %v6502 = vpow.pop %v6501
    %v6503 = vmul.f32 %v6328, 1.442695
    %v6504 = vpow.pop %v6503
    %v6505 = vmul.f32 %v6329, 1.442695
    %v6506 = vpow.pop %v6505
    %v6507 = vmul.f32 %v6330, 1.442695
    %v6508 = vpow.pop %v6507
    %v6509 = vmul.f32 %v6331, 1.442695
    %v6510 = vpow.pop %v6509
    %v6511 = vmul.f32 %v6332, 1.442695
    %v6512 = vpow.pop %v6511
    %v6513 = vmul.f32 %v6333, 1.442695
    %v6514 = vpow.pop %v6513
    %v6515 = vmul.f32 %v6334, 1.442695
    %v6516 = vpow.pop %v6515
    %v6517 = vadd.f32 %v6336, 1.0
    %v6518 = vadd.f32 %v6338, 1.0
    %v6519 = vadd.f32 %v6340, 1.0
    %v6520 = vadd.f32 %v6342, 1.0
    %v6521 = vadd.f32 %v6344, 1.0
    %v6522 = vadd.f32 %v6346, 1.0
    %v6523 = vadd.f32 %v6348, 1.0
    %v6524 = vadd.f32 %v6350, 1.0
    %v6525 = vadd.f32 %v6352, 1.0
    %v6526 = vadd.f32 %v6354, 1.0
    %v6527 = vadd.f32 %v6356, 1.0
    %v6528 = vadd.f32 %v6358, 1.0
    %v6529 = vadd.f32 %v6360, 1.0
    %v6530 = vadd.f32 %v6362, 1.0
    %v6531 = vadd.f32 %v6364, 1.0
    %v6532 = vadd.f32 %v6366, 1.0
    %v6533 = vadd.f32 %v6368, 1.0
    %v6534 = vadd.f32 %v6370, 1.0
    %v6535 = vadd.f32 %v6372, 1.0
    %v6536 = vadd.f32 %v6374, 1.0
    %v6537 = vadd.f32 %v6376, 1.0
    %v6538 = vadd.f32 %v6378, 1.0
    %v6539 = vadd.f32 %v6380, 1.0
    %v6540 = vadd.f32 %v6382, 1.0
    %v6541 = vadd.f32 %v6384, 1.0
    %v6542 = vadd.f32 %v6386, 1.0
    %v6543 = vadd.f32 %v6388, 1.0
    %v6544 = vadd.f32 %v6390, 1.0
    %v6545 = vadd.f32 %v6392, 1.0
    %v6546 = vadd.f32 %v6394, 1.0
    %v6547 = vadd.f32 %v6396, 1.0
    %v6548 = vadd.f32 %v6398, 1.0
    %v6549 = vadd.f32 %v6400, 1.0
    %v6550 = vadd.f32 %v6402, 1.0
    %v6551 = vadd.f32 %v6404, 1.0
    %v6552 = vadd.f32 %v6406, 1.0
    %v6553 = vadd.f32 %v6408, 1.0
    %v6554 = vadd.f32 %v6410, 1.0
    %v6555 = vadd.f32 %v6412, 1.0
    %v6556 = vadd.f32 %v6414, 1.0
    %v6557 = vadd.f32 %v6416, 1.0
    %v6558 = vadd.f32 %v6418, 1.0
    %v6559 = vadd.f32 %v6420, 1.0
    %v6560 = vadd.f32 %v6422, 1.0
    %v6561 = vadd.f32 %v6424, 1.0
    %v6562 = vadd.f32 %v6426, 1.0
    %v6563 = vadd.f32 %v6428, 1.0
    %v6564 = vadd.f32 %v6430, 1.0
    %v6565 = vadd.f32 %v6432, 1.0
    %v6566 = vadd.f32 %v6434, 1.0
    %v6567 = vadd.f32 %v6436, 1.0
    %v6568 = vadd.f32 %v6438, 1.0
    %v6569 = vadd.f32 %v6440, 1.0
    %v6570 = vadd.f32 %v6442, 1.0
    %v6571 = vadd.f32 %v6444, 1.0
    %v6572 = vadd.f32 %v6446, 1.0
    %v6573 = vadd.f32 %v6448, 1.0
    %v6574 = vadd.f32 %v6450, 1.0
    %v6575 = vadd.f32 %v6452, 1.0
    %v6576 = vadd.f32 %v6454, 1.0
    %v6577 = vadd.f32 %v6456, 1.0
    %v6578 = vadd.f32 %v6458, 1.0
    %v6579 = vadd.f32 %v6460, 1.0
    %v6580 = vadd.f32 %v6462, 1.0
    %v6581 = vadd.f32 %v6464, 1.0
    %v6582 = vadd.f32 %v6466, 1.0
    %v6583 = vadd.f32 %v6468, 1.0
    %v6584 = vadd.f32 %v6470, 1.0
    %v6585 = vadd.f32 %v6472, 1.0
    %v6586 = vadd.f32 %v6474, 1.0
    %v6587 = vadd.f32 %v6476, 1.0
    %v6588 = vadd.f32 %v6478, 1.0
    %v6589 = vadd.f32 %v6480, 1.0
    %v6590 = vadd.f32 %v6482, 1.0
    %v6591 = vadd.f32 %v6484, 1.0
    %v6592 = vadd.f32 %v6486, 1.0
    %v6593 = vadd.f32 %v6488, 1.0
    %v6594 = vadd.f32 %v6490, 1.0
    %v6595 = vadd.f32 %v6492, 1.0
    %v6596 = vadd.f32 %v6494, 1.0
    %v6597 = vadd.f32 %v6496, 1.0
    %v6598 = vadd.f32 %v6498, 1.0
    %v6599 = vadd.f32 %v6500, 1.0
    %v6600 = vadd.f32 %v6502, 1.0
    %v6601 = vadd.f32 %v6504, 1.0
    %v6602 = vadd.f32 %v6506, 1.0
    %v6603 = vadd.f32 %v6508, 1.0
    %v6604 = vadd.f32 %v6510, 1.0
    %v6605 = vadd.f32 %v6512, 1.0
    %v6606 = vadd.f32 %v6514, 1.0
    %v6607 = vadd.f32 %v6516, 1.0
    %v6608 = vrcp.pop %v6517
    %v6609 = vmul.f32 1.0, %v6608
    %v6610 = vrcp.pop %v6518
    %v6611 = vmul.f32 1.0, %v6610
    %v6612 = vrcp.pop %v6519
    %v6613 = vmul.f32 1.0, %v6612
    %v6614 = vrcp.pop %v6520
    %v6615 = vmul.f32 1.0, %v6614
    %v6616 = vrcp.pop %v6521
    %v6617 = vmul.f32 1.0, %v6616
    %v6618 = vrcp.pop %v6522
    %v6619 = vmul.f32 1.0, %v6618
    %v6620 = vrcp.pop %v6523
    %v6621 = vmul.f32 1.0, %v6620
    %v6622 = vrcp.pop %v6524
    %v6623 = vmul.f32 1.0, %v6622
    %v6624 = vrcp.pop %v6525
    %v6625 = vmul.f32 1.0, %v6624
    %v6626 = vrcp.pop %v6526
    %v6627 = vmul.f32 1.0, %v6626
    %v6628 = vrcp.pop %v6527
    %v6629 = vmul.f32 1.0, %v6628
    %v6630 = vrcp.pop %v6528
    %v6631 = vmul.f32 1.0, %v6630
    %v6632 = vrcp.pop %v6529
    %v6633 = vmul.f32 1.0, %v6632
    %v6634 = vrcp.pop %v6530
    %v6635 = vmul.f32 1.0, %v6634
    %v6636 = vrcp.pop %v6531
    %v6637 = vmul.f32 1.0, %v6636
    %v6638 = vrcp.pop %v6532
    %v6639 = vmul.f32 1.0, %v6638
    %v6640 = vrcp.pop %v6533
    %v6641 = vmul.f32 1.0, %v6640
    %v6642 = vrcp.pop %v6534
    %v6643 = vmul.f32 1.0, %v6642
    %v6644 = vrcp.pop %v6535
    %v6645 = vmul.f32 1.0, %v6644
    %v6646 = vrcp.pop %v6536
    %v6647 = vmul.f32 1.0, %v6646
    %v6648 = vrcp.pop %v6537
    %v6649 = vmul.f32 1.0, %v6648
    %v6650 = vrcp.pop %v6538
    %v6651 = vmul.f32 1.0, %v6650
    %v6652 = vrcp.pop %v6539
    %v6653 = vmul.f32 1.0, %v6652
    %v6654 = vrcp.pop %v6540
    %v6655 = vmul.f32 1.0, %v6654
    %v6656 = vrcp.pop %v6541
    %v6657 = vmul.f32 1.0, %v6656
    %v6658 = vrcp.pop %v6542
    %v6659 = vmul.f32 1.0, %v6658
    %v6660 = vrcp.pop %v6543
    %v6661 = vmul.f32 1.0, %v6660
    %v6662 = vrcp.pop %v6544
    %v6663 = vmul.f32 1.0, %v6662
    %v6664 = vrcp.pop %v6545
    %v6665 = vmul.f32 1.0, %v6664
    %v6666 = vrcp.pop %v6546
    %v6667 = vmul.f32 1.0, %v6666
    %v6668 = vrcp.pop %v6547
    %v6669 = vmul.f32 1.0, %v6668
    %v6670 = vrcp.pop %v6548
    %v6671 = vmul.f32 1.0, %v6670
    %v6672 = vrcp.pop %v6549
    %v6673 = vmul.f32 1.0, %v6672
    %v6674 = vrcp.pop %v6550
    %v6675 = vmul.f32 1.0, %v6674
    %v6676 = vrcp.pop %v6551
    %v6677 = vmul.f32 1.0, %v6676
    %v6678 = vrcp.pop %v6552
    %v6679 = vmul.f32 1.0, %v6678
    %v6680 = vrcp.pop %v6553
    %v6681 = vmul.f32 1.0, %v6680
    %v6682 = vrcp.pop %v6554
    %v6683 = vmul.f32 1.0, %v6682
    %v6684 = vrcp.pop %v6555
    %v6685 = vmul.f32 1.0, %v6684
    %v6686 = vrcp.pop %v6556
    %v6687 = vmul.f32 1.0, %v6686
    %v6688 = vrcp.pop %v6557
    %v6689 = vmul.f32 1.0, %v6688
    %v6690 = vrcp.pop %v6558
    %v6691 = vmul.f32 1.0, %v6690
    %v6692 = vrcp.pop %v6559
    %v6693 = vmul.f32 1.0, %v6692
    %v6694 = vrcp.pop %v6560
    %v6695 = vmul.f32 1.0, %v6694
    %v6696 = vrcp.pop %v6561
    %v6697 = vmul.f32 1.0, %v6696
    %v6698 = vrcp.pop %v6562
    %v6699 = vmul.f32 1.0, %v6698
    %v6700 = vrcp.pop %v6563
    %v6701 = vmul.f32 1.0, %v6700
    %v6702 = vrcp.pop %v6564
    %v6703 = vmul.f32 1.0, %v6702
    %v6704 = vrcp.pop %v6565
    %v6705 = vmul.f32 1.0, %v6704
    %v6706 = vrcp.pop %v6566
    %v6707 = vmul.f32 1.0, %v6706
    %v6708 = vrcp.pop %v6567
    %v6709 = vmul.f32 1.0, %v6708
    %v6710 = vrcp.pop %v6568
    %v6711 = vmul.f32 1.0, %v6710
    %v6712 = vrcp.pop %v6569
    %v6713 = vmul.f32 1.0, %v6712
    %v6714 = vrcp.pop %v6570
    %v6715 = vmul.f32 1.0, %v6714
    %v6716 = vrcp.pop %v6571
    %v6717 = vmul.f32 1.0, %v6716
    %v6718 = vrcp.pop %v6572
    %v6719 = vmul.f32 1.0, %v6718
    %v6720 = vrcp.pop %v6573
    %v6721 = vmul.f32 1.0, %v6720
    %v6722 = vrcp.pop %v6574
    %v6723 = vmul.f32 1.0, %v6722
    %v6724 = vrcp.pop %v6575
    %v6725 = vmul.f32 1.0, %v6724
    %v6726 = vrcp.pop %v6576
    %v6727 = vmul.f32 1.0, %v6726
    %v6728 = vrcp.pop %v6577
    %v6729 = vmul.f32 1.0, %v6728
    %v6730 = vrcp.pop %v6578
    %v6731 = vmul.f32 1.0, %v6730
    %v6732 = vrcp.pop %v6579
    %v6733 = vmul.f32 1.0, %v6732
    %v6734 = vrcp.pop %v6580
    %v6735 = vmul.f32 1.0, %v6734
    %v6736 = vrcp.pop %v6581
    %v6737 = vmul.f32 1.0, %v6736
    %v6738 = vrcp.pop %v6582
    %v6739 = vmul.f32 1.0, %v6738
    %v6740 = vrcp.pop %v6583
    %v6741 = vmul.f32 1.0, %v6740
    %v6742 = vrcp.pop %v6584
    %v6743 = vmul.f32 1.0, %v6742
    %v6744 = vrcp.pop %v6585
    %v6745 = vmul.f32 1.0, %v6744
    %v6746 = vrcp.pop %v6586
    %v6747 = vmul.f32 1.0, %v6746
    %v6748 = vrcp.pop %v6587
    %v6749 = vmul.f32 1.0, %v6748
    %v6750 = vrcp.pop %v6588
    %v6751 = vmul.f32 1.0, %v6750
    %v6752 = vrcp.pop %v6589
    %v6753 = vmul.f32 1.0, %v6752
    %v6754 = vrcp.pop %v6590
    %v6755 = vmul.f32 1.0, %v6754
    %v6756 = vrcp.pop %v6591
    %v6757 = vmul.f32 1.0, %v6756
    %v6758 = vrcp.pop %v6592
    %v6759 = vmul.f32 1.0, %v6758
    %v6760 = vrcp.pop %v6593
    %v6761 = vmul.f32 1.0, %v6760
    %v6762 = vrcp.pop %v6594
    %v6763 = vmul.f32 1.0, %v6762
    %v6764 = vrcp.pop %v6595
    %v6765 = vmul.f32 1.0, %v6764
    %v6766 = vrcp.pop %v6596
    %v6767 = vmul.f32 1.0, %v6766
    %v6768 = vrcp.pop %v6597
    %v6769 = vmul.f32 1.0, %v6768
    %v6770 = vrcp.pop %v6598
    %v6771 = vmul.f32 1.0, %v6770
    %v6772 = vrcp.pop %v6599
    %v6773 = vmul.f32 1.0, %v6772
    %v6774 = vrcp.pop %v6600
    %v6775 = vmul.f32 1.0, %v6774
    %v6776 = vrcp.pop %v6601
    %v6777 = vmul.f32 1.0, %v6776
    %v6778 = vrcp.pop %v6602
    %v6779 = vmul.f32 1.0, %v6778
    %v6780 = vrcp.pop %v6603
    %v6781 = vmul.f32 1.0, %v6780
    %v6782 = vrcp.pop %v6604
    %v6783 = vmul.f32 1.0, %v6782
    %v6784 = vrcp.pop %v6605
    %v6785 = vmul.f32 1.0, %v6784
    %v6786 = vrcp.pop %v6606
    %v6787 = vmul.f32 1.0, %v6786
    %v6788 = vrcp.pop %v6607
    %v6789 = vmul.f32 1.0, %v6788
    %6790 = vst [vmem:[#allocation5] sm:$0xff] %v6609
    %6791 = vst [vmem:[#allocation5 + $0x8] sm:$0xff] %v6611
    %6792 = vst [vmem:[#allocation5 + $0x10] sm:$0xff] %v6613
    %6793 = vst [vmem:[#allocation5 + $0x18] sm:$0xff] %v6615
    %6794 = vst [vmem:[#allocation5 + $0x20] sm:$0xff] %v6617
    %6795 = vst [vmem:[#allocation5 + $0x28] sm:$0xff] %v6619
    %6796 = vst.msk [vmem:[#allocation5 + $0x30] sm:$0xff] %vm2712, %v6621
    %6797 = vst [vmem:[#allocation5 + $0x38] sm:$0xff] %v6623
    %6798 = vst [vmem:[#allocation5 + $0x40] sm:$0xff] %v6625
    %6799 = vst [vmem:[#allocation5 + $0x48] sm:$0xff] %v6627
    %6800 = vst [vmem:[#allocation5 + $0x50] sm:$0xff] %v6629
    %6801 = vst [vmem:[#allocation5 + $0x58] sm:$0xff] %v6631
    %6802 = vst [vmem:[#allocation5 + $0x60] sm:$0xff] %v6633
    %6803 = vst.msk [vmem:[#allocation5 + $0x68] sm:$0xff] %vm2712, %v6635
    %6804 = vst [vmem:[#allocation5 + $0x70] sm:$0xff] %v6637
    %6805 = vst [vmem:[#allocation5 + $0x78] sm:$0xff] %v6639
    %6806 = vst [vmem:[#allocation5 + $0x80] sm:$0xff] %v6641
    %6807 = vst [vmem:[#allocation5 + $0x88] sm:$0xff] %v6643
    %6808 = vst [vmem:[#allocation5 + $0x90] sm:$0xff] %v6645
    %6809 = vst [vmem:[#allocation5 + $0x98] sm:$0xff] %v6647
    %6810 = vst.msk [vmem:[#allocation5 + $0xa0] sm:$0xff] %vm2712, %v6649
    %6811 = vst [vmem:[#allocation5 + $0xa8] sm:$0xff] %v6651
    %6812 = vst [vmem:[#allocation5 + $0xb0] sm:$0xff] %v6653
    %6813 = vst [vmem:[#allocation5 + $0xb8] sm:$0xff] %v6655
    %6814 = vst [vmem:[#allocation5 + $0xc0] sm:$0xff] %v6657
    %6815 = vst [vmem:[#allocation5 + $0xc8] sm:$0xff] %v6659
    %6816 = vst [vmem:[#allocation5 + $0xd0] sm:$0xff] %v6661
    %6817 = vst.msk [vmem:[#allocation5 + $0xd8] sm:$0xff] %vm2712, %v6663
    %6818 = vst [vmem:[#allocation5 + $0xe0] sm:$0xff] %v6665
    %6819 = vst [vmem:[#allocation5 + $0xe8] sm:$0xff] %v6667
    %6820 = vst [vmem:[#allocation5 + $0xf0] sm:$0xff] %v6669
    %6821 = vst [vmem:[#allocation5 + $0xf8] sm:$0xff] %v6671
    %6822 = vst [vmem:[#allocation5 + $0x100] sm:$0xff] %v6673
    %6823 = vst [vmem:[#allocation5 + $0x108] sm:$0xff] %v6675
    %6824 = vst.msk [vmem:[#allocation5 + $0x110] sm:$0xff] %vm2712, %v6677
    %6825 = vst [vmem:[#allocation5 + $0x118] sm:$0xff] %v6679
    %6826 = vst [vmem:[#allocation5 + $0x120] sm:$0xff] %v6681
    %6827 = vst [vmem:[#allocation5 + $0x128] sm:$0xff] %v6683
    %6828 = vst [vmem:[#allocation5 + $0x130] sm:$0xff] %v6685
    %6829 = vst [vmem:[#allocation5 + $0x138] sm:$0xff] %v6687
    %6830 = vst [vmem:[#allocation5 + $0x140] sm:$0xff] %v6689
    %6831 = vst.msk [vmem:[#allocation5 + $0x148] sm:$0xff] %vm2712, %v6691
    %6832 = vst [vmem:[#allocation5 + $0x150] sm:$0xff] %v6693
    %6833 = vst [vmem:[#allocation5 + $0x158] sm:$0xff] %v6695
    %6834 = vst [vmem:[#allocation5 + $0x160] sm:$0xff] %v6697
    %6835 = vst [vmem:[#allocation5 + $0x168] sm:$0xff] %v6699
    %6836 = vst [vmem:[#allocation5 + $0x170] sm:$0xff] %v6701
    %6837 = vst [vmem:[#allocation5 + $0x178] sm:$0xff] %v6703
    %6838 = vst.msk [vmem:[#allocation5 + $0x180] sm:$0xff] %vm2712, %v6705
    %6839 = vst [vmem:[#allocation5 + $0x188] sm:$0xff] %v6707
    %6840 = vst [vmem:[#allocation5 + $0x190] sm:$0xff] %v6709
    %6841 = vst [vmem:[#allocation5 + $0x198] sm:$0xff] %v6711
    %6842 = vst [vmem:[#allocation5 + $0x1a0] sm:$0xff] %v6713
    %6843 = vst [vmem:[#allocation5 + $0x1a8] sm:$0xff] %v6715
    %6844 = vst [vmem:[#allocation5 + $0x1b0] sm:$0xff] %v6717
    %6845 = vst.msk [vmem:[#allocation5 + $0x1b8] sm:$0xff] %vm2712, %v6719
    %6846 = vst [vmem:[#allocation5 + $0x1c0] sm:$0xff] %v6721
    %6847 = vst [vmem:[#allocation5 + $0x1c8] sm:$0xff] %v6723
    %6848 = vst [vmem:[#allocation5 + $0x1d0] sm:$0xff] %v6725
    %6849 = vst [vmem:[#allocation5 + $0x1d8] sm:$0xff] %v6727
    %6850 = vst [vmem:[#allocation5 + $0x1e0] sm:$0xff] %v6729
    %6851 = vst [vmem:[#allocation5 + $0x1e8] sm:$0xff] %v6731
    %6852 = vst.msk [vmem:[#allocation5 + $0x1f0] sm:$0xff] %vm2712, %v6733
    %6853 = vst [vmem:[#allocation5 + $0x1f8] sm:$0xff] %v6735
    %6854 = vst [vmem:[#allocation5 + $0x200] sm:$0xff] %v6737
    %6855 = vst [vmem:[#allocation5 + $0x208] sm:$0xff] %v6739
    %6856 = vst [vmem:[#allocation5 + $0x210] sm:$0xff] %v6741
    %6857 = vst [vmem:[#allocation5 + $0x218] sm:$0xff] %v6743
    %6858 = vst [vmem:[#allocation5 + $0x220] sm:$0xff] %v6745
    %6859 = vst.msk [vmem:[#allocation5 + $0x228] sm:$0xff] %vm2712, %v6747
    %6860 = vst [vmem:[#allocation5 + $0x230] sm:$0xff] %v6749
    %6861 = vst [vmem:[#allocation5 + $0x238] sm:$0xff] %v6751
    %6862 = vst [vmem:[#allocation5 + $0x240] sm:$0xff] %v6753
    %6863 = vst [vmem:[#allocation5 + $0x248] sm:$0xff] %v6755
    %6864 = vst [vmem:[#allocation5 + $0x250] sm:$0xff] %v6757
    %6865 = vst [vmem:[#allocation5 + $0x258] sm:$0xff] %v6759
    %6866 = vst.msk [vmem:[#allocation5 + $0x260] sm:$0xff] %vm2712, %v6761
    %6867 = vst [vmem:[#allocation5 + $0x268] sm:$0xff] %v6763
    %6868 = vst [vmem:[#allocation5 + $0x270] sm:$0xff] %v6765
    %6869 = vst [vmem:[#allocation5 + $0x278] sm:$0xff] %v6767
    %6870 = vst [vmem:[#allocation5 + $0x280] sm:$0xff] %v6769
    %6871 = vst [vmem:[#allocation5 + $0x288] sm:$0xff] %v6771
    %6872 = vst [vmem:[#allocation5 + $0x290] sm:$0xff] %v6773
    %6873 = vst.msk [vmem:[#allocation5 + $0x298] sm:$0xff] %vm2712, %v6775
    %6874 = vst [vmem:[#allocation5 + $0x2a0] sm:$0xf] %v6777
    %6875 = vst [vmem:[#allocation5 + $0x2a8] sm:$0xf] %v6779
    %6876 = vst [vmem:[#allocation5 + $0x2b0] sm:$0xf] %v6781
    %6877 = vst [vmem:[#allocation5 + $0x2b8] sm:$0xf] %v6783
    %6878 = vst [vmem:[#allocation5 + $0x2c0] sm:$0xf] %v6785
    %6879 = vst [vmem:[#allocation5 + $0x2c8] sm:$0xf] %v6787
    %vm6880 = vcmask 125952
    %6881 = vst.msk [vmem:[#allocation5 + $0x2d0] sm:$0xf] %vm6880, %v6789
    // Predicated region
    $region83: #{vgp_forward.1} parent=1 // pred_check
      _
    $region84: #{vgp_forward.1} parent=1 // pred_check_branch
      %6883 = sbr.rel (0) target = $region86
    $region85: #{vgp_forward.1} parent=1 // pred_region
      _
    $region86: #{vgp_forward.1} parent=1 // pred_fallthru
      _
    // Predicated region
    $region87: #{vgp_forward.1} parent=1 // pred_check
      _
    $region88: #{vgp_forward.1} parent=1 // pred_check_branch
      %6885 = sbr.rel (0) target = $region90
    $region89: #{vgp_forward.1} parent=1 // pred_region
      _
    $region90: #{vgp_forward.1} parent=1 // pred_fallthru
      _
    // Predicated region
    $region91: #{vgp_forward.1} parent=1 // pred_check
      _
    $region92: #{vgp_forward.1} parent=1 // pred_check_branch
      %6887 = sbr.rel (0) target = $region94
    $region93: #{vgp_forward.1} parent=1 // pred_region
      %s6889 = ssub.s32 11648, 11648
      %6890 = vsyncadd [#allocation6], %s6889
      %s6891 = sshll.u32 [#allocation5], 4
      %s6892 = int_to_ptr.vmem [resolvable:$true] %s6891
      %6897 = dma.vmem_to_hbm [thread:$0]  %s6892, 11648, %s14, [#allocation6], 896, 896, 56
    $region94: #{vgp_forward.1} parent=1 // pred_fallthru
      _
    // Predicated region
    $region95: #{vgp_forward.1} parent=1 // pred_check
      _
    $region96: #{vgp_forward.1} parent=1 // pred_check_branch
      %6899 = sbr.rel (0) target = $region98
    $region97: #{vgp_forward.1} parent=1 // pred_region
      _
    $region98: #{vgp_forward.1} parent=1 // pred_fallthru
      _
    // Predicated region
    $region99: #{vgp_forward.1} parent=1 // pred_check
      _
    $region100: #{vgp_forward.1} parent=1 // pred_check_branch
      %6901 = sbr.rel (0) target = $region102
    $region101: #{vgp_forward.1} parent=1 // pred_region
      _
    $region102: #{vgp_forward.1} parent=1 // pred_fallthru
      _
    // Predicated region
    $region103: #{vgp_forward.1} parent=1 // pred_check
      _
    $region104: #{vgp_forward.1} parent=1 // pred_check_branch
      %6903 = sbr.rel (0) target = $region106
    $region105: #{vgp_forward.1} parent=1 // pred_region
      %6904 = dma.done [#allocation6], 11648
    $region106: #{vgp_forward.1} parent=1 // pred_fallthru
      _
    %6905 = vsyncpa [#allocation6], 1
  %6906 = vsyncmov [#allocation3]
  %s6907 = vpop.sfrf %6906
  %p6908 = scmp.eq.s32.totalorder %s6907, 0
  %p6909 = pneg %p6908
  %6911 = shalt.err (%p6909)

</llo_original>
